<compile_context>
chip_gen: v7x
topology: tpu7x:2x2x1
jax: 0.10.0
libtpu: 0.0.40
codegen_flags: <defaults>
</compile_context>

<pallas_src>
import functools

import jax
import jax.numpy as jnp
from jax.experimental import pallas as pl
from jax.experimental.pallas import tpu as pltpu


F_IN = 132
H1 = 128
H2 = 256
H3 = 256
BN_EPS = 1e-5


def fused_lstm_kernel(
    x_ref,                              # (T*Bp, 132) f32, time-major, batch padded to Bp
    wih1_ref, whh1_ref, bias1_ref,      # (132,512) bf16, (128,512) bf16, (1,512) f32
    wih2_hbm, whh2_hbm, bias2_ref,      # (128,1024) bf16 HBM, (256,1024) bf16 HBM, (1,1024) f32
    wih3_hbm, bias3_ref,                # (256,768) bf16 HBM, (1,768) f32
    whead_ref, bhead_ref,               # (256,A) f32, (1,A) f32
    out_ref,                            # (Bp, A) f32
    xg1_sc,                             # (T*Bp, 512) f32 scratch: lstm1 input projections
    wih2_v, whh2_v, wih3_v,             # VMEM staging for manually prefetched weights
    dma_sem,                            # DMA semaphores (3,)
    *, T, Bp,
):
    bf16 = jnp.bfloat16
    f32 = jnp.float32

    # ---- kick off async prefetch of layer-2/3 weights (overlaps lstm1) ----
    cp_wih2 = pltpu.make_async_copy(wih2_hbm, wih2_v, dma_sem.at[0])
    cp_whh2 = pltpu.make_async_copy(whh2_hbm, whh2_v, dma_sem.at[1])
    cp_wih3 = pltpu.make_async_copy(wih3_hbm, wih3_v, dma_sem.at[2])
    cp_wih2.start()
    cp_whh2.start()
    cp_wih3.start()

    # ---- LSTM1: hoisted input projection for all T steps (one MXU pass) ----
    x_bf = x_ref[...].astype(bf16)
    xg1_sc[...] = (jnp.dot(x_bf, wih1_ref[...], preferred_element_type=f32)
                   + bias1_ref[...])

    # Gate columns packed as [i, f, o | g]:
    def gates_packed(pre, c_prev, H):
        sig = jax.nn.sigmoid(pre[:, : 3 * H])            # [i | f | o] in one EUP pass
        g = jnp.tanh(pre[:, 3 * H:])
        c_new = sig[:, H: 2 * H] * c_prev + sig[:, :H] * g
        h_new = sig[:, 2 * H: 3 * H] * jnp.tanh(c_new)
        return h_new, c_new

    def gates_packed_first(pre, H):
        # peeled t=0: h_prev = c_prev = 0 -> forget path is dead
        sig = jax.nn.sigmoid(pre[:, : 3 * H])
        g = jnp.tanh(pre[:, 3 * H:])
        c_new = sig[:, :H] * g
        h_new = sig[:, 2 * H: 3 * H] * jnp.tanh(c_new)
        return h_new, c_new

    # ---- peeled lstm1 step t=0 (no h@W_hh) ----
    h1, c1 = gates_packed_first(xg1_sc[0:Bp, :], H1)
    h1_bf = h1.astype(bf16)

    # lstm2 needs wih2 now; whh2/wih3 keep streaming.
    cp_wih2.wait()
    xg2 = (jnp.dot(h1_bf, wih2_v[...], preferred_element_type=f32)
           + bias2_ref[...])                              # lstm2 step-0 pre-activations

    h2 = None
    c2 = None
    whh2_waited = False

    # ---- skewed recurrence: lstm1 step t  ||  lstm2 step t-1 (independent) ----
    for t in range(1, T):
        # lstm1 step t (serial chain A)
        pre1 = xg1_sc[t * Bp:(t + 1) * Bp, :] + jnp.dot(
            h1_bf, whh1_ref[...], preferred_element_type=f32)
        h1, c1 = gates_packed(pre1, c1, H1)
        h1_bf_next = h1.astype(bf16)

        # lstm2 step t-1 (serial chain B, uses xg2 built from h1_{t-1})
        if t == 1:
            h2, c2 = gates_packed_first(xg2, H2)          # peeled lstm2 t=0
        else:
            if not whh2_waited:
                cp_whh2.wait()
                whh2_waited = True
            pre2 = xg2 + jnp.dot(h2.astype(bf16), whh2_v[...],
                                 preferred_element_type=f32)
            h2, c2 = gates_packed(pre2, c2, H2)

        # lstm2 input projection for step t (off both chains; feeds next iter)
        xg2 = (jnp.dot(h1_bf_next, wih2_v[...], preferred_element_type=f32)
               + bias2_ref[...])
        h1_bf = h1_bf_next

    # ---- epilogue: final lstm2 step T-1 ----
    if not whh2_waited:
        cp_whh2.wait()
    pre2 = xg2 + jnp.dot(h2.astype(bf16), whh2_v[...], preferred_element_type=f32)
    h2, c2 = gates_packed(pre2, c2, H2)

    # ---- lstm3: seq_len=1, zero init state; gates packed [i, o | g], f dropped ----
    cp_wih3.wait()
    pre3 = (jnp.dot(h2.astype(bf16), wih3_v[...], preferred_element_type=f32)
            + bias3_ref[...])                             # (Bp, 3*H3)
    sig3 = jax.nn.sigmoid(pre3[:, : 2 * H3])              # [i | o]
    g3 = jnp.tanh(pre3[:, 2 * H3:])
    c3 = sig3[:, :H3] * g3
    h3 = sig3[:, H3: 2 * H3] * jnp.tanh(c3)

    # ---- head: BN(eval)+dense1..4 folded into one (256, A) affine, then softmax ----
    logits = jnp.dot(h3, whead_ref[...], preferred_element_type=jnp.float32) + bhead_ref[...]
    logits = logits - jnp.max(logits, axis=1, keepdims=True)
    e = jnp.exp(logits)
    denom = jnp.sum(e, axis=1, keepdims=True)
    out_ref[...] = e * pl.reciprocal(denom, approx=True)


# ----------------------------------------------------------------------------
# Forward pass wrapper: one fused pallas_call.
# ----------------------------------------------------------------------------
def lstm_model_forward_fn(x_btf, prep):
    B, T, F = x_btf.shape
    assert F == F_IN
    assert T >= 2, "skewed recurrence assumes at least 2 time steps"
    Bp = max(8, -(-B // 8) * 8)          # pad batch to sublane granularity (8 rows)
    A = prep["w_head"].shape[1]

    # batch_first -> time-major; pad batch; flatten so per-step tiles are aligned.
    x_tbf = jnp.transpose(x_btf, (1, 0, 2))              # (T, B, F)
    x_tbf = jnp.pad(x_tbf, ((0, 0), (0, Bp - B), (0, 0)))
    x_flat = x_tbf.reshape(T * Bp, F)

    vmem = pl.BlockSpec(memory_space=pltpu.MemorySpace.VMEM)
    hbm = pl.BlockSpec(memory_space=pl.ANY)
    kernel = functools.partial(fused_lstm_kernel, T=T, Bp=Bp)

    out = pl.pallas_call(
        kernel,
        out_shape=jax.ShapeDtypeStruct((Bp, A), jnp.float32),
        in_specs=[vmem,                    # x
                  vmem, vmem, vmem,        # wih1, whh1, bias1
                  hbm, hbm, vmem,          # wih2 (HBM), whh2 (HBM), bias2
                  hbm, vmem,               # wih3 (HBM), bias3
                  vmem, vmem],             # w_head, b_head
        out_specs=vmem,
        scratch_shapes=[
            pltpu.VMEM((T * Bp, 4 * H1), jnp.float32),    # xg1 slab
            pltpu.VMEM((H1, 4 * H2), jnp.bfloat16),       # wih2 staging
            pltpu.VMEM((H2, 4 * H2), jnp.bfloat16),       # whh2 staging
            pltpu.VMEM((H2, 3 * H3), jnp.bfloat16),       # wih3 staging (f dropped)
            pltpu.SemaphoreType.DMA((3,)),
        ],
    )(x_flat,
      prep["wih1"], prep["whh1"], prep["bias1"],
      prep["wih2"], prep["whh2"], prep["bias2"],
      prep["wih3"], prep["bias3"],
      prep["w_head"], prep["b_head"])
    return out[:B]


# ----------------------------------------------------------------------------
# Parameter construction (deterministic, PyTorch-style uniform init ranges).
# ----------------------------------------------------------------------------
def _uniform(key, shape, bound):
    return jax.random.uniform(key, shape, jnp.float32, -bound, bound)


def init_params(key, n_actions):
    keys = iter(jax.random.split(key, 40))
    p = {}

    def lstm_params(name, d_in, h):
        bound = 1.0 / jnp.sqrt(h)
        p[f"{name}_w_ih"] = _uniform(next(keys), (4 * h, d_in), bound)
        p[f"{name}_w_hh"] = _uniform(next(keys), (4 * h, h), bound)
        p[f"{name}_b_ih"] = _uniform(next(keys), (4 * h,), bound)
        p[f"{name}_b_hh"] = _uniform(next(keys), (4 * h,), bound)

    lstm_params("lstm1", F_IN, H1)
    lstm_params("lstm2", H1, H2)
    lstm_params("lstm3", H2, H3)

    # BatchNorm1d(256) -- eval-mode params/stats (kept non-trivial).
    p["bn_gamma"] = 1.0 + 0.1 * jax.random.normal(next(keys), (1, 256), jnp.float32)
    p["bn_beta"] = 0.1 * jax.random.normal(next(keys), (1, 256), jnp.float32)
    p["bn_mean"] = 0.05 * jax.random.normal(next(keys), (1, 256), jnp.float32)
    p["bn_var"] = jnp.abs(1.0 + 0.1 * jax.random.normal(next(keys), (1, 256), jnp.float32))

    def linear_params(wname, bname, d_in, d_out):
        bound = 1.0 / jnp.sqrt(d_in)
        # stored transposed: (d_in, d_out) so the math is x @ W
        p[wname] = _uniform(next(keys), (d_in, d_out), bound)
        p[bname] = _uniform(next(keys), (1, d_out), bound)

    linear_params("w1", "b1", 256, 256)
    linear_params("w2", "b2", 256, 128)
    linear_params("w3", "b3", 128, 64)
    linear_params("w4", "b4", 64, n_actions)
    return p


def prepare_params(p):
    """One-time weight packing (outside the hot path):
       * transpose LSTM weights to (D, 4H), sum the two biases,
       * permute gate columns: PyTorch [i,f,g,o] -> [i,f,o,g] (lstm1/2),
         [i,o,g] for lstm3 (forget gate + W_hh dead at seq_len=1, zero state),
       * cast LSTM matmul weights to bf16,
       * fold BatchNorm(eval) + dense1..dense4 into one (256, A) affine."""
    def lstm_packed(name, order):
        wih = jnp.transpose(p[f"{name}_w_ih"])                 # (D, 4H)
        whh = jnp.transpose(p[f"{name}_w_hh"])                 # (H, 4H)
        bias = (p[f"{name}_b_ih"] + p[f"{name}_b_hh"]).reshape(1, -1)
        H = whh.shape[0]
        cols = jnp.concatenate([jnp.arange(g * H, (g + 1) * H) for g in order])
        return (wih[:, cols].astype(jnp.bfloat16),
                whh[:, cols].astype(jnp.bfloat16),
                bias[:, cols])

    # PyTorch gate index: i=0, f=1, g=2, o=3
    wih1, whh1, bias1 = lstm_packed("lstm1", (0, 1, 3, 2))     # [i,f,o,g]
    wih2, whh2, bias2 = lstm_packed("lstm2", (0, 1, 3, 2))     # [i,f,o,g]
    wih3, _unused_whh3, bias3 = lstm_packed("lstm3", (0, 3, 2))  # [i,o,g]

    # BN eval: y = x*s + t with s = gamma/sqrt(var+eps), t = beta - mean*s
    s = p["bn_gamma"] / jnp.sqrt(p["bn_var"] + BN_EPS)         # (1, 256)
    t = p["bn_beta"] - p["bn_mean"] * s                        # (1, 256)
    w_head = s.reshape(-1, 1) * p["w1"]                        # diag(s) @ W1
    b_head = t @ p["w1"] + p["b1"]
    for wi, bi in ((p["w2"], p["b2"]), (p["w3"], p["b3"]), (p["w4"], p["b4"])):
        b_head = b_head @ wi + bi
        w_head = w_head @ wi

    return {
        "wih1": wih1, "whh1": whh1, "bias1": bias1,
        "wih2": wih2, "whh2": whh2, "bias2": bias2,
        "wih3": wih3, "bias3": bias3,
        "w_head": w_head.astype(jnp.float32),
        "b_head": b_head.astype(jnp.float32),
    }


# ----------------------------------------------------------------------------
# Pure-JAX f32 reference (mirrors the PyTorch module, inference mode).
# ----------------------------------------------------------------------------
def reference_forward(x_btf, p):
    def lstm_layer(x_tbf, name, H):
        wih = p[f"{name}_w_ih"]; whh = p[f"{name}_w_hh"]
        b = p[f"{name}_b_ih"] + p[f"{name}_b_hh"]
        T, B, _ = x_tbf.shape
        h = jnp.zeros((B, H), jnp.float32)
        c = jnp.zeros((B, H), jnp.float32)
        ys = []
        for t in range(T):
            pre = x_tbf[t] @ wih.T + h @ whh.T + b
            i = jax.nn.sigmoid(pre[:, :H])
            f = jax.nn.sigmoid(pre[:, H:2 * H])
            g = jnp.tanh(pre[:, 2 * H:3 * H])
            o = jax.nn.sigmoid(pre[:, 3 * H:])
            c = f * c + i * g
            h = o * jnp.tanh(c)
            ys.append(h)
        return jnp.stack(ys, 0)

    x_tbf = jnp.transpose(x_btf, (1, 0, 2))
    y1 = lstm_layer(x_tbf, "lstm1", H1)            # dropout1: identity (inference)
    y2 = lstm_layer(y1, "lstm2", H2)               # dropout2: identity (inference)
    y3 = lstm_layer(y2[-1:], "lstm3", H3)          # last step, seq_len=1
    h = y3[0]
    h = (h - p["bn_mean"]) / jnp.sqrt(p["bn_var"] + BN_EPS) * p["bn_gamma"] + p["bn_beta"]
    h = h @ p["w1"] + p["b1"]
    h = h @ p["w2"] + p["b2"]
    h = h @ p["w3"] + p["b3"]
    h = h @ p["w4"] + p["b4"]
    return jax.nn.softmax(h, axis=1)


if __name__ == "__main__":
    B, T, F = 2, 8, F_IN
    N_ACTIONS = 5

    key = jax.random.PRNGKey(0)
    k_x, k_p = jax.random.split(key)
    x = jax.random.normal(k_x, (B, T, F), jnp.float32)
    params = init_params(k_p, N_ACTIONS)
    prep = prepare_params(params)          # one-time packing, outside the hot path

    fwd = jax.jit(lstm_model_forward_fn)
    out = jax.block_until_ready(fwd(x, prep))

    assert out.shape == (B, N_ACTIONS)
    assert bool(jnp.all(jnp.isfinite(out)))
    # softmax rows sum to ~1 (approx EUP reciprocal -> slightly looser tolerance)
    assert bool(jnp.allclose(jnp.sum(out, axis=1), 1.0, atol=2e-3))
    # end-to-end check vs. f32 reference (bf16 matmuls inside the recurrence)
    ref = reference_forward(x, params)
    assert bool(jnp.max(jnp.abs(out - ref)) < 5e-2), "mismatch vs f32 reference"
    print("KERNEL_OK")
</pallas_src>

<mosaic_0001>
module attributes {stable_mosaic.version = 11 : i64} {
  func.func @fused_lstm_kernel(%arg0: memref<64x132xf32, #tpu.memory_space<vmem>>, %arg1: memref<132x512xbf16, #tpu.memory_space<vmem>>, %arg2: memref<128x512xbf16, #tpu.memory_space<vmem>>, %arg3: memref<1x512xf32, #tpu.memory_space<vmem>>, %arg4: memref<128x1024xbf16, #tpu.memory_space<any>>, %arg5: memref<256x1024xbf16, #tpu.memory_space<any>>, %arg6: memref<1x1024xf32, #tpu.memory_space<vmem>>, %arg7: memref<256x768xbf16, #tpu.memory_space<any>>, %arg8: memref<1x768xf32, #tpu.memory_space<vmem>>, %arg9: memref<256x5xf32, #tpu.memory_space<vmem>>, %arg10: memref<1x5xf32, #tpu.memory_space<vmem>>, %arg11: memref<8x5xf32, #tpu.memory_space<vmem>>, %arg12: memref<64x512xf32, #tpu.memory_space<vmem>>, %arg13: memref<128x1024xbf16, #tpu.memory_space<vmem>>, %arg14: memref<256x1024xbf16, #tpu.memory_space<vmem>>, %arg15: memref<256x768xbf16, #tpu.memory_space<vmem>>, %arg16: memref<3x!tpu.dma_semaphore, #tpu.memory_space<semaphore_mem>>) attributes {dimension_semantics = [], scalar_prefetch = 0 : i64, scratch_operands = 5 : i64, tpu.core_type = #tpu.core_type<tc>} {
    %c0_i32 = arith.constant 0 : i32
    %0 = tpu.memref_slice %arg16[%c0_i32] : memref<3x!tpu.dma_semaphore, #tpu.memory_space<semaphore_mem>> -> memref<1x!tpu.dma_semaphore, #tpu.memory_space<semaphore_mem>>
    %1 = tpu.memref_squeeze %0 : memref<1x!tpu.dma_semaphore, #tpu.memory_space<semaphore_mem>> -> memref<!tpu.dma_semaphore, #tpu.memory_space<semaphore_mem>>
    tpu.enqueue_dma source(%arg4 : memref<128x1024xbf16, #tpu.memory_space<any>>) target(%arg13 : memref<128x1024xbf16, #tpu.memory_space<vmem>>) target_semaphore(%1 : memref<!tpu.dma_semaphore, #tpu.memory_space<semaphore_mem>>)
    %c1_i32 = arith.constant 1 : i32
    %2 = tpu.memref_slice %arg16[%c1_i32] : memref<3x!tpu.dma_semaphore, #tpu.memory_space<semaphore_mem>> -> memref<1x!tpu.dma_semaphore, #tpu.memory_space<semaphore_mem>>
    %3 = tpu.memref_squeeze %2 : memref<1x!tpu.dma_semaphore, #tpu.memory_space<semaphore_mem>> -> memref<!tpu.dma_semaphore, #tpu.memory_space<semaphore_mem>>
    tpu.enqueue_dma source(%arg5 : memref<256x1024xbf16, #tpu.memory_space<any>>) target(%arg14 : memref<256x1024xbf16, #tpu.memory_space<vmem>>) target_semaphore(%3 : memref<!tpu.dma_semaphore, #tpu.memory_space<semaphore_mem>>)
    %c2_i32 = arith.constant 2 : i32
    %4 = tpu.memref_slice %arg16[%c2_i32] : memref<3x!tpu.dma_semaphore, #tpu.memory_space<semaphore_mem>> -> memref<1x!tpu.dma_semaphore, #tpu.memory_space<semaphore_mem>>
    %5 = tpu.memref_squeeze %4 : memref<1x!tpu.dma_semaphore, #tpu.memory_space<semaphore_mem>> -> memref<!tpu.dma_semaphore, #tpu.memory_space<semaphore_mem>>
    tpu.enqueue_dma source(%arg7 : memref<256x768xbf16, #tpu.memory_space<any>>) target(%arg15 : memref<256x768xbf16, #tpu.memory_space<vmem>>) target_semaphore(%5 : memref<!tpu.dma_semaphore, #tpu.memory_space<semaphore_mem>>)
    %c0 = arith.constant 0 : index
    %c0_0 = arith.constant 0 : index
    %6 = vector.load %arg0[%c0, %c0_0] : memref<64x132xf32, #tpu.memory_space<vmem>>, vector<64x132xf32>
    %7 = arith.truncf %6 : vector<64x132xf32> to vector<64x132xbf16>
    %c0_1 = arith.constant 0 : index
    %c0_2 = arith.constant 0 : index
    %8 = vector.load %arg1[%c0_1, %c0_2] : memref<132x512xbf16, #tpu.memory_space<vmem>>, vector<132x512xbf16>
    %cst = arith.constant dense<0.000000e+00> : vector<64x512xf32>
    %9 = tpu.matmul %7, %8, %cst {dimension_numbers = #tpu.dot_dimension_numbers<[1], [0], [0], [1], [0, 0, 1, 1], [], []>} : vector<64x132xbf16>, vector<132x512xbf16>, vector<64x512xf32> -> vector<64x512xf32>
    %c0_3 = arith.constant 0 : index
    %c0_4 = arith.constant 0 : index
    %10 = vector.load %arg3[%c0_3, %c0_4] : memref<1x512xf32, #tpu.memory_space<vmem>>, vector<1x512xf32>
    %11 = vector.broadcast %10 : vector<1x512xf32> to vector<64x512xf32>
    %12 = arith.addf %9, %11 : vector<64x512xf32>
    %c0_5 = arith.constant 0 : index
    %c0_6 = arith.constant 0 : index
    %13 = vector.load %arg12[%c0_5, %c0_6] : memref<64x512xf32, #tpu.memory_space<vmem>>, vector<64x512xf32>
    tpu.vector_store %arg12[%c0_5, %c0_6], %12 {strides = array<i32>} : memref<64x512xf32, #tpu.memory_space<vmem>>, vector<64x512xf32>,
    %c0_7 = arith.constant 0 : index
    %c0_8 = arith.constant 0 : index
    %14 = vector.load %arg12[%c0_7, %c0_8] : memref<64x512xf32, #tpu.memory_space<vmem>>, vector<8x512xf32>
    %15 = vector.extract_strided_slice %14 {offsets = [0, 0], sizes = [8, 384], strides = [1, 1]} : vector<8x512xf32> to vector<8x384xf32>
    %16 = arith.negf %15 : vector<8x384xf32>
    %17 = math.exp %16 : vector<8x384xf32>
    %cst_9 = arith.constant 1.000000e+00 : f32
    %18 = vector.broadcast %cst_9 : f32 to vector<8x384xf32>
    %19 = arith.addf %18, %17 : vector<8x384xf32>
    %20 = arith.divf %18, %19 : vector<8x384xf32>
    %21 = vector.extract_strided_slice %14 {offsets = [0, 384], sizes = [8, 128], strides = [1, 1]} : vector<8x512xf32> to vector<8x128xf32>
    %22 = math.tanh %21 : vector<8x128xf32>
    %23 = vector.extract_strided_slice %20 {offsets = [0, 0], sizes = [8, 128], strides = [1, 1]} : vector<8x384xf32> to vector<8x128xf32>
    %24 = arith.mulf %23, %22 : vector<8x128xf32>
    %25 = vector.extract_strided_slice %20 {offsets = [0, 256], sizes = [8, 128], strides = [1, 1]} : vector<8x384xf32> to vector<8x128xf32>
    %26 = math.tanh %24 : vector<8x128xf32>
    %27 = arith.mulf %25, %26 : vector<8x128xf32>
    %28 = arith.truncf %27 : vector<8x128xf32> to vector<8x128xbf16>
    %c0_i32_10 = arith.constant 0 : i32
    %29 = tpu.memref_slice %arg16[%c0_i32_10] : memref<3x!tpu.dma_semaphore, #tpu.memory_space<semaphore_mem>> -> memref<1x!tpu.dma_semaphore, #tpu.memory_space<semaphore_mem>>
    %30 = tpu.memref_squeeze %29 : memref<1x!tpu.dma_semaphore, #tpu.memory_space<semaphore_mem>> -> memref<!tpu.dma_semaphore, #tpu.memory_space<semaphore_mem>>
    tpu.wait_dma2 semaphore(%30 : memref<!tpu.dma_semaphore, #tpu.memory_space<semaphore_mem>>) src(%arg4 : memref<128x1024xbf16, #tpu.memory_space<any>>) dst(%arg13 : memref<128x1024xbf16, #tpu.memory_space<vmem>>)
    %c0_11 = arith.constant 0 : index
    %c0_12 = arith.constant 0 : index
    %31 = vector.load %arg13[%c0_11, %c0_12] : memref<128x1024xbf16, #tpu.memory_space<vmem>>, vector<128x1024xbf16>
    %cst_13 = arith.constant dense<0.000000e+00> : vector<8x1024xf32>
    %32 = tpu.matmul %28, %31, %cst_13 {dimension_numbers = #tpu.dot_dimension_numbers<[1], [0], [0], [1], [0, 0, 1, 1], [], []>} : vector<8x128xbf16>, vector<128x1024xbf16>, vector<8x1024xf32> -> vector<8x1024xf32>
    %c0_14 = arith.constant 0 : index
    %c0_15 = arith.constant 0 : index
    %33 = vector.load %arg6[%c0_14, %c0_15] : memref<1x1024xf32, #tpu.memory_space<vmem>>, vector<1x1024xf32>
    %34 = vector.broadcast %33 : vector<1x1024xf32> to vector<8x1024xf32>
    %35 = arith.addf %32, %34 : vector<8x1024xf32>
    %c8 = arith.constant 8 : index
    %c0_16 = arith.constant 0 : index
    %36 = vector.load %arg12[%c8, %c0_16] : memref<64x512xf32, #tpu.memory_space<vmem>>, vector<8x512xf32>
    %c0_17 = arith.constant 0 : index
    %c0_18 = arith.constant 0 : index
    %37 = vector.load %arg2[%c0_17, %c0_18] : memref<128x512xbf16, #tpu.memory_space<vmem>>, vector<128x512xbf16>
    %cst_19 = arith.constant dense<0.000000e+00> : vector<8x512xf32>
    %38 = tpu.matmul %28, %37, %cst_19 {dimension_numbers = #tpu.dot_dimension_numbers<[1], [0], [0], [1], [0, 0, 1, 1], [], []>} : vector<8x128xbf16>, vector<128x512xbf16>, vector<8x512xf32> -> vector<8x512xf32>
    %39 = arith.addf %36, %38 : vector<8x512xf32>
    %40 = vector.extract_strided_slice %39 {offsets = [0, 0], sizes = [8, 384], strides = [1, 1]} : vector<8x512xf32> to vector<8x384xf32>
    %41 = arith.negf %40 : vector<8x384xf32>
    %42 = math.exp %41 : vector<8x384xf32>
    %cst_20 = arith.constant 1.000000e+00 : f32
    %43 = vector.broadcast %cst_20 : f32 to vector<8x384xf32>
    %44 = arith.addf %43, %42 : vector<8x384xf32>
    %45 = arith.divf %43, %44 : vector<8x384xf32>
    %46 = vector.extract_strided_slice %39 {offsets = [0, 384], sizes = [8, 128], strides = [1, 1]} : vector<8x512xf32> to vector<8x128xf32>
    %47 = math.tanh %46 : vector<8x128xf32>
    %48 = vector.extract_strided_slice %45 {offsets = [0, 128], sizes = [8, 128], strides = [1, 1]} : vector<8x384xf32> to vector<8x128xf32>
    %49 = arith.mulf %48, %24 : vector<8x128xf32>
    %50 = vector.extract_strided_slice %45 {offsets = [0, 0], sizes = [8, 128], strides = [1, 1]} : vector<8x384xf32> to vector<8x128xf32>
    %51 = arith.mulf %50, %47 : vector<8x128xf32>
    %52 = arith.addf %49, %51 : vector<8x128xf32>
    %53 = vector.extract_strided_slice %45 {offsets = [0, 256], sizes = [8, 128], strides = [1, 1]} : vector<8x384xf32> to vector<8x128xf32>
    %54 = math.tanh %52 : vector<8x128xf32>
    %55 = arith.mulf %53, %54 : vector<8x128xf32>
    %56 = arith.truncf %55 : vector<8x128xf32> to vector<8x128xbf16>
    %57 = vector.extract_strided_slice %35 {offsets = [0, 0], sizes = [8, 768], strides = [1, 1]} : vector<8x1024xf32> to vector<8x768xf32>
    %58 = arith.negf %57 : vector<8x768xf32>
    %59 = math.exp %58 : vector<8x768xf32>
    %cst_21 = arith.constant 1.000000e+00 : f32
    %60 = vector.broadcast %cst_21 : f32 to vector<8x768xf32>
    %61 = arith.addf %60, %59 : vector<8x768xf32>
    %62 = arith.divf %60, %61 : vector<8x768xf32>
    %63 = vector.extract_strided_slice %35 {offsets = [0, 768], sizes = [8, 256], strides = [1, 1]} : vector<8x1024xf32> to vector<8x256xf32>
    %64 = math.tanh %63 : vector<8x256xf32>
    %65 = vector.extract_strided_slice %62 {offsets = [0, 0], sizes = [8, 256], strides = [1, 1]} : vector<8x768xf32> to vector<8x256xf32>
    %66 = arith.mulf %65, %64 : vector<8x256xf32>
    %67 = vector.extract_strided_slice %62 {offsets = [0, 512], sizes = [8, 256], strides = [1, 1]} : vector<8x768xf32> to vector<8x256xf32>
    %68 = math.tanh %66 : vector<8x256xf32>
    %69 = arith.mulf %67, %68 : vector<8x256xf32>
    %c0_22 = arith.constant 0 : index
    %c0_23 = arith.constant 0 : index
    %70 = vector.load %arg13[%c0_22, %c0_23] : memref<128x1024xbf16, #tpu.memory_space<vmem>>, vector<128x1024xbf16>
    %cst_24 = arith.constant dense<0.000000e+00> : vector<8x1024xf32>
    %71 = tpu.matmul %56, %70, %cst_24 {dimension_numbers = #tpu.dot_dimension_numbers<[1], [0], [0], [1], [0, 0, 1, 1], [], []>} : vector<8x128xbf16>, vector<128x1024xbf16>, vector<8x1024xf32> -> vector<8x1024xf32>
    %c0_25 = arith.constant 0 : index
    %c0_26 = arith.constant 0 : index
    %72 = vector.load %arg6[%c0_25, %c0_26] : memref<1x1024xf32, #tpu.memory_space<vmem>>, vector<1x1024xf32>
    %73 = vector.broadcast %72 : vector<1x1024xf32> to vector<8x1024xf32>
    %74 = arith.addf %71, %73 : vector<8x1024xf32>
    %c16 = arith.constant 16 : index
    %c0_27 = arith.constant 0 : index
    %75 = vector.load %arg12[%c16, %c0_27] : memref<64x512xf32, #tpu.memory_space<vmem>>, vector<8x512xf32>
    %c0_28 = arith.constant 0 : index
    %c0_29 = arith.constant 0 : index
    %76 = vector.load %arg2[%c0_28, %c0_29] : memref<128x512xbf16, #tpu.memory_space<vmem>>, vector<128x512xbf16>
    %cst_30 = arith.constant dense<0.000000e+00> : vector<8x512xf32>
    %77 = tpu.matmul %56, %76, %cst_30 {dimension_numbers = #tpu.dot_dimension_numbers<[1], [0], [0], [1], [0, 0, 1, 1], [], []>} : vector<8x128xbf16>, vector<128x512xbf16>, vector<8x512xf32> -> vector<8x512xf32>
    %78 = arith.addf %75, %77 : vector<8x512xf32>
    %79 = vector.extract_strided_slice %78 {offsets = [0, 0], sizes = [8, 384], strides = [1, 1]} : vector<8x512xf32> to vector<8x384xf32>
    %80 = arith.negf %79 : vector<8x384xf32>
    %81 = math.exp %80 : vector<8x384xf32>
    %cst_31 = arith.constant 1.000000e+00 : f32
    %82 = vector.broadcast %cst_31 : f32 to vector<8x384xf32>
    %83 = arith.addf %82, %81 : vector<8x384xf32>
    %84 = arith.divf %82, %83 : vector<8x384xf32>
    %85 = vector.extract_strided_slice %78 {offsets = [0, 384], sizes = [8, 128], strides = [1, 1]} : vector<8x512xf32> to vector<8x128xf32>
    %86 = math.tanh %85 : vector<8x128xf32>
    %87 = vector.extract_strided_slice %84 {offsets = [0, 128], sizes = [8, 128], strides = [1, 1]} : vector<8x384xf32> to vector<8x128xf32>
    %88 = arith.mulf %87, %52 : vector<8x128xf32>
    %89 = vector.extract_strided_slice %84 {offsets = [0, 0], sizes = [8, 128], strides = [1, 1]} : vector<8x384xf32> to vector<8x128xf32>
    %90 = arith.mulf %89, %86 : vector<8x128xf32>
    %91 = arith.addf %88, %90 : vector<8x128xf32>
    %92 = vector.extract_strided_slice %84 {offsets = [0, 256], sizes = [8, 128], strides = [1, 1]} : vector<8x384xf32> to vector<8x128xf32>
    %93 = math.tanh %91 : vector<8x128xf32>
    %94 = arith.mulf %92, %93 : vector<8x128xf32>
    %95 = arith.truncf %94 : vector<8x128xf32> to vector<8x128xbf16>
    %c1_i32_32 = arith.constant 1 : i32
    %96 = tpu.memref_slice %arg16[%c1_i32_32] : memref<3x!tpu.dma_semaphore, #tpu.memory_space<semaphore_mem>> -> memref<1x!tpu.dma_semaphore, #tpu.memory_space<semaphore_mem>>
    %97 = tpu.memref_squeeze %96 : memref<1x!tpu.dma_semaphore, #tpu.memory_space<semaphore_mem>> -> memref<!tpu.dma_semaphore, #tpu.memory_space<semaphore_mem>>
    tpu.wait_dma2 semaphore(%97 : memref<!tpu.dma_semaphore, #tpu.memory_space<semaphore_mem>>) src(%arg5 : memref<256x1024xbf16, #tpu.memory_space<any>>) dst(%arg14 : memref<256x1024xbf16, #tpu.memory_space<vmem>>)
    %98 = arith.truncf %69 : vector<8x256xf32> to vector<8x256xbf16>
    %c0_33 = arith.constant 0 : index
    %c0_34 = arith.constant 0 : index
    %99 = vector.load %arg14[%c0_33, %c0_34] : memref<256x1024xbf16, #tpu.memory_space<vmem>>, vector<256x1024xbf16>
    %cst_35 = arith.constant dense<0.000000e+00> : vector<8x1024xf32>
    %100 = tpu.matmul %98, %99, %cst_35 {dimension_numbers = #tpu.dot_dimension_numbers<[1], [0], [0], [1], [0, 0, 1, 1], [], []>} : vector<8x256xbf16>, vector<256x1024xbf16>, vector<8x1024xf32> -> vector<8x1024xf32>
    %101 = arith.addf %74, %100 : vector<8x1024xf32>
    %102 = vector.extract_strided_slice %101 {offsets = [0, 0], sizes = [8, 768], strides = [1, 1]} : vector<8x1024xf32> to vector<8x768xf32>
    %103 = arith.negf %102 : vector<8x768xf32>
    %104 = math.exp %103 : vector<8x768xf32>
    %cst_36 = arith.constant 1.000000e+00 : f32
    %105 = vector.broadcast %cst_36 : f32 to vector<8x768xf32>
    %106 = arith.addf %105, %104 : vector<8x768xf32>
    %107 = arith.divf %105, %106 : vector<8x768xf32>
    %108 = vector.extract_strided_slice %101 {offsets = [0, 768], sizes = [8, 256], strides = [1, 1]} : vector<8x1024xf32> to vector<8x256xf32>
    %109 = math.tanh %108 : vector<8x256xf32>
    %110 = vector.extract_strided_slice %107 {offsets = [0, 256], sizes = [8, 256], strides = [1, 1]} : vector<8x768xf32> to vector<8x256xf32>
    %111 = arith.mulf %110, %66 : vector<8x256xf32>
    %112 = vector.extract_strided_slice %107 {offsets = [0, 0], sizes = [8, 256], strides = [1, 1]} : vector<8x768xf32> to vector<8x256xf32>
    %113 = arith.mulf %112, %109 : vector<8x256xf32>
    %114 = arith.addf %111, %113 : vector<8x256xf32>
    %115 = vector.extract_strided_slice %107 {offsets = [0, 512], sizes = [8, 256], strides = [1, 1]} : vector<8x768xf32> to vector<8x256xf32>
    %116 = math.tanh %114 : vector<8x256xf32>
    %117 = arith.mulf %115, %116 : vector<8x256xf32>
    %c0_37 = arith.constant 0 : index
    %c0_38 = arith.constant 0 : index
    %118 = vector.load %arg13[%c0_37, %c0_38] : memref<128x1024xbf16, #tpu.memory_space<vmem>>, vector<128x1024xbf16>
    %cst_39 = arith.constant dense<0.000000e+00> : vector<8x1024xf32>
    %119 = tpu.matmul %95, %118, %cst_39 {dimension_numbers = #tpu.dot_dimension_numbers<[1], [0], [0], [1], [0, 0, 1, 1], [], []>} : vector<8x128xbf16>, vector<128x1024xbf16>, vector<8x1024xf32> -> vector<8x1024xf32>
    %c0_40 = arith.constant 0 : index
    %c0_41 = arith.constant 0 : index
    %120 = vector.load %arg6[%c0_40, %c0_41] : memref<1x1024xf32, #tpu.memory_space<vmem>>, vector<1x1024xf32>
    %121 = vector.broadcast %120 : vector<1x1024xf32> to vector<8x1024xf32>
    %122 = arith.addf %119, %121 : vector<8x1024xf32>
    %c24 = arith.constant 24 : index
    %c0_42 = arith.constant 0 : index
    %123 = vector.load %arg12[%c24, %c0_42] : memref<64x512xf32, #tpu.memory_space<vmem>>, vector<8x512xf32>
    %c0_43 = arith.constant 0 : index
    %c0_44 = arith.constant 0 : index
    %124 = vector.load %arg2[%c0_43, %c0_44] : memref<128x512xbf16, #tpu.memory_space<vmem>>, vector<128x512xbf16>
    %cst_45 = arith.constant dense<0.000000e+00> : vector<8x512xf32>
    %125 = tpu.matmul %95, %124, %cst_45 {dimension_numbers = #tpu.dot_dimension_numbers<[1], [0], [0], [1], [0, 0, 1, 1], [], []>} : vector<8x128xbf16>, vector<128x512xbf16>, vector<8x512xf32> -> vector<8x512xf32>
    %126 = arith.addf %123, %125 : vector<8x512xf32>
    %127 = vector.extract_strided_slice %126 {offsets = [0, 0], sizes = [8, 384], strides = [1, 1]} : vector<8x512xf32> to vector<8x384xf32>
    %128 = arith.negf %127 : vector<8x384xf32>
    %129 = math.exp %128 : vector<8x384xf32>
    %cst_46 = arith.constant 1.000000e+00 : f32
    %130 = vector.broadcast %cst_46 : f32 to vector<8x384xf32>
    %131 = arith.addf %130, %129 : vector<8x384xf32>
    %132 = arith.divf %130, %131 : vector<8x384xf32>
    %133 = vector.extract_strided_slice %126 {offsets = [0, 384], sizes = [8, 128], strides = [1, 1]} : vector<8x512xf32> to vector<8x128xf32>
    %134 = math.tanh %133 : vector<8x128xf32>
    %135 = vector.extract_strided_slice %132 {offsets = [0, 128], sizes = [8, 128], strides = [1, 1]} : vector<8x384xf32> to vector<8x128xf32>
    %136 = arith.mulf %135, %91 : vector<8x128xf32>
    %137 = vector.extract_strided_slice %132 {offsets = [0, 0], sizes = [8, 128], strides = [1, 1]} : vector<8x384xf32> to vector<8x128xf32>
    %138 = arith.mulf %137, %134 : vector<8x128xf32>
    %139 = arith.addf %136, %138 : vector<8x128xf32>
    %140 = vector.extract_strided_slice %132 {offsets = [0, 256], sizes = [8, 128], strides = [1, 1]} : vector<8x384xf32> to vector<8x128xf32>
    %141 = math.tanh %139 : vector<8x128xf32>
    %142 = arith.mulf %140, %141 : vector<8x128xf32>
    %143 = arith.truncf %142 : vector<8x128xf32> to vector<8x128xbf16>
    %144 = arith.truncf %117 : vector<8x256xf32> to vector<8x256xbf16>
    %c0_47 = arith.constant 0 : index
    %c0_48 = arith.constant 0 : index
    %145 = vector.load %arg14[%c0_47, %c0_48] : memref<256x1024xbf16, #tpu.memory_space<vmem>>, vector<256x1024xbf16>
    %cst_49 = arith.constant dense<0.000000e+00> : vector<8x1024xf32>
    %146 = tpu.matmul %144, %145, %cst_49 {dimension_numbers = #tpu.dot_dimension_numbers<[1], [0], [0], [1], [0, 0, 1, 1], [], []>} : vector<8x256xbf16>, vector<256x1024xbf16>, vector<8x1024xf32> -> vector<8x1024xf32>
    %147 = arith.addf %122, %146 : vector<8x1024xf32>
    %148 = vector.extract_strided_slice %147 {offsets = [0, 0], sizes = [8, 768], strides = [1, 1]} : vector<8x1024xf32> to vector<8x768xf32>
    %149 = arith.negf %148 : vector<8x768xf32>
    %150 = math.exp %149 : vector<8x768xf32>
    %cst_50 = arith.constant 1.000000e+00 : f32
    %151 = vector.broadcast %cst_50 : f32 to vector<8x768xf32>
    %152 = arith.addf %151, %150 : vector<8x768xf32>
    %153 = arith.divf %151, %152 : vector<8x768xf32>
    %154 = vector.extract_strided_slice %147 {offsets = [0, 768], sizes = [8, 256], strides = [1, 1]} : vector<8x1024xf32> to vector<8x256xf32>
    %155 = math.tanh %154 : vector<8x256xf32>
    %156 = vector.extract_strided_slice %153 {offsets = [0, 256], sizes = [8, 256], strides = [1, 1]} : vector<8x768xf32> to vector<8x256xf32>
    %157 = arith.mulf %156, %114 : vector<8x256xf32>
    %158 = vector.extract_strided_slice %153 {offsets = [0, 0], sizes = [8, 256], strides = [1, 1]} : vector<8x768xf32> to vector<8x256xf32>
    %159 = arith.mulf %158, %155 : vector<8x256xf32>
    %160 = arith.addf %157, %159 : vector<8x256xf32>
    %161 = vector.extract_strided_slice %153 {offsets = [0, 512], sizes = [8, 256], strides = [1, 1]} : vector<8x768xf32> to vector<8x256xf32>
    %162 = math.tanh %160 : vector<8x256xf32>
    %163 = arith.mulf %161, %162 : vector<8x256xf32>
    %c0_51 = arith.constant 0 : index
    %c0_52 = arith.constant 0 : index
    %164 = vector.load %arg13[%c0_51, %c0_52] : memref<128x1024xbf16, #tpu.memory_space<vmem>>, vector<128x1024xbf16>
    %cst_53 = arith.constant dense<0.000000e+00> : vector<8x1024xf32>
    %165 = tpu.matmul %143, %164, %cst_53 {dimension_numbers = #tpu.dot_dimension_numbers<[1], [0], [0], [1], [0, 0, 1, 1], [], []>} : vector<8x128xbf16>, vector<128x1024xbf16>, vector<8x1024xf32> -> vector<8x1024xf32>
    %c0_54 = arith.constant 0 : index
    %c0_55 = arith.constant 0 : index
    %166 = vector.load %arg6[%c0_54, %c0_55] : memref<1x1024xf32, #tpu.memory_space<vmem>>, vector<1x1024xf32>
    %167 = vector.broadcast %166 : vector<1x1024xf32> to vector<8x1024xf32>
    %168 = arith.addf %165, %167 : vector<8x1024xf32>
    %c32 = arith.constant 32 : index
    %c0_56 = arith.constant 0 : index
    %169 = vector.load %arg12[%c32, %c0_56] : memref<64x512xf32, #tpu.memory_space<vmem>>, vector<8x512xf32>
    %c0_57 = arith.constant 0 : index
    %c0_58 = arith.constant 0 : index
    %170 = vector.load %arg2[%c0_57, %c0_58] : memref<128x512xbf16, #tpu.memory_space<vmem>>, vector<128x512xbf16>
    %cst_59 = arith.constant dense<0.000000e+00> : vector<8x512xf32>
    %171 = tpu.matmul %143, %170, %cst_59 {dimension_numbers = #tpu.dot_dimension_numbers<[1], [0], [0], [1], [0, 0, 1, 1], [], []>} : vector<8x128xbf16>, vector<128x512xbf16>, vector<8x512xf32> -> vector<8x512xf32>
    %172 = arith.addf %169, %171 : vector<8x512xf32>
    %173 = vector.extract_strided_slice %172 {offsets = [0, 0], sizes = [8, 384], strides = [1, 1]} : vector<8x512xf32> to vector<8x384xf32>
    %174 = arith.negf %173 : vector<8x384xf32>
    %175 = math.exp %174 : vector<8x384xf32>
    %cst_60 = arith.constant 1.000000e+00 : f32
    %176 = vector.broadcast %cst_60 : f32 to vector<8x384xf32>
    %177 = arith.addf %176, %175 : vector<8x384xf32>
    %178 = arith.divf %176, %177 : vector<8x384xf32>
    %179 = vector.extract_strided_slice %172 {offsets = [0, 384], sizes = [8, 128], strides = [1, 1]} : vector<8x512xf32> to vector<8x128xf32>
    %180 = math.tanh %179 : vector<8x128xf32>
    %181 = vector.extract_strided_slice %178 {offsets = [0, 128], sizes = [8, 128], strides = [1, 1]} : vector<8x384xf32> to vector<8x128xf32>
    %182 = arith.mulf %181, %139 : vector<8x128xf32>
    %183 = vector.extract_strided_slice %178 {offsets = [0, 0], sizes = [8, 128], strides = [1, 1]} : vector<8x384xf32> to vector<8x128xf32>
    %184 = arith.mulf %183, %180 : vector<8x128xf32>
    %185 = arith.addf %182, %184 : vector<8x128xf32>
    %186 = vector.extract_strided_slice %178 {offsets = [0, 256], sizes = [8, 128], strides = [1, 1]} : vector<8x384xf32> to vector<8x128xf32>
    %187 = math.tanh %185 : vector<8x128xf32>
    %188 = arith.mulf %186, %187 : vector<8x128xf32>
    %189 = arith.truncf %188 : vector<8x128xf32> to vector<8x128xbf16>
    %190 = arith.truncf %163 : vector<8x256xf32> to vector<8x256xbf16>
    %c0_61 = arith.constant 0 : index
    %c0_62 = arith.constant 0 : index
    %191 = vector.load %arg14[%c0_61, %c0_62] : memref<256x1024xbf16, #tpu.memory_space<vmem>>, vector<256x1024xbf16>
    %cst_63 = arith.constant dense<0.000000e+00> : vector<8x1024xf32>
    %192 = tpu.matmul %190, %191, %cst_63 {dimension_numbers = #tpu.dot_dimension_numbers<[1], [0], [0], [1], [0, 0, 1, 1], [], []>} : vector<8x256xbf16>, vector<256x1024xbf16>, vector<8x1024xf32> -> vector<8x1024xf32>
    %193 = arith.addf %168, %192 : vector<8x1024xf32>
    %194 = vector.extract_strided_slice %193 {offsets = [0, 0], sizes = [8, 768], strides = [1, 1]} : vector<8x1024xf32> to vector<8x768xf32>
    %195 = arith.negf %194 : vector<8x768xf32>
    %196 = math.exp %195 : vector<8x768xf32>
    %cst_64 = arith.constant 1.000000e+00 : f32
    %197 = vector.broadcast %cst_64 : f32 to vector<8x768xf32>
    %198 = arith.addf %197, %196 : vector<8x768xf32>
    %199 = arith.divf %197, %198 : vector<8x768xf32>
    %200 = vector.extract_strided_slice %193 {offsets = [0, 768], sizes = [8, 256], strides = [1, 1]} : vector<8x1024xf32> to vector<8x256xf32>
    %201 = math.tanh %200 : vector<8x256xf32>
    %202 = vector.extract_strided_slice %199 {offsets = [0, 256], sizes = [8, 256], strides = [1, 1]} : vector<8x768xf32> to vector<8x256xf32>
    %203 = arith.mulf %202, %160 : vector<8x256xf32>
    %204 = vector.extract_strided_slice %199 {offsets = [0, 0], sizes = [8, 256], strides = [1, 1]} : vector<8x768xf32> to vector<8x256xf32>
    %205 = arith.mulf %204, %201 : vector<8x256xf32>
    %206 = arith.addf %203, %205 : vector<8x256xf32>
    %207 = vector.extract_strided_slice %199 {offsets = [0, 512], sizes = [8, 256], strides = [1, 1]} : vector<8x768xf32> to vector<8x256xf32>
    %208 = math.tanh %206 : vector<8x256xf32>
    %209 = arith.mulf %207, %208 : vector<8x256xf32>
    %c0_65 = arith.constant 0 : index
    %c0_66 = arith.constant 0 : index
    %210 = vector.load %arg13[%c0_65, %c0_66] : memref<128x1024xbf16, #tpu.memory_space<vmem>>, vector<128x1024xbf16>
    %cst_67 = arith.constant dense<0.000000e+00> : vector<8x1024xf32>
    %211 = tpu.matmul %189, %210, %cst_67 {dimension_numbers = #tpu.dot_dimension_numbers<[1], [0], [0], [1], [0, 0, 1, 1], [], []>} : vector<8x128xbf16>, vector<128x1024xbf16>, vector<8x1024xf32> -> vector<8x1024xf32>
    %c0_68 = arith.constant 0 : index
    %c0_69 = arith.constant 0 : index
    %212 = vector.load %arg6[%c0_68, %c0_69] : memref<1x1024xf32, #tpu.memory_space<vmem>>, vector<1x1024xf32>
    %213 = vector.broadcast %212 : vector<1x1024xf32> to vector<8x1024xf32>
    %214 = arith.addf %211, %213 : vector<8x1024xf32>
    %c40 = arith.constant 40 : index
    %c0_70 = arith.constant 0 : index
    %215 = vector.load %arg12[%c40, %c0_70] : memref<64x512xf32, #tpu.memory_space<vmem>>, vector<8x512xf32>
    %c0_71 = arith.constant 0 : index
    %c0_72 = arith.constant 0 : index
    %216 = vector.load %arg2[%c0_71, %c0_72] : memref<128x512xbf16, #tpu.memory_space<vmem>>, vector<128x512xbf16>
    %cst_73 = arith.constant dense<0.000000e+00> : vector<8x512xf32>
    %217 = tpu.matmul %189, %216, %cst_73 {dimension_numbers = #tpu.dot_dimension_numbers<[1], [0], [0], [1], [0, 0, 1, 1], [], []>} : vector<8x128xbf16>, vector<128x512xbf16>, vector<8x512xf32> -> vector<8x512xf32>
    %218 = arith.addf %215, %217 : vector<8x512xf32>
    %219 = vector.extract_strided_slice %218 {offsets = [0, 0], sizes = [8, 384], strides = [1, 1]} : vector<8x512xf32> to vector<8x384xf32>
    %220 = arith.negf %219 : vector<8x384xf32>
    %221 = math.exp %220 : vector<8x384xf32>
    %cst_74 = arith.constant 1.000000e+00 : f32
    %222 = vector.broadcast %cst_74 : f32 to vector<8x384xf32>
    %223 = arith.addf %222, %221 : vector<8x384xf32>
    %224 = arith.divf %222, %223 : vector<8x384xf32>
    %225 = vector.extract_strided_slice %218 {offsets = [0, 384], sizes = [8, 128], strides = [1, 1]} : vector<8x512xf32> to vector<8x128xf32>
    %226 = math.tanh %225 : vector<8x128xf32>
    %227 = vector.extract_strided_slice %224 {offsets = [0, 128], sizes = [8, 128], strides = [1, 1]} : vector<8x384xf32> to vector<8x128xf32>
    %228 = arith.mulf %227, %185 : vector<8x128xf32>
    %229 = vector.extract_strided_slice %224 {offsets = [0, 0], sizes = [8, 128], strides = [1, 1]} : vector<8x384xf32> to vector<8x128xf32>
    %230 = arith.mulf %229, %226 : vector<8x128xf32>
    %231 = arith.addf %228, %230 : vector<8x128xf32>
    %232 = vector.extract_strided_slice %224 {offsets = [0, 256], sizes = [8, 128], strides = [1, 1]} : vector<8x384xf32> to vector<8x128xf32>
    %233 = math.tanh %231 : vector<8x128xf32>
    %234 = arith.mulf %232, %233 : vector<8x128xf32>
    %235 = arith.truncf %234 : vector<8x128xf32> to vector<8x128xbf16>
    %236 = arith.truncf %209 : vector<8x256xf32> to vector<8x256xbf16>
    %c0_75 = arith.constant 0 : index
    %c0_76 = arith.constant 0 : index
    %237 = vector.load %arg14[%c0_75, %c0_76] : memref<256x1024xbf16, #tpu.memory_space<vmem>>, vector<256x1024xbf16>
    %cst_77 = arith.constant dense<0.000000e+00> : vector<8x1024xf32>
    %238 = tpu.matmul %236, %237, %cst_77 {dimension_numbers = #tpu.dot_dimension_numbers<[1], [0], [0], [1], [0, 0, 1, 1], [], []>} : vector<8x256xbf16>, vector<256x1024xbf16>, vector<8x1024xf32> -> vector<8x1024xf32>
    %239 = arith.addf %214, %238 : vector<8x1024xf32>
    %240 = vector.extract_strided_slice %239 {offsets = [0, 0], sizes = [8, 768], strides = [1, 1]} : vector<8x1024xf32> to vector<8x768xf32>
    %241 = arith.negf %240 : vector<8x768xf32>
    %242 = math.exp %241 : vector<8x768xf32>
    %cst_78 = arith.constant 1.000000e+00 : f32
    %243 = vector.broadcast %cst_78 : f32 to vector<8x768xf32>
    %244 = arith.addf %243, %242 : vector<8x768xf32>
    %245 = arith.divf %243, %244 : vector<8x768xf32>
    %246 = vector.extract_strided_slice %239 {offsets = [0, 768], sizes = [8, 256], strides = [1, 1]} : vector<8x1024xf32> to vector<8x256xf32>
    %247 = math.tanh %246 : vector<8x256xf32>
    %248 = vector.extract_strided_slice %245 {offsets = [0, 256], sizes = [8, 256], strides = [1, 1]} : vector<8x768xf32> to vector<8x256xf32>
    %249 = arith.mulf %248, %206 : vector<8x256xf32>
    %250 = vector.extract_strided_slice %245 {offsets = [0, 0], sizes = [8, 256], strides = [1, 1]} : vector<8x768xf32> to vector<8x256xf32>
    %251 = arith.mulf %250, %247 : vector<8x256xf32>
    %252 = arith.addf %249, %251 : vector<8x256xf32>
    %253 = vector.extract_strided_slice %245 {offsets = [0, 512], sizes = [8, 256], strides = [1, 1]} : vector<8x768xf32> to vector<8x256xf32>
    %254 = math.tanh %252 : vector<8x256xf32>
    %255 = arith.mulf %253, %254 : vector<8x256xf32>
    %c0_79 = arith.constant 0 : index
    %c0_80 = arith.constant 0 : index
    %256 = vector.load %arg13[%c0_79, %c0_80] : memref<128x1024xbf16, #tpu.memory_space<vmem>>, vector<128x1024xbf16>
    %cst_81 = arith.constant dense<0.000000e+00> : vector<8x1024xf32>
    %257 = tpu.matmul %235, %256, %cst_81 {dimension_numbers = #tpu.dot_dimension_numbers<[1], [0], [0], [1], [0, 0, 1, 1], [], []>} : vector<8x128xbf16>, vector<128x1024xbf16>, vector<8x1024xf32> -> vector<8x1024xf32>
    %c0_82 = arith.constant 0 : index
    %c0_83 = arith.constant 0 : index
    %258 = vector.load %arg6[%c0_82, %c0_83] : memref<1x1024xf32, #tpu.memory_space<vmem>>, vector<1x1024xf32>
    %259 = vector.broadcast %258 : vector<1x1024xf32> to vector<8x1024xf32>
    %260 = arith.addf %257, %259 : vector<8x1024xf32>
    %c48 = arith.constant 48 : index
    %c0_84 = arith.constant 0 : index
    %261 = vector.load %arg12[%c48, %c0_84] : memref<64x512xf32, #tpu.memory_space<vmem>>, vector<8x512xf32>
    %c0_85 = arith.constant 0 : index
    %c0_86 = arith.constant 0 : index
    %262 = vector.load %arg2[%c0_85, %c0_86] : memref<128x512xbf16, #tpu.memory_space<vmem>>, vector<128x512xbf16>
    %cst_87 = arith.constant dense<0.000000e+00> : vector<8x512xf32>
    %263 = tpu.matmul %235, %262, %cst_87 {dimension_numbers = #tpu.dot_dimension_numbers<[1], [0], [0], [1], [0, 0, 1, 1], [], []>} : vector<8x128xbf16>, vector<128x512xbf16>, vector<8x512xf32> -> vector<8x512xf32>
    %264 = arith.addf %261, %263 : vector<8x512xf32>
    %265 = vector.extract_strided_slice %264 {offsets = [0, 0], sizes = [8, 384], strides = [1, 1]} : vector<8x512xf32> to vector<8x384xf32>
    %266 = arith.negf %265 : vector<8x384xf32>
    %267 = math.exp %266 : vector<8x384xf32>
    %cst_88 = arith.constant 1.000000e+00 : f32
    %268 = vector.broadcast %cst_88 : f32 to vector<8x384xf32>
    %269 = arith.addf %268, %267 : vector<8x384xf32>
    %270 = arith.divf %268, %269 : vector<8x384xf32>
    %271 = vector.extract_strided_slice %264 {offsets = [0, 384], sizes = [8, 128], strides = [1, 1]} : vector<8x512xf32> to vector<8x128xf32>
    %272 = math.tanh %271 : vector<8x128xf32>
    %273 = vector.extract_strided_slice %270 {offsets = [0, 128], sizes = [8, 128], strides = [1, 1]} : vector<8x384xf32> to vector<8x128xf32>
    %274 = arith.mulf %273, %231 : vector<8x128xf32>
    %275 = vector.extract_strided_slice %270 {offsets = [0, 0], sizes = [8, 128], strides = [1, 1]} : vector<8x384xf32> to vector<8x128xf32>
    %276 = arith.mulf %275, %272 : vector<8x128xf32>
    %277 = arith.addf %274, %276 : vector<8x128xf32>
    %278 = vector.extract_strided_slice %270 {offsets = [0, 256], sizes = [8, 128], strides = [1, 1]} : vector<8x384xf32> to vector<8x128xf32>
    %279 = math.tanh %277 : vector<8x128xf32>
    %280 = arith.mulf %278, %279 : vector<8x128xf32>
    %281 = arith.truncf %280 : vector<8x128xf32> to vector<8x128xbf16>
    %282 = arith.truncf %255 : vector<8x256xf32> to vector<8x256xbf16>
    %c0_89 = arith.constant 0 : index
    %c0_90 = arith.constant 0 : index
    %283 = vector.load %arg14[%c0_89, %c0_90] : memref<256x1024xbf16, #tpu.memory_space<vmem>>, vector<256x1024xbf16>
    %cst_91 = arith.constant dense<0.000000e+00> : vector<8x1024xf32>
    %284 = tpu.matmul %282, %283, %cst_91 {dimension_numbers = #tpu.dot_dimension_numbers<[1], [0], [0], [1], [0, 0, 1, 1], [], []>} : vector<8x256xbf16>, vector<256x1024xbf16>, vector<8x1024xf32> -> vector<8x1024xf32>
    %285 = arith.addf %260, %284 : vector<8x1024xf32>
    %286 = vector.extract_strided_slice %285 {offsets = [0, 0], sizes = [8, 768], strides = [1, 1]} : vector<8x1024xf32> to vector<8x768xf32>
    %287 = arith.negf %286 : vector<8x768xf32>
    %288 = math.exp %287 : vector<8x768xf32>
    %cst_92 = arith.constant 1.000000e+00 : f32
    %289 = vector.broadcast %cst_92 : f32 to vector<8x768xf32>
    %290 = arith.addf %289, %288 : vector<8x768xf32>
    %291 = arith.divf %289, %290 : vector<8x768xf32>
    %292 = vector.extract_strided_slice %285 {offsets = [0, 768], sizes = [8, 256], strides = [1, 1]} : vector<8x1024xf32> to vector<8x256xf32>
    %293 = math.tanh %292 : vector<8x256xf32>
    %294 = vector.extract_strided_slice %291 {offsets = [0, 256], sizes = [8, 256], strides = [1, 1]} : vector<8x768xf32> to vector<8x256xf32>
    %295 = arith.mulf %294, %252 : vector<8x256xf32>
    %296 = vector.extract_strided_slice %291 {offsets = [0, 0], sizes = [8, 256], strides = [1, 1]} : vector<8x768xf32> to vector<8x256xf32>
    %297 = arith.mulf %296, %293 : vector<8x256xf32>
    %298 = arith.addf %295, %297 : vector<8x256xf32>
    %299 = vector.extract_strided_slice %291 {offsets = [0, 512], sizes = [8, 256], strides = [1, 1]} : vector<8x768xf32> to vector<8x256xf32>
    %300 = math.tanh %298 : vector<8x256xf32>
    %301 = arith.mulf %299, %300 : vector<8x256xf32>
    %c0_93 = arith.constant 0 : index
    %c0_94 = arith.constant 0 : index
    %302 = vector.load %arg13[%c0_93, %c0_94] : memref<128x1024xbf16, #tpu.memory_space<vmem>>, vector<128x1024xbf16>
    %cst_95 = arith.constant dense<0.000000e+00> : vector<8x1024xf32>
    %303 = tpu.matmul %281, %302, %cst_95 {dimension_numbers = #tpu.dot_dimension_numbers<[1], [0], [0], [1], [0, 0, 1, 1], [], []>} : vector<8x128xbf16>, vector<128x1024xbf16>, vector<8x1024xf32> -> vector<8x1024xf32>
    %c0_96 = arith.constant 0 : index
    %c0_97 = arith.constant 0 : index
    %304 = vector.load %arg6[%c0_96, %c0_97] : memref<1x1024xf32, #tpu.memory_space<vmem>>, vector<1x1024xf32>
    %305 = vector.broadcast %304 : vector<1x1024xf32> to vector<8x1024xf32>
    %306 = arith.addf %303, %305 : vector<8x1024xf32>
    %c56 = arith.constant 56 : index
    %c0_98 = arith.constant 0 : index
    %307 = vector.load %arg12[%c56, %c0_98] : memref<64x512xf32, #tpu.memory_space<vmem>>, vector<8x512xf32>
    %c0_99 = arith.constant 0 : index
    %c0_100 = arith.constant 0 : index
    %308 = vector.load %arg2[%c0_99, %c0_100] : memref<128x512xbf16, #tpu.memory_space<vmem>>, vector<128x512xbf16>
    %cst_101 = arith.constant dense<0.000000e+00> : vector<8x512xf32>
    %309 = tpu.matmul %281, %308, %cst_101 {dimension_numbers = #tpu.dot_dimension_numbers<[1], [0], [0], [1], [0, 0, 1, 1], [], []>} : vector<8x128xbf16>, vector<128x512xbf16>, vector<8x512xf32> -> vector<8x512xf32>
    %310 = arith.addf %307, %309 : vector<8x512xf32>
    %311 = vector.extract_strided_slice %310 {offsets = [0, 0], sizes = [8, 384], strides = [1, 1]} : vector<8x512xf32> to vector<8x384xf32>
    %312 = arith.negf %311 : vector<8x384xf32>
    %313 = math.exp %312 : vector<8x384xf32>
    %cst_102 = arith.constant 1.000000e+00 : f32
    %314 = vector.broadcast %cst_102 : f32 to vector<8x384xf32>
    %315 = arith.addf %314, %313 : vector<8x384xf32>
    %316 = arith.divf %314, %315 : vector<8x384xf32>
    %317 = vector.extract_strided_slice %310 {offsets = [0, 384], sizes = [8, 128], strides = [1, 1]} : vector<8x512xf32> to vector<8x128xf32>
    %318 = math.tanh %317 : vector<8x128xf32>
    %319 = vector.extract_strided_slice %316 {offsets = [0, 128], sizes = [8, 128], strides = [1, 1]} : vector<8x384xf32> to vector<8x128xf32>
    %320 = arith.mulf %319, %277 : vector<8x128xf32>
    %321 = vector.extract_strided_slice %316 {offsets = [0, 0], sizes = [8, 128], strides = [1, 1]} : vector<8x384xf32> to vector<8x128xf32>
    %322 = arith.mulf %321, %318 : vector<8x128xf32>
    %323 = arith.addf %320, %322 : vector<8x128xf32>
    %324 = vector.extract_strided_slice %316 {offsets = [0, 256], sizes = [8, 128], strides = [1, 1]} : vector<8x384xf32> to vector<8x128xf32>
    %325 = math.tanh %323 : vector<8x128xf32>
    %326 = arith.mulf %324, %325 : vector<8x128xf32>
    %327 = arith.truncf %326 : vector<8x128xf32> to vector<8x128xbf16>
    %328 = arith.truncf %301 : vector<8x256xf32> to vector<8x256xbf16>
    %c0_103 = arith.constant 0 : index
    %c0_104 = arith.constant 0 : index
    %329 = vector.load %arg14[%c0_103, %c0_104] : memref<256x1024xbf16, #tpu.memory_space<vmem>>, vector<256x1024xbf16>
    %cst_105 = arith.constant dense<0.000000e+00> : vector<8x1024xf32>
    %330 = tpu.matmul %328, %329, %cst_105 {dimension_numbers = #tpu.dot_dimension_numbers<[1], [0], [0], [1], [0, 0, 1, 1], [], []>} : vector<8x256xbf16>, vector<256x1024xbf16>, vector<8x1024xf32> -> vector<8x1024xf32>
    %331 = arith.addf %306, %330 : vector<8x1024xf32>
    %332 = vector.extract_strided_slice %331 {offsets = [0, 0], sizes = [8, 768], strides = [1, 1]} : vector<8x1024xf32> to vector<8x768xf32>
    %333 = arith.negf %332 : vector<8x768xf32>
    %334 = math.exp %333 : vector<8x768xf32>
    %cst_106 = arith.constant 1.000000e+00 : f32
    %335 = vector.broadcast %cst_106 : f32 to vector<8x768xf32>
    %336 = arith.addf %335, %334 : vector<8x768xf32>
    %337 = arith.divf %335, %336 : vector<8x768xf32>
    %338 = vector.extract_strided_slice %331 {offsets = [0, 768], sizes = [8, 256], strides = [1, 1]} : vector<8x1024xf32> to vector<8x256xf32>
    %339 = math.tanh %338 : vector<8x256xf32>
    %340 = vector.extract_strided_slice %337 {offsets = [0, 256], sizes = [8, 256], strides = [1, 1]} : vector<8x768xf32> to vector<8x256xf32>
    %341 = arith.mulf %340, %298 : vector<8x256xf32>
    %342 = vector.extract_strided_slice %337 {offsets = [0, 0], sizes = [8, 256], strides = [1, 1]} : vector<8x768xf32> to vector<8x256xf32>
    %343 = arith.mulf %342, %339 : vector<8x256xf32>
    %344 = arith.addf %341, %343 : vector<8x256xf32>
    %345 = vector.extract_strided_slice %337 {offsets = [0, 512], sizes = [8, 256], strides = [1, 1]} : vector<8x768xf32> to vector<8x256xf32>
    %346 = math.tanh %344 : vector<8x256xf32>
    %347 = arith.mulf %345, %346 : vector<8x256xf32>
    %c0_107 = arith.constant 0 : index
    %c0_108 = arith.constant 0 : index
    %348 = vector.load %arg13[%c0_107, %c0_108] : memref<128x1024xbf16, #tpu.memory_space<vmem>>, vector<128x1024xbf16>
    %cst_109 = arith.constant dense<0.000000e+00> : vector<8x1024xf32>
    %349 = tpu.matmul %327, %348, %cst_109 {dimension_numbers = #tpu.dot_dimension_numbers<[1], [0], [0], [1], [0, 0, 1, 1], [], []>} : vector<8x128xbf16>, vector<128x1024xbf16>, vector<8x1024xf32> -> vector<8x1024xf32>
    %c0_110 = arith.constant 0 : index
    %c0_111 = arith.constant 0 : index
    %350 = vector.load %arg6[%c0_110, %c0_111] : memref<1x1024xf32, #tpu.memory_space<vmem>>, vector<1x1024xf32>
    %351 = vector.broadcast %350 : vector<1x1024xf32> to vector<8x1024xf32>
    %352 = arith.addf %349, %351 : vector<8x1024xf32>
    %353 = arith.truncf %347 : vector<8x256xf32> to vector<8x256xbf16>
    %c0_112 = arith.constant 0 : index
    %c0_113 = arith.constant 0 : index
    %354 = vector.load %arg14[%c0_112, %c0_113] : memref<256x1024xbf16, #tpu.memory_space<vmem>>, vector<256x1024xbf16>
    %cst_114 = arith.constant dense<0.000000e+00> : vector<8x1024xf32>
    %355 = tpu.matmul %353, %354, %cst_114 {dimension_numbers = #tpu.dot_dimension_numbers<[1], [0], [0], [1], [0, 0, 1, 1], [], []>} : vector<8x256xbf16>, vector<256x1024xbf16>, vector<8x1024xf32> -> vector<8x1024xf32>
    %356 = arith.addf %352, %355 : vector<8x1024xf32>
    %357 = vector.extract_strided_slice %356 {offsets = [0, 0], sizes = [8, 768], strides = [1, 1]} : vector<8x1024xf32> to vector<8x768xf32>
    %358 = arith.negf %357 : vector<8x768xf32>
    %359 = math.exp %358 : vector<8x768xf32>
    %cst_115 = arith.constant 1.000000e+00 : f32
    %360 = vector.broadcast %cst_115 : f32 to vector<8x768xf32>
    %361 = arith.addf %360, %359 : vector<8x768xf32>
    %362 = arith.divf %360, %361 : vector<8x768xf32>
    %363 = vector.extract_strided_slice %356 {offsets = [0, 768], sizes = [8, 256], strides = [1, 1]} : vector<8x1024xf32> to vector<8x256xf32>
    %364 = math.tanh %363 : vector<8x256xf32>
    %365 = vector.extract_strided_slice %362 {offsets = [0, 256], sizes = [8, 256], strides = [1, 1]} : vector<8x768xf32> to vector<8x256xf32>
    %366 = arith.mulf %365, %344 : vector<8x256xf32>
    %367 = vector.extract_strided_slice %362 {offsets = [0, 0], sizes = [8, 256], strides = [1, 1]} : vector<8x768xf32> to vector<8x256xf32>
    %368 = arith.mulf %367, %364 : vector<8x256xf32>
    %369 = arith.addf %366, %368 : vector<8x256xf32>
    %370 = vector.extract_strided_slice %362 {offsets = [0, 512], sizes = [8, 256], strides = [1, 1]} : vector<8x768xf32> to vector<8x256xf32>
    %371 = math.tanh %369 : vector<8x256xf32>
    %372 = arith.mulf %370, %371 : vector<8x256xf32>
    %c2_i32_116 = arith.constant 2 : i32
    %373 = tpu.memref_slice %arg16[%c2_i32_116] : memref<3x!tpu.dma_semaphore, #tpu.memory_space<semaphore_mem>> -> memref<1x!tpu.dma_semaphore, #tpu.memory_space<semaphore_mem>>
    %374 = tpu.memref_squeeze %373 : memref<1x!tpu.dma_semaphore, #tpu.memory_space<semaphore_mem>> -> memref<!tpu.dma_semaphore, #tpu.memory_space<semaphore_mem>>
    tpu.wait_dma2 semaphore(%374 : memref<!tpu.dma_semaphore, #tpu.memory_space<semaphore_mem>>) src(%arg7 : memref<256x768xbf16, #tpu.memory_space<any>>) dst(%arg15 : memref<256x768xbf16, #tpu.memory_space<vmem>>)
    %375 = arith.truncf %372 : vector<8x256xf32> to vector<8x256xbf16>
    %c0_117 = arith.constant 0 : index
    %c0_118 = arith.constant 0 : index
    %376 = vector.load %arg15[%c0_117, %c0_118] : memref<256x768xbf16, #tpu.memory_space<vmem>>, vector<256x768xbf16>
    %cst_119 = arith.constant dense<0.000000e+00> : vector<8x768xf32>
    %377 = tpu.matmul %375, %376, %cst_119 {dimension_numbers = #tpu.dot_dimension_numbers<[1], [0], [0], [1], [0, 0, 1, 1], [], []>} : vector<8x256xbf16>, vector<256x768xbf16>, vector<8x768xf32> -> vector<8x768xf32>
    %c0_120 = arith.constant 0 : index
    %c0_121 = arith.constant 0 : index
    %378 = vector.load %arg8[%c0_120, %c0_121] : memref<1x768xf32, #tpu.memory_space<vmem>>, vector<1x768xf32>
    %379 = vector.broadcast %378 : vector<1x768xf32> to vector<8x768xf32>
    %380 = arith.addf %377, %379 : vector<8x768xf32>
    %381 = vector.extract_strided_slice %380 {offsets = [0, 0], sizes = [8, 512], strides = [1, 1]} : vector<8x768xf32> to vector<8x512xf32>
    %382 = arith.negf %381 : vector<8x512xf32>
    %383 = math.exp %382 : vector<8x512xf32>
    %cst_122 = arith.constant 1.000000e+00 : f32
    %384 = vector.broadcast %cst_122 : f32 to vector<8x512xf32>
    %385 = arith.addf %384, %383 : vector<8x512xf32>
    %386 = arith.divf %384, %385 : vector<8x512xf32>
    %387 = vector.extract_strided_slice %380 {offsets = [0, 512], sizes = [8, 256], strides = [1, 1]} : vector<8x768xf32> to vector<8x256xf32>
    %388 = math.tanh %387 : vector<8x256xf32>
    %389 = vector.extract_strided_slice %386 {offsets = [0, 0], sizes = [8, 256], strides = [1, 1]} : vector<8x512xf32> to vector<8x256xf32>
    %390 = arith.mulf %389, %388 : vector<8x256xf32>
    %391 = vector.extract_strided_slice %386 {offsets = [0, 256], sizes = [8, 256], strides = [1, 1]} : vector<8x512xf32> to vector<8x256xf32>
    %392 = math.tanh %390 : vector<8x256xf32>
    %393 = arith.mulf %391, %392 : vector<8x256xf32>
    %c0_123 = arith.constant 0 : index
    %c0_124 = arith.constant 0 : index
    %394 = vector.load %arg9[%c0_123, %c0_124] : memref<256x5xf32, #tpu.memory_space<vmem>>, vector<256x5xf32>
    %cst_125 = arith.constant dense<0.000000e+00> : vector<8x5xf32>
    %395 = tpu.matmul %393, %394, %cst_125 {dimension_numbers = #tpu.dot_dimension_numbers<[1], [0], [0], [1], [0, 0, 1, 1], [], []>} : vector<8x256xf32>, vector<256x5xf32>, vector<8x5xf32> -> vector<8x5xf32>
    %c0_126 = arith.constant 0 : index
    %c0_127 = arith.constant 0 : index
    %396 = vector.load %arg10[%c0_126, %c0_127] : memref<1x5xf32, #tpu.memory_space<vmem>>, vector<1x5xf32>
    %397 = vector.broadcast %396 : vector<1x5xf32> to vector<8x5xf32>
    %398 = arith.addf %395, %397 : vector<8x5xf32>
    %cst_128 = arith.constant dense<0xFF800000> : vector<8xf32>
    %399 = vector.multi_reduction <maximumf>, %398, %cst_128 [1] : vector<8x5xf32> to vector<8xf32>
    %400 = vector.shape_cast %399 : vector<8xf32> to vector<8x1xf32>
    %401 = vector.broadcast %400 : vector<8x1xf32> to vector<8x5xf32>
    %402 = arith.subf %398, %401 : vector<8x5xf32>
    %403 = math.exp %402 : vector<8x5xf32>
    %cst_129 = arith.constant dense<0.000000e+00> : vector<8xf32>
    %404 = vector.multi_reduction <add>, %403, %cst_129 [1] : vector<8x5xf32> to vector<8xf32>
    %405 = vector.shape_cast %404 : vector<8xf32> to vector<8x1xf32>
    %406 = tpu.reciprocal %405 {approx = true} : vector<8x1xf32> -> vector<8x1xf32>
    %407 = vector.broadcast %406 : vector<8x1xf32> to vector<8x5xf32>
    %408 = arith.mulf %403, %407 : vector<8x5xf32>
    %c0_130 = arith.constant 0 : index
    %c0_131 = arith.constant 0 : index
    %409 = vector.load %arg11[%c0_130, %c0_131] : memref<8x5xf32, #tpu.memory_space<vmem>>, vector<8x5xf32>
    tpu.vector_store %arg11[%c0_130, %c0_131], %408 {strides = array<i32>} : memref<8x5xf32, #tpu.memory_space<vmem>>, vector<8x5xf32>,
    return
  }
}

</mosaic_0001>

<llo_original>
// kernel: lstm_model_forward_fn.1
$region0: #{lstm_model_forward_fn.1}
  #allocation0 [shape = 'u32[]', space=smem, size = 0x4, offset = 0x4, fixed_abs, tag = 'smem constant byte address 0x4 - core index']
  #allocation1 [shape = 'u32[144,128]{1,0:T(1,128)}', space=vmem, size = 0x12000, scoped, tag = 'internal scratch']
  #allocation2 [shape = 'f32[64,512]{1,0:T(8,128)}', space=vmem, size = 0x20000, scoped, tag = 'scratch operand']
  #allocation3 [shape = 'bf16[128,1024]{1,0:T(16,128)(2,1)}', space=vmem, size = 0x40000, scoped, tag = 'scratch operand']
  #allocation4 [shape = 'bf16[256,1024]{1,0:T(16,128)(2,1)}', space=vmem, size = 0x80000, scoped, tag = 'scratch operand']
  #allocation5 [shape = 'bf16[256,768]{1,0:T(16,128)(2,1)}', space=vmem, size = 0x60000, scoped, tag = 'scratch operand']
  #allocation6 [shape = 's32[3]{0}', space=sflag, size = 0xc, scoped, tag = 'scratch operand']
  #allocation11 [shape = 's32[]', space=sflag, size = 0x4, offset = 0, fixed_abs, tag = 'sflag constant byte address 0x0 - dummy sync flag']
  #allocation12 [shape = 's32[]', space=sflag, size = 0x4, offset = 0, fixed_abs, tag = 'sflag constant byte address 0x0 - dummy sync flag']
  #allocation14 [shape = 's32[]', space=sflag, size = 0x4, offset = 0, fixed_abs, tag = 'sflag constant byte address 0x0 - dummy sync flag']
  %s0 = inlined_call_operand.vmem [shape: f32[64,132], index: 0, kind: input, shape index: {}]
  %s1 = inlined_call_operand.hbm [shape: bf16[132,512], index: 1, kind: input, shape index: {}]
  %s2 = inlined_call_operand.hbm [shape: bf16[128,512], index: 2, kind: input, shape index: {}]
  %s3 = inlined_call_operand.vmem [shape: f32[1,512], index: 3, kind: input, shape index: {}]
  %s4 = inlined_call_operand.vmem [shape: bf16[128,1024], index: 4, kind: input, shape index: {}]
  %s5 = inlined_call_operand.hbm [shape: bf16[256,1024], index: 5, kind: input, shape index: {}]
  %s6 = inlined_call_operand.vmem [shape: f32[1,1024], index: 6, kind: input, shape index: {}]
  %s7 = inlined_call_operand.hbm [shape: bf16[256,768], index: 7, kind: input, shape index: {}]
  %s8 = inlined_call_operand.vmem [shape: f32[1,768], index: 8, kind: input, shape index: {}]
  %s9 = inlined_call_operand.vmem [shape: f32[256,5], index: 9, kind: input, shape index: {}]
  %s10 = inlined_call_operand.vmem [shape: f32[1,5], index: 10, kind: input, shape index: {}]
  %s11 = inlined_call_operand.vmem [shape: f32[8,5], index: 11, kind: output, shape index: {}]
  %s12 = sld [smem:[#allocation0]]
  $region87: #{lstm_model_forward_fn.1} parent=0
    _
  %s14 = ssub.s32 1, %s12
  %s15 = scalar_select 0, %s14, %s12
  $region1: #{lstm_model_forward_fn.1} parent=0
    #allocation7 [shape = 'u8[139264]{0}', space=vmem, size = 0x22000, scoped, tag = 'input window, operand 1, single buffered']
    #allocation8 [shape = 's32[1]{0}', space=sflag, size = 0x4, scoped, tag = 'scoped memory for lstm_model_forward_fn.1']
    #allocation9 [shape = 'u8[131072]{0}', space=vmem, size = 0x20000, scoped, tag = 'input window, operand 2, single buffered']
    #allocation10 [shape = 's32[1]{0}', space=sflag, size = 0x4, scoped, tag = 'scoped memory for lstm_model_forward_fn.1']
    #allocation13 [shape = 'u32[9]{0}', space=smem, size = 0x24, scoped, tag = 'DMA stride descriptor']
    #allocation15 [shape = 'u32[9]{0}', space=smem, size = 0x24, scoped, tag = 'DMA stride descriptor']
    %16 = vsyncpa [#allocation8], 0
    %17 = vsyncpa [#allocation10], 0
    // Predicated region
    $region2: #{lstm_model_forward_fn.1} parent=1 // pred_check
      _
    $region3: #{lstm_model_forward_fn.1} parent=1 // pred_check_branch
      %19 = sbr.rel (0) target = $region5
    $region4: #{lstm_model_forward_fn.1} parent=1 // pred_region
      _
    $region5: #{lstm_model_forward_fn.1} parent=1 // pred_fallthru
      _
    // Predicated region
    $region6: #{lstm_model_forward_fn.1} parent=1 // pred_check
      _
    $region7: #{lstm_model_forward_fn.1} parent=1 // pred_check_branch
      %21 = sbr.rel (0) target = $region9
    $region8: #{lstm_model_forward_fn.1} parent=1 // pred_region
      %s23 = ssub.s32 4352, 4352
      %24 = vsyncadd [#allocation8], %s23
      %s25 = sshll.u32 [#allocation7], 4
      %s26 = int_to_ptr.vmem [resolvable:$true] %s25
      %31 = dma.hbm_to_vmem [thread:$0]  %s1, 4352, %s26, [#allocation8], 256, 256, 16
    $region9: #{lstm_model_forward_fn.1} parent=1 // pred_fallthru
      _
    // Predicated region
    $region10: #{lstm_model_forward_fn.1} parent=1 // pred_check
      _
    $region11: #{lstm_model_forward_fn.1} parent=1 // pred_check_branch
      %33 = sbr.rel (0) target = $region13
    $region12: #{lstm_model_forward_fn.1} parent=1 // pred_region
      %s35 = ssub.s32 4096, 4096
      %36 = vsyncadd [#allocation10], %s35
      %s37 = sshll.u32 [#allocation9], 4
      %s38 = int_to_ptr.vmem [resolvable:$true] %s37
      %43 = dma.hbm_to_vmem [thread:$0]  %s2, 4096, %s38, [#allocation10], 256, 256, 16
    $region13: #{lstm_model_forward_fn.1} parent=1 // pred_fallthru
      _
    // Predicated region
    $region14: #{lstm_model_forward_fn.1} parent=1 // pred_check
      _
    $region15: #{lstm_model_forward_fn.1} parent=1 // pred_check_branch
      %45 = sbr.rel (0) target = $region17
    $region16: #{lstm_model_forward_fn.1} parent=1 // pred_region
      _
    $region17: #{lstm_model_forward_fn.1} parent=1 // pred_fallthru
      _
    // Predicated region
    $region18: #{lstm_model_forward_fn.1} parent=1 // pred_check
      _
    $region19: #{lstm_model_forward_fn.1} parent=1 // pred_check_branch
      %47 = sbr.rel (0) target = $region21
    $region20: #{lstm_model_forward_fn.1} parent=1 // pred_region
      _
    $region21: #{lstm_model_forward_fn.1} parent=1 // pred_fallthru
      _
    // Predicated region
    $region22: #{lstm_model_forward_fn.1} parent=1 // pred_check
      _
    $region23: #{lstm_model_forward_fn.1} parent=1 // pred_check_branch
      %49 = sbr.rel (0) target = $region25
    $region24: #{lstm_model_forward_fn.1} parent=1 // pred_region
      _
    $region25: #{lstm_model_forward_fn.1} parent=1 // pred_fallthru
      _
    // Predicated region
    $region26: #{lstm_model_forward_fn.1} parent=1 // pred_check
      _
    $region27: #{lstm_model_forward_fn.1} parent=1 // pred_check_branch
      %51 = sbr.rel (0) target = $region29
    $region28: #{lstm_model_forward_fn.1} parent=1 // pred_region
      _
    $region29: #{lstm_model_forward_fn.1} parent=1 // pred_fallthru
      _
    // Predicated region
    $region30: #{lstm_model_forward_fn.1} parent=1 // pred_check
      _
    $region31: #{lstm_model_forward_fn.1} parent=1 // pred_check_branch
      %53 = sbr.rel (0) target = $region33
    $region32: #{lstm_model_forward_fn.1} parent=1 // pred_region
      _
    $region33: #{lstm_model_forward_fn.1} parent=1 // pred_fallthru
      _
    // Predicated region
    $region34: #{lstm_model_forward_fn.1} parent=1 // pred_check
      _
    $region35: #{lstm_model_forward_fn.1} parent=1 // pred_check_branch
      %55 = sbr.rel (0) target = $region37
    $region36: #{lstm_model_forward_fn.1} parent=1 // pred_region
      %56 = dma.done [#allocation8], 4352
    $region37: #{lstm_model_forward_fn.1} parent=1 // pred_fallthru
      _
    // Predicated region
    $region38: #{lstm_model_forward_fn.1} parent=1 // pred_check
      _
    $region39: #{lstm_model_forward_fn.1} parent=1 // pred_check_branch
      %58 = sbr.rel (0) target = $region41
    $region40: #{lstm_model_forward_fn.1} parent=1 // pred_region
      %59 = dma.done [#allocation10], 4096
    $region41: #{lstm_model_forward_fn.1} parent=1 // pred_fallthru
      _
    %p62 = scmp.lt.u32.totalorder 4, 8
    %p63 = pneg %p62
    // Predicated region
    $region42: #{lstm_model_forward_fn.1} parent=1 // pred_check
      _
    $region43: #{lstm_model_forward_fn.1} parent=1 // pred_check_branch
      %65 = sbr.rel (%p62) target = $region45
    $region44: #{lstm_model_forward_fn.1} parent=1 // pred_region
      %s334 = sand.u32 4, 7
      %p335 = scmp.eq.s32.totalorder %s334, 0
      %p336 = pneg %p335
      // Predicated region
      $region57: #{lstm_model_forward_fn.1} parent=44 // pred_check
        _
      $region58: #{lstm_model_forward_fn.1} parent=44 // pred_check_branch
        %338 = sbr.rel (%p335) target = $region60
      $region59: #{lstm_model_forward_fn.1} parent=44 // pred_region
        %s339 = sand.u32 4, 7
        %s340 = ssub.s32 4, %s339
        %s341 = scalar_lea.vmem %s4, %s340
        %s342 = ssub.s32 4, %s339
        %s343 = scalar_lea.vmem [#allocation3], %s342
        loop: start=0, step=1, limit=1
        $region61: #{lstm_model_forward_fn.1} parent=59 // loop_pre_header
          _
        $region62: #{lstm_model_forward_fn.1} parent=59 // loop_header
          %s345 = sphi 0, %s349
          %p346 = scmp.ge.s32.totalorder %s345, 1
          %s350 = sphi %s4, %s4
          %s351 = sphi [#allocation3], [#allocation3]
        $region63: #{lstm_model_forward_fn.1} parent=59 // loop_header_branch
          %348 = sbr.rel (%p346) target = $region67
        $region64: #{lstm_model_forward_fn.1} parent=59 // loop_body
          _
        $region65: #{lstm_model_forward_fn.1} parent=59 // loop_footer
          %s349 = sadd.s32 1, %s345
        $region66: #{lstm_model_forward_fn.1} parent=59 // loop_footer_branch
          %344 = sbr.rel target = $region62
        $region67: #{lstm_model_forward_fn.1} parent=59 // loop_exit
          _
        %s352 = sshllo.u32 0, %s339
        loop: start=0, step=1, limit=1
        $region68: #{lstm_model_forward_fn.1} parent=59 // loop_pre_header
          _
        $region69: #{lstm_model_forward_fn.1} parent=59 // loop_header
          %s354 = sphi 0, %s358
          %p355 = scmp.ge.s32.totalorder %s354, 1
          %s359 = sphi %s341, %s341
          %s360 = sphi %s343, %s343
        $region70: #{lstm_model_forward_fn.1} parent=59 // loop_header_branch
          %357 = sbr.rel (%p355) target = $region74
        $region71: #{lstm_model_forward_fn.1} parent=59 // loop_body
          %v361 = vld [vmem:[%s359] sm:%s352]
          %362 = vst [vmem:[%s360] sm:%s352] %v361
          %v363 = vld [vmem:[%s359 + $0x20] sm:%s352]
          %364 = vst [vmem:[%s360 + $0x4] sm:%s352] %v363
          %v365 = vld [vmem:[%s359 + $0x4] sm:%s352]
          %366 = vst [vmem:[%s360 + $0x8] sm:%s352] %v365
          %v367 = vld [vmem:[%s359 + $0x24] sm:%s352]
          %368 = vst [vmem:[%s360 + $0xc] sm:%s352] %v367
          %v369 = vld [vmem:[%s359 + $0x8] sm:%s352]
          %370 = vst [vmem:[%s360 + $0x10] sm:%s352] %v369
          %v371 = vld [vmem:[%s359 + $0x28] sm:%s352]
          %372 = vst [vmem:[%s360 + $0x14] sm:%s352] %v371
          %v373 = vld [vmem:[%s359 + $0xc] sm:%s352]
          %374 = vst [vmem:[%s360 + $0x18] sm:%s352] %v373
          %v375 = vld [vmem:[%s359 + $0x2c] sm:%s352]
          %376 = vst [vmem:[%s360 + $0x1c] sm:%s352] %v375
          %v377 = vld [vmem:[%s359 + $0x10] sm:%s352]
          %378 = vst [vmem:[%s360 + $0x20] sm:%s352] %v377
          %v379 = vld [vmem:[%s359 + $0x30] sm:%s352]
          %380 = vst [vmem:[%s360 + $0x24] sm:%s352] %v379
          %v381 = vld [vmem:[%s359 + $0x14] sm:%s352]
          %382 = vst [vmem:[%s360 + $0x28] sm:%s352] %v381
          %v383 = vld [vmem:[%s359 + $0x34] sm:%s352]
          %384 = vst [vmem:[%s360 + $0x2c] sm:%s352] %v383
          %v385 = vld [vmem:[%s359 + $0x18] sm:%s352]
          %386 = vst [vmem:[%s360 + $0x30] sm:%s352] %v385
          %v387 = vld [vmem:[%s359 + $0x38] sm:%s352]
          %388 = vst [vmem:[%s360 + $0x34] sm:%s352] %v387
          %v389 = vld [vmem:[%s359 + $0x1c] sm:%s352]
          %390 = vst [vmem:[%s360 + $0x38] sm:%s352] %v389
          %v391 = vld [vmem:[%s359 + $0x3c] sm:%s352]
          %392 = vst [vmem:[%s360 + $0x3c] sm:%s352] %v391
          %v393 = vld [vmem:[%s359 + $0x40] sm:%s352]
          %394 = vst [vmem:[%s360 + $0x40] sm:%s352] %v393
          %v395 = vld [vmem:[%s359 + $0x60] sm:%s352]
          %396 = vst [vmem:[%s360 + $0x44] sm:%s352] %v395
          %v397 = vld [vmem:[%s359 + $0x44] sm:%s352]
          %398 = vst [vmem:[%s360 + $0x48] sm:%s352] %v397
          %v399 = vld [vmem:[%s359 + $0x64] sm:%s352]
          %400 = vst [vmem:[%s360 + $0x4c] sm:%s352] %v399
          %v401 = vld [vmem:[%s359 + $0x48] sm:%s352]
          %402 = vst [vmem:[%s360 + $0x50] sm:%s352] %v401
          %v403 = vld [vmem:[%s359 + $0x68] sm:%s352]
          %404 = vst [vmem:[%s360 + $0x54] sm:%s352] %v403
          %v405 = vld [vmem:[%s359 + $0x4c] sm:%s352]
          %406 = vst [vmem:[%s360 + $0x58] sm:%s352] %v405
          %v407 = vld [vmem:[%s359 + $0x6c] sm:%s352]
          %408 = vst [vmem:[%s360 + $0x5c] sm:%s352] %v407
          %v409 = vld [vmem:[%s359 + $0x50] sm:%s352]
          %410 = vst [vmem:[%s360 + $0x60] sm:%s352] %v409
          %v411 = vld [vmem:[%s359 + $0x70] sm:%s352]
          %412 = vst [vmem:[%s360 + $0x64] sm:%s352] %v411
          %v413 = vld [vmem:[%s359 + $0x54] sm:%s352]
          %414 = vst [vmem:[%s360 + $0x68] sm:%s352] %v413
          %v415 = vld [vmem:[%s359 + $0x74] sm:%s352]
          %416 = vst [vmem:[%s360 + $0x6c] sm:%s352] %v415
          %v417 = vld [vmem:[%s359 + $0x58] sm:%s352]
          %418 = vst [vmem:[%s360 + $0x70] sm:%s352] %v417
          %v419 = vld [vmem:[%s359 + $0x78] sm:%s352]
          %420 = vst [vmem:[%s360 + $0x74] sm:%s352] %v419
          %v421 = vld [vmem:[%s359 + $0x5c] sm:%s352]
          %422 = vst [vmem:[%s360 + $0x78] sm:%s352] %v421
          %v423 = vld [vmem:[%s359 + $0x7c] sm:%s352]
          %424 = vst [vmem:[%s360 + $0x7c] sm:%s352] %v423
          %v425 = vld [vmem:[%s359 + $0x80] sm:%s352]
          %426 = vst [vmem:[%s360 + $0x80] sm:%s352] %v425
          %v427 = vld [vmem:[%s359 + $0xa0] sm:%s352]
          %428 = vst [vmem:[%s360 + $0x84] sm:%s352] %v427
          %v429 = vld [vmem:[%s359 + $0x84] sm:%s352]
          %430 = vst [vmem:[%s360 + $0x88] sm:%s352] %v429
          %v431 = vld [vmem:[%s359 + $0xa4] sm:%s352]
          %432 = vst [vmem:[%s360 + $0x8c] sm:%s352] %v431
          %v433 = vld [vmem:[%s359 + $0x88] sm:%s352]
          %434 = vst [vmem:[%s360 + $0x90] sm:%s352] %v433
          %v435 = vld [vmem:[%s359 + $0xa8] sm:%s352]
          %436 = vst [vmem:[%s360 + $0x94] sm:%s352] %v435
          %v437 = vld [vmem:[%s359 + $0x8c] sm:%s352]
          %438 = vst [vmem:[%s360 + $0x98] sm:%s352] %v437
          %v439 = vld [vmem:[%s359 + $0xac] sm:%s352]
          %440 = vst [vmem:[%s360 + $0x9c] sm:%s352] %v439
          %v441 = vld [vmem:[%s359 + $0x90] sm:%s352]
          %442 = vst [vmem:[%s360 + $0xa0] sm:%s352] %v441
          %v443 = vld [vmem:[%s359 + $0xb0] sm:%s352]
          %444 = vst [vmem:[%s360 + $0xa4] sm:%s352] %v443
          %v445 = vld [vmem:[%s359 + $0x94] sm:%s352]
          %446 = vst [vmem:[%s360 + $0xa8] sm:%s352] %v445
          %v447 = vld [vmem:[%s359 + $0xb4] sm:%s352]
          %448 = vst [vmem:[%s360 + $0xac] sm:%s352] %v447
          %v449 = vld [vmem:[%s359 + $0x98] sm:%s352]
          %450 = vst [vmem:[%s360 + $0xb0] sm:%s352] %v449
          %v451 = vld [vmem:[%s359 + $0xb8] sm:%s352]
          %452 = vst [vmem:[%s360 + $0xb4] sm:%s352] %v451
          %v453 = vld [vmem:[%s359 + $0x9c] sm:%s352]
          %454 = vst [vmem:[%s360 + $0xb8] sm:%s352] %v453
          %v455 = vld [vmem:[%s359 + $0xbc] sm:%s352]
          %456 = vst [vmem:[%s360 + $0xbc] sm:%s352] %v455
          %v457 = vld [vmem:[%s359 + $0xc0] sm:%s352]
          %458 = vst [vmem:[%s360 + $0xc0] sm:%s352] %v457
          %v459 = vld [vmem:[%s359 + $0xe0] sm:%s352]
          %460 = vst [vmem:[%s360 + $0xc4] sm:%s352] %v459
          %v461 = vld [vmem:[%s359 + $0xc4] sm:%s352]
          %462 = vst [vmem:[%s360 + $0xc8] sm:%s352] %v461
          %v463 = vld [vmem:[%s359 + $0xe4] sm:%s352]
          %464 = vst [vmem:[%s360 + $0xcc] sm:%s352] %v463
          %v465 = vld [vmem:[%s359 + $0xc8] sm:%s352]
          %466 = vst [vmem:[%s360 + $0xd0] sm:%s352] %v465
          %v467 = vld [vmem:[%s359 + $0xe8] sm:%s352]
          %468 = vst [vmem:[%s360 + $0xd4] sm:%s352] %v467
          %v469 = vld [vmem:[%s359 + $0xcc] sm:%s352]
          %470 = vst [vmem:[%s360 + $0xd8] sm:%s352] %v469
          %v471 = vld [vmem:[%s359 + $0xec] sm:%s352]
          %472 = vst [vmem:[%s360 + $0xdc] sm:%s352] %v471
          %v473 = vld [vmem:[%s359 + $0xd0] sm:%s352]
          %474 = vst [vmem:[%s360 + $0xe0] sm:%s352] %v473
          %v475 = vld [vmem:[%s359 + $0xf0] sm:%s352]
          %476 = vst [vmem:[%s360 + $0xe4] sm:%s352] %v475
          %v477 = vld [vmem:[%s359 + $0xd4] sm:%s352]
          %478 = vst [vmem:[%s360 + $0xe8] sm:%s352] %v477
          %v479 = vld [vmem:[%s359 + $0xf4] sm:%s352]
          %480 = vst [vmem:[%s360 + $0xec] sm:%s352] %v479
          %v481 = vld [vmem:[%s359 + $0xd8] sm:%s352]
          %482 = vst [vmem:[%s360 + $0xf0] sm:%s352] %v481
          %v483 = vld [vmem:[%s359 + $0xf8] sm:%s352]
          %484 = vst [vmem:[%s360 + $0xf4] sm:%s352] %v483
          %v485 = vld [vmem:[%s359 + $0xdc] sm:%s352]
          %486 = vst [vmem:[%s360 + $0xf8] sm:%s352] %v485
          %v487 = vld [vmem:[%s359 + $0xfc] sm:%s352]
          %488 = vst [vmem:[%s360 + $0xfc] sm:%s352] %v487
          %v489 = vld [vmem:[%s359 + $0x100] sm:%s352]
          %490 = vst [vmem:[%s360 + $0x100] sm:%s352] %v489
          %v491 = vld [vmem:[%s359 + $0x120] sm:%s352]
          %492 = vst [vmem:[%s360 + $0x104] sm:%s352] %v491
          %v493 = vld [vmem:[%s359 + $0x104] sm:%s352]
          %494 = vst [vmem:[%s360 + $0x108] sm:%s352] %v493
          %v495 = vld [vmem:[%s359 + $0x124] sm:%s352]
          %496 = vst [vmem:[%s360 + $0x10c] sm:%s352] %v495
          %v497 = vld [vmem:[%s359 + $0x108] sm:%s352]
          %498 = vst [vmem:[%s360 + $0x110] sm:%s352] %v497
          %v499 = vld [vmem:[%s359 + $0x128] sm:%s352]
          %500 = vst [vmem:[%s360 + $0x114] sm:%s352] %v499
          %v501 = vld [vmem:[%s359 + $0x10c] sm:%s352]
          %502 = vst [vmem:[%s360 + $0x118] sm:%s352] %v501
          %v503 = vld [vmem:[%s359 + $0x12c] sm:%s352]
          %504 = vst [vmem:[%s360 + $0x11c] sm:%s352] %v503
          %v505 = vld [vmem:[%s359 + $0x110] sm:%s352]
          %506 = vst [vmem:[%s360 + $0x120] sm:%s352] %v505
          %v507 = vld [vmem:[%s359 + $0x130] sm:%s352]
          %508 = vst [vmem:[%s360 + $0x124] sm:%s352] %v507
          %v509 = vld [vmem:[%s359 + $0x114] sm:%s352]
          %510 = vst [vmem:[%s360 + $0x128] sm:%s352] %v509
          %v511 = vld [vmem:[%s359 + $0x134] sm:%s352]
          %512 = vst [vmem:[%s360 + $0x12c] sm:%s352] %v511
          %v513 = vld [vmem:[%s359 + $0x118] sm:%s352]
          %514 = vst [vmem:[%s360 + $0x130] sm:%s352] %v513
          %v515 = vld [vmem:[%s359 + $0x138] sm:%s352]
          %516 = vst [vmem:[%s360 + $0x134] sm:%s352] %v515
          %v517 = vld [vmem:[%s359 + $0x11c] sm:%s352]
          %518 = vst [vmem:[%s360 + $0x138] sm:%s352] %v517
          %v519 = vld [vmem:[%s359 + $0x13c] sm:%s352]
          %520 = vst [vmem:[%s360 + $0x13c] sm:%s352] %v519
          %v521 = vld [vmem:[%s359 + $0x140] sm:%s352]
          %522 = vst [vmem:[%s360 + $0x140] sm:%s352] %v521
          %v523 = vld [vmem:[%s359 + $0x160] sm:%s352]
          %524 = vst [vmem:[%s360 + $0x144] sm:%s352] %v523
          %v525 = vld [vmem:[%s359 + $0x144] sm:%s352]
          %526 = vst [vmem:[%s360 + $0x148] sm:%s352] %v525
          %v527 = vld [vmem:[%s359 + $0x164] sm:%s352]
          %528 = vst [vmem:[%s360 + $0x14c] sm:%s352] %v527
          %v529 = vld [vmem:[%s359 + $0x148] sm:%s352]
          %530 = vst [vmem:[%s360 + $0x150] sm:%s352] %v529
          %v531 = vld [vmem:[%s359 + $0x168] sm:%s352]
          %532 = vst [vmem:[%s360 + $0x154] sm:%s352] %v531
          %v533 = vld [vmem:[%s359 + $0x14c] sm:%s352]
          %534 = vst [vmem:[%s360 + $0x158] sm:%s352] %v533
          %v535 = vld [vmem:[%s359 + $0x16c] sm:%s352]
          %536 = vst [vmem:[%s360 + $0x15c] sm:%s352] %v535
          %v537 = vld [vmem:[%s359 + $0x150] sm:%s352]
          %538 = vst [vmem:[%s360 + $0x160] sm:%s352] %v537
          %v539 = vld [vmem:[%s359 + $0x170] sm:%s352]
          %540 = vst [vmem:[%s360 + $0x164] sm:%s352] %v539
          %v541 = vld [vmem:[%s359 + $0x154] sm:%s352]
          %542 = vst [vmem:[%s360 + $0x168] sm:%s352] %v541
          %v543 = vld [vmem:[%s359 + $0x174] sm:%s352]
          %544 = vst [vmem:[%s360 + $0x16c] sm:%s352] %v543
          %v545 = vld [vmem:[%s359 + $0x158] sm:%s352]
          %546 = vst [vmem:[%s360 + $0x170] sm:%s352] %v545
          %v547 = vld [vmem:[%s359 + $0x178] sm:%s352]
          %548 = vst [vmem:[%s360 + $0x174] sm:%s352] %v547
          %v549 = vld [vmem:[%s359 + $0x15c] sm:%s352]
          %550 = vst [vmem:[%s360 + $0x178] sm:%s352] %v549
          %v551 = vld [vmem:[%s359 + $0x17c] sm:%s352]
          %552 = vst [vmem:[%s360 + $0x17c] sm:%s352] %v551
          %v553 = vld [vmem:[%s359 + $0x180] sm:%s352]
          %554 = vst [vmem:[%s360 + $0x180] sm:%s352] %v553
          %v555 = vld [vmem:[%s359 + $0x1a0] sm:%s352]
          %556 = vst [vmem:[%s360 + $0x184] sm:%s352] %v555
          %v557 = vld [vmem:[%s359 + $0x184] sm:%s352]
          %558 = vst [vmem:[%s360 + $0x188] sm:%s352] %v557
          %v559 = vld [vmem:[%s359 + $0x1a4] sm:%s352]
          %560 = vst [vmem:[%s360 + $0x18c] sm:%s352] %v559
          %v561 = vld [vmem:[%s359 + $0x188] sm:%s352]
          %562 = vst [vmem:[%s360 + $0x190] sm:%s352] %v561
          %v563 = vld [vmem:[%s359 + $0x1a8] sm:%s352]
          %564 = vst [vmem:[%s360 + $0x194] sm:%s352] %v563
          %v565 = vld [vmem:[%s359 + $0x18c] sm:%s352]
          %566 = vst [vmem:[%s360 + $0x198] sm:%s352] %v565
          %v567 = vld [vmem:[%s359 + $0x1ac] sm:%s352]
          %568 = vst [vmem:[%s360 + $0x19c] sm:%s352] %v567
          %v569 = vld [vmem:[%s359 + $0x190] sm:%s352]
          %570 = vst [vmem:[%s360 + $0x1a0] sm:%s352] %v569
          %v571 = vld [vmem:[%s359 + $0x1b0] sm:%s352]
          %572 = vst [vmem:[%s360 + $0x1a4] sm:%s352] %v571
          %v573 = vld [vmem:[%s359 + $0x194] sm:%s352]
          %574 = vst [vmem:[%s360 + $0x1a8] sm:%s352] %v573
          %v575 = vld [vmem:[%s359 + $0x1b4] sm:%s352]
          %576 = vst [vmem:[%s360 + $0x1ac] sm:%s352] %v575
          %v577 = vld [vmem:[%s359 + $0x198] sm:%s352]
          %578 = vst [vmem:[%s360 + $0x1b0] sm:%s352] %v577
          %v579 = vld [vmem:[%s359 + $0x1b8] sm:%s352]
          %580 = vst [vmem:[%s360 + $0x1b4] sm:%s352] %v579
          %v581 = vld [vmem:[%s359 + $0x19c] sm:%s352]
          %582 = vst [vmem:[%s360 + $0x1b8] sm:%s352] %v581
          %v583 = vld [vmem:[%s359 + $0x1bc] sm:%s352]
          %584 = vst [vmem:[%s360 + $0x1bc] sm:%s352] %v583
          %v585 = vld [vmem:[%s359 + $0x1c0] sm:%s352]
          %586 = vst [vmem:[%s360 + $0x1c0] sm:%s352] %v585
          %v587 = vld [vmem:[%s359 + $0x1e0] sm:%s352]
          %588 = vst [vmem:[%s360 + $0x1c4] sm:%s352] %v587
          %v589 = vld [vmem:[%s359 + $0x1c4] sm:%s352]
          %590 = vst [vmem:[%s360 + $0x1c8] sm:%s352] %v589
          %v591 = vld [vmem:[%s359 + $0x1e4] sm:%s352]
          %592 = vst [vmem:[%s360 + $0x1cc] sm:%s352] %v591
          %v593 = vld [vmem:[%s359 + $0x1c8] sm:%s352]
          %594 = vst [vmem:[%s360 + $0x1d0] sm:%s352] %v593
          %v595 = vld [vmem:[%s359 + $0x1e8] sm:%s352]
          %596 = vst [vmem:[%s360 + $0x1d4] sm:%s352] %v595
          %v597 = vld [vmem:[%s359 + $0x1cc] sm:%s352]
          %598 = vst [vmem:[%s360 + $0x1d8] sm:%s352] %v597
          %v599 = vld [vmem:[%s359 + $0x1ec] sm:%s352]
          %600 = vst [vmem:[%s360 + $0x1dc] sm:%s352] %v599
          %v601 = vld [vmem:[%s359 + $0x1d0] sm:%s352]
          %602 = vst [vmem:[%s360 + $0x1e0] sm:%s352] %v601
          %v603 = vld [vmem:[%s359 + $0x1f0] sm:%s352]
          %604 = vst [vmem:[%s360 + $0x1e4] sm:%s352] %v603
          %v605 = vld [vmem:[%s359 + $0x1d4] sm:%s352]
          %606 = vst [vmem:[%s360 + $0x1e8] sm:%s352] %v605
          %v607 = vld [vmem:[%s359 + $0x1f4] sm:%s352]
          %608 = vst [vmem:[%s360 + $0x1ec] sm:%s352] %v607
          %v609 = vld [vmem:[%s359 + $0x1d8] sm:%s352]
          %610 = vst [vmem:[%s360 + $0x1f0] sm:%s352] %v609
          %v611 = vld [vmem:[%s359 + $0x1f8] sm:%s352]
          %612 = vst [vmem:[%s360 + $0x1f4] sm:%s352] %v611
          %v613 = vld [vmem:[%s359 + $0x1dc] sm:%s352]
          %614 = vst [vmem:[%s360 + $0x1f8] sm:%s352] %v613
          %v615 = vld [vmem:[%s359 + $0x1fc] sm:%s352]
          %616 = vst [vmem:[%s360 + $0x1fc] sm:%s352] %v615
        $region72: #{lstm_model_forward_fn.1} parent=59 // loop_footer
          %s358 = sadd.s32 1, %s354
        $region73: #{lstm_model_forward_fn.1} parent=59 // loop_footer_branch
          %353 = sbr.rel target = $region69
        $region74: #{lstm_model_forward_fn.1} parent=59 // loop_exit
          _
      $region60: #{lstm_model_forward_fn.1} parent=44 // pred_fallthru
        _
    $region45: #{lstm_model_forward_fn.1} parent=1 // pred_fallthru
      _
    // Predicated region
    $region46: #{lstm_model_forward_fn.1} parent=1 // pred_check
      %p66 = pneg %p62
    $region47: #{lstm_model_forward_fn.1} parent=1 // pred_check_branch
      %68 = sbr.rel (%p66) target = $region49
    $region48: #{lstm_model_forward_fn.1} parent=1 // pred_region
      %s69 = sshllo.u32 0, 4
      loop: start=0, step=1, limit=1
      $region50: #{lstm_model_forward_fn.1} parent=48 // loop_pre_header
        _
      $region51: #{lstm_model_forward_fn.1} parent=48 // loop_header
        %s71 = sphi 0, %s75
        %p72 = scmp.ge.s32.totalorder %s71, 1
        %s76 = sphi %s4, %s4
        %s77 = sphi [#allocation3], [#allocation3]
      $region52: #{lstm_model_forward_fn.1} parent=48 // loop_header_branch
        %74 = sbr.rel (%p72) target = $region56
      $region53: #{lstm_model_forward_fn.1} parent=48 // loop_body
        %v78 = vld [vmem:[%s76] sm:%s69]
        %79 = vst [vmem:[%s77] sm:%s69] %v78
        %v80 = vld [vmem:[%s76 + $0x20] sm:%s69]
        %81 = vst [vmem:[%s77 + $0x4] sm:%s69] %v80
        %v82 = vld [vmem:[%s76 + $0x4] sm:%s69]
        %83 = vst [vmem:[%s77 + $0x8] sm:%s69] %v82
        %v84 = vld [vmem:[%s76 + $0x24] sm:%s69]
        %85 = vst [vmem:[%s77 + $0xc] sm:%s69] %v84
        %v86 = vld [vmem:[%s76 + $0x8] sm:%s69]
        %87 = vst [vmem:[%s77 + $0x10] sm:%s69] %v86
        %v88 = vld [vmem:[%s76 + $0x28] sm:%s69]
        %89 = vst [vmem:[%s77 + $0x14] sm:%s69] %v88
        %v90 = vld [vmem:[%s76 + $0xc] sm:%s69]
        %91 = vst [vmem:[%s77 + $0x18] sm:%s69] %v90
        %v92 = vld [vmem:[%s76 + $0x2c] sm:%s69]
        %93 = vst [vmem:[%s77 + $0x1c] sm:%s69] %v92
        %v94 = vld [vmem:[%s76 + $0x10] sm:%s69]
        %95 = vst [vmem:[%s77 + $0x20] sm:%s69] %v94
        %v96 = vld [vmem:[%s76 + $0x30] sm:%s69]
        %97 = vst [vmem:[%s77 + $0x24] sm:%s69] %v96
        %v98 = vld [vmem:[%s76 + $0x14] sm:%s69]
        %99 = vst [vmem:[%s77 + $0x28] sm:%s69] %v98
        %v100 = vld [vmem:[%s76 + $0x34] sm:%s69]
        %101 = vst [vmem:[%s77 + $0x2c] sm:%s69] %v100
        %v102 = vld [vmem:[%s76 + $0x18] sm:%s69]
        %103 = vst [vmem:[%s77 + $0x30] sm:%s69] %v102
        %v104 = vld [vmem:[%s76 + $0x38] sm:%s69]
        %105 = vst [vmem:[%s77 + $0x34] sm:%s69] %v104
        %v106 = vld [vmem:[%s76 + $0x1c] sm:%s69]
        %107 = vst [vmem:[%s77 + $0x38] sm:%s69] %v106
        %v108 = vld [vmem:[%s76 + $0x3c] sm:%s69]
        %109 = vst [vmem:[%s77 + $0x3c] sm:%s69] %v108
        %v110 = vld [vmem:[%s76 + $0x40] sm:%s69]
        %111 = vst [vmem:[%s77 + $0x40] sm:%s69] %v110
        %v112 = vld [vmem:[%s76 + $0x60] sm:%s69]
        %113 = vst [vmem:[%s77 + $0x44] sm:%s69] %v112
        %v114 = vld [vmem:[%s76 + $0x44] sm:%s69]
        %115 = vst [vmem:[%s77 + $0x48] sm:%s69] %v114
        %v116 = vld [vmem:[%s76 + $0x64] sm:%s69]
        %117 = vst [vmem:[%s77 + $0x4c] sm:%s69] %v116
        %v118 = vld [vmem:[%s76 + $0x48] sm:%s69]
        %119 = vst [vmem:[%s77 + $0x50] sm:%s69] %v118
        %v120 = vld [vmem:[%s76 + $0x68] sm:%s69]
        %121 = vst [vmem:[%s77 + $0x54] sm:%s69] %v120
        %v122 = vld [vmem:[%s76 + $0x4c] sm:%s69]
        %123 = vst [vmem:[%s77 + $0x58] sm:%s69] %v122
        %v124 = vld [vmem:[%s76 + $0x6c] sm:%s69]
        %125 = vst [vmem:[%s77 + $0x5c] sm:%s69] %v124
        %v126 = vld [vmem:[%s76 + $0x50] sm:%s69]
        %127 = vst [vmem:[%s77 + $0x60] sm:%s69] %v126
        %v128 = vld [vmem:[%s76 + $0x70] sm:%s69]
        %129 = vst [vmem:[%s77 + $0x64] sm:%s69] %v128
        %v130 = vld [vmem:[%s76 + $0x54] sm:%s69]
        %131 = vst [vmem:[%s77 + $0x68] sm:%s69] %v130
        %v132 = vld [vmem:[%s76 + $0x74] sm:%s69]
        %133 = vst [vmem:[%s77 + $0x6c] sm:%s69] %v132
        %v134 = vld [vmem:[%s76 + $0x58] sm:%s69]
        %135 = vst [vmem:[%s77 + $0x70] sm:%s69] %v134
        %v136 = vld [vmem:[%s76 + $0x78] sm:%s69]
        %137 = vst [vmem:[%s77 + $0x74] sm:%s69] %v136
        %v138 = vld [vmem:[%s76 + $0x5c] sm:%s69]
        %139 = vst [vmem:[%s77 + $0x78] sm:%s69] %v138
        %v140 = vld [vmem:[%s76 + $0x7c] sm:%s69]
        %141 = vst [vmem:[%s77 + $0x7c] sm:%s69] %v140
        %v142 = vld [vmem:[%s76 + $0x80] sm:%s69]
        %143 = vst [vmem:[%s77 + $0x80] sm:%s69] %v142
        %v144 = vld [vmem:[%s76 + $0xa0] sm:%s69]
        %145 = vst [vmem:[%s77 + $0x84] sm:%s69] %v144
        %v146 = vld [vmem:[%s76 + $0x84] sm:%s69]
        %147 = vst [vmem:[%s77 + $0x88] sm:%s69] %v146
        %v148 = vld [vmem:[%s76 + $0xa4] sm:%s69]
        %149 = vst [vmem:[%s77 + $0x8c] sm:%s69] %v148
        %v150 = vld [vmem:[%s76 + $0x88] sm:%s69]
        %151 = vst [vmem:[%s77 + $0x90] sm:%s69] %v150
        %v152 = vld [vmem:[%s76 + $0xa8] sm:%s69]
        %153 = vst [vmem:[%s77 + $0x94] sm:%s69] %v152
        %v154 = vld [vmem:[%s76 + $0x8c] sm:%s69]
        %155 = vst [vmem:[%s77 + $0x98] sm:%s69] %v154
        %v156 = vld [vmem:[%s76 + $0xac] sm:%s69]
        %157 = vst [vmem:[%s77 + $0x9c] sm:%s69] %v156
        %v158 = vld [vmem:[%s76 + $0x90] sm:%s69]
        %159 = vst [vmem:[%s77 + $0xa0] sm:%s69] %v158
        %v160 = vld [vmem:[%s76 + $0xb0] sm:%s69]
        %161 = vst [vmem:[%s77 + $0xa4] sm:%s69] %v160
        %v162 = vld [vmem:[%s76 + $0x94] sm:%s69]
        %163 = vst [vmem:[%s77 + $0xa8] sm:%s69] %v162
        %v164 = vld [vmem:[%s76 + $0xb4] sm:%s69]
        %165 = vst [vmem:[%s77 + $0xac] sm:%s69] %v164
        %v166 = vld [vmem:[%s76 + $0x98] sm:%s69]
        %167 = vst [vmem:[%s77 + $0xb0] sm:%s69] %v166
        %v168 = vld [vmem:[%s76 + $0xb8] sm:%s69]
        %169 = vst [vmem:[%s77 + $0xb4] sm:%s69] %v168
        %v170 = vld [vmem:[%s76 + $0x9c] sm:%s69]
        %171 = vst [vmem:[%s77 + $0xb8] sm:%s69] %v170
        %v172 = vld [vmem:[%s76 + $0xbc] sm:%s69]
        %173 = vst [vmem:[%s77 + $0xbc] sm:%s69] %v172
        %v174 = vld [vmem:[%s76 + $0xc0] sm:%s69]
        %175 = vst [vmem:[%s77 + $0xc0] sm:%s69] %v174
        %v176 = vld [vmem:[%s76 + $0xe0] sm:%s69]
        %177 = vst [vmem:[%s77 + $0xc4] sm:%s69] %v176
        %v178 = vld [vmem:[%s76 + $0xc4] sm:%s69]
        %179 = vst [vmem:[%s77 + $0xc8] sm:%s69] %v178
        %v180 = vld [vmem:[%s76 + $0xe4] sm:%s69]
        %181 = vst [vmem:[%s77 + $0xcc] sm:%s69] %v180
        %v182 = vld [vmem:[%s76 + $0xc8] sm:%s69]
        %183 = vst [vmem:[%s77 + $0xd0] sm:%s69] %v182
        %v184 = vld [vmem:[%s76 + $0xe8] sm:%s69]
        %185 = vst [vmem:[%s77 + $0xd4] sm:%s69] %v184
        %v186 = vld [vmem:[%s76 + $0xcc] sm:%s69]
        %187 = vst [vmem:[%s77 + $0xd8] sm:%s69] %v186
        %v188 = vld [vmem:[%s76 + $0xec] sm:%s69]
        %189 = vst [vmem:[%s77 + $0xdc] sm:%s69] %v188
        %v190 = vld [vmem:[%s76 + $0xd0] sm:%s69]
        %191 = vst [vmem:[%s77 + $0xe0] sm:%s69] %v190
        %v192 = vld [vmem:[%s76 + $0xf0] sm:%s69]
        %193 = vst [vmem:[%s77 + $0xe4] sm:%s69] %v192
        %v194 = vld [vmem:[%s76 + $0xd4] sm:%s69]
        %195 = vst [vmem:[%s77 + $0xe8] sm:%s69] %v194
        %v196 = vld [vmem:[%s76 + $0xf4] sm:%s69]
        %197 = vst [vmem:[%s77 + $0xec] sm:%s69] %v196
        %v198 = vld [vmem:[%s76 + $0xd8] sm:%s69]
        %199 = vst [vmem:[%s77 + $0xf0] sm:%s69] %v198
        %v200 = vld [vmem:[%s76 + $0xf8] sm:%s69]
        %201 = vst [vmem:[%s77 + $0xf4] sm:%s69] %v200
        %v202 = vld [vmem:[%s76 + $0xdc] sm:%s69]
        %203 = vst [vmem:[%s77 + $0xf8] sm:%s69] %v202
        %v204 = vld [vmem:[%s76 + $0xfc] sm:%s69]
        %205 = vst [vmem:[%s77 + $0xfc] sm:%s69] %v204
        %v206 = vld [vmem:[%s76 + $0x100] sm:%s69]
        %207 = vst [vmem:[%s77 + $0x100] sm:%s69] %v206
        %v208 = vld [vmem:[%s76 + $0x120] sm:%s69]
        %209 = vst [vmem:[%s77 + $0x104] sm:%s69] %v208
        %v210 = vld [vmem:[%s76 + $0x104] sm:%s69]
        %211 = vst [vmem:[%s77 + $0x108] sm:%s69] %v210
        %v212 = vld [vmem:[%s76 + $0x124] sm:%s69]
        %213 = vst [vmem:[%s77 + $0x10c] sm:%s69] %v212
        %v214 = vld [vmem:[%s76 + $0x108] sm:%s69]
        %215 = vst [vmem:[%s77 + $0x110] sm:%s69] %v214
        %v216 = vld [vmem:[%s76 + $0x128] sm:%s69]
        %217 = vst [vmem:[%s77 + $0x114] sm:%s69] %v216
        %v218 = vld [vmem:[%s76 + $0x10c] sm:%s69]
        %219 = vst [vmem:[%s77 + $0x118] sm:%s69] %v218
        %v220 = vld [vmem:[%s76 + $0x12c] sm:%s69]
        %221 = vst [vmem:[%s77 + $0x11c] sm:%s69] %v220
        %v222 = vld [vmem:[%s76 + $0x110] sm:%s69]
        %223 = vst [vmem:[%s77 + $0x120] sm:%s69] %v222
        %v224 = vld [vmem:[%s76 + $0x130] sm:%s69]
        %225 = vst [vmem:[%s77 + $0x124] sm:%s69] %v224
        %v226 = vld [vmem:[%s76 + $0x114] sm:%s69]
        %227 = vst [vmem:[%s77 + $0x128] sm:%s69] %v226
        %v228 = vld [vmem:[%s76 + $0x134] sm:%s69]
        %229 = vst [vmem:[%s77 + $0x12c] sm:%s69] %v228
        %v230 = vld [vmem:[%s76 + $0x118] sm:%s69]
        %231 = vst [vmem:[%s77 + $0x130] sm:%s69] %v230
        %v232 = vld [vmem:[%s76 + $0x138] sm:%s69]
        %233 = vst [vmem:[%s77 + $0x134] sm:%s69] %v232
        %v234 = vld [vmem:[%s76 + $0x11c] sm:%s69]
        %235 = vst [vmem:[%s77 + $0x138] sm:%s69] %v234
        %v236 = vld [vmem:[%s76 + $0x13c] sm:%s69]
        %237 = vst [vmem:[%s77 + $0x13c] sm:%s69] %v236
        %v238 = vld [vmem:[%s76 + $0x140] sm:%s69]
        %239 = vst [vmem:[%s77 + $0x140] sm:%s69] %v238
        %v240 = vld [vmem:[%s76 + $0x160] sm:%s69]
        %241 = vst [vmem:[%s77 + $0x144] sm:%s69] %v240
        %v242 = vld [vmem:[%s76 + $0x144] sm:%s69]
        %243 = vst [vmem:[%s77 + $0x148] sm:%s69] %v242
        %v244 = vld [vmem:[%s76 + $0x164] sm:%s69]
        %245 = vst [vmem:[%s77 + $0x14c] sm:%s69] %v244
        %v246 = vld [vmem:[%s76 + $0x148] sm:%s69]
        %247 = vst [vmem:[%s77 + $0x150] sm:%s69] %v246
        %v248 = vld [vmem:[%s76 + $0x168] sm:%s69]
        %249 = vst [vmem:[%s77 + $0x154] sm:%s69] %v248
        %v250 = vld [vmem:[%s76 + $0x14c] sm:%s69]
        %251 = vst [vmem:[%s77 + $0x158] sm:%s69] %v250
        %v252 = vld [vmem:[%s76 + $0x16c] sm:%s69]
        %253 = vst [vmem:[%s77 + $0x15c] sm:%s69] %v252
        %v254 = vld [vmem:[%s76 + $0x150] sm:%s69]
        %255 = vst [vmem:[%s77 + $0x160] sm:%s69] %v254
        %v256 = vld [vmem:[%s76 + $0x170] sm:%s69]
        %257 = vst [vmem:[%s77 + $0x164] sm:%s69] %v256
        %v258 = vld [vmem:[%s76 + $0x154] sm:%s69]
        %259 = vst [vmem:[%s77 + $0x168] sm:%s69] %v258
        %v260 = vld [vmem:[%s76 + $0x174] sm:%s69]
        %261 = vst [vmem:[%s77 + $0x16c] sm:%s69] %v260
        %v262 = vld [vmem:[%s76 + $0x158] sm:%s69]
        %263 = vst [vmem:[%s77 + $0x170] sm:%s69] %v262
        %v264 = vld [vmem:[%s76 + $0x178] sm:%s69]
        %265 = vst [vmem:[%s77 + $0x174] sm:%s69] %v264
        %v266 = vld [vmem:[%s76 + $0x15c] sm:%s69]
        %267 = vst [vmem:[%s77 + $0x178] sm:%s69] %v266
        %v268 = vld [vmem:[%s76 + $0x17c] sm:%s69]
        %269 = vst [vmem:[%s77 + $0x17c] sm:%s69] %v268
        %v270 = vld [vmem:[%s76 + $0x180] sm:%s69]
        %271 = vst [vmem:[%s77 + $0x180] sm:%s69] %v270
        %v272 = vld [vmem:[%s76 + $0x1a0] sm:%s69]
        %273 = vst [vmem:[%s77 + $0x184] sm:%s69] %v272
        %v274 = vld [vmem:[%s76 + $0x184] sm:%s69]
        %275 = vst [vmem:[%s77 + $0x188] sm:%s69] %v274
        %v276 = vld [vmem:[%s76 + $0x1a4] sm:%s69]
        %277 = vst [vmem:[%s77 + $0x18c] sm:%s69] %v276
        %v278 = vld [vmem:[%s76 + $0x188] sm:%s69]
        %279 = vst [vmem:[%s77 + $0x190] sm:%s69] %v278
        %v280 = vld [vmem:[%s76 + $0x1a8] sm:%s69]
        %281 = vst [vmem:[%s77 + $0x194] sm:%s69] %v280
        %v282 = vld [vmem:[%s76 + $0x18c] sm:%s69]
        %283 = vst [vmem:[%s77 + $0x198] sm:%s69] %v282
        %v284 = vld [vmem:[%s76 + $0x1ac] sm:%s69]
        %285 = vst [vmem:[%s77 + $0x19c] sm:%s69] %v284
        %v286 = vld [vmem:[%s76 + $0x190] sm:%s69]
        %287 = vst [vmem:[%s77 + $0x1a0] sm:%s69] %v286
        %v288 = vld [vmem:[%s76 + $0x1b0] sm:%s69]
        %289 = vst [vmem:[%s77 + $0x1a4] sm:%s69] %v288
        %v290 = vld [vmem:[%s76 + $0x194] sm:%s69]
        %291 = vst [vmem:[%s77 + $0x1a8] sm:%s69] %v290
        %v292 = vld [vmem:[%s76 + $0x1b4] sm:%s69]
        %293 = vst [vmem:[%s77 + $0x1ac] sm:%s69] %v292
        %v294 = vld [vmem:[%s76 + $0x198] sm:%s69]
        %295 = vst [vmem:[%s77 + $0x1b0] sm:%s69] %v294
        %v296 = vld [vmem:[%s76 + $0x1b8] sm:%s69]
        %297 = vst [vmem:[%s77 + $0x1b4] sm:%s69] %v296
        %v298 = vld [vmem:[%s76 + $0x19c] sm:%s69]
        %299 = vst [vmem:[%s77 + $0x1b8] sm:%s69] %v298
        %v300 = vld [vmem:[%s76 + $0x1bc] sm:%s69]
        %301 = vst [vmem:[%s77 + $0x1bc] sm:%s69] %v300
        %v302 = vld [vmem:[%s76 + $0x1c0] sm:%s69]
        %303 = vst [vmem:[%s77 + $0x1c0] sm:%s69] %v302
        %v304 = vld [vmem:[%s76 + $0x1e0] sm:%s69]
        %305 = vst [vmem:[%s77 + $0x1c4] sm:%s69] %v304
        %v306 = vld [vmem:[%s76 + $0x1c4] sm:%s69]
        %307 = vst [vmem:[%s77 + $0x1c8] sm:%s69] %v306
        %v308 = vld [vmem:[%s76 + $0x1e4] sm:%s69]
        %309 = vst [vmem:[%s77 + $0x1cc] sm:%s69] %v308
        %v310 = vld [vmem:[%s76 + $0x1c8] sm:%s69]
        %311 = vst [vmem:[%s77 + $0x1d0] sm:%s69] %v310
        %v312 = vld [vmem:[%s76 + $0x1e8] sm:%s69]
        %313 = vst [vmem:[%s77 + $0x1d4] sm:%s69] %v312
        %v314 = vld [vmem:[%s76 + $0x1cc] sm:%s69]
        %315 = vst [vmem:[%s77 + $0x1d8] sm:%s69] %v314
        %v316 = vld [vmem:[%s76 + $0x1ec] sm:%s69]
        %317 = vst [vmem:[%s77 + $0x1dc] sm:%s69] %v316
        %v318 = vld [vmem:[%s76 + $0x1d0] sm:%s69]
        %319 = vst [vmem:[%s77 + $0x1e0] sm:%s69] %v318
        %v320 = vld [vmem:[%s76 + $0x1f0] sm:%s69]
        %321 = vst [vmem:[%s77 + $0x1e4] sm:%s69] %v320
        %v322 = vld [vmem:[%s76 + $0x1d4] sm:%s69]
        %323 = vst [vmem:[%s77 + $0x1e8] sm:%s69] %v322
        %v324 = vld [vmem:[%s76 + $0x1f4] sm:%s69]
        %325 = vst [vmem:[%s77 + $0x1ec] sm:%s69] %v324
        %v326 = vld [vmem:[%s76 + $0x1d8] sm:%s69]
        %327 = vst [vmem:[%s77 + $0x1f0] sm:%s69] %v326
        %v328 = vld [vmem:[%s76 + $0x1f8] sm:%s69]
        %329 = vst [vmem:[%s77 + $0x1f4] sm:%s69] %v328
        %v330 = vld [vmem:[%s76 + $0x1dc] sm:%s69]
        %331 = vst [vmem:[%s77 + $0x1f8] sm:%s69] %v330
        %v332 = vld [vmem:[%s76 + $0x1fc] sm:%s69]
        %333 = vst [vmem:[%s77 + $0x1fc] sm:%s69] %v332
      $region54: #{lstm_model_forward_fn.1} parent=48 // loop_footer
        %s75 = sadd.s32 1, %s71
      $region55: #{lstm_model_forward_fn.1} parent=48 // loop_footer_branch
        %70 = sbr.rel target = $region51
      $region56: #{lstm_model_forward_fn.1} parent=48 // loop_exit
        _
    $region49: #{lstm_model_forward_fn.1} parent=1 // pred_fallthru
      _
    // Predicated region
    $region75: #{lstm_model_forward_fn.1} parent=1 // pred_check
      _
    $region76: #{lstm_model_forward_fn.1} parent=1 // pred_check_branch
      %619 = sbr.rel (0) target = $region78
    $region77: #{lstm_model_forward_fn.1} parent=1 // pred_region
      %620 = vsyncadd [#allocation6], 8192
    $region78: #{lstm_model_forward_fn.1} parent=1 // pred_fallthru
      _
    %s621 = scalar_lea.sflag [#allocation6], 1
    %s623 = sshll.u32 1, 14
    %s624 = sxor.u32 4294967295, %s623
    %s626 = sld [smem:[#allocation0]]
    %s627 = sadd.s32 2, %s626
    %s629 = sshll.u32 7, 26
    %s630 = sxor.u32 4294967295, %s629
    %s631 = sand.u32 0, %s630
    %s632 = sshll.u32 %s627, 26
    %s633 = sor.u32 %s631, %s632
    %s634 = sshll.u32 [#allocation4], 4
    %s635 = int_to_ptr.vmem [resolvable:$true] %s634
    %638 = sst [smem:[#allocation13]] 1024
    %s639 = scalar_lea.smem [#allocation13], 1
    %640 = sst [smem:[%s639]] 1024
    %s641 = scalar_lea.smem [#allocation13], 2
    %642 = sst [smem:[%s641]] 8
    %s643 = scalar_lea.smem [#allocation13], 3
    %644 = sst [smem:[%s643]] 64
    %s645 = scalar_lea.smem [#allocation13], 4
    %646 = sst [smem:[%s645]] 128
    %s647 = scalar_lea.smem [#allocation13], 5
    %648 = sst [smem:[%s647]] 2
    %s649 = scalar_lea.smem [#allocation13], 6
    %650 = sst [smem:[%s649]] 512
    %s651 = scalar_lea.smem [#allocation13], 7
    %652 = sst [smem:[%s651]] 64
    %s653 = scalar_lea.smem [#allocation13], 8
    %654 = sst [smem:[%s653]] 4
    %656 = dma.general %s5, 16384, %s635, %s621, [#allocation12], [#allocation13], %s633, 0
    %s657 = scalar_lea.sflag [#allocation6], 2
    %s659 = sshll.u32 1, 14
    %s660 = sxor.u32 4294967295, %s659
    %s662 = sadd.s32 2, %s626
    %s664 = sshll.u32 7, 26
    %s665 = sxor.u32 4294967295, %s664
    %s666 = sand.u32 0, %s665
    %s667 = sshll.u32 %s662, 26
    %s668 = sor.u32 %s666, %s667
    %s669 = sshll.u32 [#allocation5], 4
    %s670 = int_to_ptr.vmem [resolvable:$true] %s669
    %673 = sst [smem:[#allocation15]] 768
    %s674 = scalar_lea.smem [#allocation15], 1
    %675 = sst [smem:[%s674]] 768
    %s676 = scalar_lea.smem [#allocation15], 2
    %677 = sst [smem:[%s676]] 6
    %s678 = scalar_lea.smem [#allocation15], 3
    %679 = sst [smem:[%s678]] 64
    %s680 = scalar_lea.smem [#allocation15], 4
    %681 = sst [smem:[%s680]] 128
    %s682 = scalar_lea.smem [#allocation15], 5
    %683 = sst [smem:[%s682]] 2
    %s684 = scalar_lea.smem [#allocation15], 6
    %685 = sst [smem:[%s684]] 384
    %s686 = scalar_lea.smem [#allocation15], 7
    %687 = sst [smem:[%s686]] 64
    %s688 = scalar_lea.smem [#allocation15], 8
    %689 = sst [smem:[%s688]] 4
    %691 = dma.general %s7, 12288, %s670, %s657, [#allocation14], [#allocation15], %s668, 0
    %v692 = vld [vmem:[%s0] sm:$0xff]
    %v693 = vld [vmem:[%s0 + $0x8] sm:$0xff]
    %v694 = vld [vmem:[%s0 + $0x10] sm:$0xff]
    %v695 = vld [vmem:[%s0 + $0x18] sm:$0xff]
    %v696 = vld [vmem:[%s0 + $0x20] sm:$0xff]
    %v697 = vld [vmem:[%s0 + $0x28] sm:$0xff]
    %v698 = vld [vmem:[%s0 + $0x30] sm:$0xff]
    %v699 = vld [vmem:[%s0 + $0x38] sm:$0xff]
    %v700 = vld [vmem:[%s0 + $0x40] sm:$0xff]
    %v701 = vld [vmem:[%s0 + $0x48] sm:$0xff]
    %v702 = vld [vmem:[%s0 + $0x50] sm:$0xff]
    %v703 = vld [vmem:[%s0 + $0x58] sm:$0xff]
    %v704 = vld [vmem:[%s0 + $0x60] sm:$0xff]
    %v705 = vld [vmem:[%s0 + $0x68] sm:$0xff]
    %v706 = vld [vmem:[%s0 + $0x70] sm:$0xff]
    %v707 = vld [vmem:[%s0 + $0x78] sm:$0xff]
    %v708 = vpack.c.bf16 %v694, %v692
    %v709 = vpack.c.bf16 %v695, %v693
    %v710 = vpack.c.bf16 %v698, %v696
    %v711 = vpack.c.bf16 %v699, %v697
    %v712 = vpack.c.bf16 %v702, %v700
    %v713 = vpack.c.bf16 %v703, %v701
    %v714 = vpack.c.bf16 %v706, %v704
    %v715 = vpack.c.bf16 %v707, %v705
    %v716 = vld [vmem:[#allocation7] sm:$0xff]
    %v717 = vld [vmem:[#allocation7 + $0x8] sm:$0xff]
    %v718 = vld [vmem:[#allocation7 + $0x10] sm:$0xff]
    %v719 = vld [vmem:[#allocation7 + $0x18] sm:$0xff]
    %v720 = vld [vmem:[#allocation7 + $0x20] sm:$0xff]
    %v721 = vld [vmem:[#allocation7 + $0x28] sm:$0xff]
    %v722 = vld [vmem:[#allocation7 + $0x30] sm:$0xff]
    %v723 = vld [vmem:[#allocation7 + $0x38] sm:$0xff]
    %v724 = vld [vmem:[#allocation7 + $0x40] sm:$0xff]
    %v725 = vld [vmem:[#allocation7 + $0x48] sm:$0xff]
    %v726 = vld [vmem:[#allocation7 + $0x50] sm:$0xff]
    %v727 = vld [vmem:[#allocation7 + $0x58] sm:$0xff]
    %v728 = vld [vmem:[#allocation7 + $0x60] sm:$0xff]
    %v729 = vld [vmem:[#allocation7 + $0x68] sm:$0xff]
    %v730 = vld [vmem:[#allocation7 + $0x70] sm:$0xff]
    %v731 = vld [vmem:[#allocation7 + $0x78] sm:$0xff]
    %v732 = vld [vmem:[#allocation7 + $0x80] sm:$0xff]
    %v733 = vld [vmem:[#allocation7 + $0x88] sm:$0xff]
    %v734 = vld [vmem:[#allocation7 + $0x90] sm:$0xff]
    %v735 = vld [vmem:[#allocation7 + $0x98] sm:$0xff]
    %v736 = vld [vmem:[#allocation7 + $0xa0] sm:$0xff]
    %v737 = vld [vmem:[#allocation7 + $0xa8] sm:$0xff]
    %v738 = vld [vmem:[#allocation7 + $0xb0] sm:$0xff]
    %v739 = vld [vmem:[#allocation7 + $0xb8] sm:$0xff]
    %v740 = vld [vmem:[#allocation7 + $0xc0] sm:$0xff]
    %v741 = vld [vmem:[#allocation7 + $0xc8] sm:$0xff]
    %v742 = vld [vmem:[#allocation7 + $0xd0] sm:$0xff]
    %v743 = vld [vmem:[#allocation7 + $0xd8] sm:$0xff]
    %v744 = vld [vmem:[#allocation7 + $0xe0] sm:$0xff]
    %v745 = vld [vmem:[#allocation7 + $0xe8] sm:$0xff]
    %v746 = vld [vmem:[#allocation7 + $0xf0] sm:$0xff]
    %v747 = vld [vmem:[#allocation7 + $0xf8] sm:$0xff]
    %v748 = vld [vmem:[#allocation7 + $0x100] sm:$0x33]
    %v749 = vld [vmem:[#allocation7 + $0x108] sm:$0x33]
    %v750 = vld [vmem:[%s3] sm:$0xf]
    %v752 = vlaneseq
    %v753 = vshrl.u32 %v752, 7
    %v754 = vsub.s32 0, %v753
    %v755 = vrot.slane %v750, %v754
    %v756 = vlaneseq
    %v757 = vshrl.u32 %v756, 7
    %v758 = vsub.s32 1, %v757
    %v759 = vrot.slane %v750, %v758
    %v760 = vlaneseq
    %v761 = vshrl.u32 %v760, 7
    %v762 = vsub.s32 2, %v761
    %v763 = vrot.slane %v750, %v762
    %v764 = vlaneseq
    %v765 = vshrl.u32 %v764, 7
    %v766 = vsub.s32 3, %v765
    %v767 = vrot.slane %v750, %v766
    %v806 = vunpack.c.l.b16 %v716
    %v807 = vunpack.c.h.b16 %v716
    %v808 = vunpack.c.l.b16 %v717
    %v809 = vunpack.c.h.b16 %v717
    %v810 = vunpack.c.l.b16 %v718
    %v811 = vunpack.c.h.b16 %v718
    %v812 = vunpack.c.l.b16 %v719
    %v813 = vunpack.c.h.b16 %v719
    %v814 = vunpack.c.l.b16 %v720
    %v815 = vunpack.c.h.b16 %v720
    %v816 = vunpack.c.l.b16 %v721
    %v817 = vunpack.c.h.b16 %v721
    %v818 = vunpack.c.l.b16 %v722
    %v819 = vunpack.c.h.b16 %v722
    %v820 = vunpack.c.l.b16 %v723
    %v821 = vunpack.c.h.b16 %v723
    %v822 = vunpack.c.l.b16 %v724
    %v823 = vunpack.c.h.b16 %v724
    %v824 = vunpack.c.l.b16 %v725
    %v825 = vunpack.c.h.b16 %v725
    %v826 = vunpack.c.l.b16 %v726
    %v827 = vunpack.c.h.b16 %v726
    %v828 = vunpack.c.l.b16 %v727
    %v829 = vunpack.c.h.b16 %v727
    %v830 = vunpack.c.l.b16 %v728
    %v831 = vunpack.c.h.b16 %v728
    %v832 = vunpack.c.l.b16 %v729
    %v833 = vunpack.c.h.b16 %v729
    %v834 = vunpack.c.l.b16 %v730
    %v835 = vunpack.c.h.b16 %v730
    %v836 = vunpack.c.l.b16 %v731
    %v837 = vunpack.c.h.b16 %v731
    %v838 = vunpack.c.l.b16 %v732
    %v839 = vunpack.c.h.b16 %v732
    %v840 = vunpack.c.l.b16 %v733
    %v841 = vunpack.c.h.b16 %v733
    %v842 = vunpack.c.l.b16 %v734
    %v843 = vunpack.c.h.b16 %v734
    %v844 = vunpack.c.l.b16 %v735
    %v845 = vunpack.c.h.b16 %v735
    %v846 = vunpack.c.l.b16 %v736
    %v847 = vunpack.c.h.b16 %v736
    %v848 = vunpack.c.l.b16 %v737
    %v849 = vunpack.c.h.b16 %v737
    %v850 = vunpack.c.l.b16 %v738
    %v851 = vunpack.c.h.b16 %v738
    %v852 = vunpack.c.l.b16 %v739
    %v853 = vunpack.c.h.b16 %v739
    %v854 = vunpack.c.l.b16 %v740
    %v855 = vunpack.c.h.b16 %v740
    %v856 = vunpack.c.l.b16 %v741
    %v857 = vunpack.c.h.b16 %v741
    %v858 = vunpack.c.l.b16 %v742
    %v859 = vunpack.c.h.b16 %v742
    %v860 = vunpack.c.l.b16 %v743
    %v861 = vunpack.c.h.b16 %v743
    %v862 = vunpack.c.l.b16 %v744
    %v863 = vunpack.c.h.b16 %v744
    %v864 = vunpack.c.l.b16 %v745
    %v865 = vunpack.c.h.b16 %v745
    %v866 = vunpack.c.l.b16 %v746
    %v867 = vunpack.c.h.b16 %v746
    %v868 = vunpack.c.l.b16 %v747
    %v869 = vunpack.c.h.b16 %v747
    %v870 = vunpack.c.l.b16 %v748
    %v871 = vunpack.c.h.b16 %v748
    %v872 = vunpack.c.l.b16 %v749
    %v873 = vunpack.c.h.b16 %v749
    %v874 = vpack.c.b16 %v810, %v806
    %v875 = vpack.c.b16 %v811, %v807
    %v876 = vpack.c.b16 %v812, %v808
    %v877 = vpack.c.b16 %v813, %v809
    %v878 = vpack.c.b16 %v818, %v814
    %v879 = vpack.c.b16 %v819, %v815
    %v880 = vpack.c.b16 %v820, %v816
    %v881 = vpack.c.b16 %v821, %v817
    %v882 = vpack.c.b16 %v826, %v822
    %v883 = vpack.c.b16 %v827, %v823
    %v884 = vpack.c.b16 %v828, %v824
    %v885 = vpack.c.b16 %v829, %v825
    %v886 = vpack.c.b16 %v834, %v830
    %v887 = vpack.c.b16 %v835, %v831
    %v888 = vpack.c.b16 %v836, %v832
    %v889 = vpack.c.b16 %v837, %v833
    %v890 = vpack.c.b16 %v842, %v838
    %v891 = vpack.c.b16 %v843, %v839
    %v892 = vpack.c.b16 %v844, %v840
    %v893 = vpack.c.b16 %v845, %v841
    %v894 = vpack.c.b16 %v850, %v846
    %v895 = vpack.c.b16 %v851, %v847
    %v896 = vpack.c.b16 %v852, %v848
    %v897 = vpack.c.b16 %v853, %v849
    %v898 = vpack.c.b16 %v858, %v854
    %v899 = vpack.c.b16 %v859, %v855
    %v900 = vpack.c.b16 %v860, %v856
    %v901 = vpack.c.b16 %v861, %v857
    %v902 = vpack.c.b16 %v866, %v862
    %v903 = vpack.c.b16 %v867, %v863
    %v904 = vpack.c.b16 %v868, %v864
    %v905 = vpack.c.b16 %v869, %v865
    %v906 = vpack.c.b16 %v870, %v870
    %v907 = vpack.c.b16 %v871, %v871
    %v908 = vpack.c.b16 %v872, %v872
    %v909 = vpack.c.b16 %v873, %v873
    %vm942 = vcmask 31744
    %v944 = vsel %vm942, %v709, 0
    %v947 = vsel %vm942, %v711, 0
    %v950 = vsel %vm942, %v713, 0
    %v953 = vsel %vm942, %v715, 0
    %vm955 = vcmask 1041408
    %v957 = vsel %vm955, %v906, 0
    %v960 = vsel %vm955, %v907, 0
    %v963 = vsel %vm955, %v908, 0
    %v966 = vsel %vm955, %v909, 0
    %968 = vmatprep.subr.bf16.mxu0 %v875
    %969 = vmatpush1.bf16.msra.mxu0 %v874
    %970 = vmatprep.subr.bf16.mxu0 %v879
    %971 = vmatpush1.bf16.msra.mxu0 %v878
    %972 = vmatprep.subr.bf16.mxu0 %v883
    %973 = vmatpush1.bf16.msra.mxu0 %v882
    %974 = vmatprep.subr.bf16.mxu0 %v887
    %975 = vmatpush1.bf16.msra.mxu0 %v886
    %976 = vmatprep.subr.bf16.mxu0 %v891
    %977 = vmatpush1.bf16.msra.mxu0 %v890
    %978 = vmatprep.subr.bf16.mxu0 %v895
    %979 = vmatpush1.bf16.msra.mxu0 %v894
    %980 = vmatprep.subr.bf16.mxu0 %v899
    %981 = vmatpush1.bf16.msra.mxu0 %v898
    %982 = vmatprep.subr.bf16.mxu0 %v903
    %983 = vmatpush1.bf16.msra.mxu0 %v902
    %984 = vmatprep.subr.bf16.mxu0 %v960
    %985 = vmatpush1.bf16.msra.mxu0 %v957
    %986 = vmatprep.subr.bf16.mxu0 0
    %987 = vmatpush1.bf16.msra.mxu0 0
    %988 = vmatprep.subr.bf16.mxu0 0
    %989 = vmatpush1.bf16.msra.mxu0 0
    %990 = vmatprep.subr.bf16.mxu0 0
    %991 = vmatpush1.bf16.msra.mxu0 0
    %992 = vmatprep.subr.bf16.mxu0 0
    %993 = vmatpush1.bf16.msra.mxu0 0
    %994 = vmatprep.subr.bf16.mxu0 0
    %995 = vmatpush1.bf16.msra.mxu0 0
    %996 = vmatprep.subr.bf16.mxu0 0
    %997 = vmatpush1.bf16.msra.mxu0 0
    %998 = vmatprep.subr.bf16.mxu0 0
    %999 = vmatpush1.bf16.msra.mxu0 0
    %1000 = vmatprep.mubr.bf16.mxu0 %v944
    %1001 = vmatmul.mubr.bf16.gmra.mrb[0].mxu0 %v708
    %v1002 = vpop.f32.mrb[0].mxu0
    %v1003 = vadd.f32 %v755, %v1002
    %v1004 = vpop.f32.mrb[0].mxu0
    %v1005 = vadd.f32 %v759, %v1004
    %v1006 = vpop.f32.mrb[0].mxu0
    %v1007 = vadd.f32 %v755, %v1006
    %v1008 = vpop.f32.mrb[0].mxu0
    %v1009 = vadd.f32 %v759, %v1008
    %1010 = vmatprep.mubr.bf16.mxu0 %v947
    %1011 = vmatmul.mubr.bf16.gmra.mrb[0].mxu0 %v710
    %v1012 = vpop.f32.mrb[0].mxu0
    %v1013 = vadd.f32 %v755, %v1012
    %v1014 = vpop.f32.mrb[0].mxu0
    %v1015 = vadd.f32 %v759, %v1014
    %v1016 = vpop.f32.mrb[0].mxu0
    %v1017 = vadd.f32 %v755, %v1016
    %v1018 = vpop.f32.mrb[0].mxu0
    %v1019 = vadd.f32 %v759, %v1018
    %1020 = vmatprep.mubr.bf16.mxu0 %v950
    %1021 = vmatmul.mubr.bf16.gmra.mrb[0].mxu0 %v712
    %v1022 = vpop.f32.mrb[0].mxu0
    %v1023 = vadd.f32 %v755, %v1022
    %v1024 = vpop.f32.mrb[0].mxu0
    %v1025 = vadd.f32 %v759, %v1024
    %v1026 = vpop.f32.mrb[0].mxu0
    %v1027 = vadd.f32 %v755, %v1026
    %v1028 = vpop.f32.mrb[0].mxu0
    %v1029 = vadd.f32 %v759, %v1028
    %1030 = vmatprep.mubr.bf16.mxu0 %v953
    %1031 = vmatmul.mubr.bf16.gmra.mrb[0].mxu0 %v714
    %v1032 = vpop.f32.mrb[0].mxu0
    %v1033 = vadd.f32 %v755, %v1032
    %v1034 = vpop.f32.mrb[0].mxu0
    %v1035 = vadd.f32 %v759, %v1034
    %v1036 = vpop.f32.mrb[0].mxu0
    %v1037 = vadd.f32 %v755, %v1036
    %v1038 = vpop.f32.mrb[0].mxu0
    %v1039 = vadd.f32 %v759, %v1038
    %1040 = vdwg.mxu0
    %1041 = vmatprep.subr.bf16.mxu0 %v877
    %1042 = vmatpush1.bf16.msra.mxu0 %v876
    %1043 = vmatprep.subr.bf16.mxu0 %v881
    %1044 = vmatpush1.bf16.msra.mxu0 %v880
    %1045 = vmatprep.subr.bf16.mxu0 %v885
    %1046 = vmatpush1.bf16.msra.mxu0 %v884
    %1047 = vmatprep.subr.bf16.mxu0 %v889
    %1048 = vmatpush1.bf16.msra.mxu0 %v888
    %1049 = vmatprep.subr.bf16.mxu0 %v893
    %1050 = vmatpush1.bf16.msra.mxu0 %v892
    %1051 = vmatprep.subr.bf16.mxu0 %v897
    %1052 = vmatpush1.bf16.msra.mxu0 %v896
    %1053 = vmatprep.subr.bf16.mxu0 %v901
    %1054 = vmatpush1.bf16.msra.mxu0 %v900
    %1055 = vmatprep.subr.bf16.mxu0 %v905
    %1056 = vmatpush1.bf16.msra.mxu0 %v904
    %1057 = vmatprep.subr.bf16.mxu0 %v966
    %1058 = vmatpush1.bf16.msra.mxu0 %v963
    %1059 = vmatprep.subr.bf16.mxu0 0
    %1060 = vmatpush1.bf16.msra.mxu0 0
    %1061 = vmatprep.subr.bf16.mxu0 0
    %1062 = vmatpush1.bf16.msra.mxu0 0
    %1063 = vmatprep.subr.bf16.mxu0 0
    %1064 = vmatpush1.bf16.msra.mxu0 0
    %1065 = vmatprep.subr.bf16.mxu0 0
    %1066 = vmatpush1.bf16.msra.mxu0 0
    %1067 = vmatprep.subr.bf16.mxu0 0
    %1068 = vmatpush1.bf16.msra.mxu0 0
    %1069 = vmatprep.subr.bf16.mxu0 0
    %1070 = vmatpush1.bf16.msra.mxu0 0
    %1071 = vmatprep.subr.bf16.mxu0 0
    %1072 = vmatpush1.bf16.msra.mxu0 0
    %1073 = vmatprep.mubr.bf16.mxu0 %v944
    %1074 = vmatmul.mubr.bf16.gmra.mrb[0].mxu0 %v708
    %v1075 = vpop.f32.mrb[0].mxu0
    %v1076 = vadd.f32 %v763, %v1075
    %v1077 = vpop.f32.mrb[0].mxu0
    %v1078 = vadd.f32 %v767, %v1077
    %v1079 = vpop.f32.mrb[0].mxu0
    %v1080 = vadd.f32 %v763, %v1079
    %v1081 = vpop.f32.mrb[0].mxu0
    %v1082 = vadd.f32 %v767, %v1081
    %1083 = vmatprep.mubr.bf16.mxu0 %v947
    %1084 = vmatmul.mubr.bf16.gmra.mrb[0].mxu0 %v710
    %v1085 = vpop.f32.mrb[0].mxu0
    %v1086 = vadd.f32 %v763, %v1085
    %v1087 = vpop.f32.mrb[0].mxu0
    %v1088 = vadd.f32 %v767, %v1087
    %v1089 = vpop.f32.mrb[0].mxu0
    %v1090 = vadd.f32 %v763, %v1089
    %v1091 = vpop.f32.mrb[0].mxu0
    %v1092 = vadd.f32 %v767, %v1091
    %1093 = vmatprep.mubr.bf16.mxu0 %v950
    %1094 = vmatmul.mubr.bf16.gmra.mrb[0].mxu0 %v712
    %v1095 = vpop.f32.mrb[0].mxu0
    %v1096 = vadd.f32 %v763, %v1095
    %v1097 = vpop.f32.mrb[0].mxu0
    %v1098 = vadd.f32 %v767, %v1097
    %v1099 = vpop.f32.mrb[0].mxu0
    %v1100 = vadd.f32 %v763, %v1099
    %v1101 = vpop.f32.mrb[0].mxu0
    %v1102 = vadd.f32 %v767, %v1101
    %1103 = vmatprep.mubr.bf16.mxu0 %v953
    %1104 = vmatmul.mubr.bf16.gmra.mrb[0].mxu0 %v714
    %v1105 = vpop.f32.mrb[0].mxu0
    %v1106 = vadd.f32 %v763, %v1105
    %v1107 = vpop.f32.mrb[0].mxu0
    %v1108 = vadd.f32 %v767, %v1107
    %v1109 = vpop.f32.mrb[0].mxu0
    %v1110 = vadd.f32 %v763, %v1109
    %v1111 = vpop.f32.mrb[0].mxu0
    %v1112 = vadd.f32 %v767, %v1111
    %1113 = vdwg.mxu0
    %1114 = vst [vmem:[#allocation2] sm:$0xff] %v1003
    %1115 = vst [vmem:[#allocation2 + $0x8] sm:$0xff] %v1005
    %1116 = vst [vmem:[#allocation2 + $0x10] sm:$0xff] %v1076
    %1117 = vst [vmem:[#allocation2 + $0x18] sm:$0xff] %v1078
    %1118 = vst [vmem:[#allocation2 + $0x20] sm:$0xff] %v1007
    %1119 = vst [vmem:[#allocation2 + $0x28] sm:$0xff] %v1009
    %1120 = vst [vmem:[#allocation2 + $0x30] sm:$0xff] %v1080
    %1121 = vst [vmem:[#allocation2 + $0x38] sm:$0xff] %v1082
    %1122 = vst [vmem:[#allocation2 + $0x40] sm:$0xff] %v1013
    %1123 = vst [vmem:[#allocation2 + $0x48] sm:$0xff] %v1015
    %1124 = vst [vmem:[#allocation2 + $0x50] sm:$0xff] %v1086
    %1125 = vst [vmem:[#allocation2 + $0x58] sm:$0xff] %v1088
    %1126 = vst [vmem:[#allocation2 + $0x60] sm:$0xff] %v1017
    %1127 = vst [vmem:[#allocation2 + $0x68] sm:$0xff] %v1019
    %1128 = vst [vmem:[#allocation2 + $0x70] sm:$0xff] %v1090
    %1129 = vst [vmem:[#allocation2 + $0x78] sm:$0xff] %v1092
    %1130 = vst [vmem:[#allocation2 + $0x80] sm:$0xff] %v1023
    %1131 = vst [vmem:[#allocation2 + $0x88] sm:$0xff] %v1025
    %1132 = vst [vmem:[#allocation2 + $0x90] sm:$0xff] %v1096
    %1133 = vst [vmem:[#allocation2 + $0x98] sm:$0xff] %v1098
    %1134 = vst [vmem:[#allocation2 + $0xa0] sm:$0xff] %v1027
    %1135 = vst [vmem:[#allocation2 + $0xa8] sm:$0xff] %v1029
    %1136 = vst [vmem:[#allocation2 + $0xb0] sm:$0xff] %v1100
    %1137 = vst [vmem:[#allocation2 + $0xb8] sm:$0xff] %v1102
    %1138 = vst [vmem:[#allocation2 + $0xc0] sm:$0xff] %v1033
    %1139 = vst [vmem:[#allocation2 + $0xc8] sm:$0xff] %v1035
    %1140 = vst [vmem:[#allocation2 + $0xd0] sm:$0xff] %v1106
    %1141 = vst [vmem:[#allocation2 + $0xd8] sm:$0xff] %v1108
    %1142 = vst [vmem:[#allocation2 + $0xe0] sm:$0xff] %v1037
    %1143 = vst [vmem:[#allocation2 + $0xe8] sm:$0xff] %v1039
    %1144 = vst [vmem:[#allocation2 + $0xf0] sm:$0xff] %v1110
    %1145 = vst [vmem:[#allocation2 + $0xf8] sm:$0xff] %v1112
    %v1146 = vld [vmem:[#allocation2] sm:$0xff]
    %v1147 = vld [vmem:[#allocation2 + $0x10] sm:$0xff]
    %v1148 = vld [vmem:[#allocation2 + $0x18] sm:$0xff]
    %v1149 = vxor.u32 %v1146, 2147483648
    %v1150 = vxor.u32 %v1147, 2147483648
    %v1151 = vmul.f32 %v1149, 1.442695
    %v1152 = vpow.pop %v1151
    %v1153 = vmul.f32 %v1150, 1.442695
    %v1154 = vpow.pop %v1153
    %v1155 = vadd.f32 %v1152, 1.0
    %v1156 = vadd.f32 %v1154, 1.0
    %v1157 = vrcp.pop %v1155
    %v1158 = vmul.f32 1.0, %v1157
    %v1159 = vrcp.pop %v1156
    %v1160 = vmul.f32 1.0, %v1159
    %v1161 = vtanh.pop %v1148
    %v1162 = vmul.f32 %v1158, %v1161
    %v1163 = vtanh.pop %v1162
    %v1164 = vmul.f32 %v1160, %v1163
    %v1165 = vpack.c.bf16 %v1164, %v1164
    %s1166 = smul.u32 4, 16
    %s1167 = smul.u32 %s1166, 8
    %s1168 = sshll.u32 %s1167, 4
    %1169 = dma.done [#allocation6], %s1168
    %v1170 = vld [vmem:[#allocation3] sm:$0xff]
    %v1171 = vld [vmem:[#allocation3 + $0x8] sm:$0xff]
    %v1172 = vld [vmem:[#allocation3 + $0x10] sm:$0xff]
    %v1173 = vld [vmem:[#allocation3 + $0x18] sm:$0xff]
    %v1174 = vld [vmem:[#allocation3 + $0x20] sm:$0xff]
    %v1175 = vld [vmem:[#allocation3 + $0x28] sm:$0xff]
    %v1176 = vld [vmem:[#allocation3 + $0x30] sm:$0xff]
    %v1177 = vld [vmem:[#allocation3 + $0x38] sm:$0xff]
    %v1178 = vld [vmem:[#allocation3 + $0x40] sm:$0xff]
    %v1179 = vld [vmem:[#allocation3 + $0x48] sm:$0xff]
    %v1180 = vld [vmem:[#allocation3 + $0x50] sm:$0xff]
    %v1181 = vld [vmem:[#allocation3 + $0x58] sm:$0xff]
    %v1182 = vld [vmem:[#allocation3 + $0x60] sm:$0xff]
    %v1183 = vld [vmem:[#allocation3 + $0x68] sm:$0xff]
    %v1184 = vld [vmem:[#allocation3 + $0x70] sm:$0xff]
    %v1185 = vld [vmem:[#allocation3 + $0x78] sm:$0xff]
    %v1186 = vld [vmem:[#allocation3 + $0x80] sm:$0xff]
    %v1187 = vld [vmem:[#allocation3 + $0x88] sm:$0xff]
    %v1188 = vld [vmem:[#allocation3 + $0x90] sm:$0xff]
    %v1189 = vld [vmem:[#allocation3 + $0x98] sm:$0xff]
    %v1190 = vld [vmem:[#allocation3 + $0xa0] sm:$0xff]
    %v1191 = vld [vmem:[#allocation3 + $0xa8] sm:$0xff]
    %v1192 = vld [vmem:[#allocation3 + $0xb0] sm:$0xff]
    %v1193 = vld [vmem:[#allocation3 + $0xb8] sm:$0xff]
    %v1194 = vld [vmem:[#allocation3 + $0xc0] sm:$0xff]
    %v1195 = vld [vmem:[#allocation3 + $0xc8] sm:$0xff]
    %v1196 = vld [vmem:[#allocation3 + $0xd0] sm:$0xff]
    %v1197 = vld [vmem:[#allocation3 + $0xd8] sm:$0xff]
    %v1198 = vld [vmem:[#allocation3 + $0xe0] sm:$0xff]
    %v1199 = vld [vmem:[#allocation3 + $0xe8] sm:$0xff]
    %v1200 = vld [vmem:[#allocation3 + $0xf0] sm:$0xff]
    %v1201 = vld [vmem:[#allocation3 + $0xf8] sm:$0xff]
    %v1202 = vld [vmem:[#allocation3 + $0x100] sm:$0xff]
    %v1203 = vld [vmem:[#allocation3 + $0x108] sm:$0xff]
    %v1204 = vld [vmem:[#allocation3 + $0x110] sm:$0xff]
    %v1205 = vld [vmem:[#allocation3 + $0x118] sm:$0xff]
    %v1206 = vld [vmem:[#allocation3 + $0x120] sm:$0xff]
    %v1207 = vld [vmem:[#allocation3 + $0x128] sm:$0xff]
    %v1208 = vld [vmem:[#allocation3 + $0x130] sm:$0xff]
    %v1209 = vld [vmem:[#allocation3 + $0x138] sm:$0xff]
    %v1210 = vld [vmem:[#allocation3 + $0x140] sm:$0xff]
    %v1211 = vld [vmem:[#allocation3 + $0x148] sm:$0xff]
    %v1212 = vld [vmem:[#allocation3 + $0x150] sm:$0xff]
    %v1213 = vld [vmem:[#allocation3 + $0x158] sm:$0xff]
    %v1214 = vld [vmem:[#allocation3 + $0x160] sm:$0xff]
    %v1215 = vld [vmem:[#allocation3 + $0x168] sm:$0xff]
    %v1216 = vld [vmem:[#allocation3 + $0x170] sm:$0xff]
    %v1217 = vld [vmem:[#allocation3 + $0x178] sm:$0xff]
    %v1218 = vld [vmem:[#allocation3 + $0x180] sm:$0xff]
    %v1219 = vld [vmem:[#allocation3 + $0x188] sm:$0xff]
    %v1220 = vld [vmem:[#allocation3 + $0x190] sm:$0xff]
    %v1221 = vld [vmem:[#allocation3 + $0x198] sm:$0xff]
    %v1222 = vld [vmem:[#allocation3 + $0x1a0] sm:$0xff]
    %v1223 = vld [vmem:[#allocation3 + $0x1a8] sm:$0xff]
    %v1224 = vld [vmem:[#allocation3 + $0x1b0] sm:$0xff]
    %v1225 = vld [vmem:[#allocation3 + $0x1b8] sm:$0xff]
    %v1226 = vld [vmem:[#allocation3 + $0x1c0] sm:$0xff]
    %v1227 = vld [vmem:[#allocation3 + $0x1c8] sm:$0xff]
    %v1228 = vld [vmem:[#allocation3 + $0x1d0] sm:$0xff]
    %v1229 = vld [vmem:[#allocation3 + $0x1d8] sm:$0xff]
    %v1230 = vld [vmem:[#allocation3 + $0x1e0] sm:$0xff]
    %v1231 = vld [vmem:[#allocation3 + $0x1e8] sm:$0xff]
    %v1232 = vld [vmem:[#allocation3 + $0x1f0] sm:$0xff]
    %v1233 = vld [vmem:[#allocation3 + $0x1f8] sm:$0xff]
    %v1234 = vld [vmem:[%s6] sm:$0xff]
    %v1236 = vlaneseq
    %v1237 = vshrl.u32 %v1236, 7
    %v1238 = vsub.s32 0, %v1237
    %v1239 = vrot.slane %v1234, %v1238
    %v1240 = vlaneseq
    %v1241 = vshrl.u32 %v1240, 7
    %v1242 = vsub.s32 1, %v1241
    %v1243 = vrot.slane %v1234, %v1242
    %v1244 = vlaneseq
    %v1245 = vshrl.u32 %v1244, 7
    %v1246 = vsub.s32 2, %v1245
    %v1247 = vrot.slane %v1234, %v1246
    %v1248 = vlaneseq
    %v1249 = vshrl.u32 %v1248, 7
    %v1250 = vsub.s32 3, %v1249
    %v1251 = vrot.slane %v1234, %v1250
    %v1252 = vlaneseq
    %v1253 = vshrl.u32 %v1252, 7
    %v1254 = vsub.s32 4, %v1253
    %v1255 = vrot.slane %v1234, %v1254
    %v1256 = vlaneseq
    %v1257 = vshrl.u32 %v1256, 7
    %v1258 = vsub.s32 5, %v1257
    %v1259 = vrot.slane %v1234, %v1258
    %v1260 = vlaneseq
    %v1261 = vshrl.u32 %v1260, 7
    %v1262 = vsub.s32 6, %v1261
    %v1263 = vrot.slane %v1234, %v1262
    %v1264 = vlaneseq
    %v1265 = vshrl.u32 %v1264, 7
    %v1266 = vsub.s32 7, %v1265
    %v1267 = vrot.slane %v1234, %v1266
    %1276 = vmatprep.subr.bf16.mxu0 %v1171
    %1277 = vmatpush1.bf16.msra.mxu0 %v1170
    %1278 = vmatprep.subr.bf16.mxu0 %v1179
    %1279 = vmatpush1.bf16.msra.mxu0 %v1178
    %1280 = vmatprep.subr.bf16.mxu0 %v1187
    %1281 = vmatpush1.bf16.msra.mxu0 %v1186
    %1282 = vmatprep.subr.bf16.mxu0 %v1195
    %1283 = vmatpush1.bf16.msra.mxu0 %v1194
    %1284 = vmatprep.subr.bf16.mxu0 %v1203
    %1285 = vmatpush1.bf16.msra.mxu0 %v1202
    %1286 = vmatprep.subr.bf16.mxu0 %v1211
    %1287 = vmatpush1.bf16.msra.mxu0 %v1210
    %1288 = vmatprep.subr.bf16.mxu0 %v1219
    %1289 = vmatpush1.bf16.msra.mxu0 %v1218
    %1290 = vmatprep.subr.bf16.mxu0 %v1227
    %1291 = vmatpush1.bf16.msra.mxu0 %v1226
    %1292 = vmatprep.subr.bf16.mxu0 0
    %1293 = vmatpush1.bf16.msra.mxu0 0
    %1294 = vmatprep.subr.bf16.mxu0 0
    %1295 = vmatpush1.bf16.msra.mxu0 0
    %1296 = vmatprep.subr.bf16.mxu0 0
    %1297 = vmatpush1.bf16.msra.mxu0 0
    %1298 = vmatprep.subr.bf16.mxu0 0
    %1299 = vmatpush1.bf16.msra.mxu0 0
    %1300 = vmatprep.subr.bf16.mxu0 0
    %1301 = vmatpush1.bf16.msra.mxu0 0
    %1302 = vmatprep.subr.bf16.mxu0 0
    %1303 = vmatpush1.bf16.msra.mxu0 0
    %1304 = vmatprep.subr.bf16.mxu0 0
    %1305 = vmatpush1.bf16.msra.mxu0 0
    %1306 = vmatprep.subr.bf16.mxu0 0
    %1307 = vmatpush1.bf16.msra.mxu0 0
    %1308 = vmatprep.mubr.bf16.mxu0 0
    %1309 = vmatmul.mubr.bf16.gmra.mrb[0].mxu0 %v1165
    %v1310 = vpop.f32.mrb[0].mxu0
    %v1311 = vadd.f32 %v1239, %v1310
    %v1312 = vpop.f32.mrb[0].mxu0
    %v1313 = vadd.f32 %v1243, %v1312
    %v1314 = vpop.f32.mrb[0].mxu0
    %v1315 = vpop.f32.mrb[0].mxu0
    %1316 = vdwg.mxu0
    %1317 = vmatprep.subr.bf16.mxu0 %v1175
    %1318 = vmatpush1.bf16.msra.mxu0 %v1174
    %1319 = vmatprep.subr.bf16.mxu0 %v1183
    %1320 = vmatpush1.bf16.msra.mxu0 %v1182
    %1321 = vmatprep.subr.bf16.mxu0 %v1191
    %1322 = vmatpush1.bf16.msra.mxu0 %v1190
    %1323 = vmatprep.subr.bf16.mxu0 %v1199
    %1324 = vmatpush1.bf16.msra.mxu0 %v1198
    %1325 = vmatprep.subr.bf16.mxu0 %v1207
    %1326 = vmatpush1.bf16.msra.mxu0 %v1206
    %1327 = vmatprep.subr.bf16.mxu0 %v1215
    %1328 = vmatpush1.bf16.msra.mxu0 %v1214
    %1329 = vmatprep.subr.bf16.mxu0 %v1223
    %1330 = vmatpush1.bf16.msra.mxu0 %v1222
    %1331 = vmatprep.subr.bf16.mxu0 %v1231
    %1332 = vmatpush1.bf16.msra.mxu0 %v1230
    %1333 = vmatprep.subr.bf16.mxu0 0
    %1334 = vmatpush1.bf16.msra.mxu0 0
    %1335 = vmatprep.subr.bf16.mxu0 0
    %1336 = vmatpush1.bf16.msra.mxu0 0
    %1337 = vmatprep.subr.bf16.mxu0 0
    %1338 = vmatpush1.bf16.msra.mxu0 0
    %1339 = vmatprep.subr.bf16.mxu0 0
    %1340 = vmatpush1.bf16.msra.mxu0 0
    %1341 = vmatprep.subr.bf16.mxu0 0
    %1342 = vmatpush1.bf16.msra.mxu0 0
    %1343 = vmatprep.subr.bf16.mxu0 0
    %1344 = vmatpush1.bf16.msra.mxu0 0
    %1345 = vmatprep.subr.bf16.mxu0 0
    %1346 = vmatpush1.bf16.msra.mxu0 0
    %1347 = vmatprep.subr.bf16.mxu0 0
    %1348 = vmatpush1.bf16.msra.mxu0 0
    %1349 = vmatprep.mubr.bf16.mxu0 0
    %1350 = vmatmul.mubr.bf16.gmra.mrb[0].mxu0 %v1165
    %v1351 = vpop.f32.mrb[0].mxu0
    %v1352 = vadd.f32 %v1255, %v1351
    %v1353 = vpop.f32.mrb[0].mxu0
    %v1354 = vadd.f32 %v1259, %v1353
    %v1355 = vpop.f32.mrb[0].mxu0
    %v1356 = vpop.f32.mrb[0].mxu0
    %1357 = vdwg.mxu0
    %1358 = vmatprep.subr.bf16.mxu0 %v1177
    %1359 = vmatpush1.bf16.msra.mxu0 %v1176
    %1360 = vmatprep.subr.bf16.mxu0 %v1185
    %1361 = vmatpush1.bf16.msra.mxu0 %v1184
    %1362 = vmatprep.subr.bf16.mxu0 %v1193
    %1363 = vmatpush1.bf16.msra.mxu0 %v1192
    %1364 = vmatprep.subr.bf16.mxu0 %v1201
    %1365 = vmatpush1.bf16.msra.mxu0 %v1200
    %1366 = vmatprep.subr.bf16.mxu0 %v1209
    %1367 = vmatpush1.bf16.msra.mxu0 %v1208
    %1368 = vmatprep.subr.bf16.mxu0 %v1217
    %1369 = vmatpush1.bf16.msra.mxu0 %v1216
    %1370 = vmatprep.subr.bf16.mxu0 %v1225
    %1371 = vmatpush1.bf16.msra.mxu0 %v1224
    %1372 = vmatprep.subr.bf16.mxu0 %v1233
    %1373 = vmatpush1.bf16.msra.mxu0 %v1232
    %1374 = vmatprep.subr.bf16.mxu0 0
    %1375 = vmatpush1.bf16.msra.mxu0 0
    %1376 = vmatprep.subr.bf16.mxu0 0
    %1377 = vmatpush1.bf16.msra.mxu0 0
    %1378 = vmatprep.subr.bf16.mxu0 0
    %1379 = vmatpush1.bf16.msra.mxu0 0
    %1380 = vmatprep.subr.bf16.mxu0 0
    %1381 = vmatpush1.bf16.msra.mxu0 0
    %1382 = vmatprep.subr.bf16.mxu0 0
    %1383 = vmatpush1.bf16.msra.mxu0 0
    %1384 = vmatprep.subr.bf16.mxu0 0
    %1385 = vmatpush1.bf16.msra.mxu0 0
    %1386 = vmatprep.subr.bf16.mxu0 0
    %1387 = vmatpush1.bf16.msra.mxu0 0
    %1388 = vmatprep.subr.bf16.mxu0 0
    %1389 = vmatpush1.bf16.msra.mxu0 0
    %1390 = vmatprep.mubr.bf16.mxu0 0
    %1391 = vmatmul.mubr.bf16.gmra.mrb[0].mxu0 %v1165
    %v1392 = vpop.f32.mrb[0].mxu0
    %v1393 = vadd.f32 %v1263, %v1392
    %v1394 = vpop.f32.mrb[0].mxu0
    %v1395 = vadd.f32 %v1267, %v1394
    %v1396 = vpop.f32.mrb[0].mxu0
    %v1397 = vpop.f32.mrb[0].mxu0
    %1398 = vdwg.mxu0
    %v1399 = vld [vmem:[#allocation2 + $0x20] sm:$0xff]
    %v1400 = vld [vmem:[#allocation2 + $0x28] sm:$0xff]
    %v1401 = vld [vmem:[#allocation2 + $0x30] sm:$0xff]
    %v1402 = vld [vmem:[#allocation2 + $0x38] sm:$0xff]
    %v1403 = vld [vmem:[#allocation9] sm:$0xff]
    %v1404 = vld [vmem:[#allocation9 + $0x8] sm:$0xff]
    %v1405 = vld [vmem:[#allocation9 + $0x10] sm:$0xff]
    %v1406 = vld [vmem:[#allocation9 + $0x18] sm:$0xff]
    %v1407 = vld [vmem:[#allocation9 + $0x20] sm:$0xff]
    %v1408 = vld [vmem:[#allocation9 + $0x28] sm:$0xff]
    %v1409 = vld [vmem:[#allocation9 + $0x30] sm:$0xff]
    %v1410 = vld [vmem:[#allocation9 + $0x38] sm:$0xff]
    %v1411 = vld [vmem:[#allocation9 + $0x40] sm:$0xff]
    %v1412 = vld [vmem:[#allocation9 + $0x48] sm:$0xff]
    %v1413 = vld [vmem:[#allocation9 + $0x50] sm:$0xff]
    %v1414 = vld [vmem:[#allocation9 + $0x58] sm:$0xff]
    %v1415 = vld [vmem:[#allocation9 + $0x60] sm:$0xff]
    %v1416 = vld [vmem:[#allocation9 + $0x68] sm:$0xff]
    %v1417 = vld [vmem:[#allocation9 + $0x70] sm:$0xff]
    %v1418 = vld [vmem:[#allocation9 + $0x78] sm:$0xff]
    %v1419 = vld [vmem:[#allocation9 + $0x80] sm:$0xff]
    %v1420 = vld [vmem:[#allocation9 + $0x88] sm:$0xff]
    %v1421 = vld [vmem:[#allocation9 + $0x90] sm:$0xff]
    %v1422 = vld [vmem:[#allocation9 + $0x98] sm:$0xff]
    %v1423 = vld [vmem:[#allocation9 + $0xa0] sm:$0xff]
    %v1424 = vld [vmem:[#allocation9 + $0xa8] sm:$0xff]
    %v1425 = vld [vmem:[#allocation9 + $0xb0] sm:$0xff]
    %v1426 = vld [vmem:[#allocation9 + $0xb8] sm:$0xff]
    %v1427 = vld [vmem:[#allocation9 + $0xc0] sm:$0xff]
    %v1428 = vld [vmem:[#allocation9 + $0xc8] sm:$0xff]
    %v1429 = vld [vmem:[#allocation9 + $0xd0] sm:$0xff]
    %v1430 = vld [vmem:[#allocation9 + $0xd8] sm:$0xff]
    %v1431 = vld [vmem:[#allocation9 + $0xe0] sm:$0xff]
    %v1432 = vld [vmem:[#allocation9 + $0xe8] sm:$0xff]
    %v1433 = vld [vmem:[#allocation9 + $0xf0] sm:$0xff]
    %v1434 = vld [vmem:[#allocation9 + $0xf8] sm:$0xff]
    %v1467 = vunpack.c.l.b16 %v1403
    %v1468 = vunpack.c.h.b16 %v1403
    %v1469 = vunpack.c.l.b16 %v1404
    %v1470 = vunpack.c.h.b16 %v1404
    %v1471 = vunpack.c.l.b16 %v1405
    %v1472 = vunpack.c.h.b16 %v1405
    %v1473 = vunpack.c.l.b16 %v1406
    %v1474 = vunpack.c.h.b16 %v1406
    %v1475 = vunpack.c.l.b16 %v1407
    %v1476 = vunpack.c.h.b16 %v1407
    %v1477 = vunpack.c.l.b16 %v1408
    %v1478 = vunpack.c.h.b16 %v1408
    %v1479 = vunpack.c.l.b16 %v1409
    %v1480 = vunpack.c.h.b16 %v1409
    %v1481 = vunpack.c.l.b16 %v1410
    %v1482 = vunpack.c.h.b16 %v1410
    %v1483 = vunpack.c.l.b16 %v1411
    %v1484 = vunpack.c.h.b16 %v1411
    %v1485 = vunpack.c.l.b16 %v1412
    %v1486 = vunpack.c.h.b16 %v1412
    %v1487 = vunpack.c.l.b16 %v1413
    %v1488 = vunpack.c.h.b16 %v1413
    %v1489 = vunpack.c.l.b16 %v1414
    %v1490 = vunpack.c.h.b16 %v1414
    %v1491 = vunpack.c.l.b16 %v1415
    %v1492 = vunpack.c.h.b16 %v1415
    %v1493 = vunpack.c.l.b16 %v1416
    %v1494 = vunpack.c.h.b16 %v1416
    %v1495 = vunpack.c.l.b16 %v1417
    %v1496 = vunpack.c.h.b16 %v1417
    %v1497 = vunpack.c.l.b16 %v1418
    %v1498 = vunpack.c.h.b16 %v1418
    %v1499 = vunpack.c.l.b16 %v1419
    %v1500 = vunpack.c.h.b16 %v1419
    %v1501 = vunpack.c.l.b16 %v1420
    %v1502 = vunpack.c.h.b16 %v1420
    %v1503 = vunpack.c.l.b16 %v1421
    %v1504 = vunpack.c.h.b16 %v1421
    %v1505 = vunpack.c.l.b16 %v1422
    %v1506 = vunpack.c.h.b16 %v1422
    %v1507 = vunpack.c.l.b16 %v1423
    %v1508 = vunpack.c.h.b16 %v1423
    %v1509 = vunpack.c.l.b16 %v1424
    %v1510 = vunpack.c.h.b16 %v1424
    %v1511 = vunpack.c.l.b16 %v1425
    %v1512 = vunpack.c.h.b16 %v1425
    %v1513 = vunpack.c.l.b16 %v1426
    %v1514 = vunpack.c.h.b16 %v1426
    %v1515 = vunpack.c.l.b16 %v1427
    %v1516 = vunpack.c.h.b16 %v1427
    %v1517 = vunpack.c.l.b16 %v1428
    %v1518 = vunpack.c.h.b16 %v1428
    %v1519 = vunpack.c.l.b16 %v1429
    %v1520 = vunpack.c.h.b16 %v1429
    %v1521 = vunpack.c.l.b16 %v1430
    %v1522 = vunpack.c.h.b16 %v1430
    %v1523 = vunpack.c.l.b16 %v1431
    %v1524 = vunpack.c.h.b16 %v1431
    %v1525 = vunpack.c.l.b16 %v1432
    %v1526 = vunpack.c.h.b16 %v1432
    %v1527 = vunpack.c.l.b16 %v1433
    %v1528 = vunpack.c.h.b16 %v1433
    %v1529 = vunpack.c.l.b16 %v1434
    %v1530 = vunpack.c.h.b16 %v1434
    %v1531 = vpack.c.b16 %v1471, %v1467
    %v1532 = vpack.c.b16 %v1472, %v1468
    %v1533 = vpack.c.b16 %v1473, %v1469
    %v1534 = vpack.c.b16 %v1474, %v1470
    %v1535 = vpack.c.b16 %v1479, %v1475
    %v1536 = vpack.c.b16 %v1480, %v1476
    %v1537 = vpack.c.b16 %v1481, %v1477
    %v1538 = vpack.c.b16 %v1482, %v1478
    %v1539 = vpack.c.b16 %v1487, %v1483
    %v1540 = vpack.c.b16 %v1488, %v1484
    %v1541 = vpack.c.b16 %v1489, %v1485
    %v1542 = vpack.c.b16 %v1490, %v1486
    %v1543 = vpack.c.b16 %v1495, %v1491
    %v1544 = vpack.c.b16 %v1496, %v1492
    %v1545 = vpack.c.b16 %v1497, %v1493
    %v1546 = vpack.c.b16 %v1498, %v1494
    %v1547 = vpack.c.b16 %v1503, %v1499
    %v1548 = vpack.c.b16 %v1504, %v1500
    %v1549 = vpack.c.b16 %v1505, %v1501
    %v1550 = vpack.c.b16 %v1506, %v1502
    %v1551 = vpack.c.b16 %v1511, %v1507
    %v1552 = vpack.c.b16 %v1512, %v1508
    %v1553 = vpack.c.b16 %v1513, %v1509
    %v1554 = vpack.c.b16 %v1514, %v1510
    %v1555 = vpack.c.b16 %v1519, %v1515
    %v1556 = vpack.c.b16 %v1520, %v1516
    %v1557 = vpack.c.b16 %v1521, %v1517
    %v1558 = vpack.c.b16 %v1522, %v1518
    %v1559 = vpack.c.b16 %v1527, %v1523
    %v1560 = vpack.c.b16 %v1528, %v1524
    %v1561 = vpack.c.b16 %v1529, %v1525
    %v1562 = vpack.c.b16 %v1530, %v1526
    %1595 = vmatprep.subr.bf16.mxu0 %v1532
    %1596 = vmatpush1.bf16.msra.mxu0 %v1531
    %1597 = vmatprep.subr.bf16.mxu0 %v1536
    %1598 = vmatpush1.bf16.msra.mxu0 %v1535
    %1599 = vmatprep.subr.bf16.mxu0 %v1540
    %1600 = vmatpush1.bf16.msra.mxu0 %v1539
    %1601 = vmatprep.subr.bf16.mxu0 %v1544
    %1602 = vmatpush1.bf16.msra.mxu0 %v1543
    %1603 = vmatprep.subr.bf16.mxu0 %v1548
    %1604 = vmatpush1.bf16.msra.mxu0 %v1547
    %1605 = vmatprep.subr.bf16.mxu0 %v1552
    %1606 = vmatpush1.bf16.msra.mxu0 %v1551
    %1607 = vmatprep.subr.bf16.mxu0 %v1556
    %1608 = vmatpush1.bf16.msra.mxu0 %v1555
    %1609 = vmatprep.subr.bf16.mxu0 %v1560
    %1610 = vmatpush1.bf16.msra.mxu0 %v1559
    %1611 = vmatprep.subr.bf16.mxu0 0
    %1612 = vmatpush1.bf16.msra.mxu0 0
    %1613 = vmatprep.subr.bf16.mxu0 0
    %1614 = vmatpush1.bf16.msra.mxu0 0
    %1615 = vmatprep.subr.bf16.mxu0 0
    %1616 = vmatpush1.bf16.msra.mxu0 0
    %1617 = vmatprep.subr.bf16.mxu0 0
    %1618 = vmatpush1.bf16.msra.mxu0 0
    %1619 = vmatprep.subr.bf16.mxu0 0
    %1620 = vmatpush1.bf16.msra.mxu0 0
    %1621 = vmatprep.subr.bf16.mxu0 0
    %1622 = vmatpush1.bf16.msra.mxu0 0
    %1623 = vmatprep.subr.bf16.mxu0 0
    %1624 = vmatpush1.bf16.msra.mxu0 0
    %1625 = vmatprep.subr.bf16.mxu0 0
    %1626 = vmatpush1.bf16.msra.mxu0 0
    %1627 = vmatprep.mubr.bf16.mxu0 0
    %1628 = vmatmul.mubr.bf16.gmra.mrb[0].mxu0 %v1165
    %v1629 = vpop.f32.mrb[0].mxu0
    %v1630 = vadd.f32 0.0, %v1629
    %v1631 = vpop.f32.mrb[0].mxu0
    %v1632 = vadd.f32 0.0, %v1631
    %v1633 = vpop.f32.mrb[0].mxu0
    %v1634 = vpop.f32.mrb[0].mxu0
    %1635 = vdwg.mxu0
    %1636 = vmatprep.subr.bf16.mxu0 %v1534
    %1637 = vmatpush1.bf16.msra.mxu0 %v1533
    %1638 = vmatprep.subr.bf16.mxu0 %v1538
    %1639 = vmatpush1.bf16.msra.mxu0 %v1537
    %1640 = vmatprep.subr.bf16.mxu0 %v1542
    %1641 = vmatpush1.bf16.msra.mxu0 %v1541
    %1642 = vmatprep.subr.bf16.mxu0 %v1546
    %1643 = vmatpush1.bf16.msra.mxu0 %v1545
    %1644 = vmatprep.subr.bf16.mxu0 %v1550
    %1645 = vmatpush1.bf16.msra.mxu0 %v1549
    %1646 = vmatprep.subr.bf16.mxu0 %v1554
    %1647 = vmatpush1.bf16.msra.mxu0 %v1553
    %1648 = vmatprep.subr.bf16.mxu0 %v1558
    %1649 = vmatpush1.bf16.msra.mxu0 %v1557
    %1650 = vmatprep.subr.bf16.mxu0 %v1562
    %1651 = vmatpush1.bf16.msra.mxu0 %v1561
    %1652 = vmatprep.subr.bf16.mxu0 0
    %1653 = vmatpush1.bf16.msra.mxu0 0
    %1654 = vmatprep.subr.bf16.mxu0 0
    %1655 = vmatpush1.bf16.msra.mxu0 0
    %1656 = vmatprep.subr.bf16.mxu0 0
    %1657 = vmatpush1.bf16.msra.mxu0 0
    %1658 = vmatprep.subr.bf16.mxu0 0
    %1659 = vmatpush1.bf16.msra.mxu0 0
    %1660 = vmatprep.subr.bf16.mxu0 0
    %1661 = vmatpush1.bf16.msra.mxu0 0
    %1662 = vmatprep.subr.bf16.mxu0 0
    %1663 = vmatpush1.bf16.msra.mxu0 0
    %1664 = vmatprep.subr.bf16.mxu0 0
    %1665 = vmatpush1.bf16.msra.mxu0 0
    %1666 = vmatprep.subr.bf16.mxu0 0
    %1667 = vmatpush1.bf16.msra.mxu0 0
    %1668 = vmatprep.mubr.bf16.mxu0 0
    %1669 = vmatmul.mubr.bf16.gmra.mrb[0].mxu0 %v1165
    %v1670 = vpop.f32.mrb[0].mxu0
    %v1671 = vadd.f32 0.0, %v1670
    %v1672 = vpop.f32.mrb[0].mxu0
    %v1673 = vadd.f32 0.0, %v1672
    %v1674 = vpop.f32.mrb[0].mxu0
    %v1675 = vpop.f32.mrb[0].mxu0
    %1676 = vdwg.mxu0
    %v1677 = vadd.f32 %v1399, %v1630
    %v1678 = vadd.f32 %v1400, %v1632
    %v1679 = vadd.f32 %v1401, %v1671
    %v1680 = vadd.f32 %v1402, %v1673
    %v1681 = vxor.u32 %v1677, 2147483648
    %v1682 = vxor.u32 %v1678, 2147483648
    %v1683 = vxor.u32 %v1679, 2147483648
    %v1684 = vmul.f32 %v1681, 1.442695
    %v1685 = vpow.pop %v1684
    %v1686 = vmul.f32 %v1682, 1.442695
    %v1687 = vpow.pop %v1686
    %v1688 = vmul.f32 %v1683, 1.442695
    %v1689 = vpow.pop %v1688
    %v1690 = vadd.f32 %v1685, 1.0
    %v1691 = vadd.f32 %v1687, 1.0
    %v1692 = vadd.f32 %v1689, 1.0
    %v1693 = vrcp.pop %v1690
    %v1694 = vmul.f32 1.0, %v1693
    %v1695 = vrcp.pop %v1691
    %v1696 = vmul.f32 1.0, %v1695
    %v1697 = vrcp.pop %v1692
    %v1698 = vmul.f32 1.0, %v1697
    %v1699 = vtanh.pop %v1680
    %v1700 = vmul.f32 %v1696, %v1162
    %v1701 = vmul.f32 %v1694, %v1699
    %v1702 = vadd.f32 %v1700, %v1701
    %v1703 = vtanh.pop %v1702
    %v1704 = vmul.f32 %v1698, %v1703
    %v1705 = vpack.c.bf16 %v1704, %v1704
    %v1706 = vxor.u32 %v1311, 2147483648
    %v1707 = vxor.u32 %v1313, 2147483648
    %v1708 = vxor.u32 %v1352, 2147483648
    %v1709 = vxor.u32 %v1354, 2147483648
    %v1710 = vmul.f32 %v1706, 1.442695
    %v1711 = vpow.pop %v1710
    %v1712 = vmul.f32 %v1707, 1.442695
    %v1713 = vpow.pop %v1712
    %v1714 = vmul.f32 %v1708, 1.442695
    %v1715 = vpow.pop %v1714
    %v1716 = vmul.f32 %v1709, 1.442695
    %v1717 = vpow.pop %v1716
    %v1718 = vadd.f32 %v1711, 1.0
    %v1719 = vadd.f32 %v1713, 1.0
    %v1720 = vadd.f32 %v1715, 1.0
    %v1721 = vadd.f32 %v1717, 1.0
    %v1722 = vrcp.pop %v1718
    %v1723 = vmul.f32 1.0, %v1722
    %v1724 = vrcp.pop %v1719
    %v1725 = vmul.f32 1.0, %v1724
    %v1726 = vrcp.pop %v1720
    %v1727 = vmul.f32 1.0, %v1726
    %v1728 = vrcp.pop %v1721
    %v1729 = vmul.f32 1.0, %v1728
    %v1730 = vtanh.pop %v1393
    %v1731 = vtanh.pop %v1395
    %v1732 = vmul.f32 %v1723, %v1730
    %v1733 = vmul.f32 %v1725, %v1731
    %v1734 = vtanh.pop %v1732
    %v1735 = vtanh.pop %v1733
    %v1736 = vmul.f32 %v1727, %v1734
    %v1737 = vmul.f32 %v1729, %v1735
    %1738 = vmatprep.subr.bf16.mxu0 %v1171
    %1739 = vmatpush1.bf16.msra.mxu0 %v1170
    %1740 = vmatprep.subr.bf16.mxu0 %v1179
    %1741 = vmatpush1.bf16.msra.mxu0 %v1178
    %1742 = vmatprep.subr.bf16.mxu0 %v1187
    %1743 = vmatpush1.bf16.msra.mxu0 %v1186
    %1744 = vmatprep.subr.bf16.mxu0 %v1195
    %1745 = vmatpush1.bf16.msra.mxu0 %v1194
    %1746 = vmatprep.subr.bf16.mxu0 %v1203
    %1747 = vmatpush1.bf16.msra.mxu0 %v1202
    %1748 = vmatprep.subr.bf16.mxu0 %v1211
    %1749 = vmatpush1.bf16.msra.mxu0 %v1210
    %1750 = vmatprep.subr.bf16.mxu0 %v1219
    %1751 = vmatpush1.bf16.msra.mxu0 %v1218
    %1752 = vmatprep.subr.bf16.mxu0 %v1227
    %1753 = vmatpush1.bf16.msra.mxu0 %v1226
    %1754 = vmatprep.subr.bf16.mxu0 0
    %1755 = vmatpush1.bf16.msra.mxu0 0
    %1756 = vmatprep.subr.bf16.mxu0 0
    %1757 = vmatpush1.bf16.msra.mxu0 0
    %1758 = vmatprep.subr.bf16.mxu0 0
    %1759 = vmatpush1.bf16.msra.mxu0 0
    %1760 = vmatprep.subr.bf16.mxu0 0
    %1761 = vmatpush1.bf16.msra.mxu0 0
    %1762 = vmatprep.subr.bf16.mxu0 0
    %1763 = vmatpush1.bf16.msra.mxu0 0
    %1764 = vmatprep.subr.bf16.mxu0 0
    %1765 = vmatpush1.bf16.msra.mxu0 0
    %1766 = vmatprep.subr.bf16.mxu0 0
    %1767 = vmatpush1.bf16.msra.mxu0 0
    %1768 = vmatprep.subr.bf16.mxu0 0
    %1769 = vmatpush1.bf16.msra.mxu0 0
    %1770 = vmatprep.mubr.bf16.mxu0 0
    %1771 = vmatmul.mubr.bf16.gmra.mrb[0].mxu0 %v1705
    %v1772 = vpop.f32.mrb[0].mxu0
    %v1773 = vadd.f32 %v1239, %v1772
    %v1774 = vpop.f32.mrb[0].mxu0
    %v1775 = vadd.f32 %v1243, %v1774
    %v1776 = vpop.f32.mrb[0].mxu0
    %v1777 = vpop.f32.mrb[0].mxu0
    %1778 = vdwg.mxu0
    %1779 = vmatprep.subr.bf16.mxu0 %v1173
    %1780 = vmatpush1.bf16.msra.mxu0 %v1172
    %1781 = vmatprep.subr.bf16.mxu0 %v1181
    %1782 = vmatpush1.bf16.msra.mxu0 %v1180
    %1783 = vmatprep.subr.bf16.mxu0 %v1189
    %1784 = vmatpush1.bf16.msra.mxu0 %v1188
    %1785 = vmatprep.subr.bf16.mxu0 %v1197
    %1786 = vmatpush1.bf16.msra.mxu0 %v1196
    %1787 = vmatprep.subr.bf16.mxu0 %v1205
    %1788 = vmatpush1.bf16.msra.mxu0 %v1204
    %1789 = vmatprep.subr.bf16.mxu0 %v1213
    %1790 = vmatpush1.bf16.msra.mxu0 %v1212
    %1791 = vmatprep.subr.bf16.mxu0 %v1221
    %1792 = vmatpush1.bf16.msra.mxu0 %v1220
    %1793 = vmatprep.subr.bf16.mxu0 %v1229
    %1794 = vmatpush1.bf16.msra.mxu0 %v1228
    %1795 = vmatprep.subr.bf16.mxu0 0
    %1796 = vmatpush1.bf16.msra.mxu0 0
    %1797 = vmatprep.subr.bf16.mxu0 0
    %1798 = vmatpush1.bf16.msra.mxu0 0
    %1799 = vmatprep.subr.bf16.mxu0 0
    %1800 = vmatpush1.bf16.msra.mxu0 0
    %1801 = vmatprep.subr.bf16.mxu0 0
    %1802 = vmatpush1.bf16.msra.mxu0 0
    %1803 = vmatprep.subr.bf16.mxu0 0
    %1804 = vmatpush1.bf16.msra.mxu0 0
    %1805 = vmatprep.subr.bf16.mxu0 0
    %1806 = vmatpush1.bf16.msra.mxu0 0
    %1807 = vmatprep.subr.bf16.mxu0 0
    %1808 = vmatpush1.bf16.msra.mxu0 0
    %1809 = vmatprep.subr.bf16.mxu0 0
    %1810 = vmatpush1.bf16.msra.mxu0 0
    %1811 = vmatprep.mubr.bf16.mxu0 0
    %1812 = vmatmul.mubr.bf16.gmra.mrb[0].mxu0 %v1705
    %v1813 = vpop.f32.mrb[0].mxu0
    %v1814 = vadd.f32 %v1247, %v1813
    %v1815 = vpop.f32.mrb[0].mxu0
    %v1816 = vadd.f32 %v1251, %v1815
    %v1817 = vpop.f32.mrb[0].mxu0
    %v1818 = vpop.f32.mrb[0].mxu0
    %1819 = vdwg.mxu0
    %1820 = vmatprep.subr.bf16.mxu0 %v1175
    %1821 = vmatpush1.bf16.msra.mxu0 %v1174
    %1822 = vmatprep.subr.bf16.mxu0 %v1183
    %1823 = vmatpush1.bf16.msra.mxu0 %v1182
    %1824 = vmatprep.subr.bf16.mxu0 %v1191
    %1825 = vmatpush1.bf16.msra.mxu0 %v1190
    %1826 = vmatprep.subr.bf16.mxu0 %v1199
    %1827 = vmatpush1.bf16.msra.mxu0 %v1198
    %1828 = vmatprep.subr.bf16.mxu0 %v1207
    %1829 = vmatpush1.bf16.msra.mxu0 %v1206
    %1830 = vmatprep.subr.bf16.mxu0 %v1215
    %1831 = vmatpush1.bf16.msra.mxu0 %v1214
    %1832 = vmatprep.subr.bf16.mxu0 %v1223
    %1833 = vmatpush1.bf16.msra.mxu0 %v1222
    %1834 = vmatprep.subr.bf16.mxu0 %v1231
    %1835 = vmatpush1.bf16.msra.mxu0 %v1230
    %1836 = vmatprep.subr.bf16.mxu0 0
    %1837 = vmatpush1.bf16.msra.mxu0 0
    %1838 = vmatprep.subr.bf16.mxu0 0
    %1839 = vmatpush1.bf16.msra.mxu0 0
    %1840 = vmatprep.subr.bf16.mxu0 0
    %1841 = vmatpush1.bf16.msra.mxu0 0
    %1842 = vmatprep.subr.bf16.mxu0 0
    %1843 = vmatpush1.bf16.msra.mxu0 0
    %1844 = vmatprep.subr.bf16.mxu0 0
    %1845 = vmatpush1.bf16.msra.mxu0 0
    %1846 = vmatprep.subr.bf16.mxu0 0
    %1847 = vmatpush1.bf16.msra.mxu0 0
    %1848 = vmatprep.subr.bf16.mxu0 0
    %1849 = vmatpush1.bf16.msra.mxu0 0
    %1850 = vmatprep.subr.bf16.mxu0 0
    %1851 = vmatpush1.bf16.msra.mxu0 0
    %1852 = vmatprep.mubr.bf16.mxu0 0
    %1853 = vmatmul.mubr.bf16.gmra.mrb[0].mxu0 %v1705
    %v1854 = vpop.f32.mrb[0].mxu0
    %v1855 = vadd.f32 %v1255, %v1854
    %v1856 = vpop.f32.mrb[0].mxu0
    %v1857 = vadd.f32 %v1259, %v1856
    %v1858 = vpop.f32.mrb[0].mxu0
    %v1859 = vpop.f32.mrb[0].mxu0
    %1860 = vdwg.mxu0
    %1861 = vmatprep.subr.bf16.mxu0 %v1177
    %1862 = vmatpush1.bf16.msra.mxu0 %v1176
    %1863 = vmatprep.subr.bf16.mxu0 %v1185
    %1864 = vmatpush1.bf16.msra.mxu0 %v1184
    %1865 = vmatprep.subr.bf16.mxu0 %v1193
    %1866 = vmatpush1.bf16.msra.mxu0 %v1192
    %1867 = vmatprep.subr.bf16.mxu0 %v1201
    %1868 = vmatpush1.bf16.msra.mxu0 %v1200
    %1869 = vmatprep.subr.bf16.mxu0 %v1209
    %1870 = vmatpush1.bf16.msra.mxu0 %v1208
    %1871 = vmatprep.subr.bf16.mxu0 %v1217
    %1872 = vmatpush1.bf16.msra.mxu0 %v1216
    %1873 = vmatprep.subr.bf16.mxu0 %v1225
    %1874 = vmatpush1.bf16.msra.mxu0 %v1224
    %1875 = vmatprep.subr.bf16.mxu0 %v1233
    %1876 = vmatpush1.bf16.msra.mxu0 %v1232
    %1877 = vmatprep.subr.bf16.mxu0 0
    %1878 = vmatpush1.bf16.msra.mxu0 0
    %1879 = vmatprep.subr.bf16.mxu0 0
    %1880 = vmatpush1.bf16.msra.mxu0 0
    %1881 = vmatprep.subr.bf16.mxu0 0
    %1882 = vmatpush1.bf16.msra.mxu0 0
    %1883 = vmatprep.subr.bf16.mxu0 0
    %1884 = vmatpush1.bf16.msra.mxu0 0
    %1885 = vmatprep.subr.bf16.mxu0 0
    %1886 = vmatpush1.bf16.msra.mxu0 0
    %1887 = vmatprep.subr.bf16.mxu0 0
    %1888 = vmatpush1.bf16.msra.mxu0 0
    %1889 = vmatprep.subr.bf16.mxu0 0
    %1890 = vmatpush1.bf16.msra.mxu0 0
    %1891 = vmatprep.subr.bf16.mxu0 0
    %1892 = vmatpush1.bf16.msra.mxu0 0
    %1893 = vmatprep.mubr.bf16.mxu0 0
    %1894 = vmatmul.mubr.bf16.gmra.mrb[0].mxu0 %v1705
    %v1895 = vpop.f32.mrb[0].mxu0
    %v1896 = vadd.f32 %v1263, %v1895
    %v1897 = vpop.f32.mrb[0].mxu0
    %v1898 = vadd.f32 %v1267, %v1897
    %v1899 = vpop.f32.mrb[0].mxu0
    %v1900 = vpop.f32.mrb[0].mxu0
    %1901 = vdwg.mxu0
    %v1902 = vld [vmem:[#allocation2 + $0x40] sm:$0xff]
    %v1903 = vld [vmem:[#allocation2 + $0x48] sm:$0xff]
    %v1904 = vld [vmem:[#allocation2 + $0x50] sm:$0xff]
    %v1905 = vld [vmem:[#allocation2 + $0x58] sm:$0xff]
    %1906 = vmatprep.subr.bf16.mxu0 %v1532
    %1907 = vmatpush1.bf16.msra.mxu0 %v1531
    %1908 = vmatprep.subr.bf16.mxu0 %v1536
    %1909 = vmatpush1.bf16.msra.mxu0 %v1535
    %1910 = vmatprep.subr.bf16.mxu0 %v1540
    %1911 = vmatpush1.bf16.msra.mxu0 %v1539
    %1912 = vmatprep.subr.bf16.mxu0 %v1544
    %1913 = vmatpush1.bf16.msra.mxu0 %v1543
    %1914 = vmatprep.subr.bf16.mxu0 %v1548
    %1915 = vmatpush1.bf16.msra.mxu0 %v1547
    %1916 = vmatprep.subr.bf16.mxu0 %v1552
    %1917 = vmatpush1.bf16.msra.mxu0 %v1551
    %1918 = vmatprep.subr.bf16.mxu0 %v1556
    %1919 = vmatpush1.bf16.msra.mxu0 %v1555
    %1920 = vmatprep.subr.bf16.mxu0 %v1560
    %1921 = vmatpush1.bf16.msra.mxu0 %v1559
    %1922 = vmatprep.subr.bf16.mxu0 0
    %1923 = vmatpush1.bf16.msra.mxu0 0
    %1924 = vmatprep.subr.bf16.mxu0 0
    %1925 = vmatpush1.bf16.msra.mxu0 0
    %1926 = vmatprep.subr.bf16.mxu0 0
    %1927 = vmatpush1.bf16.msra.mxu0 0
    %1928 = vmatprep.subr.bf16.mxu0 0
    %1929 = vmatpush1.bf16.msra.mxu0 0
    %1930 = vmatprep.subr.bf16.mxu0 0
    %1931 = vmatpush1.bf16.msra.mxu0 0
    %1932 = vmatprep.subr.bf16.mxu0 0
    %1933 = vmatpush1.bf16.msra.mxu0 0
    %1934 = vmatprep.subr.bf16.mxu0 0
    %1935 = vmatpush1.bf16.msra.mxu0 0
    %1936 = vmatprep.subr.bf16.mxu0 0
    %1937 = vmatpush1.bf16.msra.mxu0 0
    %1938 = vmatprep.mubr.bf16.mxu0 0
    %1939 = vmatmul.mubr.bf16.gmra.mrb[0].mxu0 %v1705
    %v1940 = vpop.f32.mrb[0].mxu0
    %v1941 = vadd.f32 0.0, %v1940
    %v1942 = vpop.f32.mrb[0].mxu0
    %v1943 = vadd.f32 0.0, %v1942
    %v1944 = vpop.f32.mrb[0].mxu0
    %v1945 = vpop.f32.mrb[0].mxu0
    %1946 = vdwg.mxu0
    %1947 = vmatprep.subr.bf16.mxu0 %v1534
    %1948 = vmatpush1.bf16.msra.mxu0 %v1533
    %1949 = vmatprep.subr.bf16.mxu0 %v1538
    %1950 = vmatpush1.bf16.msra.mxu0 %v1537
    %1951 = vmatprep.subr.bf16.mxu0 %v1542
    %1952 = vmatpush1.bf16.msra.mxu0 %v1541
    %1953 = vmatprep.subr.bf16.mxu0 %v1546
    %1954 = vmatpush1.bf16.msra.mxu0 %v1545
    %1955 = vmatprep.subr.bf16.mxu0 %v1550
    %1956 = vmatpush1.bf16.msra.mxu0 %v1549
    %1957 = vmatprep.subr.bf16.mxu0 %v1554
    %1958 = vmatpush1.bf16.msra.mxu0 %v1553
    %1959 = vmatprep.subr.bf16.mxu0 %v1558
    %1960 = vmatpush1.bf16.msra.mxu0 %v1557
    %1961 = vmatprep.subr.bf16.mxu0 %v1562
    %1962 = vmatpush1.bf16.msra.mxu0 %v1561
    %1963 = vmatprep.subr.bf16.mxu0 0
    %1964 = vmatpush1.bf16.msra.mxu0 0
    %1965 = vmatprep.subr.bf16.mxu0 0
    %1966 = vmatpush1.bf16.msra.mxu0 0
    %1967 = vmatprep.subr.bf16.mxu0 0
    %1968 = vmatpush1.bf16.msra.mxu0 0
    %1969 = vmatprep.subr.bf16.mxu0 0
    %1970 = vmatpush1.bf16.msra.mxu0 0
    %1971 = vmatprep.subr.bf16.mxu0 0
    %1972 = vmatpush1.bf16.msra.mxu0 0
    %1973 = vmatprep.subr.bf16.mxu0 0
    %1974 = vmatpush1.bf16.msra.mxu0 0
    %1975 = vmatprep.subr.bf16.mxu0 0
    %1976 = vmatpush1.bf16.msra.mxu0 0
    %1977 = vmatprep.subr.bf16.mxu0 0
    %1978 = vmatpush1.bf16.msra.mxu0 0
    %1979 = vmatprep.mubr.bf16.mxu0 0
    %1980 = vmatmul.mubr.bf16.gmra.mrb[0].mxu0 %v1705
    %v1981 = vpop.f32.mrb[0].mxu0
    %v1982 = vadd.f32 0.0, %v1981
    %v1983 = vpop.f32.mrb[0].mxu0
    %v1984 = vadd.f32 0.0, %v1983
    %v1985 = vpop.f32.mrb[0].mxu0
    %v1986 = vpop.f32.mrb[0].mxu0
    %1987 = vdwg.mxu0
    %v1988 = vadd.f32 %v1902, %v1941
    %v1989 = vadd.f32 %v1903, %v1943
    %v1990 = vadd.f32 %v1904, %v1982
    %v1991 = vadd.f32 %v1905, %v1984
    %v1992 = vxor.u32 %v1988, 2147483648
    %v1993 = vxor.u32 %v1989, 2147483648
    %v1994 = vxor.u32 %v1990, 2147483648
    %v1995 = vmul.f32 %v1992, 1.442695
    %v1996 = vpow.pop %v1995
    %v1997 = vmul.f32 %v1993, 1.442695
    %v1998 = vpow.pop %v1997
    %v1999 = vmul.f32 %v1994, 1.442695
    %v2000 = vpow.pop %v1999
    %v2001 = vadd.f32 %v1996, 1.0
    %v2002 = vadd.f32 %v1998, 1.0
    %v2003 = vadd.f32 %v2000, 1.0
    %v2004 = vrcp.pop %v2001
    %v2005 = vmul.f32 1.0, %v2004
    %v2006 = vrcp.pop %v2002
    %v2007 = vmul.f32 1.0, %v2006
    %v2008 = vrcp.pop %v2003
    %v2009 = vmul.f32 1.0, %v2008
    %v2010 = vtanh.pop %v1991
    %v2011 = vmul.f32 %v2007, %v1702
    %v2012 = vmul.f32 %v2005, %v2010
    %v2013 = vadd.f32 %v2011, %v2012
    %v2014 = vtanh.pop %v2013
    %v2015 = vmul.f32 %v2009, %v2014
    %v2016 = vpack.c.bf16 %v2015, %v2015
    %s2017 = smul.u32 4, 32
    %s2018 = smul.u32 %s2017, 8
    %s2019 = sshll.u32 %s2018, 4
    %2020 = dma.done %s621, %s2019
    %v2021 = vpack.c.bf16 %v1736, %v1736
    %v2022 = vpack.c.bf16 %v1737, %v1737
    %v2023 = vld [vmem:[#allocation4] sm:$0xff]
    %v2024 = vld [vmem:[#allocation4 + $0x8] sm:$0xff]
    %v2025 = vld [vmem:[#allocation4 + $0x10] sm:$0xff]
    %v2026 = vld [vmem:[#allocation4 + $0x18] sm:$0xff]
    %v2027 = vld [vmem:[#allocation4 + $0x20] sm:$0xff]
    %v2028 = vld [vmem:[#allocation4 + $0x28] sm:$0xff]
    %v2029 = vld [vmem:[#allocation4 + $0x30] sm:$0xff]
    %v2030 = vld [vmem:[#allocation4 + $0x38] sm:$0xff]
    %v2031 = vld [vmem:[#allocation4 + $0x40] sm:$0xff]
    %v2032 = vld [vmem:[#allocation4 + $0x48] sm:$0xff]
    %v2033 = vld [vmem:[#allocation4 + $0x50] sm:$0xff]
    %v2034 = vld [vmem:[#allocation4 + $0x58] sm:$0xff]
    %v2035 = vld [vmem:[#allocation4 + $0x60] sm:$0xff]
    %v2036 = vld [vmem:[#allocation4 + $0x68] sm:$0xff]
    %v2037 = vld [vmem:[#allocation4 + $0x70] sm:$0xff]
    %v2038 = vld [vmem:[#allocation4 + $0x78] sm:$0xff]
    %v2039 = vld [vmem:[#allocation4 + $0x80] sm:$0xff]
    %v2040 = vld [vmem:[#allocation4 + $0x88] sm:$0xff]
    %v2041 = vld [vmem:[#allocation4 + $0x90] sm:$0xff]
    %v2042 = vld [vmem:[#allocation4 + $0x98] sm:$0xff]
    %v2043 = vld [vmem:[#allocation4 + $0xa0] sm:$0xff]
    %v2044 = vld [vmem:[#allocation4 + $0xa8] sm:$0xff]
    %v2045 = vld [vmem:[#allocation4 + $0xb0] sm:$0xff]
    %v2046 = vld [vmem:[#allocation4 + $0xb8] sm:$0xff]
    %v2047 = vld [vmem:[#allocation4 + $0xc0] sm:$0xff]
    %v2048 = vld [vmem:[#allocation4 + $0xc8] sm:$0xff]
    %v2049 = vld [vmem:[#allocation4 + $0xd0] sm:$0xff]
    %v2050 = vld [vmem:[#allocation4 + $0xd8] sm:$0xff]
    %v2051 = vld [vmem:[#allocation4 + $0xe0] sm:$0xff]
    %v2052 = vld [vmem:[#allocation4 + $0xe8] sm:$0xff]
    %v2053 = vld [vmem:[#allocation4 + $0xf0] sm:$0xff]
    %v2054 = vld [vmem:[#allocation4 + $0xf8] sm:$0xff]
    %v2055 = vld [vmem:[#allocation4 + $0x100] sm:$0xff]
    %v2056 = vld [vmem:[#allocation4 + $0x108] sm:$0xff]
    %v2057 = vld [vmem:[#allocation4 + $0x110] sm:$0xff]
    %v2058 = vld [vmem:[#allocation4 + $0x118] sm:$0xff]
    %v2059 = vld [vmem:[#allocation4 + $0x120] sm:$0xff]
    %v2060 = vld [vmem:[#allocation4 + $0x128] sm:$0xff]
    %v2061 = vld [vmem:[#allocation4 + $0x130] sm:$0xff]
    %v2062 = vld [vmem:[#allocation4 + $0x138] sm:$0xff]
    %v2063 = vld [vmem:[#allocation4 + $0x140] sm:$0xff]
    %v2064 = vld [vmem:[#allocation4 + $0x148] sm:$0xff]
    %v2065 = vld [vmem:[#allocation4 + $0x150] sm:$0xff]
    %v2066 = vld [vmem:[#allocation4 + $0x158] sm:$0xff]
    %v2067 = vld [vmem:[#allocation4 + $0x160] sm:$0xff]
    %v2068 = vld [vmem:[#allocation4 + $0x168] sm:$0xff]
    %v2069 = vld [vmem:[#allocation4 + $0x170] sm:$0xff]
    %v2070 = vld [vmem:[#allocation4 + $0x178] sm:$0xff]
    %v2071 = vld [vmem:[#allocation4 + $0x180] sm:$0xff]
    %v2072 = vld [vmem:[#allocation4 + $0x188] sm:$0xff]
    %v2073 = vld [vmem:[#allocation4 + $0x190] sm:$0xff]
    %v2074 = vld [vmem:[#allocation4 + $0x198] sm:$0xff]
    %v2075 = vld [vmem:[#allocation4 + $0x1a0] sm:$0xff]
    %v2076 = vld [vmem:[#allocation4 + $0x1a8] sm:$0xff]
    %v2077 = vld [vmem:[#allocation4 + $0x1b0] sm:$0xff]
    %v2078 = vld [vmem:[#allocation4 + $0x1b8] sm:$0xff]
    %v2079 = vld [vmem:[#allocation4 + $0x1c0] sm:$0xff]
    %v2080 = vld [vmem:[#allocation4 + $0x1c8] sm:$0xff]
    %v2081 = vld [vmem:[#allocation4 + $0x1d0] sm:$0xff]
    %v2082 = vld [vmem:[#allocation4 + $0x1d8] sm:$0xff]
    %v2083 = vld [vmem:[#allocation4 + $0x1e0] sm:$0xff]
    %v2084 = vld [vmem:[#allocation4 + $0x1e8] sm:$0xff]
    %v2085 = vld [vmem:[#allocation4 + $0x1f0] sm:$0xff]
    %v2086 = vld [vmem:[#allocation4 + $0x1f8] sm:$0xff]
    %v2087 = vld [vmem:[#allocation4 + $0x200] sm:$0xff]
    %v2088 = vld [vmem:[#allocation4 + $0x208] sm:$0xff]
    %v2089 = vld [vmem:[#allocation4 + $0x210] sm:$0xff]
    %v2090 = vld [vmem:[#allocation4 + $0x218] sm:$0xff]
    %v2091 = vld [vmem:[#allocation4 + $0x220] sm:$0xff]
    %v2092 = vld [vmem:[#allocation4 + $0x228] sm:$0xff]
    %v2093 = vld [vmem:[#allocation4 + $0x230] sm:$0xff]
    %v2094 = vld [vmem:[#allocation4 + $0x238] sm:$0xff]
    %v2095 = vld [vmem:[#allocation4 + $0x240] sm:$0xff]
    %v2096 = vld [vmem:[#allocation4 + $0x248] sm:$0xff]
    %v2097 = vld [vmem:[#allocation4 + $0x250] sm:$0xff]
    %v2098 = vld [vmem:[#allocation4 + $0x258] sm:$0xff]
    %v2099 = vld [vmem:[#allocation4 + $0x260] sm:$0xff]
    %v2100 = vld [vmem:[#allocation4 + $0x268] sm:$0xff]
    %v2101 = vld [vmem:[#allocation4 + $0x270] sm:$0xff]
    %v2102 = vld [vmem:[#allocation4 + $0x278] sm:$0xff]
    %v2103 = vld [vmem:[#allocation4 + $0x280] sm:$0xff]
    %v2104 = vld [vmem:[#allocation4 + $0x288] sm:$0xff]
    %v2105 = vld [vmem:[#allocation4 + $0x290] sm:$0xff]
    %v2106 = vld [vmem:[#allocation4 + $0x298] sm:$0xff]
    %v2107 = vld [vmem:[#allocation4 + $0x2a0] sm:$0xff]
    %v2108 = vld [vmem:[#allocation4 + $0x2a8] sm:$0xff]
    %v2109 = vld [vmem:[#allocation4 + $0x2b0] sm:$0xff]
    %v2110 = vld [vmem:[#allocation4 + $0x2b8] sm:$0xff]
    %v2111 = vld [vmem:[#allocation4 + $0x2c0] sm:$0xff]
    %v2112 = vld [vmem:[#allocation4 + $0x2c8] sm:$0xff]
    %v2113 = vld [vmem:[#allocation4 + $0x2d0] sm:$0xff]
    %v2114 = vld [vmem:[#allocation4 + $0x2d8] sm:$0xff]
    %v2115 = vld [vmem:[#allocation4 + $0x2e0] sm:$0xff]
    %v2116 = vld [vmem:[#allocation4 + $0x2e8] sm:$0xff]
    %v2117 = vld [vmem:[#allocation4 + $0x2f0] sm:$0xff]
    %v2118 = vld [vmem:[#allocation4 + $0x2f8] sm:$0xff]
    %v2119 = vld [vmem:[#allocation4 + $0x300] sm:$0xff]
    %v2120 = vld [vmem:[#allocation4 + $0x308] sm:$0xff]
    %v2121 = vld [vmem:[#allocation4 + $0x310] sm:$0xff]
    %v2122 = vld [vmem:[#allocation4 + $0x318] sm:$0xff]
    %v2123 = vld [vmem:[#allocation4 + $0x320] sm:$0xff]
    %v2124 = vld [vmem:[#allocation4 + $0x328] sm:$0xff]
    %v2125 = vld [vmem:[#allocation4 + $0x330] sm:$0xff]
    %v2126 = vld [vmem:[#allocation4 + $0x338] sm:$0xff]
    %v2127 = vld [vmem:[#allocation4 + $0x340] sm:$0xff]
    %v2128 = vld [vmem:[#allocation4 + $0x348] sm:$0xff]
    %v2129 = vld [vmem:[#allocation4 + $0x350] sm:$0xff]
    %v2130 = vld [vmem:[#allocation4 + $0x358] sm:$0xff]
    %v2131 = vld [vmem:[#allocation4 + $0x360] sm:$0xff]
    %v2132 = vld [vmem:[#allocation4 + $0x368] sm:$0xff]
    %v2133 = vld [vmem:[#allocation4 + $0x370] sm:$0xff]
    %v2134 = vld [vmem:[#allocation4 + $0x378] sm:$0xff]
    %v2135 = vld [vmem:[#allocation4 + $0x380] sm:$0xff]
    %v2136 = vld [vmem:[#allocation4 + $0x388] sm:$0xff]
    %v2137 = vld [vmem:[#allocation4 + $0x390] sm:$0xff]
    %v2138 = vld [vmem:[#allocation4 + $0x398] sm:$0xff]
    %v2139 = vld [vmem:[#allocation4 + $0x3a0] sm:$0xff]
    %v2140 = vld [vmem:[#allocation4 + $0x3a8] sm:$0xff]
    %v2141 = vld [vmem:[#allocation4 + $0x3b0] sm:$0xff]
    %v2142 = vld [vmem:[#allocation4 + $0x3b8] sm:$0xff]
    %v2143 = vld [vmem:[#allocation4 + $0x3c0] sm:$0xff]
    %v2144 = vld [vmem:[#allocation4 + $0x3c8] sm:$0xff]
    %v2145 = vld [vmem:[#allocation4 + $0x3d0] sm:$0xff]
    %v2146 = vld [vmem:[#allocation4 + $0x3d8] sm:$0xff]
    %v2147 = vld [vmem:[#allocation4 + $0x3e0] sm:$0xff]
    %v2148 = vld [vmem:[#allocation4 + $0x3e8] sm:$0xff]
    %v2149 = vld [vmem:[#allocation4 + $0x3f0] sm:$0xff]
    %v2150 = vld [vmem:[#allocation4 + $0x3f8] sm:$0xff]
    %2151 = vmatprep.subr.bf16.mxu0 %v2024
    %2152 = vmatpush1.bf16.msra.mxu0 %v2023
    %2153 = vmatprep.subr.bf16.mxu0 %v2032
    %2154 = vmatpush1.bf16.msra.mxu0 %v2031
    %2155 = vmatprep.subr.bf16.mxu0 %v2040
    %2156 = vmatpush1.bf16.msra.mxu0 %v2039
    %2157 = vmatprep.subr.bf16.mxu0 %v2048
    %2158 = vmatpush1.bf16.msra.mxu0 %v2047
    %2159 = vmatprep.subr.bf16.mxu0 %v2056
    %2160 = vmatpush1.bf16.msra.mxu0 %v2055
    %2161 = vmatprep.subr.bf16.mxu0 %v2064
    %2162 = vmatpush1.bf16.msra.mxu0 %v2063
    %2163 = vmatprep.subr.bf16.mxu0 %v2072
    %2164 = vmatpush1.bf16.msra.mxu0 %v2071
    %2165 = vmatprep.subr.bf16.mxu0 %v2080
    %2166 = vmatpush1.bf16.msra.mxu0 %v2079
    %2167 = vmatprep.subr.bf16.mxu0 %v2088
    %2168 = vmatpush1.bf16.msra.mxu0 %v2087
    %2169 = vmatprep.subr.bf16.mxu0 %v2096
    %2170 = vmatpush1.bf16.msra.mxu0 %v2095
    %2171 = vmatprep.subr.bf16.mxu0 %v2104
    %2172 = vmatpush1.bf16.msra.mxu0 %v2103
    %2173 = vmatprep.subr.bf16.mxu0 %v2112
    %2174 = vmatpush1.bf16.msra.mxu0 %v2111
    %2175 = vmatprep.subr.bf16.mxu0 %v2120
    %2176 = vmatpush1.bf16.msra.mxu0 %v2119
    %2177 = vmatprep.subr.bf16.mxu0 %v2128
    %2178 = vmatpush1.bf16.msra.mxu0 %v2127
    %2179 = vmatprep.subr.bf16.mxu0 %v2136
    %2180 = vmatpush1.bf16.msra.mxu0 %v2135
    %2181 = vmatprep.subr.bf16.mxu0 %v2144
    %2182 = vmatpush1.bf16.msra.mxu0 %v2143
    %2183 = vmatprep.mubr.bf16.mxu0 %v2022
    %2184 = vmatmul.mubr.bf16.gmra.mrb[0].mxu0 %v2021
    %v2185 = vpop.f32.mrb[0].mxu0
    %v2186 = vadd.f32 0.0, %v2185
    %v2187 = vpop.f32.mrb[0].mxu0
    %v2188 = vadd.f32 0.0, %v2187
    %v2189 = vpop.f32.mrb[0].mxu0
    %v2190 = vpop.f32.mrb[0].mxu0
    %2191 = vdwg.mxu0
    %2192 = vmatprep.subr.bf16.mxu0 %v2026
    %2193 = vmatpush1.bf16.msra.mxu0 %v2025
    %2194 = vmatprep.subr.bf16.mxu0 %v2034
    %2195 = vmatpush1.bf16.msra.mxu0 %v2033
    %2196 = vmatprep.subr.bf16.mxu0 %v2042
    %2197 = vmatpush1.bf16.msra.mxu0 %v2041
    %2198 = vmatprep.subr.bf16.mxu0 %v2050
    %2199 = vmatpush1.bf16.msra.mxu0 %v2049
    %2200 = vmatprep.subr.bf16.mxu0 %v2058
    %2201 = vmatpush1.bf16.msra.mxu0 %v2057
    %2202 = vmatprep.subr.bf16.mxu0 %v2066
    %2203 = vmatpush1.bf16.msra.mxu0 %v2065
    %2204 = vmatprep.subr.bf16.mxu0 %v2074
    %2205 = vmatpush1.bf16.msra.mxu0 %v2073
    %2206 = vmatprep.subr.bf16.mxu0 %v2082
    %2207 = vmatpush1.bf16.msra.mxu0 %v2081
    %2208 = vmatprep.subr.bf16.mxu0 %v2090
    %2209 = vmatpush1.bf16.msra.mxu0 %v2089
    %2210 = vmatprep.subr.bf16.mxu0 %v2098
    %2211 = vmatpush1.bf16.msra.mxu0 %v2097
    %2212 = vmatprep.subr.bf16.mxu0 %v2106
    %2213 = vmatpush1.bf16.msra.mxu0 %v2105
    %2214 = vmatprep.subr.bf16.mxu0 %v2114
    %2215 = vmatpush1.bf16.msra.mxu0 %v2113
    %2216 = vmatprep.subr.bf16.mxu0 %v2122
    %2217 = vmatpush1.bf16.msra.mxu0 %v2121
    %2218 = vmatprep.subr.bf16.mxu0 %v2130
    %2219 = vmatpush1.bf16.msra.mxu0 %v2129
    %2220 = vmatprep.subr.bf16.mxu0 %v2138
    %2221 = vmatpush1.bf16.msra.mxu0 %v2137
    %2222 = vmatprep.subr.bf16.mxu0 %v2146
    %2223 = vmatpush1.bf16.msra.mxu0 %v2145
    %2224 = vmatprep.mubr.bf16.mxu0 %v2022
    %2225 = vmatmul.mubr.bf16.gmra.mrb[0].mxu0 %v2021
    %v2226 = vpop.f32.mrb[0].mxu0
    %v2227 = vadd.f32 0.0, %v2226
    %v2228 = vpop.f32.mrb[0].mxu0
    %v2229 = vadd.f32 0.0, %v2228
    %v2230 = vpop.f32.mrb[0].mxu0
    %v2231 = vpop.f32.mrb[0].mxu0
    %2232 = vdwg.mxu0
    %2233 = vmatprep.subr.bf16.mxu0 %v2028
    %2234 = vmatpush1.bf16.msra.mxu0 %v2027
    %2235 = vmatprep.subr.bf16.mxu0 %v2036
    %2236 = vmatpush1.bf16.msra.mxu0 %v2035
    %2237 = vmatprep.subr.bf16.mxu0 %v2044
    %2238 = vmatpush1.bf16.msra.mxu0 %v2043
    %2239 = vmatprep.subr.bf16.mxu0 %v2052
    %2240 = vmatpush1.bf16.msra.mxu0 %v2051
    %2241 = vmatprep.subr.bf16.mxu0 %v2060
    %2242 = vmatpush1.bf16.msra.mxu0 %v2059
    %2243 = vmatprep.subr.bf16.mxu0 %v2068
    %2244 = vmatpush1.bf16.msra.mxu0 %v2067
    %2245 = vmatprep.subr.bf16.mxu0 %v2076
    %2246 = vmatpush1.bf16.msra.mxu0 %v2075
    %2247 = vmatprep.subr.bf16.mxu0 %v2084
    %2248 = vmatpush1.bf16.msra.mxu0 %v2083
    %2249 = vmatprep.subr.bf16.mxu0 %v2092
    %2250 = vmatpush1.bf16.msra.mxu0 %v2091
    %2251 = vmatprep.subr.bf16.mxu0 %v2100
    %2252 = vmatpush1.bf16.msra.mxu0 %v2099
    %2253 = vmatprep.subr.bf16.mxu0 %v2108
    %2254 = vmatpush1.bf16.msra.mxu0 %v2107
    %2255 = vmatprep.subr.bf16.mxu0 %v2116
    %2256 = vmatpush1.bf16.msra.mxu0 %v2115
    %2257 = vmatprep.subr.bf16.mxu0 %v2124
    %2258 = vmatpush1.bf16.msra.mxu0 %v2123
    %2259 = vmatprep.subr.bf16.mxu0 %v2132
    %2260 = vmatpush1.bf16.msra.mxu0 %v2131
    %2261 = vmatprep.subr.bf16.mxu0 %v2140
    %2262 = vmatpush1.bf16.msra.mxu0 %v2139
    %2263 = vmatprep.subr.bf16.mxu0 %v2148
    %2264 = vmatpush1.bf16.msra.mxu0 %v2147
    %2265 = vmatprep.mubr.bf16.mxu0 %v2022
    %2266 = vmatmul.mubr.bf16.gmra.mrb[0].mxu0 %v2021
    %v2267 = vpop.f32.mrb[0].mxu0
    %v2268 = vadd.f32 0.0, %v2267
    %v2269 = vpop.f32.mrb[0].mxu0
    %v2270 = vadd.f32 0.0, %v2269
    %v2271 = vpop.f32.mrb[0].mxu0
    %v2272 = vpop.f32.mrb[0].mxu0
    %2273 = vdwg.mxu0
    %2274 = vmatprep.subr.bf16.mxu0 %v2030
    %2275 = vmatpush1.bf16.msra.mxu0 %v2029
    %2276 = vmatprep.subr.bf16.mxu0 %v2038
    %2277 = vmatpush1.bf16.msra.mxu0 %v2037
    %2278 = vmatprep.subr.bf16.mxu0 %v2046
    %2279 = vmatpush1.bf16.msra.mxu0 %v2045
    %2280 = vmatprep.subr.bf16.mxu0 %v2054
    %2281 = vmatpush1.bf16.msra.mxu0 %v2053
    %2282 = vmatprep.subr.bf16.mxu0 %v2062
    %2283 = vmatpush1.bf16.msra.mxu0 %v2061
    %2284 = vmatprep.subr.bf16.mxu0 %v2070
    %2285 = vmatpush1.bf16.msra.mxu0 %v2069
    %2286 = vmatprep.subr.bf16.mxu0 %v2078
    %2287 = vmatpush1.bf16.msra.mxu0 %v2077
    %2288 = vmatprep.subr.bf16.mxu0 %v2086
    %2289 = vmatpush1.bf16.msra.mxu0 %v2085
    %2290 = vmatprep.subr.bf16.mxu0 %v2094
    %2291 = vmatpush1.bf16.msra.mxu0 %v2093
    %2292 = vmatprep.subr.bf16.mxu0 %v2102
    %2293 = vmatpush1.bf16.msra.mxu0 %v2101
    %2294 = vmatprep.subr.bf16.mxu0 %v2110
    %2295 = vmatpush1.bf16.msra.mxu0 %v2109
    %2296 = vmatprep.subr.bf16.mxu0 %v2118
    %2297 = vmatpush1.bf16.msra.mxu0 %v2117
    %2298 = vmatprep.subr.bf16.mxu0 %v2126
    %2299 = vmatpush1.bf16.msra.mxu0 %v2125
    %2300 = vmatprep.subr.bf16.mxu0 %v2134
    %2301 = vmatpush1.bf16.msra.mxu0 %v2133
    %2302 = vmatprep.subr.bf16.mxu0 %v2142
    %2303 = vmatpush1.bf16.msra.mxu0 %v2141
    %2304 = vmatprep.subr.bf16.mxu0 %v2150
    %2305 = vmatpush1.bf16.msra.mxu0 %v2149
    %2306 = vmatprep.mubr.bf16.mxu0 %v2022
    %2307 = vmatmul.mubr.bf16.gmra.mrb[0].mxu0 %v2021
    %v2308 = vpop.f32.mrb[0].mxu0
    %v2309 = vadd.f32 0.0, %v2308
    %v2310 = vpop.f32.mrb[0].mxu0
    %v2311 = vadd.f32 0.0, %v2310
    %v2312 = vpop.f32.mrb[0].mxu0
    %v2313 = vpop.f32.mrb[0].mxu0
    %2314 = vdwg.mxu0
    %v2315 = vadd.f32 %v1773, %v2186
    %v2316 = vadd.f32 %v1775, %v2188
    %v2317 = vadd.f32 %v1814, %v2227
    %v2318 = vadd.f32 %v1816, %v2229
    %v2319 = vadd.f32 %v1855, %v2268
    %v2320 = vadd.f32 %v1857, %v2270
    %v2321 = vadd.f32 %v1896, %v2309
    %v2322 = vadd.f32 %v1898, %v2311
    %v2323 = vxor.u32 %v2315, 2147483648
    %v2324 = vxor.u32 %v2316, 2147483648
    %v2325 = vxor.u32 %v2317, 2147483648
    %v2326 = vxor.u32 %v2318, 2147483648
    %v2327 = vxor.u32 %v2319, 2147483648
    %v2328 = vxor.u32 %v2320, 2147483648
    %v2329 = vmul.f32 %v2323, 1.442695
    %v2330 = vpow.pop %v2329
    %v2331 = vmul.f32 %v2324, 1.442695
    %v2332 = vpow.pop %v2331
    %v2333 = vmul.f32 %v2325, 1.442695
    %v2334 = vpow.pop %v2333
    %v2335 = vmul.f32 %v2326, 1.442695
    %v2336 = vpow.pop %v2335
    %v2337 = vmul.f32 %v2327, 1.442695
    %v2338 = vpow.pop %v2337
    %v2339 = vmul.f32 %v2328, 1.442695
    %v2340 = vpow.pop %v2339
    %v2341 = vadd.f32 %v2330, 1.0
    %v2342 = vadd.f32 %v2332, 1.0
    %v2343 = vadd.f32 %v2334, 1.0
    %v2344 = vadd.f32 %v2336, 1.0
    %v2345 = vadd.f32 %v2338, 1.0
    %v2346 = vadd.f32 %v2340, 1.0
    %v2347 = vrcp.pop %v2341
    %v2348 = vmul.f32 1.0, %v2347
    %v2349 = vrcp.pop %v2342
    %v2350 = vmul.f32 1.0, %v2349
    %v2351 = vrcp.pop %v2343
    %v2352 = vmul.f32 1.0, %v2351
    %v2353 = vrcp.pop %v2344
    %v2354 = vmul.f32 1.0, %v2353
    %v2355 = vrcp.pop %v2345
    %v2356 = vmul.f32 1.0, %v2355
    %v2357 = vrcp.pop %v2346
    %v2358 = vmul.f32 1.0, %v2357
    %v2359 = vtanh.pop %v2321
    %v2360 = vtanh.pop %v2322
    %v2361 = vmul.f32 %v2352, %v1732
    %v2362 = vmul.f32 %v2354, %v1733
    %v2363 = vmul.f32 %v2348, %v2359
    %v2364 = vmul.f32 %v2350, %v2360
    %v2365 = vadd.f32 %v2361, %v2363
    %v2366 = vadd.f32 %v2362, %v2364
    %v2367 = vtanh.pop %v2365
    %v2368 = vtanh.pop %v2366
    %v2369 = vmul.f32 %v2356, %v2367
    %v2370 = vmul.f32 %v2358, %v2368
    %v2371 = vld [vmem:[#allocation3] sm:$0xff]
    %v2372 = vld [vmem:[#allocation3 + $0x8] sm:$0xff]
    %v2373 = vld [vmem:[#allocation3 + $0x10] sm:$0xff]
    %v2374 = vld [vmem:[#allocation3 + $0x18] sm:$0xff]
    %v2375 = vld [vmem:[#allocation3 + $0x20] sm:$0xff]
    %v2376 = vld [vmem:[#allocation3 + $0x28] sm:$0xff]
    %v2377 = vld [vmem:[#allocation3 + $0x30] sm:$0xff]
    %v2378 = vld [vmem:[#allocation3 + $0x38] sm:$0xff]
    %v2379 = vld [vmem:[#allocation3 + $0x40] sm:$0xff]
    %v2380 = vld [vmem:[#allocation3 + $0x48] sm:$0xff]
    %v2381 = vld [vmem:[#allocation3 + $0x50] sm:$0xff]
    %v2382 = vld [vmem:[#allocation3 + $0x58] sm:$0xff]
    %v2383 = vld [vmem:[#allocation3 + $0x60] sm:$0xff]
    %v2384 = vld [vmem:[#allocation3 + $0x68] sm:$0xff]
    %v2385 = vld [vmem:[#allocation3 + $0x70] sm:$0xff]
    %v2386 = vld [vmem:[#allocation3 + $0x78] sm:$0xff]
    %v2387 = vld [vmem:[#allocation3 + $0x80] sm:$0xff]
    %v2388 = vld [vmem:[#allocation3 + $0x88] sm:$0xff]
    %v2389 = vld [vmem:[#allocation3 + $0x90] sm:$0xff]
    %v2390 = vld [vmem:[#allocation3 + $0x98] sm:$0xff]
    %v2391 = vld [vmem:[#allocation3 + $0xa0] sm:$0xff]
    %v2392 = vld [vmem:[#allocation3 + $0xa8] sm:$0xff]
    %v2393 = vld [vmem:[#allocation3 + $0xb0] sm:$0xff]
    %v2394 = vld [vmem:[#allocation3 + $0xb8] sm:$0xff]
    %v2395 = vld [vmem:[#allocation3 + $0xc0] sm:$0xff]
    %v2396 = vld [vmem:[#allocation3 + $0xc8] sm:$0xff]
    %v2397 = vld [vmem:[#allocation3 + $0xd0] sm:$0xff]
    %v2398 = vld [vmem:[#allocation3 + $0xd8] sm:$0xff]
    %v2399 = vld [vmem:[#allocation3 + $0xe0] sm:$0xff]
    %v2400 = vld [vmem:[#allocation3 + $0xe8] sm:$0xff]
    %v2401 = vld [vmem:[#allocation3 + $0xf0] sm:$0xff]
    %v2402 = vld [vmem:[#allocation3 + $0xf8] sm:$0xff]
    %v2403 = vld [vmem:[#allocation3 + $0x100] sm:$0xff]
    %v2404 = vld [vmem:[#allocation3 + $0x108] sm:$0xff]
    %v2405 = vld [vmem:[#allocation3 + $0x110] sm:$0xff]
    %v2406 = vld [vmem:[#allocation3 + $0x118] sm:$0xff]
    %v2407 = vld [vmem:[#allocation3 + $0x120] sm:$0xff]
    %v2408 = vld [vmem:[#allocation3 + $0x128] sm:$0xff]
    %v2409 = vld [vmem:[#allocation3 + $0x130] sm:$0xff]
    %v2410 = vld [vmem:[#allocation3 + $0x138] sm:$0xff]
    %v2411 = vld [vmem:[#allocation3 + $0x140] sm:$0xff]
    %v2412 = vld [vmem:[#allocation3 + $0x148] sm:$0xff]
    %v2413 = vld [vmem:[#allocation3 + $0x150] sm:$0xff]
    %v2414 = vld [vmem:[#allocation3 + $0x158] sm:$0xff]
    %v2415 = vld [vmem:[#allocation3 + $0x160] sm:$0xff]
    %v2416 = vld [vmem:[#allocation3 + $0x168] sm:$0xff]
    %v2417 = vld [vmem:[#allocation3 + $0x170] sm:$0xff]
    %v2418 = vld [vmem:[#allocation3 + $0x178] sm:$0xff]
    %v2419 = vld [vmem:[#allocation3 + $0x180] sm:$0xff]
    %v2420 = vld [vmem:[#allocation3 + $0x188] sm:$0xff]
    %v2421 = vld [vmem:[#allocation3 + $0x190] sm:$0xff]
    %v2422 = vld [vmem:[#allocation3 + $0x198] sm:$0xff]
    %v2423 = vld [vmem:[#allocation3 + $0x1a0] sm:$0xff]
    %v2424 = vld [vmem:[#allocation3 + $0x1a8] sm:$0xff]
    %v2425 = vld [vmem:[#allocation3 + $0x1b0] sm:$0xff]
    %v2426 = vld [vmem:[#allocation3 + $0x1b8] sm:$0xff]
    %v2427 = vld [vmem:[#allocation3 + $0x1c0] sm:$0xff]
    %v2428 = vld [vmem:[#allocation3 + $0x1c8] sm:$0xff]
    %v2429 = vld [vmem:[#allocation3 + $0x1d0] sm:$0xff]
    %v2430 = vld [vmem:[#allocation3 + $0x1d8] sm:$0xff]
    %v2431 = vld [vmem:[#allocation3 + $0x1e0] sm:$0xff]
    %v2432 = vld [vmem:[#allocation3 + $0x1e8] sm:$0xff]
    %v2433 = vld [vmem:[#allocation3 + $0x1f0] sm:$0xff]
    %v2434 = vld [vmem:[#allocation3 + $0x1f8] sm:$0xff]
    %v2435 = vld [vmem:[%s6] sm:$0xff]
    %v2437 = vlaneseq
    %v2438 = vshrl.u32 %v2437, 7
    %v2439 = vsub.s32 0, %v2438
    %v2440 = vrot.slane %v2435, %v2439
    %v2441 = vlaneseq
    %v2442 = vshrl.u32 %v2441, 7
    %v2443 = vsub.s32 1, %v2442
    %v2444 = vrot.slane %v2435, %v2443
    %v2445 = vlaneseq
    %v2446 = vshrl.u32 %v2445, 7
    %v2447 = vsub.s32 2, %v2446
    %v2448 = vrot.slane %v2435, %v2447
    %v2449 = vlaneseq
    %v2450 = vshrl.u32 %v2449, 7
    %v2451 = vsub.s32 3, %v2450
    %v2452 = vrot.slane %v2435, %v2451
    %v2453 = vlaneseq
    %v2454 = vshrl.u32 %v2453, 7
    %v2455 = vsub.s32 4, %v2454
    %v2456 = vrot.slane %v2435, %v2455
    %v2457 = vlaneseq
    %v2458 = vshrl.u32 %v2457, 7
    %v2459 = vsub.s32 5, %v2458
    %v2460 = vrot.slane %v2435, %v2459
    %v2461 = vlaneseq
    %v2462 = vshrl.u32 %v2461, 7
    %v2463 = vsub.s32 6, %v2462
    %v2464 = vrot.slane %v2435, %v2463
    %v2465 = vlaneseq
    %v2466 = vshrl.u32 %v2465, 7
    %v2467 = vsub.s32 7, %v2466
    %v2468 = vrot.slane %v2435, %v2467
    %2477 = vmatprep.subr.bf16.mxu0 %v2372
    %2478 = vmatpush1.bf16.msra.mxu0 %v2371
    %2479 = vmatprep.subr.bf16.mxu0 %v2380
    %2480 = vmatpush1.bf16.msra.mxu0 %v2379
    %2481 = vmatprep.subr.bf16.mxu0 %v2388
    %2482 = vmatpush1.bf16.msra.mxu0 %v2387
    %2483 = vmatprep.subr.bf16.mxu0 %v2396
    %2484 = vmatpush1.bf16.msra.mxu0 %v2395
    %2485 = vmatprep.subr.bf16.mxu0 %v2404
    %2486 = vmatpush1.bf16.msra.mxu0 %v2403
    %2487 = vmatprep.subr.bf16.mxu0 %v2412
    %2488 = vmatpush1.bf16.msra.mxu0 %v2411
    %2489 = vmatprep.subr.bf16.mxu0 %v2420
    %2490 = vmatpush1.bf16.msra.mxu0 %v2419
    %2491 = vmatprep.subr.bf16.mxu0 %v2428
    %2492 = vmatpush1.bf16.msra.mxu0 %v2427
    %2493 = vmatprep.subr.bf16.mxu0 0
    %2494 = vmatpush1.bf16.msra.mxu0 0
    %2495 = vmatprep.subr.bf16.mxu0 0
    %2496 = vmatpush1.bf16.msra.mxu0 0
    %2497 = vmatprep.subr.bf16.mxu0 0
    %2498 = vmatpush1.bf16.msra.mxu0 0
    %2499 = vmatprep.subr.bf16.mxu0 0
    %2500 = vmatpush1.bf16.msra.mxu0 0
    %2501 = vmatprep.subr.bf16.mxu0 0
    %2502 = vmatpush1.bf16.msra.mxu0 0
    %2503 = vmatprep.subr.bf16.mxu0 0
    %2504 = vmatpush1.bf16.msra.mxu0 0
    %2505 = vmatprep.subr.bf16.mxu0 0
    %2506 = vmatpush1.bf16.msra.mxu0 0
    %2507 = vmatprep.subr.bf16.mxu0 0
    %2508 = vmatpush1.bf16.msra.mxu0 0
    %2509 = vmatprep.mubr.bf16.mxu0 0
    %2510 = vmatmul.mubr.bf16.gmra.mrb[0].mxu0 %v2016
    %v2511 = vpop.f32.mrb[0].mxu0
    %v2512 = vadd.f32 %v2440, %v2511
    %v2513 = vpop.f32.mrb[0].mxu0
    %v2514 = vadd.f32 %v2444, %v2513
    %v2515 = vpop.f32.mrb[0].mxu0
    %v2516 = vpop.f32.mrb[0].mxu0
    %2517 = vdwg.mxu0
    %2518 = vmatprep.subr.bf16.mxu0 %v2374
    %2519 = vmatpush1.bf16.msra.mxu0 %v2373
    %2520 = vmatprep.subr.bf16.mxu0 %v2382
    %2521 = vmatpush1.bf16.msra.mxu0 %v2381
    %2522 = vmatprep.subr.bf16.mxu0 %v2390
    %2523 = vmatpush1.bf16.msra.mxu0 %v2389
    %2524 = vmatprep.subr.bf16.mxu0 %v2398
    %2525 = vmatpush1.bf16.msra.mxu0 %v2397
    %2526 = vmatprep.subr.bf16.mxu0 %v2406
    %2527 = vmatpush1.bf16.msra.mxu0 %v2405
    %2528 = vmatprep.subr.bf16.mxu0 %v2414
    %2529 = vmatpush1.bf16.msra.mxu0 %v2413
    %2530 = vmatprep.subr.bf16.mxu0 %v2422
    %2531 = vmatpush1.bf16.msra.mxu0 %v2421
    %2532 = vmatprep.subr.bf16.mxu0 %v2430
    %2533 = vmatpush1.bf16.msra.mxu0 %v2429
    %2534 = vmatprep.subr.bf16.mxu0 0
    %2535 = vmatpush1.bf16.msra.mxu0 0
    %2536 = vmatprep.subr.bf16.mxu0 0
    %2537 = vmatpush1.bf16.msra.mxu0 0
    %2538 = vmatprep.subr.bf16.mxu0 0
    %2539 = vmatpush1.bf16.msra.mxu0 0
    %2540 = vmatprep.subr.bf16.mxu0 0
    %2541 = vmatpush1.bf16.msra.mxu0 0
    %2542 = vmatprep.subr.bf16.mxu0 0
    %2543 = vmatpush1.bf16.msra.mxu0 0
    %2544 = vmatprep.subr.bf16.mxu0 0
    %2545 = vmatpush1.bf16.msra.mxu0 0
    %2546 = vmatprep.subr.bf16.mxu0 0
    %2547 = vmatpush1.bf16.msra.mxu0 0
    %2548 = vmatprep.subr.bf16.mxu0 0
    %2549 = vmatpush1.bf16.msra.mxu0 0
    %2550 = vmatprep.mubr.bf16.mxu0 0
    %2551 = vmatmul.mubr.bf16.gmra.mrb[0].mxu0 %v2016
    %v2552 = vpop.f32.mrb[0].mxu0
    %v2553 = vadd.f32 %v2448, %v2552
    %v2554 = vpop.f32.mrb[0].mxu0
    %v2555 = vadd.f32 %v2452, %v2554
    %v2556 = vpop.f32.mrb[0].mxu0
    %v2557 = vpop.f32.mrb[0].mxu0
    %2558 = vdwg.mxu0
    %2559 = vmatprep.subr.bf16.mxu0 %v2376
    %2560 = vmatpush1.bf16.msra.mxu0 %v2375
    %2561 = vmatprep.subr.bf16.mxu0 %v2384
    %2562 = vmatpush1.bf16.msra.mxu0 %v2383
    %2563 = vmatprep.subr.bf16.mxu0 %v2392
    %2564 = vmatpush1.bf16.msra.mxu0 %v2391
    %2565 = vmatprep.subr.bf16.mxu0 %v2400
    %2566 = vmatpush1.bf16.msra.mxu0 %v2399
    %2567 = vmatprep.subr.bf16.mxu0 %v2408
    %2568 = vmatpush1.bf16.msra.mxu0 %v2407
    %2569 = vmatprep.subr.bf16.mxu0 %v2416
    %2570 = vmatpush1.bf16.msra.mxu0 %v2415
    %2571 = vmatprep.subr.bf16.mxu0 %v2424
    %2572 = vmatpush1.bf16.msra.mxu0 %v2423
    %2573 = vmatprep.subr.bf16.mxu0 %v2432
    %2574 = vmatpush1.bf16.msra.mxu0 %v2431
    %2575 = vmatprep.subr.bf16.mxu0 0
    %2576 = vmatpush1.bf16.msra.mxu0 0
    %2577 = vmatprep.subr.bf16.mxu0 0
    %2578 = vmatpush1.bf16.msra.mxu0 0
    %2579 = vmatprep.subr.bf16.mxu0 0
    %2580 = vmatpush1.bf16.msra.mxu0 0
    %2581 = vmatprep.subr.bf16.mxu0 0
    %2582 = vmatpush1.bf16.msra.mxu0 0
    %2583 = vmatprep.subr.bf16.mxu0 0
    %2584 = vmatpush1.bf16.msra.mxu0 0
    %2585 = vmatprep.subr.bf16.mxu0 0
    %2586 = vmatpush1.bf16.msra.mxu0 0
    %2587 = vmatprep.subr.bf16.mxu0 0
    %2588 = vmatpush1.bf16.msra.mxu0 0
    %2589 = vmatprep.subr.bf16.mxu0 0
    %2590 = vmatpush1.bf16.msra.mxu0 0
    %2591 = vmatprep.mubr.bf16.mxu0 0
    %2592 = vmatmul.mubr.bf16.gmra.mrb[0].mxu0 %v2016
    %v2593 = vpop.f32.mrb[0].mxu0
    %v2594 = vadd.f32 %v2456, %v2593
    %v2595 = vpop.f32.mrb[0].mxu0
    %v2596 = vadd.f32 %v2460, %v2595
    %v2597 = vpop.f32.mrb[0].mxu0
    %v2598 = vpop.f32.mrb[0].mxu0
    %2599 = vdwg.mxu0
    %2600 = vmatprep.subr.bf16.mxu0 %v2378
    %2601 = vmatpush1.bf16.msra.mxu0 %v2377
    %2602 = vmatprep.subr.bf16.mxu0 %v2386
    %2603 = vmatpush1.bf16.msra.mxu0 %v2385
    %2604 = vmatprep.subr.bf16.mxu0 %v2394
    %2605 = vmatpush1.bf16.msra.mxu0 %v2393
    %2606 = vmatprep.subr.bf16.mxu0 %v2402
    %2607 = vmatpush1.bf16.msra.mxu0 %v2401
    %2608 = vmatprep.subr.bf16.mxu0 %v2410
    %2609 = vmatpush1.bf16.msra.mxu0 %v2409
    %2610 = vmatprep.subr.bf16.mxu0 %v2418
    %2611 = vmatpush1.bf16.msra.mxu0 %v2417
    %2612 = vmatprep.subr.bf16.mxu0 %v2426
    %2613 = vmatpush1.bf16.msra.mxu0 %v2425
    %2614 = vmatprep.subr.bf16.mxu0 %v2434
    %2615 = vmatpush1.bf16.msra.mxu0 %v2433
    %2616 = vmatprep.subr.bf16.mxu0 0
    %2617 = vmatpush1.bf16.msra.mxu0 0
    %2618 = vmatprep.subr.bf16.mxu0 0
    %2619 = vmatpush1.bf16.msra.mxu0 0
    %2620 = vmatprep.subr.bf16.mxu0 0
    %2621 = vmatpush1.bf16.msra.mxu0 0
    %2622 = vmatprep.subr.bf16.mxu0 0
    %2623 = vmatpush1.bf16.msra.mxu0 0
    %2624 = vmatprep.subr.bf16.mxu0 0
    %2625 = vmatpush1.bf16.msra.mxu0 0
    %2626 = vmatprep.subr.bf16.mxu0 0
    %2627 = vmatpush1.bf16.msra.mxu0 0
    %2628 = vmatprep.subr.bf16.mxu0 0
    %2629 = vmatpush1.bf16.msra.mxu0 0
    %2630 = vmatprep.subr.bf16.mxu0 0
    %2631 = vmatpush1.bf16.msra.mxu0 0
    %2632 = vmatprep.mubr.bf16.mxu0 0
    %2633 = vmatmul.mubr.bf16.gmra.mrb[0].mxu0 %v2016
    %v2634 = vpop.f32.mrb[0].mxu0
    %v2635 = vadd.f32 %v2464, %v2634
    %v2636 = vpop.f32.mrb[0].mxu0
    %v2637 = vadd.f32 %v2468, %v2636
    %v2638 = vpop.f32.mrb[0].mxu0
    %v2639 = vpop.f32.mrb[0].mxu0
    %2640 = vdwg.mxu0
    %v2641 = vld [vmem:[#allocation2 + $0x60] sm:$0xff]
    %v2642 = vld [vmem:[#allocation2 + $0x68] sm:$0xff]
    %v2643 = vld [vmem:[#allocation2 + $0x70] sm:$0xff]
    %v2644 = vld [vmem:[#allocation2 + $0x78] sm:$0xff]
    %v2645 = vld [vmem:[#allocation9] sm:$0xff]
    %v2646 = vld [vmem:[#allocation9 + $0x8] sm:$0xff]
    %v2647 = vld [vmem:[#allocation9 + $0x10] sm:$0xff]
    %v2648 = vld [vmem:[#allocation9 + $0x18] sm:$0xff]
    %v2649 = vld [vmem:[#allocation9 + $0x20] sm:$0xff]
    %v2650 = vld [vmem:[#allocation9 + $0x28] sm:$0xff]
    %v2651 = vld [vmem:[#allocation9 + $0x30] sm:$0xff]
    %v2652 = vld [vmem:[#allocation9 + $0x38] sm:$0xff]
    %v2653 = vld [vmem:[#allocation9 + $0x40] sm:$0xff]
    %v2654 = vld [vmem:[#allocation9 + $0x48] sm:$0xff]
    %v2655 = vld [vmem:[#allocation9 + $0x50] sm:$0xff]
    %v2656 = vld [vmem:[#allocation9 + $0x58] sm:$0xff]
    %v2657 = vld [vmem:[#allocation9 + $0x60] sm:$0xff]
    %v2658 = vld [vmem:[#allocation9 + $0x68] sm:$0xff]
    %v2659 = vld [vmem:[#allocation9 + $0x70] sm:$0xff]
    %v2660 = vld [vmem:[#allocation9 + $0x78] sm:$0xff]
    %v2661 = vld [vmem:[#allocation9 + $0x80] sm:$0xff]
    %v2662 = vld [vmem:[#allocation9 + $0x88] sm:$0xff]
    %v2663 = vld [vmem:[#allocation9 + $0x90] sm:$0xff]
    %v2664 = vld [vmem:[#allocation9 + $0x98] sm:$0xff]
    %v2665 = vld [vmem:[#allocation9 + $0xa0] sm:$0xff]
    %v2666 = vld [vmem:[#allocation9 + $0xa8] sm:$0xff]
    %v2667 = vld [vmem:[#allocation9 + $0xb0] sm:$0xff]
    %v2668 = vld [vmem:[#allocation9 + $0xb8] sm:$0xff]
    %v2669 = vld [vmem:[#allocation9 + $0xc0] sm:$0xff]
    %v2670 = vld [vmem:[#allocation9 + $0xc8] sm:$0xff]
    %v2671 = vld [vmem:[#allocation9 + $0xd0] sm:$0xff]
    %v2672 = vld [vmem:[#allocation9 + $0xd8] sm:$0xff]
    %v2673 = vld [vmem:[#allocation9 + $0xe0] sm:$0xff]
    %v2674 = vld [vmem:[#allocation9 + $0xe8] sm:$0xff]
    %v2675 = vld [vmem:[#allocation9 + $0xf0] sm:$0xff]
    %v2676 = vld [vmem:[#allocation9 + $0xf8] sm:$0xff]
    %v2709 = vunpack.c.l.b16 %v2645
    %v2710 = vunpack.c.h.b16 %v2645
    %v2711 = vunpack.c.l.b16 %v2646
    %v2712 = vunpack.c.h.b16 %v2646
    %v2713 = vunpack.c.l.b16 %v2647
    %v2714 = vunpack.c.h.b16 %v2647
    %v2715 = vunpack.c.l.b16 %v2648
    %v2716 = vunpack.c.h.b16 %v2648
    %v2717 = vunpack.c.l.b16 %v2649
    %v2718 = vunpack.c.h.b16 %v2649
    %v2719 = vunpack.c.l.b16 %v2650
    %v2720 = vunpack.c.h.b16 %v2650
    %v2721 = vunpack.c.l.b16 %v2651
    %v2722 = vunpack.c.h.b16 %v2651
    %v2723 = vunpack.c.l.b16 %v2652
    %v2724 = vunpack.c.h.b16 %v2652
    %v2725 = vunpack.c.l.b16 %v2653
    %v2726 = vunpack.c.h.b16 %v2653
    %v2727 = vunpack.c.l.b16 %v2654
    %v2728 = vunpack.c.h.b16 %v2654
    %v2729 = vunpack.c.l.b16 %v2655
    %v2730 = vunpack.c.h.b16 %v2655
    %v2731 = vunpack.c.l.b16 %v2656
    %v2732 = vunpack.c.h.b16 %v2656
    %v2733 = vunpack.c.l.b16 %v2657
    %v2734 = vunpack.c.h.b16 %v2657
    %v2735 = vunpack.c.l.b16 %v2658
    %v2736 = vunpack.c.h.b16 %v2658
    %v2737 = vunpack.c.l.b16 %v2659
    %v2738 = vunpack.c.h.b16 %v2659
    %v2739 = vunpack.c.l.b16 %v2660
    %v2740 = vunpack.c.h.b16 %v2660
    %v2741 = vunpack.c.l.b16 %v2661
    %v2742 = vunpack.c.h.b16 %v2661
    %v2743 = vunpack.c.l.b16 %v2662
    %v2744 = vunpack.c.h.b16 %v2662
    %v2745 = vunpack.c.l.b16 %v2663
    %v2746 = vunpack.c.h.b16 %v2663
    %v2747 = vunpack.c.l.b16 %v2664
    %v2748 = vunpack.c.h.b16 %v2664
    %v2749 = vunpack.c.l.b16 %v2665
    %v2750 = vunpack.c.h.b16 %v2665
    %v2751 = vunpack.c.l.b16 %v2666
    %v2752 = vunpack.c.h.b16 %v2666
    %v2753 = vunpack.c.l.b16 %v2667
    %v2754 = vunpack.c.h.b16 %v2667
    %v2755 = vunpack.c.l.b16 %v2668
    %v2756 = vunpack.c.h.b16 %v2668
    %v2757 = vunpack.c.l.b16 %v2669
    %v2758 = vunpack.c.h.b16 %v2669
    %v2759 = vunpack.c.l.b16 %v2670
    %v2760 = vunpack.c.h.b16 %v2670
    %v2761 = vunpack.c.l.b16 %v2671
    %v2762 = vunpack.c.h.b16 %v2671
    %v2763 = vunpack.c.l.b16 %v2672
    %v2764 = vunpack.c.h.b16 %v2672
    %v2765 = vunpack.c.l.b16 %v2673
    %v2766 = vunpack.c.h.b16 %v2673
    %v2767 = vunpack.c.l.b16 %v2674
    %v2768 = vunpack.c.h.b16 %v2674
    %v2769 = vunpack.c.l.b16 %v2675
    %v2770 = vunpack.c.h.b16 %v2675
    %v2771 = vunpack.c.l.b16 %v2676
    %v2772 = vunpack.c.h.b16 %v2676
    %v2773 = vpack.c.b16 %v2713, %v2709
    %v2774 = vpack.c.b16 %v2714, %v2710
    %v2775 = vpack.c.b16 %v2715, %v2711
    %v2776 = vpack.c.b16 %v2716, %v2712
    %v2777 = vpack.c.b16 %v2721, %v2717
    %v2778 = vpack.c.b16 %v2722, %v2718
    %v2779 = vpack.c.b16 %v2723, %v2719
    %v2780 = vpack.c.b16 %v2724, %v2720
    %v2781 = vpack.c.b16 %v2729, %v2725
    %v2782 = vpack.c.b16 %v2730, %v2726
    %v2783 = vpack.c.b16 %v2731, %v2727
    %v2784 = vpack.c.b16 %v2732, %v2728
    %v2785 = vpack.c.b16 %v2737, %v2733
    %v2786 = vpack.c.b16 %v2738, %v2734
    %v2787 = vpack.c.b16 %v2739, %v2735
    %v2788 = vpack.c.b16 %v2740, %v2736
    %v2789 = vpack.c.b16 %v2745, %v2741
    %v2790 = vpack.c.b16 %v2746, %v2742
    %v2791 = vpack.c.b16 %v2747, %v2743
    %v2792 = vpack.c.b16 %v2748, %v2744
    %v2793 = vpack.c.b16 %v2753, %v2749
    %v2794 = vpack.c.b16 %v2754, %v2750
    %v2795 = vpack.c.b16 %v2755, %v2751
    %v2796 = vpack.c.b16 %v2756, %v2752
    %v2797 = vpack.c.b16 %v2761, %v2757
    %v2798 = vpack.c.b16 %v2762, %v2758
    %v2799 = vpack.c.b16 %v2763, %v2759
    %v2800 = vpack.c.b16 %v2764, %v2760
    %v2801 = vpack.c.b16 %v2769, %v2765
    %v2802 = vpack.c.b16 %v2770, %v2766
    %v2803 = vpack.c.b16 %v2771, %v2767
    %v2804 = vpack.c.b16 %v2772, %v2768
    %2837 = vmatprep.subr.bf16.mxu0 %v2774
    %2838 = vmatpush1.bf16.msra.mxu0 %v2773
    %2839 = vmatprep.subr.bf16.mxu0 %v2778
    %2840 = vmatpush1.bf16.msra.mxu0 %v2777
    %2841 = vmatprep.subr.bf16.mxu0 %v2782
    %2842 = vmatpush1.bf16.msra.mxu0 %v2781
    %2843 = vmatprep.subr.bf16.mxu0 %v2786
    %2844 = vmatpush1.bf16.msra.mxu0 %v2785
    %2845 = vmatprep.subr.bf16.mxu0 %v2790
    %2846 = vmatpush1.bf16.msra.mxu0 %v2789
    %2847 = vmatprep.subr.bf16.mxu0 %v2794
    %2848 = vmatpush1.bf16.msra.mxu0 %v2793
    %2849 = vmatprep.subr.bf16.mxu0 %v2798
    %2850 = vmatpush1.bf16.msra.mxu0 %v2797
    %2851 = vmatprep.subr.bf16.mxu0 %v2802
    %2852 = vmatpush1.bf16.msra.mxu0 %v2801
    %2853 = vmatprep.subr.bf16.mxu0 0
    %2854 = vmatpush1.bf16.msra.mxu0 0
    %2855 = vmatprep.subr.bf16.mxu0 0
    %2856 = vmatpush1.bf16.msra.mxu0 0
    %2857 = vmatprep.subr.bf16.mxu0 0
    %2858 = vmatpush1.bf16.msra.mxu0 0
    %2859 = vmatprep.subr.bf16.mxu0 0
    %2860 = vmatpush1.bf16.msra.mxu0 0
    %2861 = vmatprep.subr.bf16.mxu0 0
    %2862 = vmatpush1.bf16.msra.mxu0 0
    %2863 = vmatprep.subr.bf16.mxu0 0
    %2864 = vmatpush1.bf16.msra.mxu0 0
    %2865 = vmatprep.subr.bf16.mxu0 0
    %2866 = vmatpush1.bf16.msra.mxu0 0
    %2867 = vmatprep.subr.bf16.mxu0 0
    %2868 = vmatpush1.bf16.msra.mxu0 0
    %2869 = vmatprep.mubr.bf16.mxu0 0
    %2870 = vmatmul.mubr.bf16.gmra.mrb[0].mxu0 %v2016
    %v2871 = vpop.f32.mrb[0].mxu0
    %v2872 = vadd.f32 0.0, %v2871
    %v2873 = vpop.f32.mrb[0].mxu0
    %v2874 = vadd.f32 0.0, %v2873
    %v2875 = vpop.f32.mrb[0].mxu0
    %v2876 = vpop.f32.mrb[0].mxu0
    %2877 = vdwg.mxu0
    %2878 = vmatprep.subr.bf16.mxu0 %v2776
    %2879 = vmatpush1.bf16.msra.mxu0 %v2775
    %2880 = vmatprep.subr.bf16.mxu0 %v2780
    %2881 = vmatpush1.bf16.msra.mxu0 %v2779
    %2882 = vmatprep.subr.bf16.mxu0 %v2784
    %2883 = vmatpush1.bf16.msra.mxu0 %v2783
    %2884 = vmatprep.subr.bf16.mxu0 %v2788
    %2885 = vmatpush1.bf16.msra.mxu0 %v2787
    %2886 = vmatprep.subr.bf16.mxu0 %v2792
    %2887 = vmatpush1.bf16.msra.mxu0 %v2791
    %2888 = vmatprep.subr.bf16.mxu0 %v2796
    %2889 = vmatpush1.bf16.msra.mxu0 %v2795
    %2890 = vmatprep.subr.bf16.mxu0 %v2800
    %2891 = vmatpush1.bf16.msra.mxu0 %v2799
    %2892 = vmatprep.subr.bf16.mxu0 %v2804
    %2893 = vmatpush1.bf16.msra.mxu0 %v2803
    %2894 = vmatprep.subr.bf16.mxu0 0
    %2895 = vmatpush1.bf16.msra.mxu0 0
    %2896 = vmatprep.subr.bf16.mxu0 0
    %2897 = vmatpush1.bf16.msra.mxu0 0
    %2898 = vmatprep.subr.bf16.mxu0 0
    %2899 = vmatpush1.bf16.msra.mxu0 0
    %2900 = vmatprep.subr.bf16.mxu0 0
    %2901 = vmatpush1.bf16.msra.mxu0 0
    %2902 = vmatprep.subr.bf16.mxu0 0
    %2903 = vmatpush1.bf16.msra.mxu0 0
    %2904 = vmatprep.subr.bf16.mxu0 0
    %2905 = vmatpush1.bf16.msra.mxu0 0
    %2906 = vmatprep.subr.bf16.mxu0 0
    %2907 = vmatpush1.bf16.msra.mxu0 0
    %2908 = vmatprep.subr.bf16.mxu0 0
    %2909 = vmatpush1.bf16.msra.mxu0 0
    %2910 = vmatprep.mubr.bf16.mxu0 0
    %2911 = vmatmul.mubr.bf16.gmra.mrb[0].mxu0 %v2016
    %v2912 = vpop.f32.mrb[0].mxu0
    %v2913 = vadd.f32 0.0, %v2912
    %v2914 = vpop.f32.mrb[0].mxu0
    %v2915 = vadd.f32 0.0, %v2914
    %v2916 = vpop.f32.mrb[0].mxu0
    %v2917 = vpop.f32.mrb[0].mxu0
    %2918 = vdwg.mxu0
    %v2919 = vadd.f32 %v2641, %v2872
    %v2920 = vadd.f32 %v2642, %v2874
    %v2921 = vadd.f32 %v2643, %v2913
    %v2922 = vadd.f32 %v2644, %v2915
    %v2923 = vxor.u32 %v2919, 2147483648
    %v2924 = vxor.u32 %v2920, 2147483648
    %v2925 = vxor.u32 %v2921, 2147483648
    %v2926 = vmul.f32 %v2923, 1.442695
    %v2927 = vpow.pop %v2926
    %v2928 = vmul.f32 %v2924, 1.442695
    %v2929 = vpow.pop %v2928
    %v2930 = vmul.f32 %v2925, 1.442695
    %v2931 = vpow.pop %v2930
    %v2932 = vadd.f32 %v2927, 1.0
    %v2933 = vadd.f32 %v2929, 1.0
    %v2934 = vadd.f32 %v2931, 1.0
    %v2935 = vrcp.pop %v2932
    %v2936 = vmul.f32 1.0, %v2935
    %v2937 = vrcp.pop %v2933
    %v2938 = vmul.f32 1.0, %v2937
    %v2939 = vrcp.pop %v2934
    %v2940 = vmul.f32 1.0, %v2939
    %v2941 = vtanh.pop %v2922
    %v2942 = vmul.f32 %v2938, %v2013
    %v2943 = vmul.f32 %v2936, %v2941
    %v2944 = vadd.f32 %v2942, %v2943
    %v2945 = vtanh.pop %v2944
    %v2946 = vmul.f32 %v2940, %v2945
    %v2947 = vpack.c.bf16 %v2946, %v2946
    %v2948 = vpack.c.bf16 %v2369, %v2369
    %v2949 = vpack.c.bf16 %v2370, %v2370
    %2950 = vmatprep.subr.bf16.mxu0 %v2024
    %2951 = vmatpush1.bf16.msra.mxu0 %v2023
    %2952 = vmatprep.subr.bf16.mxu0 %v2032
    %2953 = vmatpush1.bf16.msra.mxu0 %v2031
    %2954 = vmatprep.subr.bf16.mxu0 %v2040
    %2955 = vmatpush1.bf16.msra.mxu0 %v2039
    %2956 = vmatprep.subr.bf16.mxu0 %v2048
    %2957 = vmatpush1.bf16.msra.mxu0 %v2047
    %2958 = vmatprep.subr.bf16.mxu0 %v2056
    %2959 = vmatpush1.bf16.msra.mxu0 %v2055
    %2960 = vmatprep.subr.bf16.mxu0 %v2064
    %2961 = vmatpush1.bf16.msra.mxu0 %v2063
    %2962 = vmatprep.subr.bf16.mxu0 %v2072
    %2963 = vmatpush1.bf16.msra.mxu0 %v2071
    %2964 = vmatprep.subr.bf16.mxu0 %v2080
    %2965 = vmatpush1.bf16.msra.mxu0 %v2079
    %2966 = vmatprep.subr.bf16.mxu0 %v2088
    %2967 = vmatpush1.bf16.msra.mxu0 %v2087
    %2968 = vmatprep.subr.bf16.mxu0 %v2096
    %2969 = vmatpush1.bf16.msra.mxu0 %v2095
    %2970 = vmatprep.subr.bf16.mxu0 %v2104
    %2971 = vmatpush1.bf16.msra.mxu0 %v2103
    %2972 = vmatprep.subr.bf16.mxu0 %v2112
    %2973 = vmatpush1.bf16.msra.mxu0 %v2111
    %2974 = vmatprep.subr.bf16.mxu0 %v2120
    %2975 = vmatpush1.bf16.msra.mxu0 %v2119
    %2976 = vmatprep.subr.bf16.mxu0 %v2128
    %2977 = vmatpush1.bf16.msra.mxu0 %v2127
    %2978 = vmatprep.subr.bf16.mxu0 %v2136
    %2979 = vmatpush1.bf16.msra.mxu0 %v2135
    %2980 = vmatprep.subr.bf16.mxu0 %v2144
    %2981 = vmatpush1.bf16.msra.mxu0 %v2143
    %2982 = vmatprep.mubr.bf16.mxu0 %v2949
    %2983 = vmatmul.mubr.bf16.gmra.mrb[0].mxu0 %v2948
    %v2984 = vpop.f32.mrb[0].mxu0
    %v2985 = vadd.f32 0.0, %v2984
    %v2986 = vpop.f32.mrb[0].mxu0
    %v2987 = vadd.f32 0.0, %v2986
    %v2988 = vpop.f32.mrb[0].mxu0
    %v2989 = vpop.f32.mrb[0].mxu0
    %2990 = vdwg.mxu0
    %2991 = vmatprep.subr.bf16.mxu0 %v2026
    %2992 = vmatpush1.bf16.msra.mxu0 %v2025
    %2993 = vmatprep.subr.bf16.mxu0 %v2034
    %2994 = vmatpush1.bf16.msra.mxu0 %v2033
    %2995 = vmatprep.subr.bf16.mxu0 %v2042
    %2996 = vmatpush1.bf16.msra.mxu0 %v2041
    %2997 = vmatprep.subr.bf16.mxu0 %v2050
    %2998 = vmatpush1.bf16.msra.mxu0 %v2049
    %2999 = vmatprep.subr.bf16.mxu0 %v2058
    %3000 = vmatpush1.bf16.msra.mxu0 %v2057
    %3001 = vmatprep.subr.bf16.mxu0 %v2066
    %3002 = vmatpush1.bf16.msra.mxu0 %v2065
    %3003 = vmatprep.subr.bf16.mxu0 %v2074
    %3004 = vmatpush1.bf16.msra.mxu0 %v2073
    %3005 = vmatprep.subr.bf16.mxu0 %v2082
    %3006 = vmatpush1.bf16.msra.mxu0 %v2081
    %3007 = vmatprep.subr.bf16.mxu0 %v2090
    %3008 = vmatpush1.bf16.msra.mxu0 %v2089
    %3009 = vmatprep.subr.bf16.mxu0 %v2098
    %3010 = vmatpush1.bf16.msra.mxu0 %v2097
    %3011 = vmatprep.subr.bf16.mxu0 %v2106
    %3012 = vmatpush1.bf16.msra.mxu0 %v2105
    %3013 = vmatprep.subr.bf16.mxu0 %v2114
    %3014 = vmatpush1.bf16.msra.mxu0 %v2113
    %3015 = vmatprep.subr.bf16.mxu0 %v2122
    %3016 = vmatpush1.bf16.msra.mxu0 %v2121
    %3017 = vmatprep.subr.bf16.mxu0 %v2130
    %3018 = vmatpush1.bf16.msra.mxu0 %v2129
    %3019 = vmatprep.subr.bf16.mxu0 %v2138
    %3020 = vmatpush1.bf16.msra.mxu0 %v2137
    %3021 = vmatprep.subr.bf16.mxu0 %v2146
    %3022 = vmatpush1.bf16.msra.mxu0 %v2145
    %3023 = vmatprep.mubr.bf16.mxu0 %v2949
    %3024 = vmatmul.mubr.bf16.gmra.mrb[0].mxu0 %v2948
    %v3025 = vpop.f32.mrb[0].mxu0
    %v3026 = vadd.f32 0.0, %v3025
    %v3027 = vpop.f32.mrb[0].mxu0
    %v3028 = vadd.f32 0.0, %v3027
    %v3029 = vpop.f32.mrb[0].mxu0
    %v3030 = vpop.f32.mrb[0].mxu0
    %3031 = vdwg.mxu0
    %3032 = vmatprep.subr.bf16.mxu0 %v2028
    %3033 = vmatpush1.bf16.msra.mxu0 %v2027
    %3034 = vmatprep.subr.bf16.mxu0 %v2036
    %3035 = vmatpush1.bf16.msra.mxu0 %v2035
    %3036 = vmatprep.subr.bf16.mxu0 %v2044
    %3037 = vmatpush1.bf16.msra.mxu0 %v2043
    %3038 = vmatprep.subr.bf16.mxu0 %v2052
    %3039 = vmatpush1.bf16.msra.mxu0 %v2051
    %3040 = vmatprep.subr.bf16.mxu0 %v2060
    %3041 = vmatpush1.bf16.msra.mxu0 %v2059
    %3042 = vmatprep.subr.bf16.mxu0 %v2068
    %3043 = vmatpush1.bf16.msra.mxu0 %v2067
    %3044 = vmatprep.subr.bf16.mxu0 %v2076
    %3045 = vmatpush1.bf16.msra.mxu0 %v2075
    %3046 = vmatprep.subr.bf16.mxu0 %v2084
    %3047 = vmatpush1.bf16.msra.mxu0 %v2083
    %3048 = vmatprep.subr.bf16.mxu0 %v2092
    %3049 = vmatpush1.bf16.msra.mxu0 %v2091
    %3050 = vmatprep.subr.bf16.mxu0 %v2100
    %3051 = vmatpush1.bf16.msra.mxu0 %v2099
    %3052 = vmatprep.subr.bf16.mxu0 %v2108
    %3053 = vmatpush1.bf16.msra.mxu0 %v2107
    %3054 = vmatprep.subr.bf16.mxu0 %v2116
    %3055 = vmatpush1.bf16.msra.mxu0 %v2115
    %3056 = vmatprep.subr.bf16.mxu0 %v2124
    %3057 = vmatpush1.bf16.msra.mxu0 %v2123
    %3058 = vmatprep.subr.bf16.mxu0 %v2132
    %3059 = vmatpush1.bf16.msra.mxu0 %v2131
    %3060 = vmatprep.subr.bf16.mxu0 %v2140
    %3061 = vmatpush1.bf16.msra.mxu0 %v2139
    %3062 = vmatprep.subr.bf16.mxu0 %v2148
    %3063 = vmatpush1.bf16.msra.mxu0 %v2147
    %3064 = vmatprep.mubr.bf16.mxu0 %v2949
    %3065 = vmatmul.mubr.bf16.gmra.mrb[0].mxu0 %v2948
    %v3066 = vpop.f32.mrb[0].mxu0
    %v3067 = vadd.f32 0.0, %v3066
    %v3068 = vpop.f32.mrb[0].mxu0
    %v3069 = vadd.f32 0.0, %v3068
    %v3070 = vpop.f32.mrb[0].mxu0
    %v3071 = vpop.f32.mrb[0].mxu0
    %3072 = vdwg.mxu0
    %3073 = vmatprep.subr.bf16.mxu0 %v2030
    %3074 = vmatpush1.bf16.msra.mxu0 %v2029
    %3075 = vmatprep.subr.bf16.mxu0 %v2038
    %3076 = vmatpush1.bf16.msra.mxu0 %v2037
    %3077 = vmatprep.subr.bf16.mxu0 %v2046
    %3078 = vmatpush1.bf16.msra.mxu0 %v2045
    %3079 = vmatprep.subr.bf16.mxu0 %v2054
    %3080 = vmatpush1.bf16.msra.mxu0 %v2053
    %3081 = vmatprep.subr.bf16.mxu0 %v2062
    %3082 = vmatpush1.bf16.msra.mxu0 %v2061
    %3083 = vmatprep.subr.bf16.mxu0 %v2070
    %3084 = vmatpush1.bf16.msra.mxu0 %v2069
    %3085 = vmatprep.subr.bf16.mxu0 %v2078
    %3086 = vmatpush1.bf16.msra.mxu0 %v2077
    %3087 = vmatprep.subr.bf16.mxu0 %v2086
    %3088 = vmatpush1.bf16.msra.mxu0 %v2085
    %3089 = vmatprep.subr.bf16.mxu0 %v2094
    %3090 = vmatpush1.bf16.msra.mxu0 %v2093
    %3091 = vmatprep.subr.bf16.mxu0 %v2102
    %3092 = vmatpush1.bf16.msra.mxu0 %v2101
    %3093 = vmatprep.subr.bf16.mxu0 %v2110
    %3094 = vmatpush1.bf16.msra.mxu0 %v2109
    %3095 = vmatprep.subr.bf16.mxu0 %v2118
    %3096 = vmatpush1.bf16.msra.mxu0 %v2117
    %3097 = vmatprep.subr.bf16.mxu0 %v2126
    %3098 = vmatpush1.bf16.msra.mxu0 %v2125
    %3099 = vmatprep.subr.bf16.mxu0 %v2134
    %3100 = vmatpush1.bf16.msra.mxu0 %v2133
    %3101 = vmatprep.subr.bf16.mxu0 %v2142
    %3102 = vmatpush1.bf16.msra.mxu0 %v2141
    %3103 = vmatprep.subr.bf16.mxu0 %v2150
    %3104 = vmatpush1.bf16.msra.mxu0 %v2149
    %3105 = vmatprep.mubr.bf16.mxu0 %v2949
    %3106 = vmatmul.mubr.bf16.gmra.mrb[0].mxu0 %v2948
    %v3107 = vpop.f32.mrb[0].mxu0
    %v3108 = vadd.f32 0.0, %v3107
    %v3109 = vpop.f32.mrb[0].mxu0
    %v3110 = vadd.f32 0.0, %v3109
    %v3111 = vpop.f32.mrb[0].mxu0
    %v3112 = vpop.f32.mrb[0].mxu0
    %3113 = vdwg.mxu0
    %v3114 = vadd.f32 %v2512, %v2985
    %v3115 = vadd.f32 %v2514, %v2987
    %v3116 = vadd.f32 %v2553, %v3026
    %v3117 = vadd.f32 %v2555, %v3028
    %v3118 = vadd.f32 %v2594, %v3067
    %v3119 = vadd.f32 %v2596, %v3069
    %v3120 = vadd.f32 %v2635, %v3108
    %v3121 = vadd.f32 %v2637, %v3110
    %v3122 = vxor.u32 %v3114, 2147483648
    %v3123 = vxor.u32 %v3115, 2147483648
    %v3124 = vxor.u32 %v3116, 2147483648
    %v3125 = vxor.u32 %v3117, 2147483648
    %v3126 = vxor.u32 %v3118, 2147483648
    %v3127 = vxor.u32 %v3119, 2147483648
    %v3128 = vmul.f32 %v3122, 1.442695
    %v3129 = vpow.pop %v3128
    %v3130 = vmul.f32 %v3123, 1.442695
    %v3131 = vpow.pop %v3130
    %v3132 = vmul.f32 %v3124, 1.442695
    %v3133 = vpow.pop %v3132
    %v3134 = vmul.f32 %v3125, 1.442695
    %v3135 = vpow.pop %v3134
    %v3136 = vmul.f32 %v3126, 1.442695
    %v3137 = vpow.pop %v3136
    %v3138 = vmul.f32 %v3127, 1.442695
    %v3139 = vpow.pop %v3138
    %v3140 = vadd.f32 %v3129, 1.0
    %v3141 = vadd.f32 %v3131, 1.0
    %v3142 = vadd.f32 %v3133, 1.0
    %v3143 = vadd.f32 %v3135, 1.0
    %v3144 = vadd.f32 %v3137, 1.0
    %v3145 = vadd.f32 %v3139, 1.0
    %v3146 = vrcp.pop %v3140
    %v3147 = vmul.f32 1.0, %v3146
    %v3148 = vrcp.pop %v3141
    %v3149 = vmul.f32 1.0, %v3148
    %v3150 = vrcp.pop %v3142
    %v3151 = vmul.f32 1.0, %v3150
    %v3152 = vrcp.pop %v3143
    %v3153 = vmul.f32 1.0, %v3152
    %v3154 = vrcp.pop %v3144
    %v3155 = vmul.f32 1.0, %v3154
    %v3156 = vrcp.pop %v3145
    %v3157 = vmul.f32 1.0, %v3156
    %v3158 = vtanh.pop %v3120
    %v3159 = vtanh.pop %v3121
    %v3160 = vmul.f32 %v3151, %v2365
    %v3161 = vmul.f32 %v3153, %v2366
    %v3162 = vmul.f32 %v3147, %v3158
    %v3163 = vmul.f32 %v3149, %v3159
    %v3164 = vadd.f32 %v3160, %v3162
    %v3165 = vadd.f32 %v3161, %v3163
    %v3166 = vtanh.pop %v3164
    %v3167 = vtanh.pop %v3165
    %v3168 = vmul.f32 %v3155, %v3166
    %v3169 = vmul.f32 %v3157, %v3167
    %3170 = vmatprep.subr.bf16.mxu0 %v2372
    %3171 = vmatpush1.bf16.msra.mxu0 %v2371
    %3172 = vmatprep.subr.bf16.mxu0 %v2380
    %3173 = vmatpush1.bf16.msra.mxu0 %v2379
    %3174 = vmatprep.subr.bf16.mxu0 %v2388
    %3175 = vmatpush1.bf16.msra.mxu0 %v2387
    %3176 = vmatprep.subr.bf16.mxu0 %v2396
    %3177 = vmatpush1.bf16.msra.mxu0 %v2395
    %3178 = vmatprep.subr.bf16.mxu0 %v2404
    %3179 = vmatpush1.bf16.msra.mxu0 %v2403
    %3180 = vmatprep.subr.bf16.mxu0 %v2412
    %3181 = vmatpush1.bf16.msra.mxu0 %v2411
    %3182 = vmatprep.subr.bf16.mxu0 %v2420
    %3183 = vmatpush1.bf16.msra.mxu0 %v2419
    %3184 = vmatprep.subr.bf16.mxu0 %v2428
    %3185 = vmatpush1.bf16.msra.mxu0 %v2427
    %3186 = vmatprep.subr.bf16.mxu0 0
    %3187 = vmatpush1.bf16.msra.mxu0 0
    %3188 = vmatprep.subr.bf16.mxu0 0
    %3189 = vmatpush1.bf16.msra.mxu0 0
    %3190 = vmatprep.subr.bf16.mxu0 0
    %3191 = vmatpush1.bf16.msra.mxu0 0
    %3192 = vmatprep.subr.bf16.mxu0 0
    %3193 = vmatpush1.bf16.msra.mxu0 0
    %3194 = vmatprep.subr.bf16.mxu0 0
    %3195 = vmatpush1.bf16.msra.mxu0 0
    %3196 = vmatprep.subr.bf16.mxu0 0
    %3197 = vmatpush1.bf16.msra.mxu0 0
    %3198 = vmatprep.subr.bf16.mxu0 0
    %3199 = vmatpush1.bf16.msra.mxu0 0
    %3200 = vmatprep.subr.bf16.mxu0 0
    %3201 = vmatpush1.bf16.msra.mxu0 0
    %3202 = vmatprep.mubr.bf16.mxu0 0
    %3203 = vmatmul.mubr.bf16.gmra.mrb[0].mxu0 %v2947
    %v3204 = vpop.f32.mrb[0].mxu0
    %v3205 = vadd.f32 %v2440, %v3204
    %v3206 = vpop.f32.mrb[0].mxu0
    %v3207 = vadd.f32 %v2444, %v3206
    %v3208 = vpop.f32.mrb[0].mxu0
    %v3209 = vpop.f32.mrb[0].mxu0
    %3210 = vdwg.mxu0
    %3211 = vmatprep.subr.bf16.mxu0 %v2374
    %3212 = vmatpush1.bf16.msra.mxu0 %v2373
    %3213 = vmatprep.subr.bf16.mxu0 %v2382
    %3214 = vmatpush1.bf16.msra.mxu0 %v2381
    %3215 = vmatprep.subr.bf16.mxu0 %v2390
    %3216 = vmatpush1.bf16.msra.mxu0 %v2389
    %3217 = vmatprep.subr.bf16.mxu0 %v2398
    %3218 = vmatpush1.bf16.msra.mxu0 %v2397
    %3219 = vmatprep.subr.bf16.mxu0 %v2406
    %3220 = vmatpush1.bf16.msra.mxu0 %v2405
    %3221 = vmatprep.subr.bf16.mxu0 %v2414
    %3222 = vmatpush1.bf16.msra.mxu0 %v2413
    %3223 = vmatprep.subr.bf16.mxu0 %v2422
    %3224 = vmatpush1.bf16.msra.mxu0 %v2421
    %3225 = vmatprep.subr.bf16.mxu0 %v2430
    %3226 = vmatpush1.bf16.msra.mxu0 %v2429
    %3227 = vmatprep.subr.bf16.mxu0 0
    %3228 = vmatpush1.bf16.msra.mxu0 0
    %3229 = vmatprep.subr.bf16.mxu0 0
    %3230 = vmatpush1.bf16.msra.mxu0 0
    %3231 = vmatprep.subr.bf16.mxu0 0
    %3232 = vmatpush1.bf16.msra.mxu0 0
    %3233 = vmatprep.subr.bf16.mxu0 0
    %3234 = vmatpush1.bf16.msra.mxu0 0
    %3235 = vmatprep.subr.bf16.mxu0 0
    %3236 = vmatpush1.bf16.msra.mxu0 0
    %3237 = vmatprep.subr.bf16.mxu0 0
    %3238 = vmatpush1.bf16.msra.mxu0 0
    %3239 = vmatprep.subr.bf16.mxu0 0
    %3240 = vmatpush1.bf16.msra.mxu0 0
    %3241 = vmatprep.subr.bf16.mxu0 0
    %3242 = vmatpush1.bf16.msra.mxu0 0
    %3243 = vmatprep.mubr.bf16.mxu0 0
    %3244 = vmatmul.mubr.bf16.gmra.mrb[0].mxu0 %v2947
    %v3245 = vpop.f32.mrb[0].mxu0
    %v3246 = vadd.f32 %v2448, %v3245
    %v3247 = vpop.f32.mrb[0].mxu0
    %v3248 = vadd.f32 %v2452, %v3247
    %v3249 = vpop.f32.mrb[0].mxu0
    %v3250 = vpop.f32.mrb[0].mxu0
    %3251 = vdwg.mxu0
    %3252 = vmatprep.subr.bf16.mxu0 %v2376
    %3253 = vmatpush1.bf16.msra.mxu0 %v2375
    %3254 = vmatprep.subr.bf16.mxu0 %v2384
    %3255 = vmatpush1.bf16.msra.mxu0 %v2383
    %3256 = vmatprep.subr.bf16.mxu0 %v2392
    %3257 = vmatpush1.bf16.msra.mxu0 %v2391
    %3258 = vmatprep.subr.bf16.mxu0 %v2400
    %3259 = vmatpush1.bf16.msra.mxu0 %v2399
    %3260 = vmatprep.subr.bf16.mxu0 %v2408
    %3261 = vmatpush1.bf16.msra.mxu0 %v2407
    %3262 = vmatprep.subr.bf16.mxu0 %v2416
    %3263 = vmatpush1.bf16.msra.mxu0 %v2415
    %3264 = vmatprep.subr.bf16.mxu0 %v2424
    %3265 = vmatpush1.bf16.msra.mxu0 %v2423
    %3266 = vmatprep.subr.bf16.mxu0 %v2432
    %3267 = vmatpush1.bf16.msra.mxu0 %v2431
    %3268 = vmatprep.subr.bf16.mxu0 0
    %3269 = vmatpush1.bf16.msra.mxu0 0
    %3270 = vmatprep.subr.bf16.mxu0 0
    %3271 = vmatpush1.bf16.msra.mxu0 0
    %3272 = vmatprep.subr.bf16.mxu0 0
    %3273 = vmatpush1.bf16.msra.mxu0 0
    %3274 = vmatprep.subr.bf16.mxu0 0
    %3275 = vmatpush1.bf16.msra.mxu0 0
    %3276 = vmatprep.subr.bf16.mxu0 0
    %3277 = vmatpush1.bf16.msra.mxu0 0
    %3278 = vmatprep.subr.bf16.mxu0 0
    %3279 = vmatpush1.bf16.msra.mxu0 0
    %3280 = vmatprep.subr.bf16.mxu0 0
    %3281 = vmatpush1.bf16.msra.mxu0 0
    %3282 = vmatprep.subr.bf16.mxu0 0
    %3283 = vmatpush1.bf16.msra.mxu0 0
    %3284 = vmatprep.mubr.bf16.mxu0 0
    %3285 = vmatmul.mubr.bf16.gmra.mrb[0].mxu0 %v2947
    %v3286 = vpop.f32.mrb[0].mxu0
    %v3287 = vadd.f32 %v2456, %v3286
    %v3288 = vpop.f32.mrb[0].mxu0
    %v3289 = vadd.f32 %v2460, %v3288
    %v3290 = vpop.f32.mrb[0].mxu0
    %v3291 = vpop.f32.mrb[0].mxu0
    %3292 = vdwg.mxu0
    %3293 = vmatprep.subr.bf16.mxu0 %v2378
    %3294 = vmatpush1.bf16.msra.mxu0 %v2377
    %3295 = vmatprep.subr.bf16.mxu0 %v2386
    %3296 = vmatpush1.bf16.msra.mxu0 %v2385
    %3297 = vmatprep.subr.bf16.mxu0 %v2394
    %3298 = vmatpush1.bf16.msra.mxu0 %v2393
    %3299 = vmatprep.subr.bf16.mxu0 %v2402
    %3300 = vmatpush1.bf16.msra.mxu0 %v2401
    %3301 = vmatprep.subr.bf16.mxu0 %v2410
    %3302 = vmatpush1.bf16.msra.mxu0 %v2409
    %3303 = vmatprep.subr.bf16.mxu0 %v2418
    %3304 = vmatpush1.bf16.msra.mxu0 %v2417
    %3305 = vmatprep.subr.bf16.mxu0 %v2426
    %3306 = vmatpush1.bf16.msra.mxu0 %v2425
    %3307 = vmatprep.subr.bf16.mxu0 %v2434
    %3308 = vmatpush1.bf16.msra.mxu0 %v2433
    %3309 = vmatprep.subr.bf16.mxu0 0
    %3310 = vmatpush1.bf16.msra.mxu0 0
    %3311 = vmatprep.subr.bf16.mxu0 0
    %3312 = vmatpush1.bf16.msra.mxu0 0
    %3313 = vmatprep.subr.bf16.mxu0 0
    %3314 = vmatpush1.bf16.msra.mxu0 0
    %3315 = vmatprep.subr.bf16.mxu0 0
    %3316 = vmatpush1.bf16.msra.mxu0 0
    %3317 = vmatprep.subr.bf16.mxu0 0
    %3318 = vmatpush1.bf16.msra.mxu0 0
    %3319 = vmatprep.subr.bf16.mxu0 0
    %3320 = vmatpush1.bf16.msra.mxu0 0
    %3321 = vmatprep.subr.bf16.mxu0 0
    %3322 = vmatpush1.bf16.msra.mxu0 0
    %3323 = vmatprep.subr.bf16.mxu0 0
    %3324 = vmatpush1.bf16.msra.mxu0 0
    %3325 = vmatprep.mubr.bf16.mxu0 0
    %3326 = vmatmul.mubr.bf16.gmra.mrb[0].mxu0 %v2947
    %v3327 = vpop.f32.mrb[0].mxu0
    %v3328 = vadd.f32 %v2464, %v3327
    %v3329 = vpop.f32.mrb[0].mxu0
    %v3330 = vadd.f32 %v2468, %v3329
    %v3331 = vpop.f32.mrb[0].mxu0
    %v3332 = vpop.f32.mrb[0].mxu0
    %3333 = vdwg.mxu0
    %v3334 = vld [vmem:[#allocation2 + $0x80] sm:$0xff]
    %v3335 = vld [vmem:[#allocation2 + $0x88] sm:$0xff]
    %v3336 = vld [vmem:[#allocation2 + $0x90] sm:$0xff]
    %v3337 = vld [vmem:[#allocation2 + $0x98] sm:$0xff]
    %3338 = vmatprep.subr.bf16.mxu0 %v2774
    %3339 = vmatpush1.bf16.msra.mxu0 %v2773
    %3340 = vmatprep.subr.bf16.mxu0 %v2778
    %3341 = vmatpush1.bf16.msra.mxu0 %v2777
    %3342 = vmatprep.subr.bf16.mxu0 %v2782
    %3343 = vmatpush1.bf16.msra.mxu0 %v2781
    %3344 = vmatprep.subr.bf16.mxu0 %v2786
    %3345 = vmatpush1.bf16.msra.mxu0 %v2785
    %3346 = vmatprep.subr.bf16.mxu0 %v2790
    %3347 = vmatpush1.bf16.msra.mxu0 %v2789
    %3348 = vmatprep.subr.bf16.mxu0 %v2794
    %3349 = vmatpush1.bf16.msra.mxu0 %v2793
    %3350 = vmatprep.subr.bf16.mxu0 %v2798
    %3351 = vmatpush1.bf16.msra.mxu0 %v2797
    %3352 = vmatprep.subr.bf16.mxu0 %v2802
    %3353 = vmatpush1.bf16.msra.mxu0 %v2801
    %3354 = vmatprep.subr.bf16.mxu0 0
    %3355 = vmatpush1.bf16.msra.mxu0 0
    %3356 = vmatprep.subr.bf16.mxu0 0
    %3357 = vmatpush1.bf16.msra.mxu0 0
    %3358 = vmatprep.subr.bf16.mxu0 0
    %3359 = vmatpush1.bf16.msra.mxu0 0
    %3360 = vmatprep.subr.bf16.mxu0 0
    %3361 = vmatpush1.bf16.msra.mxu0 0
    %3362 = vmatprep.subr.bf16.mxu0 0
    %3363 = vmatpush1.bf16.msra.mxu0 0
    %3364 = vmatprep.subr.bf16.mxu0 0
    %3365 = vmatpush1.bf16.msra.mxu0 0
    %3366 = vmatprep.subr.bf16.mxu0 0
    %3367 = vmatpush1.bf16.msra.mxu0 0
    %3368 = vmatprep.subr.bf16.mxu0 0
    %3369 = vmatpush1.bf16.msra.mxu0 0
    %3370 = vmatprep.mubr.bf16.mxu0 0
    %3371 = vmatmul.mubr.bf16.gmra.mrb[0].mxu0 %v2947
    %v3372 = vpop.f32.mrb[0].mxu0
    %v3373 = vadd.f32 0.0, %v3372
    %v3374 = vpop.f32.mrb[0].mxu0
    %v3375 = vadd.f32 0.0, %v3374
    %v3376 = vpop.f32.mrb[0].mxu0
    %v3377 = vpop.f32.mrb[0].mxu0
    %3378 = vdwg.mxu0
    %3379 = vmatprep.subr.bf16.mxu0 %v2776
    %3380 = vmatpush1.bf16.msra.mxu0 %v2775
    %3381 = vmatprep.subr.bf16.mxu0 %v2780
    %3382 = vmatpush1.bf16.msra.mxu0 %v2779
    %3383 = vmatprep.subr.bf16.mxu0 %v2784
    %3384 = vmatpush1.bf16.msra.mxu0 %v2783
    %3385 = vmatprep.subr.bf16.mxu0 %v2788
    %3386 = vmatpush1.bf16.msra.mxu0 %v2787
    %3387 = vmatprep.subr.bf16.mxu0 %v2792
    %3388 = vmatpush1.bf16.msra.mxu0 %v2791
    %3389 = vmatprep.subr.bf16.mxu0 %v2796
    %3390 = vmatpush1.bf16.msra.mxu0 %v2795
    %3391 = vmatprep.subr.bf16.mxu0 %v2800
    %3392 = vmatpush1.bf16.msra.mxu0 %v2799
    %3393 = vmatprep.subr.bf16.mxu0 %v2804
    %3394 = vmatpush1.bf16.msra.mxu0 %v2803
    %3395 = vmatprep.subr.bf16.mxu0 0
    %3396 = vmatpush1.bf16.msra.mxu0 0
    %3397 = vmatprep.subr.bf16.mxu0 0
    %3398 = vmatpush1.bf16.msra.mxu0 0
    %3399 = vmatprep.subr.bf16.mxu0 0
    %3400 = vmatpush1.bf16.msra.mxu0 0
    %3401 = vmatprep.subr.bf16.mxu0 0
    %3402 = vmatpush1.bf16.msra.mxu0 0
    %3403 = vmatprep.subr.bf16.mxu0 0
    %3404 = vmatpush1.bf16.msra.mxu0 0
    %3405 = vmatprep.subr.bf16.mxu0 0
    %3406 = vmatpush1.bf16.msra.mxu0 0
    %3407 = vmatprep.subr.bf16.mxu0 0
    %3408 = vmatpush1.bf16.msra.mxu0 0
    %3409 = vmatprep.subr.bf16.mxu0 0
    %3410 = vmatpush1.bf16.msra.mxu0 0
    %3411 = vmatprep.mubr.bf16.mxu0 0
    %3412 = vmatmul.mubr.bf16.gmra.mrb[0].mxu0 %v2947
    %v3413 = vpop.f32.mrb[0].mxu0
    %v3414 = vadd.f32 0.0, %v3413
    %v3415 = vpop.f32.mrb[0].mxu0
    %v3416 = vadd.f32 0.0, %v3415
    %v3417 = vpop.f32.mrb[0].mxu0
    %v3418 = vpop.f32.mrb[0].mxu0
    %3419 = vdwg.mxu0
    %v3420 = vadd.f32 %v3334, %v3373
    %v3421 = vadd.f32 %v3335, %v3375
    %v3422 = vadd.f32 %v3336, %v3414
    %v3423 = vadd.f32 %v3337, %v3416
    %v3424 = vxor.u32 %v3420, 2147483648
    %v3425 = vxor.u32 %v3421, 2147483648
    %v3426 = vxor.u32 %v3422, 2147483648
    %v3427 = vmul.f32 %v3424, 1.442695
    %v3428 = vpow.pop %v3427
    %v3429 = vmul.f32 %v3425, 1.442695
    %v3430 = vpow.pop %v3429
    %v3431 = vmul.f32 %v3426, 1.442695
    %v3432 = vpow.pop %v3431
    %v3433 = vadd.f32 %v3428, 1.0
    %v3434 = vadd.f32 %v3430, 1.0
    %v3435 = vadd.f32 %v3432, 1.0
    %v3436 = vrcp.pop %v3433
    %v3437 = vmul.f32 1.0, %v3436
    %v3438 = vrcp.pop %v3434
    %v3439 = vmul.f32 1.0, %v3438
    %v3440 = vrcp.pop %v3435
    %v3441 = vmul.f32 1.0, %v3440
    %v3442 = vtanh.pop %v3423
    %v3443 = vmul.f32 %v3439, %v2944
    %v3444 = vmul.f32 %v3437, %v3442
    %v3445 = vadd.f32 %v3443, %v3444
    %v3446 = vtanh.pop %v3445
    %v3447 = vmul.f32 %v3441, %v3446
    %v3448 = vpack.c.bf16 %v3447, %v3447
    %v3449 = vpack.c.bf16 %v3168, %v3168
    %v3450 = vpack.c.bf16 %v3169, %v3169
    %3451 = vmatprep.subr.bf16.mxu0 %v2024
    %3452 = vmatpush1.bf16.msra.mxu0 %v2023
    %3453 = vmatprep.subr.bf16.mxu0 %v2032
    %3454 = vmatpush1.bf16.msra.mxu0 %v2031
    %3455 = vmatprep.subr.bf16.mxu0 %v2040
    %3456 = vmatpush1.bf16.msra.mxu0 %v2039
    %3457 = vmatprep.subr.bf16.mxu0 %v2048
    %3458 = vmatpush1.bf16.msra.mxu0 %v2047
    %3459 = vmatprep.subr.bf16.mxu0 %v2056
    %3460 = vmatpush1.bf16.msra.mxu0 %v2055
    %3461 = vmatprep.subr.bf16.mxu0 %v2064
    %3462 = vmatpush1.bf16.msra.mxu0 %v2063
    %3463 = vmatprep.subr.bf16.mxu0 %v2072
    %3464 = vmatpush1.bf16.msra.mxu0 %v2071
    %3465 = vmatprep.subr.bf16.mxu0 %v2080
    %3466 = vmatpush1.bf16.msra.mxu0 %v2079
    %3467 = vmatprep.subr.bf16.mxu0 %v2088
    %3468 = vmatpush1.bf16.msra.mxu0 %v2087
    %3469 = vmatprep.subr.bf16.mxu0 %v2096
    %3470 = vmatpush1.bf16.msra.mxu0 %v2095
    %3471 = vmatprep.subr.bf16.mxu0 %v2104
    %3472 = vmatpush1.bf16.msra.mxu0 %v2103
    %3473 = vmatprep.subr.bf16.mxu0 %v2112
    %3474 = vmatpush1.bf16.msra.mxu0 %v2111
    %3475 = vmatprep.subr.bf16.mxu0 %v2120
    %3476 = vmatpush1.bf16.msra.mxu0 %v2119
    %3477 = vmatprep.subr.bf16.mxu0 %v2128
    %3478 = vmatpush1.bf16.msra.mxu0 %v2127
    %3479 = vmatprep.subr.bf16.mxu0 %v2136
    %3480 = vmatpush1.bf16.msra.mxu0 %v2135
    %3481 = vmatprep.subr.bf16.mxu0 %v2144
    %3482 = vmatpush1.bf16.msra.mxu0 %v2143
    %3483 = vmatprep.mubr.bf16.mxu0 %v3450
    %3484 = vmatmul.mubr.bf16.gmra.mrb[0].mxu0 %v3449
    %v3485 = vpop.f32.mrb[0].mxu0
    %v3486 = vadd.f32 0.0, %v3485
    %v3487 = vpop.f32.mrb[0].mxu0
    %v3488 = vadd.f32 0.0, %v3487
    %v3489 = vpop.f32.mrb[0].mxu0
    %v3490 = vpop.f32.mrb[0].mxu0
    %3491 = vdwg.mxu0
    %3492 = vmatprep.subr.bf16.mxu0 %v2026
    %3493 = vmatpush1.bf16.msra.mxu0 %v2025
    %3494 = vmatprep.subr.bf16.mxu0 %v2034
    %3495 = vmatpush1.bf16.msra.mxu0 %v2033
    %3496 = vmatprep.subr.bf16.mxu0 %v2042
    %3497 = vmatpush1.bf16.msra.mxu0 %v2041
    %3498 = vmatprep.subr.bf16.mxu0 %v2050
    %3499 = vmatpush1.bf16.msra.mxu0 %v2049
    %3500 = vmatprep.subr.bf16.mxu0 %v2058
    %3501 = vmatpush1.bf16.msra.mxu0 %v2057
    %3502 = vmatprep.subr.bf16.mxu0 %v2066
    %3503 = vmatpush1.bf16.msra.mxu0 %v2065
    %3504 = vmatprep.subr.bf16.mxu0 %v2074
    %3505 = vmatpush1.bf16.msra.mxu0 %v2073
    %3506 = vmatprep.subr.bf16.mxu0 %v2082
    %3507 = vmatpush1.bf16.msra.mxu0 %v2081
    %3508 = vmatprep.subr.bf16.mxu0 %v2090
    %3509 = vmatpush1.bf16.msra.mxu0 %v2089
    %3510 = vmatprep.subr.bf16.mxu0 %v2098
    %3511 = vmatpush1.bf16.msra.mxu0 %v2097
    %3512 = vmatprep.subr.bf16.mxu0 %v2106
    %3513 = vmatpush1.bf16.msra.mxu0 %v2105
    %3514 = vmatprep.subr.bf16.mxu0 %v2114
    %3515 = vmatpush1.bf16.msra.mxu0 %v2113
    %3516 = vmatprep.subr.bf16.mxu0 %v2122
    %3517 = vmatpush1.bf16.msra.mxu0 %v2121
    %3518 = vmatprep.subr.bf16.mxu0 %v2130
    %3519 = vmatpush1.bf16.msra.mxu0 %v2129
    %3520 = vmatprep.subr.bf16.mxu0 %v2138
    %3521 = vmatpush1.bf16.msra.mxu0 %v2137
    %3522 = vmatprep.subr.bf16.mxu0 %v2146
    %3523 = vmatpush1.bf16.msra.mxu0 %v2145
    %3524 = vmatprep.mubr.bf16.mxu0 %v3450
    %3525 = vmatmul.mubr.bf16.gmra.mrb[0].mxu0 %v3449
    %v3526 = vpop.f32.mrb[0].mxu0
    %v3527 = vadd.f32 0.0, %v3526
    %v3528 = vpop.f32.mrb[0].mxu0
    %v3529 = vadd.f32 0.0, %v3528
    %v3530 = vpop.f32.mrb[0].mxu0
    %v3531 = vpop.f32.mrb[0].mxu0
    %3532 = vdwg.mxu0
    %3533 = vmatprep.subr.bf16.mxu0 %v2028
    %3534 = vmatpush1.bf16.msra.mxu0 %v2027
    %3535 = vmatprep.subr.bf16.mxu0 %v2036
    %3536 = vmatpush1.bf16.msra.mxu0 %v2035
    %3537 = vmatprep.subr.bf16.mxu0 %v2044
    %3538 = vmatpush1.bf16.msra.mxu0 %v2043
    %3539 = vmatprep.subr.bf16.mxu0 %v2052
    %3540 = vmatpush1.bf16.msra.mxu0 %v2051
    %3541 = vmatprep.subr.bf16.mxu0 %v2060
    %3542 = vmatpush1.bf16.msra.mxu0 %v2059
    %3543 = vmatprep.subr.bf16.mxu0 %v2068
    %3544 = vmatpush1.bf16.msra.mxu0 %v2067
    %3545 = vmatprep.subr.bf16.mxu0 %v2076
    %3546 = vmatpush1.bf16.msra.mxu0 %v2075
    %3547 = vmatprep.subr.bf16.mxu0 %v2084
    %3548 = vmatpush1.bf16.msra.mxu0 %v2083
    %3549 = vmatprep.subr.bf16.mxu0 %v2092
    %3550 = vmatpush1.bf16.msra.mxu0 %v2091
    %3551 = vmatprep.subr.bf16.mxu0 %v2100
    %3552 = vmatpush1.bf16.msra.mxu0 %v2099
    %3553 = vmatprep.subr.bf16.mxu0 %v2108
    %3554 = vmatpush1.bf16.msra.mxu0 %v2107
    %3555 = vmatprep.subr.bf16.mxu0 %v2116
    %3556 = vmatpush1.bf16.msra.mxu0 %v2115
    %3557 = vmatprep.subr.bf16.mxu0 %v2124
    %3558 = vmatpush1.bf16.msra.mxu0 %v2123
    %3559 = vmatprep.subr.bf16.mxu0 %v2132
    %3560 = vmatpush1.bf16.msra.mxu0 %v2131
    %3561 = vmatprep.subr.bf16.mxu0 %v2140
    %3562 = vmatpush1.bf16.msra.mxu0 %v2139
    %3563 = vmatprep.subr.bf16.mxu0 %v2148
    %3564 = vmatpush1.bf16.msra.mxu0 %v2147
    %3565 = vmatprep.mubr.bf16.mxu0 %v3450
    %3566 = vmatmul.mubr.bf16.gmra.mrb[0].mxu0 %v3449
    %v3567 = vpop.f32.mrb[0].mxu0
    %v3568 = vadd.f32 0.0, %v3567
    %v3569 = vpop.f32.mrb[0].mxu0
    %v3570 = vadd.f32 0.0, %v3569
    %v3571 = vpop.f32.mrb[0].mxu0
    %v3572 = vpop.f32.mrb[0].mxu0
    %3573 = vdwg.mxu0
    %3574 = vmatprep.subr.bf16.mxu0 %v2030
    %3575 = vmatpush1.bf16.msra.mxu0 %v2029
    %3576 = vmatprep.subr.bf16.mxu0 %v2038
    %3577 = vmatpush1.bf16.msra.mxu0 %v2037
    %3578 = vmatprep.subr.bf16.mxu0 %v2046
    %3579 = vmatpush1.bf16.msra.mxu0 %v2045
    %3580 = vmatprep.subr.bf16.mxu0 %v2054
    %3581 = vmatpush1.bf16.msra.mxu0 %v2053
    %3582 = vmatprep.subr.bf16.mxu0 %v2062
    %3583 = vmatpush1.bf16.msra.mxu0 %v2061
    %3584 = vmatprep.subr.bf16.mxu0 %v2070
    %3585 = vmatpush1.bf16.msra.mxu0 %v2069
    %3586 = vmatprep.subr.bf16.mxu0 %v2078
    %3587 = vmatpush1.bf16.msra.mxu0 %v2077
    %3588 = vmatprep.subr.bf16.mxu0 %v2086
    %3589 = vmatpush1.bf16.msra.mxu0 %v2085
    %3590 = vmatprep.subr.bf16.mxu0 %v2094
    %3591 = vmatpush1.bf16.msra.mxu0 %v2093
    %3592 = vmatprep.subr.bf16.mxu0 %v2102
    %3593 = vmatpush1.bf16.msra.mxu0 %v2101
    %3594 = vmatprep.subr.bf16.mxu0 %v2110
    %3595 = vmatpush1.bf16.msra.mxu0 %v2109
    %3596 = vmatprep.subr.bf16.mxu0 %v2118
    %3597 = vmatpush1.bf16.msra.mxu0 %v2117
    %3598 = vmatprep.subr.bf16.mxu0 %v2126
    %3599 = vmatpush1.bf16.msra.mxu0 %v2125
    %3600 = vmatprep.subr.bf16.mxu0 %v2134
    %3601 = vmatpush1.bf16.msra.mxu0 %v2133
    %3602 = vmatprep.subr.bf16.mxu0 %v2142
    %3603 = vmatpush1.bf16.msra.mxu0 %v2141
    %3604 = vmatprep.subr.bf16.mxu0 %v2150
    %3605 = vmatpush1.bf16.msra.mxu0 %v2149
    %3606 = vmatprep.mubr.bf16.mxu0 %v3450
    %3607 = vmatmul.mubr.bf16.gmra.mrb[0].mxu0 %v3449
    %v3608 = vpop.f32.mrb[0].mxu0
    %v3609 = vadd.f32 0.0, %v3608
    %v3610 = vpop.f32.mrb[0].mxu0
    %v3611 = vadd.f32 0.0, %v3610
    %v3612 = vpop.f32.mrb[0].mxu0
    %v3613 = vpop.f32.mrb[0].mxu0
    %3614 = vdwg.mxu0
    %v3615 = vadd.f32 %v3205, %v3486
    %v3616 = vadd.f32 %v3207, %v3488
    %v3617 = vadd.f32 %v3246, %v3527
    %v3618 = vadd.f32 %v3248, %v3529
    %v3619 = vadd.f32 %v3287, %v3568
    %v3620 = vadd.f32 %v3289, %v3570
    %v3621 = vadd.f32 %v3328, %v3609
    %v3622 = vadd.f32 %v3330, %v3611
    %v3623 = vxor.u32 %v3615, 2147483648
    %v3624 = vxor.u32 %v3616, 2147483648
    %v3625 = vxor.u32 %v3617, 2147483648
    %v3626 = vxor.u32 %v3618, 2147483648
    %v3627 = vxor.u32 %v3619, 2147483648
    %v3628 = vxor.u32 %v3620, 2147483648
    %v3629 = vmul.f32 %v3623, 1.442695
    %v3630 = vpow.pop %v3629
    %v3631 = vmul.f32 %v3624, 1.442695
    %v3632 = vpow.pop %v3631
    %v3633 = vmul.f32 %v3625, 1.442695
    %v3634 = vpow.pop %v3633
    %v3635 = vmul.f32 %v3626, 1.442695
    %v3636 = vpow.pop %v3635
    %v3637 = vmul.f32 %v3627, 1.442695
    %v3638 = vpow.pop %v3637
    %v3639 = vmul.f32 %v3628, 1.442695
    %v3640 = vpow.pop %v3639
    %v3641 = vadd.f32 %v3630, 1.0
    %v3642 = vadd.f32 %v3632, 1.0
    %v3643 = vadd.f32 %v3634, 1.0
    %v3644 = vadd.f32 %v3636, 1.0
    %v3645 = vadd.f32 %v3638, 1.0
    %v3646 = vadd.f32 %v3640, 1.0
    %v3647 = vrcp.pop %v3641
    %v3648 = vmul.f32 1.0, %v3647
    %v3649 = vrcp.pop %v3642
    %v3650 = vmul.f32 1.0, %v3649
    %v3651 = vrcp.pop %v3643
    %v3652 = vmul.f32 1.0, %v3651
    %v3653 = vrcp.pop %v3644
    %v3654 = vmul.f32 1.0, %v3653
    %v3655 = vrcp.pop %v3645
    %v3656 = vmul.f32 1.0, %v3655
    %v3657 = vrcp.pop %v3646
    %v3658 = vmul.f32 1.0, %v3657
    %v3659 = vtanh.pop %v3621
    %v3660 = vtanh.pop %v3622
    %v3661 = vmul.f32 %v3652, %v3164
    %v3662 = vmul.f32 %v3654, %v3165
    %v3663 = vmul.f32 %v3648, %v3659
    %v3664 = vmul.f32 %v3650, %v3660
    %v3665 = vadd.f32 %v3661, %v3663
    %v3666 = vadd.f32 %v3662, %v3664
    %v3667 = vtanh.pop %v3665
    %v3668 = vtanh.pop %v3666
    %v3669 = vmul.f32 %v3656, %v3667
    %v3670 = vmul.f32 %v3658, %v3668
    %3671 = vmatprep.subr.bf16.mxu0 %v2372
    %3672 = vmatpush1.bf16.msra.mxu0 %v2371
    %3673 = vmatprep.subr.bf16.mxu0 %v2380
    %3674 = vmatpush1.bf16.msra.mxu0 %v2379
    %3675 = vmatprep.subr.bf16.mxu0 %v2388
    %3676 = vmatpush1.bf16.msra.mxu0 %v2387
    %3677 = vmatprep.subr.bf16.mxu0 %v2396
    %3678 = vmatpush1.bf16.msra.mxu0 %v2395
    %3679 = vmatprep.subr.bf16.mxu0 %v2404
    %3680 = vmatpush1.bf16.msra.mxu0 %v2403
    %3681 = vmatprep.subr.bf16.mxu0 %v2412
    %3682 = vmatpush1.bf16.msra.mxu0 %v2411
    %3683 = vmatprep.subr.bf16.mxu0 %v2420
    %3684 = vmatpush1.bf16.msra.mxu0 %v2419
    %3685 = vmatprep.subr.bf16.mxu0 %v2428
    %3686 = vmatpush1.bf16.msra.mxu0 %v2427
    %3687 = vmatprep.subr.bf16.mxu0 0
    %3688 = vmatpush1.bf16.msra.mxu0 0
    %3689 = vmatprep.subr.bf16.mxu0 0
    %3690 = vmatpush1.bf16.msra.mxu0 0
    %3691 = vmatprep.subr.bf16.mxu0 0
    %3692 = vmatpush1.bf16.msra.mxu0 0
    %3693 = vmatprep.subr.bf16.mxu0 0
    %3694 = vmatpush1.bf16.msra.mxu0 0
    %3695 = vmatprep.subr.bf16.mxu0 0
    %3696 = vmatpush1.bf16.msra.mxu0 0
    %3697 = vmatprep.subr.bf16.mxu0 0
    %3698 = vmatpush1.bf16.msra.mxu0 0
    %3699 = vmatprep.subr.bf16.mxu0 0
    %3700 = vmatpush1.bf16.msra.mxu0 0
    %3701 = vmatprep.subr.bf16.mxu0 0
    %3702 = vmatpush1.bf16.msra.mxu0 0
    %3703 = vmatprep.mubr.bf16.mxu0 0
    %3704 = vmatmul.mubr.bf16.gmra.mrb[0].mxu0 %v3448
    %v3705 = vpop.f32.mrb[0].mxu0
    %v3706 = vadd.f32 %v2440, %v3705
    %v3707 = vpop.f32.mrb[0].mxu0
    %v3708 = vadd.f32 %v2444, %v3707
    %v3709 = vpop.f32.mrb[0].mxu0
    %v3710 = vpop.f32.mrb[0].mxu0
    %3711 = vdwg.mxu0
    %3712 = vmatprep.subr.bf16.mxu0 %v2374
    %3713 = vmatpush1.bf16.msra.mxu0 %v2373
    %3714 = vmatprep.subr.bf16.mxu0 %v2382
    %3715 = vmatpush1.bf16.msra.mxu0 %v2381
    %3716 = vmatprep.subr.bf16.mxu0 %v2390
    %3717 = vmatpush1.bf16.msra.mxu0 %v2389
    %3718 = vmatprep.subr.bf16.mxu0 %v2398
    %3719 = vmatpush1.bf16.msra.mxu0 %v2397
    %3720 = vmatprep.subr.bf16.mxu0 %v2406
    %3721 = vmatpush1.bf16.msra.mxu0 %v2405
    %3722 = vmatprep.subr.bf16.mxu0 %v2414
    %3723 = vmatpush1.bf16.msra.mxu0 %v2413
    %3724 = vmatprep.subr.bf16.mxu0 %v2422
    %3725 = vmatpush1.bf16.msra.mxu0 %v2421
    %3726 = vmatprep.subr.bf16.mxu0 %v2430
    %3727 = vmatpush1.bf16.msra.mxu0 %v2429
    %3728 = vmatprep.subr.bf16.mxu0 0
    %3729 = vmatpush1.bf16.msra.mxu0 0
    %3730 = vmatprep.subr.bf16.mxu0 0
    %3731 = vmatpush1.bf16.msra.mxu0 0
    %3732 = vmatprep.subr.bf16.mxu0 0
    %3733 = vmatpush1.bf16.msra.mxu0 0
    %3734 = vmatprep.subr.bf16.mxu0 0
    %3735 = vmatpush1.bf16.msra.mxu0 0
    %3736 = vmatprep.subr.bf16.mxu0 0
    %3737 = vmatpush1.bf16.msra.mxu0 0
    %3738 = vmatprep.subr.bf16.mxu0 0
    %3739 = vmatpush1.bf16.msra.mxu0 0
    %3740 = vmatprep.subr.bf16.mxu0 0
    %3741 = vmatpush1.bf16.msra.mxu0 0
    %3742 = vmatprep.subr.bf16.mxu0 0
    %3743 = vmatpush1.bf16.msra.mxu0 0
    %3744 = vmatprep.mubr.bf16.mxu0 0
    %3745 = vmatmul.mubr.bf16.gmra.mrb[0].mxu0 %v3448
    %v3746 = vpop.f32.mrb[0].mxu0
    %v3747 = vadd.f32 %v2448, %v3746
    %v3748 = vpop.f32.mrb[0].mxu0
    %v3749 = vadd.f32 %v2452, %v3748
    %v3750 = vpop.f32.mrb[0].mxu0
    %v3751 = vpop.f32.mrb[0].mxu0
    %3752 = vdwg.mxu0
    %3753 = vmatprep.subr.bf16.mxu0 %v2376
    %3754 = vmatpush1.bf16.msra.mxu0 %v2375
    %3755 = vmatprep.subr.bf16.mxu0 %v2384
    %3756 = vmatpush1.bf16.msra.mxu0 %v2383
    %3757 = vmatprep.subr.bf16.mxu0 %v2392
    %3758 = vmatpush1.bf16.msra.mxu0 %v2391
    %3759 = vmatprep.subr.bf16.mxu0 %v2400
    %3760 = vmatpush1.bf16.msra.mxu0 %v2399
    %3761 = vmatprep.subr.bf16.mxu0 %v2408
    %3762 = vmatpush1.bf16.msra.mxu0 %v2407
    %3763 = vmatprep.subr.bf16.mxu0 %v2416
    %3764 = vmatpush1.bf16.msra.mxu0 %v2415
    %3765 = vmatprep.subr.bf16.mxu0 %v2424
    %3766 = vmatpush1.bf16.msra.mxu0 %v2423
    %3767 = vmatprep.subr.bf16.mxu0 %v2432
    %3768 = vmatpush1.bf16.msra.mxu0 %v2431
    %3769 = vmatprep.subr.bf16.mxu0 0
    %3770 = vmatpush1.bf16.msra.mxu0 0
    %3771 = vmatprep.subr.bf16.mxu0 0
    %3772 = vmatpush1.bf16.msra.mxu0 0
    %3773 = vmatprep.subr.bf16.mxu0 0
    %3774 = vmatpush1.bf16.msra.mxu0 0
    %3775 = vmatprep.subr.bf16.mxu0 0
    %3776 = vmatpush1.bf16.msra.mxu0 0
    %3777 = vmatprep.subr.bf16.mxu0 0
    %3778 = vmatpush1.bf16.msra.mxu0 0
    %3779 = vmatprep.subr.bf16.mxu0 0
    %3780 = vmatpush1.bf16.msra.mxu0 0
    %3781 = vmatprep.subr.bf16.mxu0 0
    %3782 = vmatpush1.bf16.msra.mxu0 0
    %3783 = vmatprep.subr.bf16.mxu0 0
    %3784 = vmatpush1.bf16.msra.mxu0 0
    %3785 = vmatprep.mubr.bf16.mxu0 0
    %3786 = vmatmul.mubr.bf16.gmra.mrb[0].mxu0 %v3448
    %v3787 = vpop.f32.mrb[0].mxu0
    %v3788 = vadd.f32 %v2456, %v3787
    %v3789 = vpop.f32.mrb[0].mxu0
    %v3790 = vadd.f32 %v2460, %v3789
    %v3791 = vpop.f32.mrb[0].mxu0
    %v3792 = vpop.f32.mrb[0].mxu0
    %3793 = vdwg.mxu0
    %3794 = vmatprep.subr.bf16.mxu0 %v2378
    %3795 = vmatpush1.bf16.msra.mxu0 %v2377
    %3796 = vmatprep.subr.bf16.mxu0 %v2386
    %3797 = vmatpush1.bf16.msra.mxu0 %v2385
    %3798 = vmatprep.subr.bf16.mxu0 %v2394
    %3799 = vmatpush1.bf16.msra.mxu0 %v2393
    %3800 = vmatprep.subr.bf16.mxu0 %v2402
    %3801 = vmatpush1.bf16.msra.mxu0 %v2401
    %3802 = vmatprep.subr.bf16.mxu0 %v2410
    %3803 = vmatpush1.bf16.msra.mxu0 %v2409
    %3804 = vmatprep.subr.bf16.mxu0 %v2418
    %3805 = vmatpush1.bf16.msra.mxu0 %v2417
    %3806 = vmatprep.subr.bf16.mxu0 %v2426
    %3807 = vmatpush1.bf16.msra.mxu0 %v2425
    %3808 = vmatprep.subr.bf16.mxu0 %v2434
    %3809 = vmatpush1.bf16.msra.mxu0 %v2433
    %3810 = vmatprep.subr.bf16.mxu0 0
    %3811 = vmatpush1.bf16.msra.mxu0 0
    %3812 = vmatprep.subr.bf16.mxu0 0
    %3813 = vmatpush1.bf16.msra.mxu0 0
    %3814 = vmatprep.subr.bf16.mxu0 0
    %3815 = vmatpush1.bf16.msra.mxu0 0
    %3816 = vmatprep.subr.bf16.mxu0 0
    %3817 = vmatpush1.bf16.msra.mxu0 0
    %3818 = vmatprep.subr.bf16.mxu0 0
    %3819 = vmatpush1.bf16.msra.mxu0 0
    %3820 = vmatprep.subr.bf16.mxu0 0
    %3821 = vmatpush1.bf16.msra.mxu0 0
    %3822 = vmatprep.subr.bf16.mxu0 0
    %3823 = vmatpush1.bf16.msra.mxu0 0
    %3824 = vmatprep.subr.bf16.mxu0 0
    %3825 = vmatpush1.bf16.msra.mxu0 0
    %3826 = vmatprep.mubr.bf16.mxu0 0
    %3827 = vmatmul.mubr.bf16.gmra.mrb[0].mxu0 %v3448
    %v3828 = vpop.f32.mrb[0].mxu0
    %v3829 = vadd.f32 %v2464, %v3828
    %v3830 = vpop.f32.mrb[0].mxu0
    %v3831 = vadd.f32 %v2468, %v3830
    %v3832 = vpop.f32.mrb[0].mxu0
    %v3833 = vpop.f32.mrb[0].mxu0
    %3834 = vdwg.mxu0
    %v3835 = vld [vmem:[#allocation2 + $0xa0] sm:$0xff]
    %v3836 = vld [vmem:[#allocation2 + $0xa8] sm:$0xff]
    %v3837 = vld [vmem:[#allocation2 + $0xb0] sm:$0xff]
    %v3838 = vld [vmem:[#allocation2 + $0xb8] sm:$0xff]
    %3839 = vmatprep.subr.bf16.mxu0 %v2774
    %3840 = vmatpush1.bf16.msra.mxu0 %v2773
    %3841 = vmatprep.subr.bf16.mxu0 %v2778
    %3842 = vmatpush1.bf16.msra.mxu0 %v2777
    %3843 = vmatprep.subr.bf16.mxu0 %v2782
    %3844 = vmatpush1.bf16.msra.mxu0 %v2781
    %3845 = vmatprep.subr.bf16.mxu0 %v2786
    %3846 = vmatpush1.bf16.msra.mxu0 %v2785
    %3847 = vmatprep.subr.bf16.mxu0 %v2790
    %3848 = vmatpush1.bf16.msra.mxu0 %v2789
    %3849 = vmatprep.subr.bf16.mxu0 %v2794
    %3850 = vmatpush1.bf16.msra.mxu0 %v2793
    %3851 = vmatprep.subr.bf16.mxu0 %v2798
    %3852 = vmatpush1.bf16.msra.mxu0 %v2797
    %3853 = vmatprep.subr.bf16.mxu0 %v2802
    %3854 = vmatpush1.bf16.msra.mxu0 %v2801
    %3855 = vmatprep.subr.bf16.mxu0 0
    %3856 = vmatpush1.bf16.msra.mxu0 0
    %3857 = vmatprep.subr.bf16.mxu0 0
    %3858 = vmatpush1.bf16.msra.mxu0 0
    %3859 = vmatprep.subr.bf16.mxu0 0
    %3860 = vmatpush1.bf16.msra.mxu0 0
    %3861 = vmatprep.subr.bf16.mxu0 0
    %3862 = vmatpush1.bf16.msra.mxu0 0
    %3863 = vmatprep.subr.bf16.mxu0 0
    %3864 = vmatpush1.bf16.msra.mxu0 0
    %3865 = vmatprep.subr.bf16.mxu0 0
    %3866 = vmatpush1.bf16.msra.mxu0 0
    %3867 = vmatprep.subr.bf16.mxu0 0
    %3868 = vmatpush1.bf16.msra.mxu0 0
    %3869 = vmatprep.subr.bf16.mxu0 0
    %3870 = vmatpush1.bf16.msra.mxu0 0
    %3871 = vmatprep.mubr.bf16.mxu0 0
    %3872 = vmatmul.mubr.bf16.gmra.mrb[0].mxu0 %v3448
    %v3873 = vpop.f32.mrb[0].mxu0
    %v3874 = vadd.f32 0.0, %v3873
    %v3875 = vpop.f32.mrb[0].mxu0
    %v3876 = vadd.f32 0.0, %v3875
    %v3877 = vpop.f32.mrb[0].mxu0
    %v3878 = vpop.f32.mrb[0].mxu0
    %3879 = vdwg.mxu0
    %3880 = vmatprep.subr.bf16.mxu0 %v2776
    %3881 = vmatpush1.bf16.msra.mxu0 %v2775
    %3882 = vmatprep.subr.bf16.mxu0 %v2780
    %3883 = vmatpush1.bf16.msra.mxu0 %v2779
    %3884 = vmatprep.subr.bf16.mxu0 %v2784
    %3885 = vmatpush1.bf16.msra.mxu0 %v2783
    %3886 = vmatprep.subr.bf16.mxu0 %v2788
    %3887 = vmatpush1.bf16.msra.mxu0 %v2787
    %3888 = vmatprep.subr.bf16.mxu0 %v2792
    %3889 = vmatpush1.bf16.msra.mxu0 %v2791
    %3890 = vmatprep.subr.bf16.mxu0 %v2796
    %3891 = vmatpush1.bf16.msra.mxu0 %v2795
    %3892 = vmatprep.subr.bf16.mxu0 %v2800
    %3893 = vmatpush1.bf16.msra.mxu0 %v2799
    %3894 = vmatprep.subr.bf16.mxu0 %v2804
    %3895 = vmatpush1.bf16.msra.mxu0 %v2803
    %3896 = vmatprep.subr.bf16.mxu0 0
    %3897 = vmatpush1.bf16.msra.mxu0 0
    %3898 = vmatprep.subr.bf16.mxu0 0
    %3899 = vmatpush1.bf16.msra.mxu0 0
    %3900 = vmatprep.subr.bf16.mxu0 0
    %3901 = vmatpush1.bf16.msra.mxu0 0
    %3902 = vmatprep.subr.bf16.mxu0 0
    %3903 = vmatpush1.bf16.msra.mxu0 0
    %3904 = vmatprep.subr.bf16.mxu0 0
    %3905 = vmatpush1.bf16.msra.mxu0 0
    %3906 = vmatprep.subr.bf16.mxu0 0
    %3907 = vmatpush1.bf16.msra.mxu0 0
    %3908 = vmatprep.subr.bf16.mxu0 0
    %3909 = vmatpush1.bf16.msra.mxu0 0
    %3910 = vmatprep.subr.bf16.mxu0 0
    %3911 = vmatpush1.bf16.msra.mxu0 0
    %3912 = vmatprep.mubr.bf16.mxu0 0
    %3913 = vmatmul.mubr.bf16.gmra.mrb[0].mxu0 %v3448
    %v3914 = vpop.f32.mrb[0].mxu0
    %v3915 = vadd.f32 0.0, %v3914
    %v3916 = vpop.f32.mrb[0].mxu0
    %v3917 = vadd.f32 0.0, %v3916
    %v3918 = vpop.f32.mrb[0].mxu0
    %v3919 = vpop.f32.mrb[0].mxu0
    %3920 = vdwg.mxu0
    %v3921 = vadd.f32 %v3835, %v3874
    %v3922 = vadd.f32 %v3836, %v3876
    %v3923 = vadd.f32 %v3837, %v3915
    %v3924 = vadd.f32 %v3838, %v3917
    %v3925 = vxor.u32 %v3921, 2147483648
    %v3926 = vxor.u32 %v3922, 2147483648
    %v3927 = vxor.u32 %v3923, 2147483648
    %v3928 = vmul.f32 %v3925, 1.442695
    %v3929 = vpow.pop %v3928
    %v3930 = vmul.f32 %v3926, 1.442695
    %v3931 = vpow.pop %v3930
    %v3932 = vmul.f32 %v3927, 1.442695
    %v3933 = vpow.pop %v3932
    %v3934 = vadd.f32 %v3929, 1.0
    %v3935 = vadd.f32 %v3931, 1.0
    %v3936 = vadd.f32 %v3933, 1.0
    %v3937 = vrcp.pop %v3934
    %v3938 = vmul.f32 1.0, %v3937
    %v3939 = vrcp.pop %v3935
    %v3940 = vmul.f32 1.0, %v3939
    %v3941 = vrcp.pop %v3936
    %v3942 = vmul.f32 1.0, %v3941
    %v3943 = vtanh.pop %v3924
    %v3944 = vmul.f32 %v3940, %v3445
    %v3945 = vmul.f32 %v3938, %v3943
    %v3946 = vadd.f32 %v3944, %v3945
    %v3947 = vtanh.pop %v3946
    %v3948 = vmul.f32 %v3942, %v3947
    %v3949 = vpack.c.bf16 %v3948, %v3948
    %v3950 = vpack.c.bf16 %v3669, %v3669
    %v3951 = vpack.c.bf16 %v3670, %v3670
    %3952 = vmatprep.subr.bf16.mxu0 %v2024
    %3953 = vmatpush1.bf16.msra.mxu0 %v2023
    %3954 = vmatprep.subr.bf16.mxu0 %v2032
    %3955 = vmatpush1.bf16.msra.mxu0 %v2031
    %3956 = vmatprep.subr.bf16.mxu0 %v2040
    %3957 = vmatpush1.bf16.msra.mxu0 %v2039
    %3958 = vmatprep.subr.bf16.mxu0 %v2048
    %3959 = vmatpush1.bf16.msra.mxu0 %v2047
    %3960 = vmatprep.subr.bf16.mxu0 %v2056
    %3961 = vmatpush1.bf16.msra.mxu0 %v2055
    %3962 = vmatprep.subr.bf16.mxu0 %v2064
    %3963 = vmatpush1.bf16.msra.mxu0 %v2063
    %3964 = vmatprep.subr.bf16.mxu0 %v2072
    %3965 = vmatpush1.bf16.msra.mxu0 %v2071
    %3966 = vmatprep.subr.bf16.mxu0 %v2080
    %3967 = vmatpush1.bf16.msra.mxu0 %v2079
    %3968 = vmatprep.subr.bf16.mxu0 %v2088
    %3969 = vmatpush1.bf16.msra.mxu0 %v2087
    %3970 = vmatprep.subr.bf16.mxu0 %v2096
    %3971 = vmatpush1.bf16.msra.mxu0 %v2095
    %3972 = vmatprep.subr.bf16.mxu0 %v2104
    %3973 = vmatpush1.bf16.msra.mxu0 %v2103
    %3974 = vmatprep.subr.bf16.mxu0 %v2112
    %3975 = vmatpush1.bf16.msra.mxu0 %v2111
    %3976 = vmatprep.subr.bf16.mxu0 %v2120
    %3977 = vmatpush1.bf16.msra.mxu0 %v2119
    %3978 = vmatprep.subr.bf16.mxu0 %v2128
    %3979 = vmatpush1.bf16.msra.mxu0 %v2127
    %3980 = vmatprep.subr.bf16.mxu0 %v2136
    %3981 = vmatpush1.bf16.msra.mxu0 %v2135
    %3982 = vmatprep.subr.bf16.mxu0 %v2144
    %3983 = vmatpush1.bf16.msra.mxu0 %v2143
    %3984 = vmatprep.mubr.bf16.mxu0 %v3951
    %3985 = vmatmul.mubr.bf16.gmra.mrb[0].mxu0 %v3950
    %v3986 = vpop.f32.mrb[0].mxu0
    %v3987 = vadd.f32 0.0, %v3986
    %v3988 = vpop.f32.mrb[0].mxu0
    %v3989 = vadd.f32 0.0, %v3988
    %v3990 = vpop.f32.mrb[0].mxu0
    %v3991 = vpop.f32.mrb[0].mxu0
    %3992 = vdwg.mxu0
    %3993 = vmatprep.subr.bf16.mxu0 %v2026
    %3994 = vmatpush1.bf16.msra.mxu0 %v2025
    %3995 = vmatprep.subr.bf16.mxu0 %v2034
    %3996 = vmatpush1.bf16.msra.mxu0 %v2033
    %3997 = vmatprep.subr.bf16.mxu0 %v2042
    %3998 = vmatpush1.bf16.msra.mxu0 %v2041
    %3999 = vmatprep.subr.bf16.mxu0 %v2050
    %4000 = vmatpush1.bf16.msra.mxu0 %v2049
    %4001 = vmatprep.subr.bf16.mxu0 %v2058
    %4002 = vmatpush1.bf16.msra.mxu0 %v2057
    %4003 = vmatprep.subr.bf16.mxu0 %v2066
    %4004 = vmatpush1.bf16.msra.mxu0 %v2065
    %4005 = vmatprep.subr.bf16.mxu0 %v2074
    %4006 = vmatpush1.bf16.msra.mxu0 %v2073
    %4007 = vmatprep.subr.bf16.mxu0 %v2082
    %4008 = vmatpush1.bf16.msra.mxu0 %v2081
    %4009 = vmatprep.subr.bf16.mxu0 %v2090
    %4010 = vmatpush1.bf16.msra.mxu0 %v2089
    %4011 = vmatprep.subr.bf16.mxu0 %v2098
    %4012 = vmatpush1.bf16.msra.mxu0 %v2097
    %4013 = vmatprep.subr.bf16.mxu0 %v2106
    %4014 = vmatpush1.bf16.msra.mxu0 %v2105
    %4015 = vmatprep.subr.bf16.mxu0 %v2114
    %4016 = vmatpush1.bf16.msra.mxu0 %v2113
    %4017 = vmatprep.subr.bf16.mxu0 %v2122
    %4018 = vmatpush1.bf16.msra.mxu0 %v2121
    %4019 = vmatprep.subr.bf16.mxu0 %v2130
    %4020 = vmatpush1.bf16.msra.mxu0 %v2129
    %4021 = vmatprep.subr.bf16.mxu0 %v2138
    %4022 = vmatpush1.bf16.msra.mxu0 %v2137
    %4023 = vmatprep.subr.bf16.mxu0 %v2146
    %4024 = vmatpush1.bf16.msra.mxu0 %v2145
    %4025 = vmatprep.mubr.bf16.mxu0 %v3951
    %4026 = vmatmul.mubr.bf16.gmra.mrb[0].mxu0 %v3950
    %v4027 = vpop.f32.mrb[0].mxu0
    %v4028 = vadd.f32 0.0, %v4027
    %v4029 = vpop.f32.mrb[0].mxu0
    %v4030 = vadd.f32 0.0, %v4029
    %v4031 = vpop.f32.mrb[0].mxu0
    %v4032 = vpop.f32.mrb[0].mxu0
    %4033 = vdwg.mxu0
    %4034 = vmatprep.subr.bf16.mxu0 %v2028
    %4035 = vmatpush1.bf16.msra.mxu0 %v2027
    %4036 = vmatprep.subr.bf16.mxu0 %v2036
    %4037 = vmatpush1.bf16.msra.mxu0 %v2035
    %4038 = vmatprep.subr.bf16.mxu0 %v2044
    %4039 = vmatpush1.bf16.msra.mxu0 %v2043
    %4040 = vmatprep.subr.bf16.mxu0 %v2052
    %4041 = vmatpush1.bf16.msra.mxu0 %v2051
    %4042 = vmatprep.subr.bf16.mxu0 %v2060
    %4043 = vmatpush1.bf16.msra.mxu0 %v2059
    %4044 = vmatprep.subr.bf16.mxu0 %v2068
    %4045 = vmatpush1.bf16.msra.mxu0 %v2067
    %4046 = vmatprep.subr.bf16.mxu0 %v2076
    %4047 = vmatpush1.bf16.msra.mxu0 %v2075
    %4048 = vmatprep.subr.bf16.mxu0 %v2084
    %4049 = vmatpush1.bf16.msra.mxu0 %v2083
    %4050 = vmatprep.subr.bf16.mxu0 %v2092
    %4051 = vmatpush1.bf16.msra.mxu0 %v2091
    %4052 = vmatprep.subr.bf16.mxu0 %v2100
    %4053 = vmatpush1.bf16.msra.mxu0 %v2099
    %4054 = vmatprep.subr.bf16.mxu0 %v2108
    %4055 = vmatpush1.bf16.msra.mxu0 %v2107
    %4056 = vmatprep.subr.bf16.mxu0 %v2116
    %4057 = vmatpush1.bf16.msra.mxu0 %v2115
    %4058 = vmatprep.subr.bf16.mxu0 %v2124
    %4059 = vmatpush1.bf16.msra.mxu0 %v2123
    %4060 = vmatprep.subr.bf16.mxu0 %v2132
    %4061 = vmatpush1.bf16.msra.mxu0 %v2131
    %4062 = vmatprep.subr.bf16.mxu0 %v2140
    %4063 = vmatpush1.bf16.msra.mxu0 %v2139
    %4064 = vmatprep.subr.bf16.mxu0 %v2148
    %4065 = vmatpush1.bf16.msra.mxu0 %v2147
    %4066 = vmatprep.mubr.bf16.mxu0 %v3951
    %4067 = vmatmul.mubr.bf16.gmra.mrb[0].mxu0 %v3950
    %v4068 = vpop.f32.mrb[0].mxu0
    %v4069 = vadd.f32 0.0, %v4068
    %v4070 = vpop.f32.mrb[0].mxu0
    %v4071 = vadd.f32 0.0, %v4070
    %v4072 = vpop.f32.mrb[0].mxu0
    %v4073 = vpop.f32.mrb[0].mxu0
    %4074 = vdwg.mxu0
    %4075 = vmatprep.subr.bf16.mxu0 %v2030
    %4076 = vmatpush1.bf16.msra.mxu0 %v2029
    %4077 = vmatprep.subr.bf16.mxu0 %v2038
    %4078 = vmatpush1.bf16.msra.mxu0 %v2037
    %4079 = vmatprep.subr.bf16.mxu0 %v2046
    %4080 = vmatpush1.bf16.msra.mxu0 %v2045
    %4081 = vmatprep.subr.bf16.mxu0 %v2054
    %4082 = vmatpush1.bf16.msra.mxu0 %v2053
    %4083 = vmatprep.subr.bf16.mxu0 %v2062
    %4084 = vmatpush1.bf16.msra.mxu0 %v2061
    %4085 = vmatprep.subr.bf16.mxu0 %v2070
    %4086 = vmatpush1.bf16.msra.mxu0 %v2069
    %4087 = vmatprep.subr.bf16.mxu0 %v2078
    %4088 = vmatpush1.bf16.msra.mxu0 %v2077
    %4089 = vmatprep.subr.bf16.mxu0 %v2086
    %4090 = vmatpush1.bf16.msra.mxu0 %v2085
    %4091 = vmatprep.subr.bf16.mxu0 %v2094
    %4092 = vmatpush1.bf16.msra.mxu0 %v2093
    %4093 = vmatprep.subr.bf16.mxu0 %v2102
    %4094 = vmatpush1.bf16.msra.mxu0 %v2101
    %4095 = vmatprep.subr.bf16.mxu0 %v2110
    %4096 = vmatpush1.bf16.msra.mxu0 %v2109
    %4097 = vmatprep.subr.bf16.mxu0 %v2118
    %4098 = vmatpush1.bf16.msra.mxu0 %v2117
    %4099 = vmatprep.subr.bf16.mxu0 %v2126
    %4100 = vmatpush1.bf16.msra.mxu0 %v2125
    %4101 = vmatprep.subr.bf16.mxu0 %v2134
    %4102 = vmatpush1.bf16.msra.mxu0 %v2133
    %4103 = vmatprep.subr.bf16.mxu0 %v2142
    %4104 = vmatpush1.bf16.msra.mxu0 %v2141
    %4105 = vmatprep.subr.bf16.mxu0 %v2150
    %4106 = vmatpush1.bf16.msra.mxu0 %v2149
    %4107 = vmatprep.mubr.bf16.mxu0 %v3951
    %4108 = vmatmul.mubr.bf16.gmra.mrb[0].mxu0 %v3950
    %v4109 = vpop.f32.mrb[0].mxu0
    %v4110 = vadd.f32 0.0, %v4109
    %v4111 = vpop.f32.mrb[0].mxu0
    %v4112 = vadd.f32 0.0, %v4111
    %v4113 = vpop.f32.mrb[0].mxu0
    %v4114 = vpop.f32.mrb[0].mxu0
    %4115 = vdwg.mxu0
    %v4116 = vadd.f32 %v3706, %v3987
    %v4117 = vadd.f32 %v3708, %v3989
    %v4118 = vadd.f32 %v3747, %v4028
    %v4119 = vadd.f32 %v3749, %v4030
    %v4120 = vadd.f32 %v3788, %v4069
    %v4121 = vadd.f32 %v3790, %v4071
    %v4122 = vadd.f32 %v3829, %v4110
    %v4123 = vadd.f32 %v3831, %v4112
    %v4124 = vxor.u32 %v4116, 2147483648
    %v4125 = vxor.u32 %v4117, 2147483648
    %v4126 = vxor.u32 %v4118, 2147483648
    %v4127 = vxor.u32 %v4119, 2147483648
    %v4128 = vxor.u32 %v4120, 2147483648
    %v4129 = vxor.u32 %v4121, 2147483648
    %v4130 = vmul.f32 %v4124, 1.442695
    %v4131 = vpow.pop %v4130
    %v4132 = vmul.f32 %v4125, 1.442695
    %v4133 = vpow.pop %v4132
    %v4134 = vmul.f32 %v4126, 1.442695
    %v4135 = vpow.pop %v4134
    %v4136 = vmul.f32 %v4127, 1.442695
    %v4137 = vpow.pop %v4136
    %v4138 = vmul.f32 %v4128, 1.442695
    %v4139 = vpow.pop %v4138
    %v4140 = vmul.f32 %v4129, 1.442695
    %v4141 = vpow.pop %v4140
    %v4142 = vadd.f32 %v4131, 1.0
    %v4143 = vadd.f32 %v4133, 1.0
    %v4144 = vadd.f32 %v4135, 1.0
    %v4145 = vadd.f32 %v4137, 1.0
    %v4146 = vadd.f32 %v4139, 1.0
    %v4147 = vadd.f32 %v4141, 1.0
    %v4148 = vrcp.pop %v4142
    %v4149 = vmul.f32 1.0, %v4148
    %v4150 = vrcp.pop %v4143
    %v4151 = vmul.f32 1.0, %v4150
    %v4152 = vrcp.pop %v4144
    %v4153 = vmul.f32 1.0, %v4152
    %v4154 = vrcp.pop %v4145
    %v4155 = vmul.f32 1.0, %v4154
    %v4156 = vrcp.pop %v4146
    %v4157 = vmul.f32 1.0, %v4156
    %v4158 = vrcp.pop %v4147
    %v4159 = vmul.f32 1.0, %v4158
    %v4160 = vtanh.pop %v4122
    %v4161 = vtanh.pop %v4123
    %v4162 = vmul.f32 %v4153, %v3665
    %v4163 = vmul.f32 %v4155, %v3666
    %v4164 = vmul.f32 %v4149, %v4160
    %v4165 = vmul.f32 %v4151, %v4161
    %v4166 = vadd.f32 %v4162, %v4164
    %v4167 = vadd.f32 %v4163, %v4165
    %v4168 = vtanh.pop %v4166
    %v4169 = vtanh.pop %v4167
    %v4170 = vmul.f32 %v4157, %v4168
    %v4171 = vmul.f32 %v4159, %v4169
    %4172 = vmatprep.subr.bf16.mxu0 %v2372
    %4173 = vmatpush1.bf16.msra.mxu0 %v2371
    %4174 = vmatprep.subr.bf16.mxu0 %v2380
    %4175 = vmatpush1.bf16.msra.mxu0 %v2379
    %4176 = vmatprep.subr.bf16.mxu0 %v2388
    %4177 = vmatpush1.bf16.msra.mxu0 %v2387
    %4178 = vmatprep.subr.bf16.mxu0 %v2396
    %4179 = vmatpush1.bf16.msra.mxu0 %v2395
    %4180 = vmatprep.subr.bf16.mxu0 %v2404
    %4181 = vmatpush1.bf16.msra.mxu0 %v2403
    %4182 = vmatprep.subr.bf16.mxu0 %v2412
    %4183 = vmatpush1.bf16.msra.mxu0 %v2411
    %4184 = vmatprep.subr.bf16.mxu0 %v2420
    %4185 = vmatpush1.bf16.msra.mxu0 %v2419
    %4186 = vmatprep.subr.bf16.mxu0 %v2428
    %4187 = vmatpush1.bf16.msra.mxu0 %v2427
    %4188 = vmatprep.subr.bf16.mxu0 0
    %4189 = vmatpush1.bf16.msra.mxu0 0
    %4190 = vmatprep.subr.bf16.mxu0 0
    %4191 = vmatpush1.bf16.msra.mxu0 0
    %4192 = vmatprep.subr.bf16.mxu0 0
    %4193 = vmatpush1.bf16.msra.mxu0 0
    %4194 = vmatprep.subr.bf16.mxu0 0
    %4195 = vmatpush1.bf16.msra.mxu0 0
    %4196 = vmatprep.subr.bf16.mxu0 0
    %4197 = vmatpush1.bf16.msra.mxu0 0
    %4198 = vmatprep.subr.bf16.mxu0 0
    %4199 = vmatpush1.bf16.msra.mxu0 0
    %4200 = vmatprep.subr.bf16.mxu0 0
    %4201 = vmatpush1.bf16.msra.mxu0 0
    %4202 = vmatprep.subr.bf16.mxu0 0
    %4203 = vmatpush1.bf16.msra.mxu0 0
    %4204 = vmatprep.mubr.bf16.mxu0 0
    %4205 = vmatmul.mubr.bf16.gmra.mrb[0].mxu0 %v3949
    %v4206 = vpop.f32.mrb[0].mxu0
    %v4207 = vadd.f32 %v2440, %v4206
    %v4208 = vpop.f32.mrb[0].mxu0
    %v4209 = vadd.f32 %v2444, %v4208
    %v4210 = vpop.f32.mrb[0].mxu0
    %v4211 = vpop.f32.mrb[0].mxu0
    %4212 = vdwg.mxu0
    %4213 = vmatprep.subr.bf16.mxu0 %v2374
    %4214 = vmatpush1.bf16.msra.mxu0 %v2373
    %4215 = vmatprep.subr.bf16.mxu0 %v2382
    %4216 = vmatpush1.bf16.msra.mxu0 %v2381
    %4217 = vmatprep.subr.bf16.mxu0 %v2390
    %4218 = vmatpush1.bf16.msra.mxu0 %v2389
    %4219 = vmatprep.subr.bf16.mxu0 %v2398
    %4220 = vmatpush1.bf16.msra.mxu0 %v2397
    %4221 = vmatprep.subr.bf16.mxu0 %v2406
    %4222 = vmatpush1.bf16.msra.mxu0 %v2405
    %4223 = vmatprep.subr.bf16.mxu0 %v2414
    %4224 = vmatpush1.bf16.msra.mxu0 %v2413
    %4225 = vmatprep.subr.bf16.mxu0 %v2422
    %4226 = vmatpush1.bf16.msra.mxu0 %v2421
    %4227 = vmatprep.subr.bf16.mxu0 %v2430
    %4228 = vmatpush1.bf16.msra.mxu0 %v2429
    %4229 = vmatprep.subr.bf16.mxu0 0
    %4230 = vmatpush1.bf16.msra.mxu0 0
    %4231 = vmatprep.subr.bf16.mxu0 0
    %4232 = vmatpush1.bf16.msra.mxu0 0
    %4233 = vmatprep.subr.bf16.mxu0 0
    %4234 = vmatpush1.bf16.msra.mxu0 0
    %4235 = vmatprep.subr.bf16.mxu0 0
    %4236 = vmatpush1.bf16.msra.mxu0 0
    %4237 = vmatprep.subr.bf16.mxu0 0
    %4238 = vmatpush1.bf16.msra.mxu0 0
    %4239 = vmatprep.subr.bf16.mxu0 0
    %4240 = vmatpush1.bf16.msra.mxu0 0
    %4241 = vmatprep.subr.bf16.mxu0 0
    %4242 = vmatpush1.bf16.msra.mxu0 0
    %4243 = vmatprep.subr.bf16.mxu0 0
    %4244 = vmatpush1.bf16.msra.mxu0 0
    %4245 = vmatprep.mubr.bf16.mxu0 0
    %4246 = vmatmul.mubr.bf16.gmra.mrb[0].mxu0 %v3949
    %v4247 = vpop.f32.mrb[0].mxu0
    %v4248 = vadd.f32 %v2448, %v4247
    %v4249 = vpop.f32.mrb[0].mxu0
    %v4250 = vadd.f32 %v2452, %v4249
    %v4251 = vpop.f32.mrb[0].mxu0
    %v4252 = vpop.f32.mrb[0].mxu0
    %4253 = vdwg.mxu0
    %4254 = vmatprep.subr.bf16.mxu0 %v2376
    %4255 = vmatpush1.bf16.msra.mxu0 %v2375
    %4256 = vmatprep.subr.bf16.mxu0 %v2384
    %4257 = vmatpush1.bf16.msra.mxu0 %v2383
    %4258 = vmatprep.subr.bf16.mxu0 %v2392
    %4259 = vmatpush1.bf16.msra.mxu0 %v2391
    %4260 = vmatprep.subr.bf16.mxu0 %v2400
    %4261 = vmatpush1.bf16.msra.mxu0 %v2399
    %4262 = vmatprep.subr.bf16.mxu0 %v2408
    %4263 = vmatpush1.bf16.msra.mxu0 %v2407
    %4264 = vmatprep.subr.bf16.mxu0 %v2416
    %4265 = vmatpush1.bf16.msra.mxu0 %v2415
    %4266 = vmatprep.subr.bf16.mxu0 %v2424
    %4267 = vmatpush1.bf16.msra.mxu0 %v2423
    %4268 = vmatprep.subr.bf16.mxu0 %v2432
    %4269 = vmatpush1.bf16.msra.mxu0 %v2431
    %4270 = vmatprep.subr.bf16.mxu0 0
    %4271 = vmatpush1.bf16.msra.mxu0 0
    %4272 = vmatprep.subr.bf16.mxu0 0
    %4273 = vmatpush1.bf16.msra.mxu0 0
    %4274 = vmatprep.subr.bf16.mxu0 0
    %4275 = vmatpush1.bf16.msra.mxu0 0
    %4276 = vmatprep.subr.bf16.mxu0 0
    %4277 = vmatpush1.bf16.msra.mxu0 0
    %4278 = vmatprep.subr.bf16.mxu0 0
    %4279 = vmatpush1.bf16.msra.mxu0 0
    %4280 = vmatprep.subr.bf16.mxu0 0
    %4281 = vmatpush1.bf16.msra.mxu0 0
    %4282 = vmatprep.subr.bf16.mxu0 0
    %4283 = vmatpush1.bf16.msra.mxu0 0
    %4284 = vmatprep.subr.bf16.mxu0 0
    %4285 = vmatpush1.bf16.msra.mxu0 0
    %4286 = vmatprep.mubr.bf16.mxu0 0
    %4287 = vmatmul.mubr.bf16.gmra.mrb[0].mxu0 %v3949
    %v4288 = vpop.f32.mrb[0].mxu0
    %v4289 = vadd.f32 %v2456, %v4288
    %v4290 = vpop.f32.mrb[0].mxu0
    %v4291 = vadd.f32 %v2460, %v4290
    %v4292 = vpop.f32.mrb[0].mxu0
    %v4293 = vpop.f32.mrb[0].mxu0
    %4294 = vdwg.mxu0
    %4295 = vmatprep.subr.bf16.mxu0 %v2378
    %4296 = vmatpush1.bf16.msra.mxu0 %v2377
    %4297 = vmatprep.subr.bf16.mxu0 %v2386
    %4298 = vmatpush1.bf16.msra.mxu0 %v2385
    %4299 = vmatprep.subr.bf16.mxu0 %v2394
    %4300 = vmatpush1.bf16.msra.mxu0 %v2393
    %4301 = vmatprep.subr.bf16.mxu0 %v2402
    %4302 = vmatpush1.bf16.msra.mxu0 %v2401
    %4303 = vmatprep.subr.bf16.mxu0 %v2410
    %4304 = vmatpush1.bf16.msra.mxu0 %v2409
    %4305 = vmatprep.subr.bf16.mxu0 %v2418
    %4306 = vmatpush1.bf16.msra.mxu0 %v2417
    %4307 = vmatprep.subr.bf16.mxu0 %v2426
    %4308 = vmatpush1.bf16.msra.mxu0 %v2425
    %4309 = vmatprep.subr.bf16.mxu0 %v2434
    %4310 = vmatpush1.bf16.msra.mxu0 %v2433
    %4311 = vmatprep.subr.bf16.mxu0 0
    %4312 = vmatpush1.bf16.msra.mxu0 0
    %4313 = vmatprep.subr.bf16.mxu0 0
    %4314 = vmatpush1.bf16.msra.mxu0 0
    %4315 = vmatprep.subr.bf16.mxu0 0
    %4316 = vmatpush1.bf16.msra.mxu0 0
    %4317 = vmatprep.subr.bf16.mxu0 0
    %4318 = vmatpush1.bf16.msra.mxu0 0
    %4319 = vmatprep.subr.bf16.mxu0 0
    %4320 = vmatpush1.bf16.msra.mxu0 0
    %4321 = vmatprep.subr.bf16.mxu0 0
    %4322 = vmatpush1.bf16.msra.mxu0 0
    %4323 = vmatprep.subr.bf16.mxu0 0
    %4324 = vmatpush1.bf16.msra.mxu0 0
    %4325 = vmatprep.subr.bf16.mxu0 0
    %4326 = vmatpush1.bf16.msra.mxu0 0
    %4327 = vmatprep.mubr.bf16.mxu0 0
    %4328 = vmatmul.mubr.bf16.gmra.mrb[0].mxu0 %v3949
    %v4329 = vpop.f32.mrb[0].mxu0
    %v4330 = vadd.f32 %v2464, %v4329
    %v4331 = vpop.f32.mrb[0].mxu0
    %v4332 = vadd.f32 %v2468, %v4331
    %v4333 = vpop.f32.mrb[0].mxu0
    %v4334 = vpop.f32.mrb[0].mxu0
    %4335 = vdwg.mxu0
    %v4336 = vld [vmem:[#allocation2 + $0xc0] sm:$0xff]
    %v4337 = vld [vmem:[#allocation2 + $0xc8] sm:$0xff]
    %v4338 = vld [vmem:[#allocation2 + $0xd0] sm:$0xff]
    %v4339 = vld [vmem:[#allocation2 + $0xd8] sm:$0xff]
    %4340 = vmatprep.subr.bf16.mxu0 %v2774
    %4341 = vmatpush1.bf16.msra.mxu0 %v2773
    %4342 = vmatprep.subr.bf16.mxu0 %v2778
    %4343 = vmatpush1.bf16.msra.mxu0 %v2777
    %4344 = vmatprep.subr.bf16.mxu0 %v2782
    %4345 = vmatpush1.bf16.msra.mxu0 %v2781
    %4346 = vmatprep.subr.bf16.mxu0 %v2786
    %4347 = vmatpush1.bf16.msra.mxu0 %v2785
    %4348 = vmatprep.subr.bf16.mxu0 %v2790
    %4349 = vmatpush1.bf16.msra.mxu0 %v2789
    %4350 = vmatprep.subr.bf16.mxu0 %v2794
    %4351 = vmatpush1.bf16.msra.mxu0 %v2793
    %4352 = vmatprep.subr.bf16.mxu0 %v2798
    %4353 = vmatpush1.bf16.msra.mxu0 %v2797
    %4354 = vmatprep.subr.bf16.mxu0 %v2802
    %4355 = vmatpush1.bf16.msra.mxu0 %v2801
    %4356 = vmatprep.subr.bf16.mxu0 0
    %4357 = vmatpush1.bf16.msra.mxu0 0
    %4358 = vmatprep.subr.bf16.mxu0 0
    %4359 = vmatpush1.bf16.msra.mxu0 0
    %4360 = vmatprep.subr.bf16.mxu0 0
    %4361 = vmatpush1.bf16.msra.mxu0 0
    %4362 = vmatprep.subr.bf16.mxu0 0
    %4363 = vmatpush1.bf16.msra.mxu0 0
    %4364 = vmatprep.subr.bf16.mxu0 0
    %4365 = vmatpush1.bf16.msra.mxu0 0
    %4366 = vmatprep.subr.bf16.mxu0 0
    %4367 = vmatpush1.bf16.msra.mxu0 0
    %4368 = vmatprep.subr.bf16.mxu0 0
    %4369 = vmatpush1.bf16.msra.mxu0 0
    %4370 = vmatprep.subr.bf16.mxu0 0
    %4371 = vmatpush1.bf16.msra.mxu0 0
    %4372 = vmatprep.mubr.bf16.mxu0 0
    %4373 = vmatmul.mubr.bf16.gmra.mrb[0].mxu0 %v3949
    %v4374 = vpop.f32.mrb[0].mxu0
    %v4375 = vadd.f32 0.0, %v4374
    %v4376 = vpop.f32.mrb[0].mxu0
    %v4377 = vadd.f32 0.0, %v4376
    %v4378 = vpop.f32.mrb[0].mxu0
    %v4379 = vpop.f32.mrb[0].mxu0
    %4380 = vdwg.mxu0
    %4381 = vmatprep.subr.bf16.mxu0 %v2776
    %4382 = vmatpush1.bf16.msra.mxu0 %v2775
    %4383 = vmatprep.subr.bf16.mxu0 %v2780
    %4384 = vmatpush1.bf16.msra.mxu0 %v2779
    %4385 = vmatprep.subr.bf16.mxu0 %v2784
    %4386 = vmatpush1.bf16.msra.mxu0 %v2783
    %4387 = vmatprep.subr.bf16.mxu0 %v2788
    %4388 = vmatpush1.bf16.msra.mxu0 %v2787
    %4389 = vmatprep.subr.bf16.mxu0 %v2792
    %4390 = vmatpush1.bf16.msra.mxu0 %v2791
    %4391 = vmatprep.subr.bf16.mxu0 %v2796
    %4392 = vmatpush1.bf16.msra.mxu0 %v2795
    %4393 = vmatprep.subr.bf16.mxu0 %v2800
    %4394 = vmatpush1.bf16.msra.mxu0 %v2799
    %4395 = vmatprep.subr.bf16.mxu0 %v2804
    %4396 = vmatpush1.bf16.msra.mxu0 %v2803
    %4397 = vmatprep.subr.bf16.mxu0 0
    %4398 = vmatpush1.bf16.msra.mxu0 0
    %4399 = vmatprep.subr.bf16.mxu0 0
    %4400 = vmatpush1.bf16.msra.mxu0 0
    %4401 = vmatprep.subr.bf16.mxu0 0
    %4402 = vmatpush1.bf16.msra.mxu0 0
    %4403 = vmatprep.subr.bf16.mxu0 0
    %4404 = vmatpush1.bf16.msra.mxu0 0
    %4405 = vmatprep.subr.bf16.mxu0 0
    %4406 = vmatpush1.bf16.msra.mxu0 0
    %4407 = vmatprep.subr.bf16.mxu0 0
    %4408 = vmatpush1.bf16.msra.mxu0 0
    %4409 = vmatprep.subr.bf16.mxu0 0
    %4410 = vmatpush1.bf16.msra.mxu0 0
    %4411 = vmatprep.subr.bf16.mxu0 0
    %4412 = vmatpush1.bf16.msra.mxu0 0
    %4413 = vmatprep.mubr.bf16.mxu0 0
    %4414 = vmatmul.mubr.bf16.gmra.mrb[0].mxu0 %v3949
    %v4415 = vpop.f32.mrb[0].mxu0
    %v4416 = vadd.f32 0.0, %v4415
    %v4417 = vpop.f32.mrb[0].mxu0
    %v4418 = vadd.f32 0.0, %v4417
    %v4419 = vpop.f32.mrb[0].mxu0
    %v4420 = vpop.f32.mrb[0].mxu0
    %4421 = vdwg.mxu0
    %v4422 = vadd.f32 %v4336, %v4375
    %v4423 = vadd.f32 %v4337, %v4377
    %v4424 = vadd.f32 %v4338, %v4416
    %v4425 = vadd.f32 %v4339, %v4418
    %v4426 = vxor.u32 %v4422, 2147483648
    %v4427 = vxor.u32 %v4423, 2147483648
    %v4428 = vxor.u32 %v4424, 2147483648
    %v4429 = vmul.f32 %v4426, 1.442695
    %v4430 = vpow.pop %v4429
    %v4431 = vmul.f32 %v4427, 1.442695
    %v4432 = vpow.pop %v4431
    %v4433 = vmul.f32 %v4428, 1.442695
    %v4434 = vpow.pop %v4433
    %v4435 = vadd.f32 %v4430, 1.0
    %v4436 = vadd.f32 %v4432, 1.0
    %v4437 = vadd.f32 %v4434, 1.0
    %v4438 = vrcp.pop %v4435
    %v4439 = vmul.f32 1.0, %v4438
    %v4440 = vrcp.pop %v4436
    %v4441 = vmul.f32 1.0, %v4440
    %v4442 = vrcp.pop %v4437
    %v4443 = vmul.f32 1.0, %v4442
    %v4444 = vtanh.pop %v4425
    %v4445 = vmul.f32 %v4441, %v3946
    %v4446 = vmul.f32 %v4439, %v4444
    %v4447 = vadd.f32 %v4445, %v4446
    %v4448 = vtanh.pop %v4447
    %v4449 = vmul.f32 %v4443, %v4448
    %v4450 = vpack.c.bf16 %v4449, %v4449
    %v4451 = vpack.c.bf16 %v4170, %v4170
    %v4452 = vpack.c.bf16 %v4171, %v4171
    %4453 = vmatprep.subr.bf16.mxu0 %v2024
    %4454 = vmatpush1.bf16.msra.mxu0 %v2023
    %4455 = vmatprep.subr.bf16.mxu0 %v2032
    %4456 = vmatpush1.bf16.msra.mxu0 %v2031
    %4457 = vmatprep.subr.bf16.mxu0 %v2040
    %4458 = vmatpush1.bf16.msra.mxu0 %v2039
    %4459 = vmatprep.subr.bf16.mxu0 %v2048
    %4460 = vmatpush1.bf16.msra.mxu0 %v2047
    %4461 = vmatprep.subr.bf16.mxu0 %v2056
    %4462 = vmatpush1.bf16.msra.mxu0 %v2055
    %4463 = vmatprep.subr.bf16.mxu0 %v2064
    %4464 = vmatpush1.bf16.msra.mxu0 %v2063
    %4465 = vmatprep.subr.bf16.mxu0 %v2072
    %4466 = vmatpush1.bf16.msra.mxu0 %v2071
    %4467 = vmatprep.subr.bf16.mxu0 %v2080
    %4468 = vmatpush1.bf16.msra.mxu0 %v2079
    %4469 = vmatprep.subr.bf16.mxu0 %v2088
    %4470 = vmatpush1.bf16.msra.mxu0 %v2087
    %4471 = vmatprep.subr.bf16.mxu0 %v2096
    %4472 = vmatpush1.bf16.msra.mxu0 %v2095
    %4473 = vmatprep.subr.bf16.mxu0 %v2104
    %4474 = vmatpush1.bf16.msra.mxu0 %v2103
    %4475 = vmatprep.subr.bf16.mxu0 %v2112
    %4476 = vmatpush1.bf16.msra.mxu0 %v2111
    %4477 = vmatprep.subr.bf16.mxu0 %v2120
    %4478 = vmatpush1.bf16.msra.mxu0 %v2119
    %4479 = vmatprep.subr.bf16.mxu0 %v2128
    %4480 = vmatpush1.bf16.msra.mxu0 %v2127
    %4481 = vmatprep.subr.bf16.mxu0 %v2136
    %4482 = vmatpush1.bf16.msra.mxu0 %v2135
    %4483 = vmatprep.subr.bf16.mxu0 %v2144
    %4484 = vmatpush1.bf16.msra.mxu0 %v2143
    %4485 = vmatprep.mubr.bf16.mxu0 %v4452
    %4486 = vmatmul.mubr.bf16.gmra.mrb[0].mxu0 %v4451
    %v4487 = vpop.f32.mrb[0].mxu0
    %v4488 = vadd.f32 0.0, %v4487
    %v4489 = vpop.f32.mrb[0].mxu0
    %v4490 = vadd.f32 0.0, %v4489
    %v4491 = vpop.f32.mrb[0].mxu0
    %v4492 = vpop.f32.mrb[0].mxu0
    %4493 = vdwg.mxu0
    %4494 = vmatprep.subr.bf16.mxu0 %v2026
    %4495 = vmatpush1.bf16.msra.mxu0 %v2025
    %4496 = vmatprep.subr.bf16.mxu0 %v2034
    %4497 = vmatpush1.bf16.msra.mxu0 %v2033
    %4498 = vmatprep.subr.bf16.mxu0 %v2042
    %4499 = vmatpush1.bf16.msra.mxu0 %v2041
    %4500 = vmatprep.subr.bf16.mxu0 %v2050
    %4501 = vmatpush1.bf16.msra.mxu0 %v2049
    %4502 = vmatprep.subr.bf16.mxu0 %v2058
    %4503 = vmatpush1.bf16.msra.mxu0 %v2057
    %4504 = vmatprep.subr.bf16.mxu0 %v2066
    %4505 = vmatpush1.bf16.msra.mxu0 %v2065
    %4506 = vmatprep.subr.bf16.mxu0 %v2074
    %4507 = vmatpush1.bf16.msra.mxu0 %v2073
    %4508 = vmatprep.subr.bf16.mxu0 %v2082
    %4509 = vmatpush1.bf16.msra.mxu0 %v2081
    %4510 = vmatprep.subr.bf16.mxu0 %v2090
    %4511 = vmatpush1.bf16.msra.mxu0 %v2089
    %4512 = vmatprep.subr.bf16.mxu0 %v2098
    %4513 = vmatpush1.bf16.msra.mxu0 %v2097
    %4514 = vmatprep.subr.bf16.mxu0 %v2106
    %4515 = vmatpush1.bf16.msra.mxu0 %v2105
    %4516 = vmatprep.subr.bf16.mxu0 %v2114
    %4517 = vmatpush1.bf16.msra.mxu0 %v2113
    %4518 = vmatprep.subr.bf16.mxu0 %v2122
    %4519 = vmatpush1.bf16.msra.mxu0 %v2121
    %4520 = vmatprep.subr.bf16.mxu0 %v2130
    %4521 = vmatpush1.bf16.msra.mxu0 %v2129
    %4522 = vmatprep.subr.bf16.mxu0 %v2138
    %4523 = vmatpush1.bf16.msra.mxu0 %v2137
    %4524 = vmatprep.subr.bf16.mxu0 %v2146
    %4525 = vmatpush1.bf16.msra.mxu0 %v2145
    %4526 = vmatprep.mubr.bf16.mxu0 %v4452
    %4527 = vmatmul.mubr.bf16.gmra.mrb[0].mxu0 %v4451
    %v4528 = vpop.f32.mrb[0].mxu0
    %v4529 = vadd.f32 0.0, %v4528
    %v4530 = vpop.f32.mrb[0].mxu0
    %v4531 = vadd.f32 0.0, %v4530
    %v4532 = vpop.f32.mrb[0].mxu0
    %v4533 = vpop.f32.mrb[0].mxu0
    %4534 = vdwg.mxu0
    %4535 = vmatprep.subr.bf16.mxu0 %v2028
    %4536 = vmatpush1.bf16.msra.mxu0 %v2027
    %4537 = vmatprep.subr.bf16.mxu0 %v2036
    %4538 = vmatpush1.bf16.msra.mxu0 %v2035
    %4539 = vmatprep.subr.bf16.mxu0 %v2044
    %4540 = vmatpush1.bf16.msra.mxu0 %v2043
    %4541 = vmatprep.subr.bf16.mxu0 %v2052
    %4542 = vmatpush1.bf16.msra.mxu0 %v2051
    %4543 = vmatprep.subr.bf16.mxu0 %v2060
    %4544 = vmatpush1.bf16.msra.mxu0 %v2059
    %4545 = vmatprep.subr.bf16.mxu0 %v2068
    %4546 = vmatpush1.bf16.msra.mxu0 %v2067
    %4547 = vmatprep.subr.bf16.mxu0 %v2076
    %4548 = vmatpush1.bf16.msra.mxu0 %v2075
    %4549 = vmatprep.subr.bf16.mxu0 %v2084
    %4550 = vmatpush1.bf16.msra.mxu0 %v2083
    %4551 = vmatprep.subr.bf16.mxu0 %v2092
    %4552 = vmatpush1.bf16.msra.mxu0 %v2091
    %4553 = vmatprep.subr.bf16.mxu0 %v2100
    %4554 = vmatpush1.bf16.msra.mxu0 %v2099
    %4555 = vmatprep.subr.bf16.mxu0 %v2108
    %4556 = vmatpush1.bf16.msra.mxu0 %v2107
    %4557 = vmatprep.subr.bf16.mxu0 %v2116
    %4558 = vmatpush1.bf16.msra.mxu0 %v2115
    %4559 = vmatprep.subr.bf16.mxu0 %v2124
    %4560 = vmatpush1.bf16.msra.mxu0 %v2123
    %4561 = vmatprep.subr.bf16.mxu0 %v2132
    %4562 = vmatpush1.bf16.msra.mxu0 %v2131
    %4563 = vmatprep.subr.bf16.mxu0 %v2140
    %4564 = vmatpush1.bf16.msra.mxu0 %v2139
    %4565 = vmatprep.subr.bf16.mxu0 %v2148
    %4566 = vmatpush1.bf16.msra.mxu0 %v2147
    %4567 = vmatprep.mubr.bf16.mxu0 %v4452
    %4568 = vmatmul.mubr.bf16.gmra.mrb[0].mxu0 %v4451
    %v4569 = vpop.f32.mrb[0].mxu0
    %v4570 = vadd.f32 0.0, %v4569
    %v4571 = vpop.f32.mrb[0].mxu0
    %v4572 = vadd.f32 0.0, %v4571
    %v4573 = vpop.f32.mrb[0].mxu0
    %v4574 = vpop.f32.mrb[0].mxu0
    %4575 = vdwg.mxu0
    %4576 = vmatprep.subr.bf16.mxu0 %v2030
    %4577 = vmatpush1.bf16.msra.mxu0 %v2029
    %4578 = vmatprep.subr.bf16.mxu0 %v2038
    %4579 = vmatpush1.bf16.msra.mxu0 %v2037
    %4580 = vmatprep.subr.bf16.mxu0 %v2046
    %4581 = vmatpush1.bf16.msra.mxu0 %v2045
    %4582 = vmatprep.subr.bf16.mxu0 %v2054
    %4583 = vmatpush1.bf16.msra.mxu0 %v2053
    %4584 = vmatprep.subr.bf16.mxu0 %v2062
    %4585 = vmatpush1.bf16.msra.mxu0 %v2061
    %4586 = vmatprep.subr.bf16.mxu0 %v2070
    %4587 = vmatpush1.bf16.msra.mxu0 %v2069
    %4588 = vmatprep.subr.bf16.mxu0 %v2078
    %4589 = vmatpush1.bf16.msra.mxu0 %v2077
    %4590 = vmatprep.subr.bf16.mxu0 %v2086
    %4591 = vmatpush1.bf16.msra.mxu0 %v2085
    %4592 = vmatprep.subr.bf16.mxu0 %v2094
    %4593 = vmatpush1.bf16.msra.mxu0 %v2093
    %4594 = vmatprep.subr.bf16.mxu0 %v2102
    %4595 = vmatpush1.bf16.msra.mxu0 %v2101
    %4596 = vmatprep.subr.bf16.mxu0 %v2110
    %4597 = vmatpush1.bf16.msra.mxu0 %v2109
    %4598 = vmatprep.subr.bf16.mxu0 %v2118
    %4599 = vmatpush1.bf16.msra.mxu0 %v2117
    %4600 = vmatprep.subr.bf16.mxu0 %v2126
    %4601 = vmatpush1.bf16.msra.mxu0 %v2125
    %4602 = vmatprep.subr.bf16.mxu0 %v2134
    %4603 = vmatpush1.bf16.msra.mxu0 %v2133
    %4604 = vmatprep.subr.bf16.mxu0 %v2142
    %4605 = vmatpush1.bf16.msra.mxu0 %v2141
    %4606 = vmatprep.subr.bf16.mxu0 %v2150
    %4607 = vmatpush1.bf16.msra.mxu0 %v2149
    %4608 = vmatprep.mubr.bf16.mxu0 %v4452
    %4609 = vmatmul.mubr.bf16.gmra.mrb[0].mxu0 %v4451
    %v4610 = vpop.f32.mrb[0].mxu0
    %v4611 = vadd.f32 0.0, %v4610
    %v4612 = vpop.f32.mrb[0].mxu0
    %v4613 = vadd.f32 0.0, %v4612
    %v4614 = vpop.f32.mrb[0].mxu0
    %v4615 = vpop.f32.mrb[0].mxu0
    %4616 = vdwg.mxu0
    %v4617 = vadd.f32 %v4207, %v4488
    %v4618 = vadd.f32 %v4209, %v4490
    %v4619 = vadd.f32 %v4248, %v4529
    %v4620 = vadd.f32 %v4250, %v4531
    %v4621 = vadd.f32 %v4289, %v4570
    %v4622 = vadd.f32 %v4291, %v4572
    %v4623 = vadd.f32 %v4330, %v4611
    %v4624 = vadd.f32 %v4332, %v4613
    %v4625 = vxor.u32 %v4617, 2147483648
    %v4626 = vxor.u32 %v4618, 2147483648
    %v4627 = vxor.u32 %v4619, 2147483648
    %v4628 = vxor.u32 %v4620, 2147483648
    %v4629 = vxor.u32 %v4621, 2147483648
    %v4630 = vxor.u32 %v4622, 2147483648
    %v4631 = vmul.f32 %v4625, 1.442695
    %v4632 = vpow.pop %v4631
    %v4633 = vmul.f32 %v4626, 1.442695
    %v4634 = vpow.pop %v4633
    %v4635 = vmul.f32 %v4627, 1.442695
    %v4636 = vpow.pop %v4635
    %v4637 = vmul.f32 %v4628, 1.442695
    %v4638 = vpow.pop %v4637
    %v4639 = vmul.f32 %v4629, 1.442695
    %v4640 = vpow.pop %v4639
    %v4641 = vmul.f32 %v4630, 1.442695
    %v4642 = vpow.pop %v4641
    %v4643 = vadd.f32 %v4632, 1.0
    %v4644 = vadd.f32 %v4634, 1.0
    %v4645 = vadd.f32 %v4636, 1.0
    %v4646 = vadd.f32 %v4638, 1.0
    %v4647 = vadd.f32 %v4640, 1.0
    %v4648 = vadd.f32 %v4642, 1.0
    %v4649 = vrcp.pop %v4643
    %v4650 = vmul.f32 1.0, %v4649
    %v4651 = vrcp.pop %v4644
    %v4652 = vmul.f32 1.0, %v4651
    %v4653 = vrcp.pop %v4645
    %v4654 = vmul.f32 1.0, %v4653
    %v4655 = vrcp.pop %v4646
    %v4656 = vmul.f32 1.0, %v4655
    %v4657 = vrcp.pop %v4647
    %v4658 = vmul.f32 1.0, %v4657
    %v4659 = vrcp.pop %v4648
    %v4660 = vmul.f32 1.0, %v4659
    %v4661 = vtanh.pop %v4623
    %v4662 = vtanh.pop %v4624
    %v4663 = vmul.f32 %v4654, %v4166
    %v4664 = vmul.f32 %v4656, %v4167
    %v4665 = vmul.f32 %v4650, %v4661
    %v4666 = vmul.f32 %v4652, %v4662
    %v4667 = vadd.f32 %v4663, %v4665
    %v4668 = vadd.f32 %v4664, %v4666
    %v4669 = vtanh.pop %v4667
    %v4670 = vtanh.pop %v4668
    %v4671 = vmul.f32 %v4658, %v4669
    %v4672 = vmul.f32 %v4660, %v4670
    %4673 = vmatprep.subr.bf16.mxu0 %v2372
    %4674 = vmatpush1.bf16.msra.mxu0 %v2371
    %4675 = vmatprep.subr.bf16.mxu0 %v2380
    %4676 = vmatpush1.bf16.msra.mxu0 %v2379
    %4677 = vmatprep.subr.bf16.mxu0 %v2388
    %4678 = vmatpush1.bf16.msra.mxu0 %v2387
    %4679 = vmatprep.subr.bf16.mxu0 %v2396
    %4680 = vmatpush1.bf16.msra.mxu0 %v2395
    %4681 = vmatprep.subr.bf16.mxu0 %v2404
    %4682 = vmatpush1.bf16.msra.mxu0 %v2403
    %4683 = vmatprep.subr.bf16.mxu0 %v2412
    %4684 = vmatpush1.bf16.msra.mxu0 %v2411
    %4685 = vmatprep.subr.bf16.mxu0 %v2420
    %4686 = vmatpush1.bf16.msra.mxu0 %v2419
    %4687 = vmatprep.subr.bf16.mxu0 %v2428
    %4688 = vmatpush1.bf16.msra.mxu0 %v2427
    %4689 = vmatprep.subr.bf16.mxu0 0
    %4690 = vmatpush1.bf16.msra.mxu0 0
    %4691 = vmatprep.subr.bf16.mxu0 0
    %4692 = vmatpush1.bf16.msra.mxu0 0
    %4693 = vmatprep.subr.bf16.mxu0 0
    %4694 = vmatpush1.bf16.msra.mxu0 0
    %4695 = vmatprep.subr.bf16.mxu0 0
    %4696 = vmatpush1.bf16.msra.mxu0 0
    %4697 = vmatprep.subr.bf16.mxu0 0
    %4698 = vmatpush1.bf16.msra.mxu0 0
    %4699 = vmatprep.subr.bf16.mxu0 0
    %4700 = vmatpush1.bf16.msra.mxu0 0
    %4701 = vmatprep.subr.bf16.mxu0 0
    %4702 = vmatpush1.bf16.msra.mxu0 0
    %4703 = vmatprep.subr.bf16.mxu0 0
    %4704 = vmatpush1.bf16.msra.mxu0 0
    %4705 = vmatprep.mubr.bf16.mxu0 0
    %4706 = vmatmul.mubr.bf16.gmra.mrb[0].mxu0 %v4450
    %v4707 = vpop.f32.mrb[0].mxu0
    %v4708 = vadd.f32 %v2440, %v4707
    %v4709 = vpop.f32.mrb[0].mxu0
    %v4710 = vadd.f32 %v2444, %v4709
    %v4711 = vpop.f32.mrb[0].mxu0
    %v4712 = vpop.f32.mrb[0].mxu0
    %4713 = vdwg.mxu0
    %4714 = vmatprep.subr.bf16.mxu0 %v2374
    %4715 = vmatpush1.bf16.msra.mxu0 %v2373
    %4716 = vmatprep.subr.bf16.mxu0 %v2382
    %4717 = vmatpush1.bf16.msra.mxu0 %v2381
    %4718 = vmatprep.subr.bf16.mxu0 %v2390
    %4719 = vmatpush1.bf16.msra.mxu0 %v2389
    %4720 = vmatprep.subr.bf16.mxu0 %v2398
    %4721 = vmatpush1.bf16.msra.mxu0 %v2397
    %4722 = vmatprep.subr.bf16.mxu0 %v2406
    %4723 = vmatpush1.bf16.msra.mxu0 %v2405
    %4724 = vmatprep.subr.bf16.mxu0 %v2414
    %4725 = vmatpush1.bf16.msra.mxu0 %v2413
    %4726 = vmatprep.subr.bf16.mxu0 %v2422
    %4727 = vmatpush1.bf16.msra.mxu0 %v2421
    %4728 = vmatprep.subr.bf16.mxu0 %v2430
    %4729 = vmatpush1.bf16.msra.mxu0 %v2429
    %4730 = vmatprep.subr.bf16.mxu0 0
    %4731 = vmatpush1.bf16.msra.mxu0 0
    %4732 = vmatprep.subr.bf16.mxu0 0
    %4733 = vmatpush1.bf16.msra.mxu0 0
    %4734 = vmatprep.subr.bf16.mxu0 0
    %4735 = vmatpush1.bf16.msra.mxu0 0
    %4736 = vmatprep.subr.bf16.mxu0 0
    %4737 = vmatpush1.bf16.msra.mxu0 0
    %4738 = vmatprep.subr.bf16.mxu0 0
    %4739 = vmatpush1.bf16.msra.mxu0 0
    %4740 = vmatprep.subr.bf16.mxu0 0
    %4741 = vmatpush1.bf16.msra.mxu0 0
    %4742 = vmatprep.subr.bf16.mxu0 0
    %4743 = vmatpush1.bf16.msra.mxu0 0
    %4744 = vmatprep.subr.bf16.mxu0 0
    %4745 = vmatpush1.bf16.msra.mxu0 0
    %4746 = vmatprep.mubr.bf16.mxu0 0
    %4747 = vmatmul.mubr.bf16.gmra.mrb[0].mxu0 %v4450
    %v4748 = vpop.f32.mrb[0].mxu0
    %v4749 = vadd.f32 %v2448, %v4748
    %v4750 = vpop.f32.mrb[0].mxu0
    %v4751 = vadd.f32 %v2452, %v4750
    %v4752 = vpop.f32.mrb[0].mxu0
    %v4753 = vpop.f32.mrb[0].mxu0
    %4754 = vdwg.mxu0
    %4755 = vmatprep.subr.bf16.mxu0 %v2376
    %4756 = vmatpush1.bf16.msra.mxu0 %v2375
    %4757 = vmatprep.subr.bf16.mxu0 %v2384
    %4758 = vmatpush1.bf16.msra.mxu0 %v2383
    %4759 = vmatprep.subr.bf16.mxu0 %v2392
    %4760 = vmatpush1.bf16.msra.mxu0 %v2391
    %4761 = vmatprep.subr.bf16.mxu0 %v2400
    %4762 = vmatpush1.bf16.msra.mxu0 %v2399
    %4763 = vmatprep.subr.bf16.mxu0 %v2408
    %4764 = vmatpush1.bf16.msra.mxu0 %v2407
    %4765 = vmatprep.subr.bf16.mxu0 %v2416
    %4766 = vmatpush1.bf16.msra.mxu0 %v2415
    %4767 = vmatprep.subr.bf16.mxu0 %v2424
    %4768 = vmatpush1.bf16.msra.mxu0 %v2423
    %4769 = vmatprep.subr.bf16.mxu0 %v2432
    %4770 = vmatpush1.bf16.msra.mxu0 %v2431
    %4771 = vmatprep.subr.bf16.mxu0 0
    %4772 = vmatpush1.bf16.msra.mxu0 0
    %4773 = vmatprep.subr.bf16.mxu0 0
    %4774 = vmatpush1.bf16.msra.mxu0 0
    %4775 = vmatprep.subr.bf16.mxu0 0
    %4776 = vmatpush1.bf16.msra.mxu0 0
    %4777 = vmatprep.subr.bf16.mxu0 0
    %4778 = vmatpush1.bf16.msra.mxu0 0
    %4779 = vmatprep.subr.bf16.mxu0 0
    %4780 = vmatpush1.bf16.msra.mxu0 0
    %4781 = vmatprep.subr.bf16.mxu0 0
    %4782 = vmatpush1.bf16.msra.mxu0 0
    %4783 = vmatprep.subr.bf16.mxu0 0
    %4784 = vmatpush1.bf16.msra.mxu0 0
    %4785 = vmatprep.subr.bf16.mxu0 0
    %4786 = vmatpush1.bf16.msra.mxu0 0
    %4787 = vmatprep.mubr.bf16.mxu0 0
    %4788 = vmatmul.mubr.bf16.gmra.mrb[0].mxu0 %v4450
    %v4789 = vpop.f32.mrb[0].mxu0
    %v4790 = vadd.f32 %v2456, %v4789
    %v4791 = vpop.f32.mrb[0].mxu0
    %v4792 = vadd.f32 %v2460, %v4791
    %v4793 = vpop.f32.mrb[0].mxu0
    %v4794 = vpop.f32.mrb[0].mxu0
    %4795 = vdwg.mxu0
    %4796 = vmatprep.subr.bf16.mxu0 %v2378
    %4797 = vmatpush1.bf16.msra.mxu0 %v2377
    %4798 = vmatprep.subr.bf16.mxu0 %v2386
    %4799 = vmatpush1.bf16.msra.mxu0 %v2385
    %4800 = vmatprep.subr.bf16.mxu0 %v2394
    %4801 = vmatpush1.bf16.msra.mxu0 %v2393
    %4802 = vmatprep.subr.bf16.mxu0 %v2402
    %4803 = vmatpush1.bf16.msra.mxu0 %v2401
    %4804 = vmatprep.subr.bf16.mxu0 %v2410
    %4805 = vmatpush1.bf16.msra.mxu0 %v2409
    %4806 = vmatprep.subr.bf16.mxu0 %v2418
    %4807 = vmatpush1.bf16.msra.mxu0 %v2417
    %4808 = vmatprep.subr.bf16.mxu0 %v2426
    %4809 = vmatpush1.bf16.msra.mxu0 %v2425
    %4810 = vmatprep.subr.bf16.mxu0 %v2434
    %4811 = vmatpush1.bf16.msra.mxu0 %v2433
    %4812 = vmatprep.subr.bf16.mxu0 0
    %4813 = vmatpush1.bf16.msra.mxu0 0
    %4814 = vmatprep.subr.bf16.mxu0 0
    %4815 = vmatpush1.bf16.msra.mxu0 0
    %4816 = vmatprep.subr.bf16.mxu0 0
    %4817 = vmatpush1.bf16.msra.mxu0 0
    %4818 = vmatprep.subr.bf16.mxu0 0
    %4819 = vmatpush1.bf16.msra.mxu0 0
    %4820 = vmatprep.subr.bf16.mxu0 0
    %4821 = vmatpush1.bf16.msra.mxu0 0
    %4822 = vmatprep.subr.bf16.mxu0 0
    %4823 = vmatpush1.bf16.msra.mxu0 0
    %4824 = vmatprep.subr.bf16.mxu0 0
    %4825 = vmatpush1.bf16.msra.mxu0 0
    %4826 = vmatprep.subr.bf16.mxu0 0
    %4827 = vmatpush1.bf16.msra.mxu0 0
    %4828 = vmatprep.mubr.bf16.mxu0 0
    %4829 = vmatmul.mubr.bf16.gmra.mrb[0].mxu0 %v4450
    %v4830 = vpop.f32.mrb[0].mxu0
    %v4831 = vadd.f32 %v2464, %v4830
    %v4832 = vpop.f32.mrb[0].mxu0
    %v4833 = vadd.f32 %v2468, %v4832
    %v4834 = vpop.f32.mrb[0].mxu0
    %v4835 = vpop.f32.mrb[0].mxu0
    %4836 = vdwg.mxu0
    %v4837 = vld [vmem:[#allocation2 + $0xe0] sm:$0xff]
    %v4838 = vld [vmem:[#allocation2 + $0xe8] sm:$0xff]
    %v4839 = vld [vmem:[#allocation2 + $0xf0] sm:$0xff]
    %v4840 = vld [vmem:[#allocation2 + $0xf8] sm:$0xff]
    %4841 = vmatprep.subr.bf16.mxu0 %v2774
    %4842 = vmatpush1.bf16.msra.mxu0 %v2773
    %4843 = vmatprep.subr.bf16.mxu0 %v2778
    %4844 = vmatpush1.bf16.msra.mxu0 %v2777
    %4845 = vmatprep.subr.bf16.mxu0 %v2782
    %4846 = vmatpush1.bf16.msra.mxu0 %v2781
    %4847 = vmatprep.subr.bf16.mxu0 %v2786
    %4848 = vmatpush1.bf16.msra.mxu0 %v2785
    %4849 = vmatprep.subr.bf16.mxu0 %v2790
    %4850 = vmatpush1.bf16.msra.mxu0 %v2789
    %4851 = vmatprep.subr.bf16.mxu0 %v2794
    %4852 = vmatpush1.bf16.msra.mxu0 %v2793
    %4853 = vmatprep.subr.bf16.mxu0 %v2798
    %4854 = vmatpush1.bf16.msra.mxu0 %v2797
    %4855 = vmatprep.subr.bf16.mxu0 %v2802
    %4856 = vmatpush1.bf16.msra.mxu0 %v2801
    %4857 = vmatprep.subr.bf16.mxu0 0
    %4858 = vmatpush1.bf16.msra.mxu0 0
    %4859 = vmatprep.subr.bf16.mxu0 0
    %4860 = vmatpush1.bf16.msra.mxu0 0
    %4861 = vmatprep.subr.bf16.mxu0 0
    %4862 = vmatpush1.bf16.msra.mxu0 0
    %4863 = vmatprep.subr.bf16.mxu0 0
    %4864 = vmatpush1.bf16.msra.mxu0 0
    %4865 = vmatprep.subr.bf16.mxu0 0
    %4866 = vmatpush1.bf16.msra.mxu0 0
    %4867 = vmatprep.subr.bf16.mxu0 0
    %4868 = vmatpush1.bf16.msra.mxu0 0
    %4869 = vmatprep.subr.bf16.mxu0 0
    %4870 = vmatpush1.bf16.msra.mxu0 0
    %4871 = vmatprep.subr.bf16.mxu0 0
    %4872 = vmatpush1.bf16.msra.mxu0 0
    %4873 = vmatprep.mubr.bf16.mxu0 0
    %4874 = vmatmul.mubr.bf16.gmra.mrb[0].mxu0 %v4450
    %v4875 = vpop.f32.mrb[0].mxu0
    %v4876 = vadd.f32 0.0, %v4875
    %v4877 = vpop.f32.mrb[0].mxu0
    %v4878 = vadd.f32 0.0, %v4877
    %v4879 = vpop.f32.mrb[0].mxu0
    %v4880 = vpop.f32.mrb[0].mxu0
    %4881 = vdwg.mxu0
    %4882 = vmatprep.subr.bf16.mxu0 %v2776
    %4883 = vmatpush1.bf16.msra.mxu0 %v2775
    %4884 = vmatprep.subr.bf16.mxu0 %v2780
    %4885 = vmatpush1.bf16.msra.mxu0 %v2779
    %4886 = vmatprep.subr.bf16.mxu0 %v2784
    %4887 = vmatpush1.bf16.msra.mxu0 %v2783
    %4888 = vmatprep.subr.bf16.mxu0 %v2788
    %4889 = vmatpush1.bf16.msra.mxu0 %v2787
    %4890 = vmatprep.subr.bf16.mxu0 %v2792
    %4891 = vmatpush1.bf16.msra.mxu0 %v2791
    %4892 = vmatprep.subr.bf16.mxu0 %v2796
    %4893 = vmatpush1.bf16.msra.mxu0 %v2795
    %4894 = vmatprep.subr.bf16.mxu0 %v2800
    %4895 = vmatpush1.bf16.msra.mxu0 %v2799
    %4896 = vmatprep.subr.bf16.mxu0 %v2804
    %4897 = vmatpush1.bf16.msra.mxu0 %v2803
    %4898 = vmatprep.subr.bf16.mxu0 0
    %4899 = vmatpush1.bf16.msra.mxu0 0
    %4900 = vmatprep.subr.bf16.mxu0 0
    %4901 = vmatpush1.bf16.msra.mxu0 0
    %4902 = vmatprep.subr.bf16.mxu0 0
    %4903 = vmatpush1.bf16.msra.mxu0 0
    %4904 = vmatprep.subr.bf16.mxu0 0
    %4905 = vmatpush1.bf16.msra.mxu0 0
    %4906 = vmatprep.subr.bf16.mxu0 0
    %4907 = vmatpush1.bf16.msra.mxu0 0
    %4908 = vmatprep.subr.bf16.mxu0 0
    %4909 = vmatpush1.bf16.msra.mxu0 0
    %4910 = vmatprep.subr.bf16.mxu0 0
    %4911 = vmatpush1.bf16.msra.mxu0 0
    %4912 = vmatprep.subr.bf16.mxu0 0
    %4913 = vmatpush1.bf16.msra.mxu0 0
    %4914 = vmatprep.mubr.bf16.mxu0 0
    %4915 = vmatmul.mubr.bf16.gmra.mrb[0].mxu0 %v4450
    %v4916 = vpop.f32.mrb[0].mxu0
    %v4917 = vadd.f32 0.0, %v4916
    %v4918 = vpop.f32.mrb[0].mxu0
    %v4919 = vadd.f32 0.0, %v4918
    %v4920 = vpop.f32.mrb[0].mxu0
    %v4921 = vpop.f32.mrb[0].mxu0
    %4922 = vdwg.mxu0
    %v4923 = vadd.f32 %v4837, %v4876
    %v4924 = vadd.f32 %v4838, %v4878
    %v4925 = vadd.f32 %v4839, %v4917
    %v4926 = vadd.f32 %v4840, %v4919
    %v4927 = vxor.u32 %v4923, 2147483648
    %v4928 = vxor.u32 %v4924, 2147483648
    %v4929 = vxor.u32 %v4925, 2147483648
    %v4930 = vmul.f32 %v4927, 1.442695
    %v4931 = vpow.pop %v4930
    %v4932 = vmul.f32 %v4928, 1.442695
    %v4933 = vpow.pop %v4932
    %v4934 = vmul.f32 %v4929, 1.442695
    %v4935 = vpow.pop %v4934
    %v4936 = vadd.f32 %v4931, 1.0
    %v4937 = vadd.f32 %v4933, 1.0
    %v4938 = vadd.f32 %v4935, 1.0
    %v4939 = vrcp.pop %v4936
    %v4940 = vmul.f32 1.0, %v4939
    %v4941 = vrcp.pop %v4937
    %v4942 = vmul.f32 1.0, %v4941
    %v4943 = vrcp.pop %v4938
    %v4944 = vmul.f32 1.0, %v4943
    %v4945 = vtanh.pop %v4926
    %v4946 = vmul.f32 %v4942, %v4447
    %v4947 = vmul.f32 %v4940, %v4945
    %v4948 = vadd.f32 %v4946, %v4947
    %v4949 = vtanh.pop %v4948
    %v4950 = vmul.f32 %v4944, %v4949
    %v4951 = vpack.c.bf16 %v4950, %v4950
    %v4952 = vpack.c.bf16 %v4671, %v4671
    %v4953 = vpack.c.bf16 %v4672, %v4672
    %4954 = vmatprep.subr.bf16.mxu0 %v2024
    %4955 = vmatpush1.bf16.msra.mxu0 %v2023
    %4956 = vmatprep.subr.bf16.mxu0 %v2032
    %4957 = vmatpush1.bf16.msra.mxu0 %v2031
    %4958 = vmatprep.subr.bf16.mxu0 %v2040
    %4959 = vmatpush1.bf16.msra.mxu0 %v2039
    %4960 = vmatprep.subr.bf16.mxu0 %v2048
    %4961 = vmatpush1.bf16.msra.mxu0 %v2047
    %4962 = vmatprep.subr.bf16.mxu0 %v2056
    %4963 = vmatpush1.bf16.msra.mxu0 %v2055
    %4964 = vmatprep.subr.bf16.mxu0 %v2064
    %4965 = vmatpush1.bf16.msra.mxu0 %v2063
    %4966 = vmatprep.subr.bf16.mxu0 %v2072
    %4967 = vmatpush1.bf16.msra.mxu0 %v2071
    %4968 = vmatprep.subr.bf16.mxu0 %v2080
    %4969 = vmatpush1.bf16.msra.mxu0 %v2079
    %4970 = vmatprep.subr.bf16.mxu0 %v2088
    %4971 = vmatpush1.bf16.msra.mxu0 %v2087
    %4972 = vmatprep.subr.bf16.mxu0 %v2096
    %4973 = vmatpush1.bf16.msra.mxu0 %v2095
    %4974 = vmatprep.subr.bf16.mxu0 %v2104
    %4975 = vmatpush1.bf16.msra.mxu0 %v2103
    %4976 = vmatprep.subr.bf16.mxu0 %v2112
    %4977 = vmatpush1.bf16.msra.mxu0 %v2111
    %4978 = vmatprep.subr.bf16.mxu0 %v2120
    %4979 = vmatpush1.bf16.msra.mxu0 %v2119
    %4980 = vmatprep.subr.bf16.mxu0 %v2128
    %4981 = vmatpush1.bf16.msra.mxu0 %v2127
    %4982 = vmatprep.subr.bf16.mxu0 %v2136
    %4983 = vmatpush1.bf16.msra.mxu0 %v2135
    %4984 = vmatprep.subr.bf16.mxu0 %v2144
    %4985 = vmatpush1.bf16.msra.mxu0 %v2143
    %4986 = vmatprep.mubr.bf16.mxu0 %v4953
    %4987 = vmatmul.mubr.bf16.gmra.mrb[0].mxu0 %v4952
    %v4988 = vpop.f32.mrb[0].mxu0
    %v4989 = vadd.f32 0.0, %v4988
    %v4990 = vpop.f32.mrb[0].mxu0
    %v4991 = vadd.f32 0.0, %v4990
    %v4992 = vpop.f32.mrb[0].mxu0
    %v4993 = vpop.f32.mrb[0].mxu0
    %4994 = vdwg.mxu0
    %4995 = vmatprep.subr.bf16.mxu0 %v2026
    %4996 = vmatpush1.bf16.msra.mxu0 %v2025
    %4997 = vmatprep.subr.bf16.mxu0 %v2034
    %4998 = vmatpush1.bf16.msra.mxu0 %v2033
    %4999 = vmatprep.subr.bf16.mxu0 %v2042
    %5000 = vmatpush1.bf16.msra.mxu0 %v2041
    %5001 = vmatprep.subr.bf16.mxu0 %v2050
    %5002 = vmatpush1.bf16.msra.mxu0 %v2049
    %5003 = vmatprep.subr.bf16.mxu0 %v2058
    %5004 = vmatpush1.bf16.msra.mxu0 %v2057
    %5005 = vmatprep.subr.bf16.mxu0 %v2066
    %5006 = vmatpush1.bf16.msra.mxu0 %v2065
    %5007 = vmatprep.subr.bf16.mxu0 %v2074
    %5008 = vmatpush1.bf16.msra.mxu0 %v2073
    %5009 = vmatprep.subr.bf16.mxu0 %v2082
    %5010 = vmatpush1.bf16.msra.mxu0 %v2081
    %5011 = vmatprep.subr.bf16.mxu0 %v2090
    %5012 = vmatpush1.bf16.msra.mxu0 %v2089
    %5013 = vmatprep.subr.bf16.mxu0 %v2098
    %5014 = vmatpush1.bf16.msra.mxu0 %v2097
    %5015 = vmatprep.subr.bf16.mxu0 %v2106
    %5016 = vmatpush1.bf16.msra.mxu0 %v2105
    %5017 = vmatprep.subr.bf16.mxu0 %v2114
    %5018 = vmatpush1.bf16.msra.mxu0 %v2113
    %5019 = vmatprep.subr.bf16.mxu0 %v2122
    %5020 = vmatpush1.bf16.msra.mxu0 %v2121
    %5021 = vmatprep.subr.bf16.mxu0 %v2130
    %5022 = vmatpush1.bf16.msra.mxu0 %v2129
    %5023 = vmatprep.subr.bf16.mxu0 %v2138
    %5024 = vmatpush1.bf16.msra.mxu0 %v2137
    %5025 = vmatprep.subr.bf16.mxu0 %v2146
    %5026 = vmatpush1.bf16.msra.mxu0 %v2145
    %5027 = vmatprep.mubr.bf16.mxu0 %v4953
    %5028 = vmatmul.mubr.bf16.gmra.mrb[0].mxu0 %v4952
    %v5029 = vpop.f32.mrb[0].mxu0
    %v5030 = vadd.f32 0.0, %v5029
    %v5031 = vpop.f32.mrb[0].mxu0
    %v5032 = vadd.f32 0.0, %v5031
    %v5033 = vpop.f32.mrb[0].mxu0
    %v5034 = vpop.f32.mrb[0].mxu0
    %5035 = vdwg.mxu0
    %5036 = vmatprep.subr.bf16.mxu0 %v2028
    %5037 = vmatpush1.bf16.msra.mxu0 %v2027
    %5038 = vmatprep.subr.bf16.mxu0 %v2036
    %5039 = vmatpush1.bf16.msra.mxu0 %v2035
    %5040 = vmatprep.subr.bf16.mxu0 %v2044
    %5041 = vmatpush1.bf16.msra.mxu0 %v2043
    %5042 = vmatprep.subr.bf16.mxu0 %v2052
    %5043 = vmatpush1.bf16.msra.mxu0 %v2051
    %5044 = vmatprep.subr.bf16.mxu0 %v2060
    %5045 = vmatpush1.bf16.msra.mxu0 %v2059
    %5046 = vmatprep.subr.bf16.mxu0 %v2068
    %5047 = vmatpush1.bf16.msra.mxu0 %v2067
    %5048 = vmatprep.subr.bf16.mxu0 %v2076
    %5049 = vmatpush1.bf16.msra.mxu0 %v2075
    %5050 = vmatprep.subr.bf16.mxu0 %v2084
    %5051 = vmatpush1.bf16.msra.mxu0 %v2083
    %5052 = vmatprep.subr.bf16.mxu0 %v2092
    %5053 = vmatpush1.bf16.msra.mxu0 %v2091
    %5054 = vmatprep.subr.bf16.mxu0 %v2100
    %5055 = vmatpush1.bf16.msra.mxu0 %v2099
    %5056 = vmatprep.subr.bf16.mxu0 %v2108
    %5057 = vmatpush1.bf16.msra.mxu0 %v2107
    %5058 = vmatprep.subr.bf16.mxu0 %v2116
    %5059 = vmatpush1.bf16.msra.mxu0 %v2115
    %5060 = vmatprep.subr.bf16.mxu0 %v2124
    %5061 = vmatpush1.bf16.msra.mxu0 %v2123
    %5062 = vmatprep.subr.bf16.mxu0 %v2132
    %5063 = vmatpush1.bf16.msra.mxu0 %v2131
    %5064 = vmatprep.subr.bf16.mxu0 %v2140
    %5065 = vmatpush1.bf16.msra.mxu0 %v2139
    %5066 = vmatprep.subr.bf16.mxu0 %v2148
    %5067 = vmatpush1.bf16.msra.mxu0 %v2147
    %5068 = vmatprep.mubr.bf16.mxu0 %v4953
    %5069 = vmatmul.mubr.bf16.gmra.mrb[0].mxu0 %v4952
    %v5070 = vpop.f32.mrb[0].mxu0
    %v5071 = vadd.f32 0.0, %v5070
    %v5072 = vpop.f32.mrb[0].mxu0
    %v5073 = vadd.f32 0.0, %v5072
    %v5074 = vpop.f32.mrb[0].mxu0
    %v5075 = vpop.f32.mrb[0].mxu0
    %5076 = vdwg.mxu0
    %5077 = vmatprep.subr.bf16.mxu0 %v2030
    %5078 = vmatpush1.bf16.msra.mxu0 %v2029
    %5079 = vmatprep.subr.bf16.mxu0 %v2038
    %5080 = vmatpush1.bf16.msra.mxu0 %v2037
    %5081 = vmatprep.subr.bf16.mxu0 %v2046
    %5082 = vmatpush1.bf16.msra.mxu0 %v2045
    %5083 = vmatprep.subr.bf16.mxu0 %v2054
    %5084 = vmatpush1.bf16.msra.mxu0 %v2053
    %5085 = vmatprep.subr.bf16.mxu0 %v2062
    %5086 = vmatpush1.bf16.msra.mxu0 %v2061
    %5087 = vmatprep.subr.bf16.mxu0 %v2070
    %5088 = vmatpush1.bf16.msra.mxu0 %v2069
    %5089 = vmatprep.subr.bf16.mxu0 %v2078
    %5090 = vmatpush1.bf16.msra.mxu0 %v2077
    %5091 = vmatprep.subr.bf16.mxu0 %v2086
    %5092 = vmatpush1.bf16.msra.mxu0 %v2085
    %5093 = vmatprep.subr.bf16.mxu0 %v2094
    %5094 = vmatpush1.bf16.msra.mxu0 %v2093
    %5095 = vmatprep.subr.bf16.mxu0 %v2102
    %5096 = vmatpush1.bf16.msra.mxu0 %v2101
    %5097 = vmatprep.subr.bf16.mxu0 %v2110
    %5098 = vmatpush1.bf16.msra.mxu0 %v2109
    %5099 = vmatprep.subr.bf16.mxu0 %v2118
    %5100 = vmatpush1.bf16.msra.mxu0 %v2117
    %5101 = vmatprep.subr.bf16.mxu0 %v2126
    %5102 = vmatpush1.bf16.msra.mxu0 %v2125
    %5103 = vmatprep.subr.bf16.mxu0 %v2134
    %5104 = vmatpush1.bf16.msra.mxu0 %v2133
    %5105 = vmatprep.subr.bf16.mxu0 %v2142
    %5106 = vmatpush1.bf16.msra.mxu0 %v2141
    %5107 = vmatprep.subr.bf16.mxu0 %v2150
    %5108 = vmatpush1.bf16.msra.mxu0 %v2149
    %5109 = vmatprep.mubr.bf16.mxu0 %v4953
    %5110 = vmatmul.mubr.bf16.gmra.mrb[0].mxu0 %v4952
    %v5111 = vpop.f32.mrb[0].mxu0
    %v5112 = vadd.f32 0.0, %v5111
    %v5113 = vpop.f32.mrb[0].mxu0
    %v5114 = vadd.f32 0.0, %v5113
    %v5115 = vpop.f32.mrb[0].mxu0
    %v5116 = vpop.f32.mrb[0].mxu0
    %5117 = vdwg.mxu0
    %v5118 = vadd.f32 %v4708, %v4989
    %v5119 = vadd.f32 %v4710, %v4991
    %v5120 = vadd.f32 %v4749, %v5030
    %v5121 = vadd.f32 %v4751, %v5032
    %v5122 = vadd.f32 %v4790, %v5071
    %v5123 = vadd.f32 %v4792, %v5073
    %v5124 = vadd.f32 %v4831, %v5112
    %v5125 = vadd.f32 %v4833, %v5114
    %v5126 = vxor.u32 %v5118, 2147483648
    %v5127 = vxor.u32 %v5119, 2147483648
    %v5128 = vxor.u32 %v5120, 2147483648
    %v5129 = vxor.u32 %v5121, 2147483648
    %v5130 = vxor.u32 %v5122, 2147483648
    %v5131 = vxor.u32 %v5123, 2147483648
    %v5132 = vmul.f32 %v5126, 1.442695
    %v5133 = vpow.pop %v5132
    %v5134 = vmul.f32 %v5127, 1.442695
    %v5135 = vpow.pop %v5134
    %v5136 = vmul.f32 %v5128, 1.442695
    %v5137 = vpow.pop %v5136
    %v5138 = vmul.f32 %v5129, 1.442695
    %v5139 = vpow.pop %v5138
    %v5140 = vmul.f32 %v5130, 1.442695
    %v5141 = vpow.pop %v5140
    %v5142 = vmul.f32 %v5131, 1.442695
    %v5143 = vpow.pop %v5142
    %v5144 = vadd.f32 %v5133, 1.0
    %v5145 = vadd.f32 %v5135, 1.0
    %v5146 = vadd.f32 %v5137, 1.0
    %v5147 = vadd.f32 %v5139, 1.0
    %v5148 = vadd.f32 %v5141, 1.0
    %v5149 = vadd.f32 %v5143, 1.0
    %v5150 = vrcp.pop %v5144
    %v5151 = vmul.f32 1.0, %v5150
    %v5152 = vrcp.pop %v5145
    %v5153 = vmul.f32 1.0, %v5152
    %v5154 = vrcp.pop %v5146
    %v5155 = vmul.f32 1.0, %v5154
    %v5156 = vrcp.pop %v5147
    %v5157 = vmul.f32 1.0, %v5156
    %v5158 = vrcp.pop %v5148
    %v5159 = vmul.f32 1.0, %v5158
    %v5160 = vrcp.pop %v5149
    %v5161 = vmul.f32 1.0, %v5160
    %v5162 = vtanh.pop %v5124
    %v5163 = vtanh.pop %v5125
    %v5164 = vmul.f32 %v5155, %v4667
    %v5165 = vmul.f32 %v5157, %v4668
    %v5166 = vmul.f32 %v5151, %v5162
    %v5167 = vmul.f32 %v5153, %v5163
    %v5168 = vadd.f32 %v5164, %v5166
    %v5169 = vadd.f32 %v5165, %v5167
    %v5170 = vtanh.pop %v5168
    %v5171 = vtanh.pop %v5169
    %v5172 = vmul.f32 %v5159, %v5170
    %v5173 = vmul.f32 %v5161, %v5171
    %5174 = vmatprep.subr.bf16.mxu0 %v2372
    %5175 = vmatpush1.bf16.msra.mxu0 %v2371
    %5176 = vmatprep.subr.bf16.mxu0 %v2380
    %5177 = vmatpush1.bf16.msra.mxu0 %v2379
    %5178 = vmatprep.subr.bf16.mxu0 %v2388
    %5179 = vmatpush1.bf16.msra.mxu0 %v2387
    %5180 = vmatprep.subr.bf16.mxu0 %v2396
    %5181 = vmatpush1.bf16.msra.mxu0 %v2395
    %5182 = vmatprep.subr.bf16.mxu0 %v2404
    %5183 = vmatpush1.bf16.msra.mxu0 %v2403
    %5184 = vmatprep.subr.bf16.mxu0 %v2412
    %5185 = vmatpush1.bf16.msra.mxu0 %v2411
    %5186 = vmatprep.subr.bf16.mxu0 %v2420
    %5187 = vmatpush1.bf16.msra.mxu0 %v2419
    %5188 = vmatprep.subr.bf16.mxu0 %v2428
    %5189 = vmatpush1.bf16.msra.mxu0 %v2427
    %5190 = vmatprep.subr.bf16.mxu0 0
    %5191 = vmatpush1.bf16.msra.mxu0 0
    %5192 = vmatprep.subr.bf16.mxu0 0
    %5193 = vmatpush1.bf16.msra.mxu0 0
    %5194 = vmatprep.subr.bf16.mxu0 0
    %5195 = vmatpush1.bf16.msra.mxu0 0
    %5196 = vmatprep.subr.bf16.mxu0 0
    %5197 = vmatpush1.bf16.msra.mxu0 0
    %5198 = vmatprep.subr.bf16.mxu0 0
    %5199 = vmatpush1.bf16.msra.mxu0 0
    %5200 = vmatprep.subr.bf16.mxu0 0
    %5201 = vmatpush1.bf16.msra.mxu0 0
    %5202 = vmatprep.subr.bf16.mxu0 0
    %5203 = vmatpush1.bf16.msra.mxu0 0
    %5204 = vmatprep.subr.bf16.mxu0 0
    %5205 = vmatpush1.bf16.msra.mxu0 0
    %5206 = vmatprep.mubr.bf16.mxu0 0
    %5207 = vmatmul.mubr.bf16.gmra.mrb[0].mxu0 %v4951
    %v5208 = vpop.f32.mrb[0].mxu0
    %v5209 = vadd.f32 %v2440, %v5208
    %v5210 = vpop.f32.mrb[0].mxu0
    %v5211 = vadd.f32 %v2444, %v5210
    %v5212 = vpop.f32.mrb[0].mxu0
    %v5213 = vpop.f32.mrb[0].mxu0
    %5214 = vdwg.mxu0
    %5215 = vmatprep.subr.bf16.mxu0 %v2374
    %5216 = vmatpush1.bf16.msra.mxu0 %v2373
    %5217 = vmatprep.subr.bf16.mxu0 %v2382
    %5218 = vmatpush1.bf16.msra.mxu0 %v2381
    %5219 = vmatprep.subr.bf16.mxu0 %v2390
    %5220 = vmatpush1.bf16.msra.mxu0 %v2389
    %5221 = vmatprep.subr.bf16.mxu0 %v2398
    %5222 = vmatpush1.bf16.msra.mxu0 %v2397
    %5223 = vmatprep.subr.bf16.mxu0 %v2406
    %5224 = vmatpush1.bf16.msra.mxu0 %v2405
    %5225 = vmatprep.subr.bf16.mxu0 %v2414
    %5226 = vmatpush1.bf16.msra.mxu0 %v2413
    %5227 = vmatprep.subr.bf16.mxu0 %v2422
    %5228 = vmatpush1.bf16.msra.mxu0 %v2421
    %5229 = vmatprep.subr.bf16.mxu0 %v2430
    %5230 = vmatpush1.bf16.msra.mxu0 %v2429
    %5231 = vmatprep.subr.bf16.mxu0 0
    %5232 = vmatpush1.bf16.msra.mxu0 0
    %5233 = vmatprep.subr.bf16.mxu0 0
    %5234 = vmatpush1.bf16.msra.mxu0 0
    %5235 = vmatprep.subr.bf16.mxu0 0
    %5236 = vmatpush1.bf16.msra.mxu0 0
    %5237 = vmatprep.subr.bf16.mxu0 0
    %5238 = vmatpush1.bf16.msra.mxu0 0
    %5239 = vmatprep.subr.bf16.mxu0 0
    %5240 = vmatpush1.bf16.msra.mxu0 0
    %5241 = vmatprep.subr.bf16.mxu0 0
    %5242 = vmatpush1.bf16.msra.mxu0 0
    %5243 = vmatprep.subr.bf16.mxu0 0
    %5244 = vmatpush1.bf16.msra.mxu0 0
    %5245 = vmatprep.subr.bf16.mxu0 0
    %5246 = vmatpush1.bf16.msra.mxu0 0
    %5247 = vmatprep.mubr.bf16.mxu0 0
    %5248 = vmatmul.mubr.bf16.gmra.mrb[0].mxu0 %v4951
    %v5249 = vpop.f32.mrb[0].mxu0
    %v5250 = vadd.f32 %v2448, %v5249
    %v5251 = vpop.f32.mrb[0].mxu0
    %v5252 = vadd.f32 %v2452, %v5251
    %v5253 = vpop.f32.mrb[0].mxu0
    %v5254 = vpop.f32.mrb[0].mxu0
    %5255 = vdwg.mxu0
    %5256 = vmatprep.subr.bf16.mxu0 %v2376
    %5257 = vmatpush1.bf16.msra.mxu0 %v2375
    %5258 = vmatprep.subr.bf16.mxu0 %v2384
    %5259 = vmatpush1.bf16.msra.mxu0 %v2383
    %5260 = vmatprep.subr.bf16.mxu0 %v2392
    %5261 = vmatpush1.bf16.msra.mxu0 %v2391
    %5262 = vmatprep.subr.bf16.mxu0 %v2400
    %5263 = vmatpush1.bf16.msra.mxu0 %v2399
    %5264 = vmatprep.subr.bf16.mxu0 %v2408
    %5265 = vmatpush1.bf16.msra.mxu0 %v2407
    %5266 = vmatprep.subr.bf16.mxu0 %v2416
    %5267 = vmatpush1.bf16.msra.mxu0 %v2415
    %5268 = vmatprep.subr.bf16.mxu0 %v2424
    %5269 = vmatpush1.bf16.msra.mxu0 %v2423
    %5270 = vmatprep.subr.bf16.mxu0 %v2432
    %5271 = vmatpush1.bf16.msra.mxu0 %v2431
    %5272 = vmatprep.subr.bf16.mxu0 0
    %5273 = vmatpush1.bf16.msra.mxu0 0
    %5274 = vmatprep.subr.bf16.mxu0 0
    %5275 = vmatpush1.bf16.msra.mxu0 0
    %5276 = vmatprep.subr.bf16.mxu0 0
    %5277 = vmatpush1.bf16.msra.mxu0 0
    %5278 = vmatprep.subr.bf16.mxu0 0
    %5279 = vmatpush1.bf16.msra.mxu0 0
    %5280 = vmatprep.subr.bf16.mxu0 0
    %5281 = vmatpush1.bf16.msra.mxu0 0
    %5282 = vmatprep.subr.bf16.mxu0 0
    %5283 = vmatpush1.bf16.msra.mxu0 0
    %5284 = vmatprep.subr.bf16.mxu0 0
    %5285 = vmatpush1.bf16.msra.mxu0 0
    %5286 = vmatprep.subr.bf16.mxu0 0
    %5287 = vmatpush1.bf16.msra.mxu0 0
    %5288 = vmatprep.mubr.bf16.mxu0 0
    %5289 = vmatmul.mubr.bf16.gmra.mrb[0].mxu0 %v4951
    %v5290 = vpop.f32.mrb[0].mxu0
    %v5291 = vadd.f32 %v2456, %v5290
    %v5292 = vpop.f32.mrb[0].mxu0
    %v5293 = vadd.f32 %v2460, %v5292
    %v5294 = vpop.f32.mrb[0].mxu0
    %v5295 = vpop.f32.mrb[0].mxu0
    %5296 = vdwg.mxu0
    %5297 = vmatprep.subr.bf16.mxu0 %v2378
    %5298 = vmatpush1.bf16.msra.mxu0 %v2377
    %5299 = vmatprep.subr.bf16.mxu0 %v2386
    %5300 = vmatpush1.bf16.msra.mxu0 %v2385
    %5301 = vmatprep.subr.bf16.mxu0 %v2394
    %5302 = vmatpush1.bf16.msra.mxu0 %v2393
    %5303 = vmatprep.subr.bf16.mxu0 %v2402
    %5304 = vmatpush1.bf16.msra.mxu0 %v2401
    %5305 = vmatprep.subr.bf16.mxu0 %v2410
    %5306 = vmatpush1.bf16.msra.mxu0 %v2409
    %5307 = vmatprep.subr.bf16.mxu0 %v2418
    %5308 = vmatpush1.bf16.msra.mxu0 %v2417
    %5309 = vmatprep.subr.bf16.mxu0 %v2426
    %5310 = vmatpush1.bf16.msra.mxu0 %v2425
    %5311 = vmatprep.subr.bf16.mxu0 %v2434
    %5312 = vmatpush1.bf16.msra.mxu0 %v2433
    %5313 = vmatprep.subr.bf16.mxu0 0
    %5314 = vmatpush1.bf16.msra.mxu0 0
    %5315 = vmatprep.subr.bf16.mxu0 0
    %5316 = vmatpush1.bf16.msra.mxu0 0
    %5317 = vmatprep.subr.bf16.mxu0 0
    %5318 = vmatpush1.bf16.msra.mxu0 0
    %5319 = vmatprep.subr.bf16.mxu0 0
    %5320 = vmatpush1.bf16.msra.mxu0 0
    %5321 = vmatprep.subr.bf16.mxu0 0
    %5322 = vmatpush1.bf16.msra.mxu0 0
    %5323 = vmatprep.subr.bf16.mxu0 0
    %5324 = vmatpush1.bf16.msra.mxu0 0
    %5325 = vmatprep.subr.bf16.mxu0 0
    %5326 = vmatpush1.bf16.msra.mxu0 0
    %5327 = vmatprep.subr.bf16.mxu0 0
    %5328 = vmatpush1.bf16.msra.mxu0 0
    %5329 = vmatprep.mubr.bf16.mxu0 0
    %5330 = vmatmul.mubr.bf16.gmra.mrb[0].mxu0 %v4951
    %v5331 = vpop.f32.mrb[0].mxu0
    %v5332 = vadd.f32 %v2464, %v5331
    %v5333 = vpop.f32.mrb[0].mxu0
    %v5334 = vadd.f32 %v2468, %v5333
    %v5335 = vpop.f32.mrb[0].mxu0
    %v5336 = vpop.f32.mrb[0].mxu0
    %5337 = vdwg.mxu0
    %v5338 = vpack.c.bf16 %v5172, %v5172
    %v5339 = vpack.c.bf16 %v5173, %v5173
    %5340 = vmatprep.subr.bf16.mxu0 %v2024
    %5341 = vmatpush1.bf16.msra.mxu0 %v2023
    %5342 = vmatprep.subr.bf16.mxu0 %v2032
    %5343 = vmatpush1.bf16.msra.mxu0 %v2031
    %5344 = vmatprep.subr.bf16.mxu0 %v2040
    %5345 = vmatpush1.bf16.msra.mxu0 %v2039
    %5346 = vmatprep.subr.bf16.mxu0 %v2048
    %5347 = vmatpush1.bf16.msra.mxu0 %v2047
    %5348 = vmatprep.subr.bf16.mxu0 %v2056
    %5349 = vmatpush1.bf16.msra.mxu0 %v2055
    %5350 = vmatprep.subr.bf16.mxu0 %v2064
    %5351 = vmatpush1.bf16.msra.mxu0 %v2063
    %5352 = vmatprep.subr.bf16.mxu0 %v2072
    %5353 = vmatpush1.bf16.msra.mxu0 %v2071
    %5354 = vmatprep.subr.bf16.mxu0 %v2080
    %5355 = vmatpush1.bf16.msra.mxu0 %v2079
    %5356 = vmatprep.subr.bf16.mxu0 %v2088
    %5357 = vmatpush1.bf16.msra.mxu0 %v2087
    %5358 = vmatprep.subr.bf16.mxu0 %v2096
    %5359 = vmatpush1.bf16.msra.mxu0 %v2095
    %5360 = vmatprep.subr.bf16.mxu0 %v2104
    %5361 = vmatpush1.bf16.msra.mxu0 %v2103
    %5362 = vmatprep.subr.bf16.mxu0 %v2112
    %5363 = vmatpush1.bf16.msra.mxu0 %v2111
    %5364 = vmatprep.subr.bf16.mxu0 %v2120
    %5365 = vmatpush1.bf16.msra.mxu0 %v2119
    %5366 = vmatprep.subr.bf16.mxu0 %v2128
    %5367 = vmatpush1.bf16.msra.mxu0 %v2127
    %5368 = vmatprep.subr.bf16.mxu0 %v2136
    %5369 = vmatpush1.bf16.msra.mxu0 %v2135
    %5370 = vmatprep.subr.bf16.mxu0 %v2144
    %5371 = vmatpush1.bf16.msra.mxu0 %v2143
    %5372 = vmatprep.mubr.bf16.mxu0 %v5339
    %5373 = vmatmul.mubr.bf16.gmra.mrb[0].mxu0 %v5338
    %v5374 = vpop.f32.mrb[0].mxu0
    %v5375 = vadd.f32 0.0, %v5374
    %v5376 = vpop.f32.mrb[0].mxu0
    %v5377 = vadd.f32 0.0, %v5376
    %v5378 = vpop.f32.mrb[0].mxu0
    %v5379 = vpop.f32.mrb[0].mxu0
    %5380 = vdwg.mxu0
    %5381 = vmatprep.subr.bf16.mxu0 %v2026
    %5382 = vmatpush1.bf16.msra.mxu0 %v2025
    %5383 = vmatprep.subr.bf16.mxu0 %v2034
    %5384 = vmatpush1.bf16.msra.mxu0 %v2033
    %5385 = vmatprep.subr.bf16.mxu0 %v2042
    %5386 = vmatpush1.bf16.msra.mxu0 %v2041
    %5387 = vmatprep.subr.bf16.mxu0 %v2050
    %5388 = vmatpush1.bf16.msra.mxu0 %v2049
    %5389 = vmatprep.subr.bf16.mxu0 %v2058
    %5390 = vmatpush1.bf16.msra.mxu0 %v2057
    %5391 = vmatprep.subr.bf16.mxu0 %v2066
    %5392 = vmatpush1.bf16.msra.mxu0 %v2065
    %5393 = vmatprep.subr.bf16.mxu0 %v2074
    %5394 = vmatpush1.bf16.msra.mxu0 %v2073
    %5395 = vmatprep.subr.bf16.mxu0 %v2082
    %5396 = vmatpush1.bf16.msra.mxu0 %v2081
    %5397 = vmatprep.subr.bf16.mxu0 %v2090
    %5398 = vmatpush1.bf16.msra.mxu0 %v2089
    %5399 = vmatprep.subr.bf16.mxu0 %v2098
    %5400 = vmatpush1.bf16.msra.mxu0 %v2097
    %5401 = vmatprep.subr.bf16.mxu0 %v2106
    %5402 = vmatpush1.bf16.msra.mxu0 %v2105
    %5403 = vmatprep.subr.bf16.mxu0 %v2114
    %5404 = vmatpush1.bf16.msra.mxu0 %v2113
    %5405 = vmatprep.subr.bf16.mxu0 %v2122
    %5406 = vmatpush1.bf16.msra.mxu0 %v2121
    %5407 = vmatprep.subr.bf16.mxu0 %v2130
    %5408 = vmatpush1.bf16.msra.mxu0 %v2129
    %5409 = vmatprep.subr.bf16.mxu0 %v2138
    %5410 = vmatpush1.bf16.msra.mxu0 %v2137
    %5411 = vmatprep.subr.bf16.mxu0 %v2146
    %5412 = vmatpush1.bf16.msra.mxu0 %v2145
    %5413 = vmatprep.mubr.bf16.mxu0 %v5339
    %5414 = vmatmul.mubr.bf16.gmra.mrb[0].mxu0 %v5338
    %v5415 = vpop.f32.mrb[0].mxu0
    %v5416 = vadd.f32 0.0, %v5415
    %v5417 = vpop.f32.mrb[0].mxu0
    %v5418 = vadd.f32 0.0, %v5417
    %v5419 = vpop.f32.mrb[0].mxu0
    %v5420 = vpop.f32.mrb[0].mxu0
    %5421 = vdwg.mxu0
    %5422 = vmatprep.subr.bf16.mxu0 %v2028
    %5423 = vmatpush1.bf16.msra.mxu0 %v2027
    %5424 = vmatprep.subr.bf16.mxu0 %v2036
    %5425 = vmatpush1.bf16.msra.mxu0 %v2035
    %5426 = vmatprep.subr.bf16.mxu0 %v2044
    %5427 = vmatpush1.bf16.msra.mxu0 %v2043
    %5428 = vmatprep.subr.bf16.mxu0 %v2052
    %5429 = vmatpush1.bf16.msra.mxu0 %v2051
    %5430 = vmatprep.subr.bf16.mxu0 %v2060
    %5431 = vmatpush1.bf16.msra.mxu0 %v2059
    %5432 = vmatprep.subr.bf16.mxu0 %v2068
    %5433 = vmatpush1.bf16.msra.mxu0 %v2067
    %5434 = vmatprep.subr.bf16.mxu0 %v2076
    %5435 = vmatpush1.bf16.msra.mxu0 %v2075
    %5436 = vmatprep.subr.bf16.mxu0 %v2084
    %5437 = vmatpush1.bf16.msra.mxu0 %v2083
    %5438 = vmatprep.subr.bf16.mxu0 %v2092
    %5439 = vmatpush1.bf16.msra.mxu0 %v2091
    %5440 = vmatprep.subr.bf16.mxu0 %v2100
    %5441 = vmatpush1.bf16.msra.mxu0 %v2099
    %5442 = vmatprep.subr.bf16.mxu0 %v2108
    %5443 = vmatpush1.bf16.msra.mxu0 %v2107
    %5444 = vmatprep.subr.bf16.mxu0 %v2116
    %5445 = vmatpush1.bf16.msra.mxu0 %v2115
    %5446 = vmatprep.subr.bf16.mxu0 %v2124
    %5447 = vmatpush1.bf16.msra.mxu0 %v2123
    %5448 = vmatprep.subr.bf16.mxu0 %v2132
    %5449 = vmatpush1.bf16.msra.mxu0 %v2131
    %5450 = vmatprep.subr.bf16.mxu0 %v2140
    %5451 = vmatpush1.bf16.msra.mxu0 %v2139
    %5452 = vmatprep.subr.bf16.mxu0 %v2148
    %5453 = vmatpush1.bf16.msra.mxu0 %v2147
    %5454 = vmatprep.mubr.bf16.mxu0 %v5339
    %5455 = vmatmul.mubr.bf16.gmra.mrb[0].mxu0 %v5338
    %v5456 = vpop.f32.mrb[0].mxu0
    %v5457 = vadd.f32 0.0, %v5456
    %v5458 = vpop.f32.mrb[0].mxu0
    %v5459 = vadd.f32 0.0, %v5458
    %v5460 = vpop.f32.mrb[0].mxu0
    %v5461 = vpop.f32.mrb[0].mxu0
    %5462 = vdwg.mxu0
    %5463 = vmatprep.subr.bf16.mxu0 %v2030
    %5464 = vmatpush1.bf16.msra.mxu0 %v2029
    %5465 = vmatprep.subr.bf16.mxu0 %v2038
    %5466 = vmatpush1.bf16.msra.mxu0 %v2037
    %5467 = vmatprep.subr.bf16.mxu0 %v2046
    %5468 = vmatpush1.bf16.msra.mxu0 %v2045
    %5469 = vmatprep.subr.bf16.mxu0 %v2054
    %5470 = vmatpush1.bf16.msra.mxu0 %v2053
    %5471 = vmatprep.subr.bf16.mxu0 %v2062
    %5472 = vmatpush1.bf16.msra.mxu0 %v2061
    %5473 = vmatprep.subr.bf16.mxu0 %v2070
    %5474 = vmatpush1.bf16.msra.mxu0 %v2069
    %5475 = vmatprep.subr.bf16.mxu0 %v2078
    %5476 = vmatpush1.bf16.msra.mxu0 %v2077
    %5477 = vmatprep.subr.bf16.mxu0 %v2086
    %5478 = vmatpush1.bf16.msra.mxu0 %v2085
    %5479 = vmatprep.subr.bf16.mxu0 %v2094
    %5480 = vmatpush1.bf16.msra.mxu0 %v2093
    %5481 = vmatprep.subr.bf16.mxu0 %v2102
    %5482 = vmatpush1.bf16.msra.mxu0 %v2101
    %5483 = vmatprep.subr.bf16.mxu0 %v2110
    %5484 = vmatpush1.bf16.msra.mxu0 %v2109
    %5485 = vmatprep.subr.bf16.mxu0 %v2118
    %5486 = vmatpush1.bf16.msra.mxu0 %v2117
    %5487 = vmatprep.subr.bf16.mxu0 %v2126
    %5488 = vmatpush1.bf16.msra.mxu0 %v2125
    %5489 = vmatprep.subr.bf16.mxu0 %v2134
    %5490 = vmatpush1.bf16.msra.mxu0 %v2133
    %5491 = vmatprep.subr.bf16.mxu0 %v2142
    %5492 = vmatpush1.bf16.msra.mxu0 %v2141
    %5493 = vmatprep.subr.bf16.mxu0 %v2150
    %5494 = vmatpush1.bf16.msra.mxu0 %v2149
    %5495 = vmatprep.mubr.bf16.mxu0 %v5339
    %5496 = vmatmul.mubr.bf16.gmra.mrb[0].mxu0 %v5338
    %v5497 = vpop.f32.mrb[0].mxu0
    %v5498 = vadd.f32 0.0, %v5497
    %v5499 = vpop.f32.mrb[0].mxu0
    %v5500 = vadd.f32 0.0, %v5499
    %v5501 = vpop.f32.mrb[0].mxu0
    %v5502 = vpop.f32.mrb[0].mxu0
    %5503 = vdwg.mxu0
    %v5504 = vadd.f32 %v5209, %v5375
    %v5505 = vadd.f32 %v5211, %v5377
    %v5506 = vadd.f32 %v5250, %v5416
    %v5507 = vadd.f32 %v5252, %v5418
    %v5508 = vadd.f32 %v5291, %v5457
    %v5509 = vadd.f32 %v5293, %v5459
    %v5510 = vadd.f32 %v5332, %v5498
    %v5511 = vadd.f32 %v5334, %v5500
    %v5512 = vxor.u32 %v5504, 2147483648
    %v5513 = vxor.u32 %v5505, 2147483648
    %v5514 = vxor.u32 %v5506, 2147483648
    %v5515 = vxor.u32 %v5507, 2147483648
    %v5516 = vxor.u32 %v5508, 2147483648
    %v5517 = vxor.u32 %v5509, 2147483648
    %v5518 = vmul.f32 %v5512, 1.442695
    %v5519 = vpow.pop %v5518
    %v5520 = vmul.f32 %v5513, 1.442695
    %v5521 = vpow.pop %v5520
    %v5522 = vmul.f32 %v5514, 1.442695
    %v5523 = vpow.pop %v5522
    %v5524 = vmul.f32 %v5515, 1.442695
    %v5525 = vpow.pop %v5524
    %v5526 = vmul.f32 %v5516, 1.442695
    %v5527 = vpow.pop %v5526
    %v5528 = vmul.f32 %v5517, 1.442695
    %v5529 = vpow.pop %v5528
    %v5530 = vadd.f32 %v5519, 1.0
    %v5531 = vadd.f32 %v5521, 1.0
    %v5532 = vadd.f32 %v5523, 1.0
    %v5533 = vadd.f32 %v5525, 1.0
    %v5534 = vadd.f32 %v5527, 1.0
    %v5535 = vadd.f32 %v5529, 1.0
    %v5536 = vrcp.pop %v5530
    %v5537 = vmul.f32 1.0, %v5536
    %v5538 = vrcp.pop %v5531
    %v5539 = vmul.f32 1.0, %v5538
    %v5540 = vrcp.pop %v5532
    %v5541 = vmul.f32 1.0, %v5540
    %v5542 = vrcp.pop %v5533
    %v5543 = vmul.f32 1.0, %v5542
    %v5544 = vrcp.pop %v5534
    %v5545 = vmul.f32 1.0, %v5544
    %v5546 = vrcp.pop %v5535
    %v5547 = vmul.f32 1.0, %v5546
    %v5548 = vtanh.pop %v5510
    %v5549 = vtanh.pop %v5511
    %v5550 = vmul.f32 %v5541, %v5168
    %v5551 = vmul.f32 %v5543, %v5169
    %v5552 = vmul.f32 %v5537, %v5548
    %v5553 = vmul.f32 %v5539, %v5549
    %v5554 = vadd.f32 %v5550, %v5552
    %v5555 = vadd.f32 %v5551, %v5553
    %v5556 = vtanh.pop %v5554
    %v5557 = vtanh.pop %v5555
    %v5558 = vmul.f32 %v5545, %v5556
    %v5559 = vmul.f32 %v5547, %v5557
    %s5560 = smul.u32 %s2017, 6
    %s5561 = sshll.u32 %s5560, 4
    %5562 = dma.done %s657, %s5561
    %v5563 = vpack.c.bf16 %v5558, %v5558
    %v5564 = vpack.c.bf16 %v5559, %v5559
    %v5565 = vld [vmem:[#allocation5] sm:$0xff]
    %v5566 = vld [vmem:[#allocation5 + $0x8] sm:$0xff]
    %v5567 = vld [vmem:[#allocation5 + $0x10] sm:$0xff]
    %v5568 = vld [vmem:[#allocation5 + $0x18] sm:$0xff]
    %v5569 = vld [vmem:[#allocation5 + $0x20] sm:$0xff]
    %v5570 = vld [vmem:[#allocation5 + $0x28] sm:$0xff]
    %v5571 = vld [vmem:[#allocation5 + $0x30] sm:$0xff]
    %v5572 = vld [vmem:[#allocation5 + $0x38] sm:$0xff]
    %v5573 = vld [vmem:[#allocation5 + $0x40] sm:$0xff]
    %v5574 = vld [vmem:[#allocation5 + $0x48] sm:$0xff]
    %v5575 = vld [vmem:[#allocation5 + $0x50] sm:$0xff]
    %v5576 = vld [vmem:[#allocation5 + $0x58] sm:$0xff]
    %v5577 = vld [vmem:[#allocation5 + $0x60] sm:$0xff]
    %v5578 = vld [vmem:[#allocation5 + $0x68] sm:$0xff]
    %v5579 = vld [vmem:[#allocation5 + $0x70] sm:$0xff]
    %v5580 = vld [vmem:[#allocation5 + $0x78] sm:$0xff]
    %v5581 = vld [vmem:[#allocation5 + $0x80] sm:$0xff]
    %v5582 = vld [vmem:[#allocation5 + $0x88] sm:$0xff]
    %v5583 = vld [vmem:[#allocation5 + $0x90] sm:$0xff]
    %v5584 = vld [vmem:[#allocation5 + $0x98] sm:$0xff]
    %v5585 = vld [vmem:[#allocation5 + $0xa0] sm:$0xff]
    %v5586 = vld [vmem:[#allocation5 + $0xa8] sm:$0xff]
    %v5587 = vld [vmem:[#allocation5 + $0xb0] sm:$0xff]
    %v5588 = vld [vmem:[#allocation5 + $0xb8] sm:$0xff]
    %v5589 = vld [vmem:[#allocation5 + $0xc0] sm:$0xff]
    %v5590 = vld [vmem:[#allocation5 + $0xc8] sm:$0xff]
    %v5591 = vld [vmem:[#allocation5 + $0xd0] sm:$0xff]
    %v5592 = vld [vmem:[#allocation5 + $0xd8] sm:$0xff]
    %v5593 = vld [vmem:[#allocation5 + $0xe0] sm:$0xff]
    %v5594 = vld [vmem:[#allocation5 + $0xe8] sm:$0xff]
    %v5595 = vld [vmem:[#allocation5 + $0xf0] sm:$0xff]
    %v5596 = vld [vmem:[#allocation5 + $0xf8] sm:$0xff]
    %v5597 = vld [vmem:[#allocation5 + $0x100] sm:$0xff]
    %v5598 = vld [vmem:[#allocation5 + $0x108] sm:$0xff]
    %v5599 = vld [vmem:[#allocation5 + $0x110] sm:$0xff]
    %v5600 = vld [vmem:[#allocation5 + $0x118] sm:$0xff]
    %v5601 = vld [vmem:[#allocation5 + $0x120] sm:$0xff]
    %v5602 = vld [vmem:[#allocation5 + $0x128] sm:$0xff]
    %v5603 = vld [vmem:[#allocation5 + $0x130] sm:$0xff]
    %v5604 = vld [vmem:[#allocation5 + $0x138] sm:$0xff]
    %v5605 = vld [vmem:[#allocation5 + $0x140] sm:$0xff]
    %v5606 = vld [vmem:[#allocation5 + $0x148] sm:$0xff]
    %v5607 = vld [vmem:[#allocation5 + $0x150] sm:$0xff]
    %v5608 = vld [vmem:[#allocation5 + $0x158] sm:$0xff]
    %v5609 = vld [vmem:[#allocation5 + $0x160] sm:$0xff]
    %v5610 = vld [vmem:[#allocation5 + $0x168] sm:$0xff]
    %v5611 = vld [vmem:[#allocation5 + $0x170] sm:$0xff]
    %v5612 = vld [vmem:[#allocation5 + $0x178] sm:$0xff]
    %v5613 = vld [vmem:[#allocation5 + $0x180] sm:$0xff]
    %v5614 = vld [vmem:[#allocation5 + $0x188] sm:$0xff]
    %v5615 = vld [vmem:[#allocation5 + $0x190] sm:$0xff]
    %v5616 = vld [vmem:[#allocation5 + $0x198] sm:$0xff]
    %v5617 = vld [vmem:[#allocation5 + $0x1a0] sm:$0xff]
    %v5618 = vld [vmem:[#allocation5 + $0x1a8] sm:$0xff]
    %v5619 = vld [vmem:[#allocation5 + $0x1b0] sm:$0xff]
    %v5620 = vld [vmem:[#allocation5 + $0x1b8] sm:$0xff]
    %v5621 = vld [vmem:[#allocation5 + $0x1c0] sm:$0xff]
    %v5622 = vld [vmem:[#allocation5 + $0x1c8] sm:$0xff]
    %v5623 = vld [vmem:[#allocation5 + $0x1d0] sm:$0xff]
    %v5624 = vld [vmem:[#allocation5 + $0x1d8] sm:$0xff]
    %v5625 = vld [vmem:[#allocation5 + $0x1e0] sm:$0xff]
    %v5626 = vld [vmem:[#allocation5 + $0x1e8] sm:$0xff]
    %v5627 = vld [vmem:[#allocation5 + $0x1f0] sm:$0xff]
    %v5628 = vld [vmem:[#allocation5 + $0x1f8] sm:$0xff]
    %v5629 = vld [vmem:[#allocation5 + $0x200] sm:$0xff]
    %v5630 = vld [vmem:[#allocation5 + $0x208] sm:$0xff]
    %v5631 = vld [vmem:[#allocation5 + $0x210] sm:$0xff]
    %v5632 = vld [vmem:[#allocation5 + $0x218] sm:$0xff]
    %v5633 = vld [vmem:[#allocation5 + $0x220] sm:$0xff]
    %v5634 = vld [vmem:[#allocation5 + $0x228] sm:$0xff]
    %v5635 = vld [vmem:[#allocation5 + $0x230] sm:$0xff]
    %v5636 = vld [vmem:[#allocation5 + $0x238] sm:$0xff]
    %v5637 = vld [vmem:[#allocation5 + $0x240] sm:$0xff]
    %v5638 = vld [vmem:[#allocation5 + $0x248] sm:$0xff]
    %v5639 = vld [vmem:[#allocation5 + $0x250] sm:$0xff]
    %v5640 = vld [vmem:[#allocation5 + $0x258] sm:$0xff]
    %v5641 = vld [vmem:[#allocation5 + $0x260] sm:$0xff]
    %v5642 = vld [vmem:[#allocation5 + $0x268] sm:$0xff]
    %v5643 = vld [vmem:[#allocation5 + $0x270] sm:$0xff]
    %v5644 = vld [vmem:[#allocation5 + $0x278] sm:$0xff]
    %v5645 = vld [vmem:[#allocation5 + $0x280] sm:$0xff]
    %v5646 = vld [vmem:[#allocation5 + $0x288] sm:$0xff]
    %v5647 = vld [vmem:[#allocation5 + $0x290] sm:$0xff]
    %v5648 = vld [vmem:[#allocation5 + $0x298] sm:$0xff]
    %v5649 = vld [vmem:[#allocation5 + $0x2a0] sm:$0xff]
    %v5650 = vld [vmem:[#allocation5 + $0x2a8] sm:$0xff]
    %v5651 = vld [vmem:[#allocation5 + $0x2b0] sm:$0xff]
    %v5652 = vld [vmem:[#allocation5 + $0x2b8] sm:$0xff]
    %v5653 = vld [vmem:[#allocation5 + $0x2c0] sm:$0xff]
    %v5654 = vld [vmem:[#allocation5 + $0x2c8] sm:$0xff]
    %v5655 = vld [vmem:[#allocation5 + $0x2d0] sm:$0xff]
    %v5656 = vld [vmem:[#allocation5 + $0x2d8] sm:$0xff]
    %v5657 = vld [vmem:[#allocation5 + $0x2e0] sm:$0xff]
    %v5658 = vld [vmem:[#allocation5 + $0x2e8] sm:$0xff]
    %v5659 = vld [vmem:[#allocation5 + $0x2f0] sm:$0xff]
    %v5660 = vld [vmem:[#allocation5 + $0x2f8] sm:$0xff]
    %v5661 = vld [vmem:[%s8] sm:$0x3f]
    %v5663 = vlaneseq
    %v5664 = vshrl.u32 %v5663, 7
    %v5665 = vsub.s32 0, %v5664
    %v5666 = vrot.slane %v5661, %v5665
    %v5667 = vlaneseq
    %v5668 = vshrl.u32 %v5667, 7
    %v5669 = vsub.s32 1, %v5668
    %v5670 = vrot.slane %v5661, %v5669
    %v5671 = vlaneseq
    %v5672 = vshrl.u32 %v5671, 7
    %v5673 = vsub.s32 2, %v5672
    %v5674 = vrot.slane %v5661, %v5673
    %v5675 = vlaneseq
    %v5676 = vshrl.u32 %v5675, 7
    %v5677 = vsub.s32 3, %v5676
    %v5678 = vrot.slane %v5661, %v5677
    %v5679 = vlaneseq
    %v5680 = vshrl.u32 %v5679, 7
    %v5681 = vsub.s32 4, %v5680
    %v5682 = vrot.slane %v5661, %v5681
    %v5683 = vlaneseq
    %v5684 = vshrl.u32 %v5683, 7
    %v5685 = vsub.s32 5, %v5684
    %v5686 = vrot.slane %v5661, %v5685
    %5693 = vmatprep.subr.bf16.mxu0 %v5566
    %5694 = vmatpush1.bf16.msra.mxu0 %v5565
    %5695 = vmatprep.subr.bf16.mxu0 %v5572
    %5696 = vmatpush1.bf16.msra.mxu0 %v5571
    %5697 = vmatprep.subr.bf16.mxu0 %v5578
    %5698 = vmatpush1.bf16.msra.mxu0 %v5577
    %5699 = vmatprep.subr.bf16.mxu0 %v5584
    %5700 = vmatpush1.bf16.msra.mxu0 %v5583
    %5701 = vmatprep.subr.bf16.mxu0 %v5590
    %5702 = vmatpush1.bf16.msra.mxu0 %v5589
    %5703 = vmatprep.subr.bf16.mxu0 %v5596
    %5704 = vmatpush1.bf16.msra.mxu0 %v5595
    %5705 = vmatprep.subr.bf16.mxu0 %v5602
    %5706 = vmatpush1.bf16.msra.mxu0 %v5601
    %5707 = vmatprep.subr.bf16.mxu0 %v5608
    %5708 = vmatpush1.bf16.msra.mxu0 %v5607
    %5709 = vmatprep.subr.bf16.mxu0 %v5614
    %5710 = vmatpush1.bf16.msra.mxu0 %v5613
    %5711 = vmatprep.subr.bf16.mxu0 %v5620
    %5712 = vmatpush1.bf16.msra.mxu0 %v5619
    %5713 = vmatprep.subr.bf16.mxu0 %v5626
    %5714 = vmatpush1.bf16.msra.mxu0 %v5625
    %5715 = vmatprep.subr.bf16.mxu0 %v5632
    %5716 = vmatpush1.bf16.msra.mxu0 %v5631
    %5717 = vmatprep.subr.bf16.mxu0 %v5638
    %5718 = vmatpush1.bf16.msra.mxu0 %v5637
    %5719 = vmatprep.subr.bf16.mxu0 %v5644
    %5720 = vmatpush1.bf16.msra.mxu0 %v5643
    %5721 = vmatprep.subr.bf16.mxu0 %v5650
    %5722 = vmatpush1.bf16.msra.mxu0 %v5649
    %5723 = vmatprep.subr.bf16.mxu0 %v5656
    %5724 = vmatpush1.bf16.msra.mxu0 %v5655
    %5725 = vmatprep.mubr.bf16.mxu0 %v5564
    %5726 = vmatmul.mubr.bf16.gmra.mrb[0].mxu0 %v5563
    %v5727 = vpop.f32.mrb[0].mxu0
    %v5728 = vadd.f32 %v5666, %v5727
    %v5729 = vpop.f32.mrb[0].mxu0
    %v5730 = vadd.f32 %v5670, %v5729
    %v5731 = vpop.f32.mrb[0].mxu0
    %v5732 = vpop.f32.mrb[0].mxu0
    %5733 = vdwg.mxu0
    %5734 = vmatprep.subr.bf16.mxu0 %v5568
    %5735 = vmatpush1.bf16.msra.mxu0 %v5567
    %5736 = vmatprep.subr.bf16.mxu0 %v5574
    %5737 = vmatpush1.bf16.msra.mxu0 %v5573
    %5738 = vmatprep.subr.bf16.mxu0 %v5580
    %5739 = vmatpush1.bf16.msra.mxu0 %v5579
    %5740 = vmatprep.subr.bf16.mxu0 %v5586
    %5741 = vmatpush1.bf16.msra.mxu0 %v5585
    %5742 = vmatprep.subr.bf16.mxu0 %v5592
    %5743 = vmatpush1.bf16.msra.mxu0 %v5591
    %5744 = vmatprep.subr.bf16.mxu0 %v5598
    %5745 = vmatpush1.bf16.msra.mxu0 %v5597
    %5746 = vmatprep.subr.bf16.mxu0 %v5604
    %5747 = vmatpush1.bf16.msra.mxu0 %v5603
    %5748 = vmatprep.subr.bf16.mxu0 %v5610
    %5749 = vmatpush1.bf16.msra.mxu0 %v5609
    %5750 = vmatprep.subr.bf16.mxu0 %v5616
    %5751 = vmatpush1.bf16.msra.mxu0 %v5615
    %5752 = vmatprep.subr.bf16.mxu0 %v5622
    %5753 = vmatpush1.bf16.msra.mxu0 %v5621
    %5754 = vmatprep.subr.bf16.mxu0 %v5628
    %5755 = vmatpush1.bf16.msra.mxu0 %v5627
    %5756 = vmatprep.subr.bf16.mxu0 %v5634
    %5757 = vmatpush1.bf16.msra.mxu0 %v5633
    %5758 = vmatprep.subr.bf16.mxu0 %v5640
    %5759 = vmatpush1.bf16.msra.mxu0 %v5639
    %5760 = vmatprep.subr.bf16.mxu0 %v5646
    %5761 = vmatpush1.bf16.msra.mxu0 %v5645
    %5762 = vmatprep.subr.bf16.mxu0 %v5652
    %5763 = vmatpush1.bf16.msra.mxu0 %v5651
    %5764 = vmatprep.subr.bf16.mxu0 %v5658
    %5765 = vmatpush1.bf16.msra.mxu0 %v5657
    %5766 = vmatprep.mubr.bf16.mxu0 %v5564
    %5767 = vmatmul.mubr.bf16.gmra.mrb[0].mxu0 %v5563
    %v5768 = vpop.f32.mrb[0].mxu0
    %v5769 = vadd.f32 %v5674, %v5768
    %v5770 = vpop.f32.mrb[0].mxu0
    %v5771 = vadd.f32 %v5678, %v5770
    %v5772 = vpop.f32.mrb[0].mxu0
    %v5773 = vpop.f32.mrb[0].mxu0
    %5774 = vdwg.mxu0
    %5775 = vmatprep.subr.bf16.mxu0 %v5570
    %5776 = vmatpush1.bf16.msra.mxu0 %v5569
    %5777 = vmatprep.subr.bf16.mxu0 %v5576
    %5778 = vmatpush1.bf16.msra.mxu0 %v5575
    %5779 = vmatprep.subr.bf16.mxu0 %v5582
    %5780 = vmatpush1.bf16.msra.mxu0 %v5581
    %5781 = vmatprep.subr.bf16.mxu0 %v5588
    %5782 = vmatpush1.bf16.msra.mxu0 %v5587
    %5783 = vmatprep.subr.bf16.mxu0 %v5594
    %5784 = vmatpush1.bf16.msra.mxu0 %v5593
    %5785 = vmatprep.subr.bf16.mxu0 %v5600
    %5786 = vmatpush1.bf16.msra.mxu0 %v5599
    %5787 = vmatprep.subr.bf16.mxu0 %v5606
    %5788 = vmatpush1.bf16.msra.mxu0 %v5605
    %5789 = vmatprep.subr.bf16.mxu0 %v5612
    %5790 = vmatpush1.bf16.msra.mxu0 %v5611
    %5791 = vmatprep.subr.bf16.mxu0 %v5618
    %5792 = vmatpush1.bf16.msra.mxu0 %v5617
    %5793 = vmatprep.subr.bf16.mxu0 %v5624
    %5794 = vmatpush1.bf16.msra.mxu0 %v5623
    %5795 = vmatprep.subr.bf16.mxu0 %v5630
    %5796 = vmatpush1.bf16.msra.mxu0 %v5629
    %5797 = vmatprep.subr.bf16.mxu0 %v5636
    %5798 = vmatpush1.bf16.msra.mxu0 %v5635
    %5799 = vmatprep.subr.bf16.mxu0 %v5642
    %5800 = vmatpush1.bf16.msra.mxu0 %v5641
    %5801 = vmatprep.subr.bf16.mxu0 %v5648
    %5802 = vmatpush1.bf16.msra.mxu0 %v5647
    %5803 = vmatprep.subr.bf16.mxu0 %v5654
    %5804 = vmatpush1.bf16.msra.mxu0 %v5653
    %5805 = vmatprep.subr.bf16.mxu0 %v5660
    %5806 = vmatpush1.bf16.msra.mxu0 %v5659
    %5807 = vmatprep.mubr.bf16.mxu0 %v5564
    %5808 = vmatmul.mubr.bf16.gmra.mrb[0].mxu0 %v5563
    %v5809 = vpop.f32.mrb[0].mxu0
    %v5810 = vadd.f32 %v5682, %v5809
    %v5811 = vpop.f32.mrb[0].mxu0
    %v5812 = vadd.f32 %v5686, %v5811
    %v5813 = vpop.f32.mrb[0].mxu0
    %v5814 = vpop.f32.mrb[0].mxu0
    %5815 = vdwg.mxu0
    %v5816 = vxor.u32 %v5728, 2147483648
    %v5817 = vxor.u32 %v5730, 2147483648
    %v5818 = vxor.u32 %v5769, 2147483648
    %v5819 = vxor.u32 %v5771, 2147483648
    %v5820 = vmul.f32 %v5816, 1.442695
    %v5821 = vpow.pop %v5820
    %v5822 = vmul.f32 %v5817, 1.442695
    %v5823 = vpow.pop %v5822
    %v5824 = vmul.f32 %v5818, 1.442695
    %v5825 = vpow.pop %v5824
    %v5826 = vmul.f32 %v5819, 1.442695
    %v5827 = vpow.pop %v5826
    %v5828 = vadd.f32 %v5821, 1.0
    %v5829 = vadd.f32 %v5823, 1.0
    %v5830 = vadd.f32 %v5825, 1.0
    %v5831 = vadd.f32 %v5827, 1.0
    %v5832 = vrcp.pop %v5828
    %v5833 = vmul.f32 1.0, %v5832
    %v5834 = vrcp.pop %v5829
    %v5835 = vmul.f32 1.0, %v5834
    %v5836 = vrcp.pop %v5830
    %v5837 = vmul.f32 1.0, %v5836
    %v5838 = vrcp.pop %v5831
    %v5839 = vmul.f32 1.0, %v5838
    %v5840 = vtanh.pop %v5810
    %v5841 = vtanh.pop %v5812
    %v5842 = vmul.f32 %v5833, %v5840
    %v5843 = vmul.f32 %v5835, %v5841
    %v5844 = vtanh.pop %v5842
    %v5845 = vtanh.pop %v5843
    %v5846 = vmul.f32 %v5837, %v5844
    %v5847 = vmul.f32 %v5839, %v5845
    %v5848 = vld [vmem:[%s9] sm:$0xff]
    %v5849 = vld [vmem:[%s9 + $0x8] sm:$0xff]
    %v5850 = vld [vmem:[%s9 + $0x10] sm:$0xff]
    %v5851 = vld [vmem:[%s9 + $0x18] sm:$0xff]
    %v5852 = vld [vmem:[%s9 + $0x20] sm:$0xff]
    %v5853 = vld [vmem:[%s9 + $0x28] sm:$0xff]
    %v5854 = vld [vmem:[%s9 + $0x30] sm:$0xff]
    %v5855 = vld [vmem:[%s9 + $0x38] sm:$0xff]
    %v5856 = vld [vmem:[%s9 + $0x40] sm:$0xff]
    %v5857 = vld [vmem:[%s9 + $0x48] sm:$0xff]
    %v5858 = vld [vmem:[%s9 + $0x50] sm:$0xff]
    %v5859 = vld [vmem:[%s9 + $0x58] sm:$0xff]
    %v5860 = vld [vmem:[%s9 + $0x60] sm:$0xff]
    %v5861 = vld [vmem:[%s9 + $0x68] sm:$0xff]
    %v5862 = vld [vmem:[%s9 + $0x70] sm:$0xff]
    %v5863 = vld [vmem:[%s9 + $0x78] sm:$0xff]
    %v5864 = vld [vmem:[%s9 + $0x80] sm:$0xff]
    %v5865 = vld [vmem:[%s9 + $0x88] sm:$0xff]
    %v5866 = vld [vmem:[%s9 + $0x90] sm:$0xff]
    %v5867 = vld [vmem:[%s9 + $0x98] sm:$0xff]
    %v5868 = vld [vmem:[%s9 + $0xa0] sm:$0xff]
    %v5869 = vld [vmem:[%s9 + $0xa8] sm:$0xff]
    %v5870 = vld [vmem:[%s9 + $0xb0] sm:$0xff]
    %v5871 = vld [vmem:[%s9 + $0xb8] sm:$0xff]
    %v5872 = vld [vmem:[%s9 + $0xc0] sm:$0xff]
    %v5873 = vld [vmem:[%s9 + $0xc8] sm:$0xff]
    %v5874 = vld [vmem:[%s9 + $0xd0] sm:$0xff]
    %v5875 = vld [vmem:[%s9 + $0xd8] sm:$0xff]
    %v5876 = vld [vmem:[%s9 + $0xe0] sm:$0xff]
    %v5877 = vld [vmem:[%s9 + $0xe8] sm:$0xff]
    %v5878 = vld [vmem:[%s9 + $0xf0] sm:$0xff]
    %v5879 = vld [vmem:[%s9 + $0xf8] sm:$0xff]
    %v5880 = vld [vmem:[%s10] sm:$0x1]
    %v5882 = vlaneseq
    %v5883 = vshrl.u32 %v5882, 7
    %v5884 = vsub.s32 0, %v5883
    %v5885 = vrot.slane %v5880, %v5884
    %5887 = vmatprep.subr.mxu0 0.0
    %5888 = vmatpush1.msra.mxu0 %v5848
    %5889 = vmatprep.subr.mxu0 0.0
    %5890 = vmatpush1.msra.mxu0 %v5849
    %5891 = vmatprep.subr.mxu0 0.0
    %5892 = vmatpush1.msra.mxu0 %v5850
    %5893 = vmatprep.subr.mxu0 0.0
    %5894 = vmatpush1.msra.mxu0 %v5851
    %5895 = vmatprep.subr.mxu0 0.0
    %5896 = vmatpush1.msra.mxu0 %v5852
    %5897 = vmatprep.subr.mxu0 0.0
    %5898 = vmatpush1.msra.mxu0 %v5853
    %5899 = vmatprep.subr.mxu0 0.0
    %5900 = vmatpush1.msra.mxu0 %v5854
    %5901 = vmatprep.subr.mxu0 0.0
    %5902 = vmatpush1.msra.mxu0 %v5855
    %5903 = vmatprep.subr.mxu0 0.0
    %5904 = vmatpush1.msra.mxu0 %v5856
    %5905 = vmatprep.subr.mxu0 0.0
    %5906 = vmatpush1.msra.mxu0 %v5857
    %5907 = vmatprep.subr.mxu0 0.0
    %5908 = vmatpush1.msra.mxu0 %v5858
    %5909 = vmatprep.subr.mxu0 0.0
    %5910 = vmatpush1.msra.mxu0 %v5859
    %5911 = vmatprep.subr.mxu0 0.0
    %5912 = vmatpush1.msra.mxu0 %v5860
    %5913 = vmatprep.subr.mxu0 0.0
    %5914 = vmatpush1.msra.mxu0 %v5861
    %5915 = vmatprep.subr.mxu0 0.0
    %5916 = vmatpush1.msra.mxu0 %v5862
    %5917 = vmatprep.subr.mxu0 0.0
    %5918 = vmatpush1.msra.mxu0 %v5863
    %5919 = vmatprep.subr.mxu0 0.0
    %5920 = vmatpush1.msra.mxu0 %v5864
    %5921 = vmatprep.subr.mxu0 0.0
    %5922 = vmatpush1.msra.mxu0 %v5865
    %5923 = vmatprep.subr.mxu0 0.0
    %5924 = vmatpush1.msra.mxu0 %v5866
    %5925 = vmatprep.subr.mxu0 0.0
    %5926 = vmatpush1.msra.mxu0 %v5867
    %5927 = vmatprep.subr.mxu0 0.0
    %5928 = vmatpush1.msra.mxu0 %v5868
    %5929 = vmatprep.subr.mxu0 0.0
    %5930 = vmatpush1.msra.mxu0 %v5869
    %5931 = vmatprep.subr.mxu0 0.0
    %5932 = vmatpush1.msra.mxu0 %v5870
    %5933 = vmatprep.subr.mxu0 0.0
    %5934 = vmatpush1.msra.mxu0 %v5871
    %5935 = vmatprep.subr.mxu0 0.0
    %5936 = vmatpush1.msra.mxu0 %v5872
    %5937 = vmatprep.subr.mxu0 0.0
    %5938 = vmatpush1.msra.mxu0 %v5873
    %5939 = vmatprep.subr.mxu0 0.0
    %5940 = vmatpush1.msra.mxu0 %v5874
    %5941 = vmatprep.subr.mxu0 0.0
    %5942 = vmatpush1.msra.mxu0 %v5875
    %5943 = vmatprep.subr.mxu0 0.0
    %5944 = vmatpush1.msra.mxu0 %v5876
    %5945 = vmatprep.subr.mxu0 0.0
    %5946 = vmatpush1.msra.mxu0 %v5877
    %5947 = vmatprep.subr.mxu0 0.0
    %5948 = vmatpush1.msra.mxu0 %v5878
    %5949 = vmatprep.subr.mxu0 0.0
    %5950 = vmatpush1.msra.mxu0 %v5879
    %5951 = vmatprep.mubr.f32.mxu0 %v5847
    %5952 = vmatmul.mubr.f32.gmra.mrb[0].mxu0 %v5846
    %v5953 = vpop.f32.mrb[0].mxu0
    %v5954 = vadd.f32 %v5885, %v5953
    %v5955 = vpop.f32.mrb[0].mxu0
    %5956 = vdwg.mxu0
    %vm5957 = vcmask 39936
    %v5958 = vsel %vm5957, %v5954, -inf
    %5959 = vmax.xlane.f32.xlu0 %v5958
    %v5960 = vpop.xlane.xlu0 %5959
    %v5961 = vsub.f32 %v5954, %v5960
    %v5962 = vmul.f32 %v5961, 1.442695
    %v5963 = vpow.pop %v5962
    %v5964 = vsel %vm5957, %v5963, 0.0
    %5965 = vadd.xlane.f32.xlu0 %v5964
    %v5966 = vpop.xlane.xlu0 %5965
    %v5967 = vrcp.pop %v5966
    %v5968 = vmul.f32 %v5963, %v5967
    %5969 = vst.msk [vmem:[%s11] sm:$0xff] %vm5957, %v5968
    // Predicated region
    $region79: #{lstm_model_forward_fn.1} parent=1 // pred_check
      _
    $region80: #{lstm_model_forward_fn.1} parent=1 // pred_check_branch
      %5971 = sbr.rel (0) target = $region82
    $region81: #{lstm_model_forward_fn.1} parent=1 // pred_region
      _
    $region82: #{lstm_model_forward_fn.1} parent=1 // pred_fallthru
      _
    // Predicated region
    $region83: #{lstm_model_forward_fn.1} parent=1 // pred_check
      _
    $region84: #{lstm_model_forward_fn.1} parent=1 // pred_check_branch
      %5973 = sbr.rel (0) target = $region86
    $region85: #{lstm_model_forward_fn.1} parent=1 // pred_region
      _
    $region86: #{lstm_model_forward_fn.1} parent=1 // pred_fallthru
      _
    %5974 = vsyncpa [#allocation8], 1
    %5975 = vsyncpa [#allocation10], 1
  %5976 = vsyncmov [#allocation6]
  %s5977 = vpop.sfrf %5976
  %p5978 = scmp.eq.s32.totalorder %s5977, 0
  %p5979 = pneg %p5978
  %5981 = shalt.err (%p5979)
  %s5982 = scalar_lea.sflag [#allocation6], 1
  %5983 = vsyncmov %s5982
  %s5984 = vpop.sfrf %5983
  %p5985 = scmp.eq.s32.totalorder %s5984, 0
  %p5986 = pneg %p5985
  %5988 = shalt.err (%p5986)
  %s5989 = scalar_lea.sflag [#allocation6], 2
  %5990 = vsyncmov %s5989
  %s5991 = vpop.sfrf %5990
  %p5992 = scmp.eq.s32.totalorder %s5991, 0
  %p5993 = pneg %p5992
  %5995 = shalt.err (%p5993)

</llo_original>
